<compile_context>
chip_gen: v5e
topology: v5e:2x2
jax: 0.10.0
libtpu: 0.0.40
codegen_flags: <defaults>
</compile_context>

<pallas_src>
import numpy as np

import jax
import jax.numpy as jnp
from jax.experimental import pallas as pl
from jax.experimental.pallas import tpu as pltpu

IN_CHANNELS = 3
OUT_CHANNELS = 4
DEGREES = 10
W_HIDDEN = 256
ENC_CHANNELS = IN_CHANNELS * (1 + 2 * DEGREES)  # 63
ENC_PAD = 128    # lane-dense, zero-padded encoding width


# ----------------------------------------------------------------------------
# Reference-path positional encoder (PyTorch ordering: [x, sin(f0 x), cos(f0 x), ...]).
# Used only by the pure-JAX reference; the kernel computes the same thing fused.
# ----------------------------------------------------------------------------
def positional_encode(x):
    freqs = 2.0 ** jnp.arange(DEGREES, dtype=jnp.float32)
    parts = [x]
    for f in freqs:
        parts.append(jnp.sin(x * f))
        parts.append(jnp.cos(x * f))
    return jnp.concatenate(parts, axis=-1)


# ----------------------------------------------------------------------------
# Encoder lookup tables (built once on host): per-channel frequency rows, an
# identity-column selector, a trig-column selector and a phase table (pi/2 in
# cos columns), all padded to ENC_PAD lanes.  Column layout matches PyTorch
# exactly: cols 0..2 = x, then per degree d: 3 sin columns, 3 cos columns.
# Padded columns (63..127) are all-zero (mult=0 -> xp=0, sel=0 -> enc=0).
# ----------------------------------------------------------------------------
def make_encoder_tables():
    assert IN_CHANNELS == 3
    mult = np.zeros((IN_CHANNELS, ENC_PAD), np.float32)
    sel_id = np.zeros((1, ENC_PAD), np.float32)
    sel_trig = np.zeros((1, ENC_PAD), np.float32)
    phase = np.zeros((1, ENC_PAD), np.float32)
    col = 0
    for c in range(IN_CHANNELS):
        mult[c, col] = 1.0
        sel_id[0, col] = 1.0
        col += 1
    for d in range(DEGREES):
        f = float(2.0 ** d)
        for c in range(IN_CHANNELS):          # sin columns (phase 0)
            mult[c, col] = f
            sel_trig[0, col] = 1.0
            col += 1
        for c in range(IN_CHANNELS):          # cos columns: cos(z) = sin(z + pi/2)
            mult[c, col] = f
            sel_trig[0, col] = 1.0
            phase[0, col] = float(np.pi / 2)
            col += 1
    assert col == ENC_CHANNELS
    return (jnp.asarray(mult[0:1]), jnp.asarray(mult[1:2]), jnp.asarray(mult[2:3]),
            jnp.asarray(sel_id), jnp.asarray(sel_trig), jnp.asarray(phase))


# ----------------------------------------------------------------------------
# Kernel: fused positional encoding + 9 Linear(+ReLU) layers.
# ----------------------------------------------------------------------------
def density_mlp_kernel(x_ref, m0, m1, m2, sid, strig, phase,
                       w15, b1, w2, b2, w3, b3, w4, b4,
                       w5b, b5, w6, b6, w7, b7, w8, b8,
                       w9, b9,
                       out_ref):
    x = x_ref[...]  # [tile_n, 3] f32

    # xp[:, k] = x[:, channel(k)] * freq(k); exact f32 (powers of two), lane-dense.
    xp = x[:, 0:1] * m0[...] + x[:, 1:2] * m1[...] + x[:, 2:3] * m2[...]
    # Single-sin encoder: identity columns pass xp, trig columns get sin(xp+phase)
    # (phase = pi/2 realizes cos).  Padded columns stay exactly 0.
    enc = sid[...] * xp + strig[...] * jnp.sin(xp + phase[...])
    enc_bf = enc.astype(jnp.bfloat16)  # [tile_n, 128]

    def lin(h_bf, w_ref, b_ref):
        # bf16 x bf16 MXU matmul with f32 accumulation; bias added in f32.
        return jnp.dot(h_bf, w_ref[...], preferred_element_type=jnp.float32) + b_ref[...]

    def relu_bf(a_f32):
        return jnp.maximum(a_f32, 0.0).astype(jnp.bfloat16)

    # Merged layer-1 / layer-5a matmul: enc @ [W1 | W5a]  -> [tile_n, 512] f32.
    h15 = jnp.dot(enc_bf, w15[...], preferred_element_type=jnp.float32)
    enc_w5a = h15[:, W_HIDDEN:]                 # f32 partial for layer 5 (cat-split)
    h = relu_bf(h15[:, :W_HIDDEN] + b1[...])    # layer 1

    # model_part1 (remaining layers)
    h = relu_bf(lin(h, w2, b2))
    h = relu_bf(lin(h, w3, b3))
    p1 = relu_bf(lin(h, w4, b4))

    # model_part2 : cat([enc, p1]) @ W5 == enc @ W5a + p1 @ W5b  (exact)
    h = relu_bf(enc_w5a
                + jnp.dot(p1, w5b[...], preferred_element_type=jnp.float32)
                + b5[...])
    h = relu_bf(lin(h, w6, b6))
    h = relu_bf(lin(h, w7, b7))
    h = relu_bf(lin(h, w8, b8))

    # Final layer: lane-padded weight (one MXU pass either way), compact store.
    out = lin(h, w9, b9)                        # [tile_n, 128] f32; only cols 0..3 real
    out_ref[...] = out[:, :OUT_CHANNELS].astype(out_ref.dtype)


# ----------------------------------------------------------------------------
# Wrapper
# ----------------------------------------------------------------------------
def _round_up(a, b):
    return b * pl.cdiv(a, b)


def density_mlp(x, kernel_params, enc_tables, *, tile_n=2048):
    """x: [N, 3] float32 -> [N, 4] float32.

    tile_n: max rows per grid step (sweepable).
      * v6e: 2048-4096 (128 MiB VMEM; per-step overhead <10% at 2048+).
      * v7x: cap at 2048 (64 MiB VMEM) and pick N/tile_n so the grid has an even
        number of steps >= 4 (batch axis is "parallel" across the 2 TensorCores).
      * v5e: 1024-2048 (already near MXU roofline).
    """
    n = x.shape[0]
    # Balanced tiling: tiles of ~ceil(n / num_tiles) rows (8-aligned) so zero
    # padding never exceeds 7 rows per tile, instead of up to tile_n-1 rows.
    num_tiles = max(1, int(pl.cdiv(n, tile_n)))
    tile = int(_round_up(pl.cdiv(n, num_tiles), 8))
    n_pad = tile * num_tiles
    if n_pad != n:
        x = jnp.pad(x, ((0, n_pad - n), (0, 0)))

    grid = (num_tiles,)

    def full_spec(shape):
        # Whole-array block, same block for every grid step (weights stay resident;
        # Mosaic skips the re-DMA after step 0 for constant index maps).
        nd = len(shape)
        return pl.BlockSpec(shape, lambda i, _nd=nd: (0,) * _nd)

    table_specs = [full_spec(t.shape) for t in enc_tables]
    weight_specs = [full_spec(p.shape) for p in kernel_params]

    grid_spec = pltpu.PrefetchScalarGridSpec(
        num_scalar_prefetch=0,
        grid=grid,
        in_specs=([pl.BlockSpec((tile, IN_CHANNELS), lambda i: (i, 0))]
                  + table_specs + weight_specs),
        # Compact output: last block dim == full array dim (4) is legal; masked
        # 4-lane stores are negligible for this compute-bound kernel and avoid a
        # separate HBM slice pass in the wrapper.
        out_specs=pl.BlockSpec((tile, OUT_CHANNELS), lambda i: (i, 0)),
    )

    # Advisory cost estimate: 1 matmul K=128/N=512, 7 of 256x256, 1 of 256x128.
    per_row_flops = 2 * (ENC_PAD * 2 * W_HIDDEN + 7 * W_HIDDEN * W_HIDDEN
                         + W_HIDDEN * ENC_PAD)
    param_bytes = sum(int(p.size) * p.dtype.itemsize
                      for p in list(enc_tables) + list(kernel_params))
    cost = pl.CostEstimate(
        flops=int(n_pad) * per_row_flops,
        transcendentals=int(n_pad) * ENC_PAD,
        bytes_accessed=int(n_pad) * (IN_CHANNELS * 4 + OUT_CHANNELS * 4) + param_bytes,
    )

    out = pl.pallas_call(
        density_mlp_kernel,
        out_shape=jax.ShapeDtypeStruct((n_pad, OUT_CHANNELS), jnp.float32),
        grid_spec=grid_spec,
        compiler_params=pltpu.CompilerParams(
            dimension_semantics=("parallel",),
            # 48 MiB: covers tile_n=2048-4096 with resident bf16 weights and the
            # f32 enc@W5a partial; leaves headroom on v7x's 64 MiB physical VMEM.
            vmem_limit_bytes=48 * 1024 * 1024,
        ),
        cost_estimate=cost,
    )(x, *enc_tables, *kernel_params)

    return out[:n]   # row slice only; columns are already compact


# ----------------------------------------------------------------------------
# Parameters
# ----------------------------------------------------------------------------
def init_params(key):
    """PyTorch-style init: U(-1/sqrt(fan_in), 1/sqrt(fan_in)); original shapes, f32."""
    dims = [
        (ENC_CHANNELS, W_HIDDEN), (W_HIDDEN, W_HIDDEN),
        (W_HIDDEN, W_HIDDEN), (W_HIDDEN, W_HIDDEN),                            # part1
        (ENC_CHANNELS + W_HIDDEN, W_HIDDEN), (W_HIDDEN, W_HIDDEN),
        (W_HIDDEN, W_HIDDEN), (W_HIDDEN, W_HIDDEN), (W_HIDDEN, OUT_CHANNELS),  # part2
    ]
    params = []
    for fan_in, fan_out in dims:
        key, kw, kb = jax.random.split(key, 3)
        bound = 1.0 / float(np.sqrt(fan_in))
        w = jax.random.uniform(kw, (fan_in, fan_out), jnp.float32, -bound, bound)
        b = jax.random.uniform(kb, (1, fan_out), jnp.float32, -bound, bound)
        params.append((w, b))
    return params


def prepare_kernel_params(params):
    """Split/pad/merge/cast the torch-layout params into the kernel's bf16 layout."""
    ((w1, b1), (w2, b2), (w3, b3), (w4, b4),
     (w5, b5), (w6, b6), (w7, b7), (w8, b8), (w9, b9)) = params

    def pad_rows(w, rows):
        return jnp.zeros((rows, w.shape[1]), w.dtype).at[: w.shape[0]].set(w)

    bf = lambda a: a.astype(jnp.bfloat16)

    w1p = pad_rows(w1, ENC_PAD)                            # [128, 256] (zero rows exact)
    w5a = pad_rows(w5[:ENC_CHANNELS], ENC_PAD)             # [128, 256]
    w15 = bf(jnp.concatenate([w1p, w5a], axis=1))          # merged [128, 512]
    w5b = bf(w5[ENC_CHANNELS:])                            # [256, 256]
    w9p = bf(jnp.zeros((W_HIDDEN, ENC_PAD), jnp.float32).at[:, :OUT_CHANNELS].set(w9))
    b9p = jnp.zeros((1, ENC_PAD), jnp.float32).at[:, :OUT_CHANNELS].set(b9)

    return [w15, b1, bf(w2), b2, bf(w3), b3, bf(w4), b4,
            w5b, b5, bf(w6), b6, bf(w7), b7, bf(w8), b8,
            w9p, b9p]


# ----------------------------------------------------------------------------
# Numerics-matched pure-JAX reference (original torch layout, bf16 matmul inputs,
# f32 accumulation) -- validates encoding order, cat-split, merge and padding.
# ----------------------------------------------------------------------------
def reference_forward(x, params):
    def lin(h, w, b):
        return jnp.dot(h.astype(jnp.bfloat16), w.astype(jnp.bfloat16),
                       preferred_element_type=jnp.float32) + b

    ((w1, b1), (w2, b2), (w3, b3), (w4, b4),
     (w5, b5), (w6, b6), (w7, b7), (w8, b8), (w9, b9)) = params

    enc = positional_encode(x)
    h = jax.nn.relu(lin(enc, w1, b1))
    h = jax.nn.relu(lin(h, w2, b2))
    h = jax.nn.relu(lin(h, w3, b3))
    p1 = jax.nn.relu(lin(h, w4, b4))
    h = jax.nn.relu(lin(jnp.concatenate([enc, p1], -1), w5, b5))
    h = jax.nn.relu(lin(h, w6, b6))
    h = jax.nn.relu(lin(h, w7, b7))
    h = jax.nn.relu(lin(h, w8, b8))
    return lin(h, w9, b9)


if __name__ == "__main__":
    key = jax.random.PRNGKey(0)
    key, kx = jax.random.split(key)

    N = 256  # small batch of sample points
    x = jax.random.normal(kx, (N, IN_CHANNELS), jnp.float32)

    params = init_params(key)
    kernel_params = prepare_kernel_params(params)
    enc_tables = make_encoder_tables()

    # tile_n=128 -> 2 grid steps at N=256 (keeps both v7x cores busy even here).
    out = density_mlp(x, kernel_params, enc_tables, tile_n=128)
    out = jax.block_until_ready(out)

    ref = reference_forward(x, params)
    assert out.shape == (N, OUT_CHANNELS)
    # cos(z) is computed as sin(z + pi/2) in-kernel: not bit-identical to jnp.cos,
    # but far inside this tolerance (the bf16 activation path dominates).
    assert jnp.allclose(out, ref, atol=5e-3, rtol=5e-3), "mismatch vs JAX reference"

    print("KERNEL_OK")
</pallas_src>

<mosaic_0001>
module attributes {stable_mosaic.version = 11 : i64} {
  func.func @density_mlp_kernel(%arg0: i32, %arg1: memref<128x3xf32, #tpu.memory_space<vmem>>, %arg2: memref<1x128xf32, #tpu.memory_space<vmem>>, %arg3: memref<1x128xf32, #tpu.memory_space<vmem>>, %arg4: memref<1x128xf32, #tpu.memory_space<vmem>>, %arg5: memref<1x128xf32, #tpu.memory_space<vmem>>, %arg6: memref<1x128xf32, #tpu.memory_space<vmem>>, %arg7: memref<1x128xf32, #tpu.memory_space<vmem>>, %arg8: memref<128x512xbf16, #tpu.memory_space<vmem>>, %arg9: memref<1x256xf32, #tpu.memory_space<vmem>>, %arg10: memref<256x256xbf16, #tpu.memory_space<vmem>>, %arg11: memref<1x256xf32, #tpu.memory_space<vmem>>, %arg12: memref<256x256xbf16, #tpu.memory_space<vmem>>, %arg13: memref<1x256xf32, #tpu.memory_space<vmem>>, %arg14: memref<256x256xbf16, #tpu.memory_space<vmem>>, %arg15: memref<1x256xf32, #tpu.memory_space<vmem>>, %arg16: memref<256x256xbf16, #tpu.memory_space<vmem>>, %arg17: memref<1x256xf32, #tpu.memory_space<vmem>>, %arg18: memref<256x256xbf16, #tpu.memory_space<vmem>>, %arg19: memref<1x256xf32, #tpu.memory_space<vmem>>, %arg20: memref<256x256xbf16, #tpu.memory_space<vmem>>, %arg21: memref<1x256xf32, #tpu.memory_space<vmem>>, %arg22: memref<256x256xbf16, #tpu.memory_space<vmem>>, %arg23: memref<1x256xf32, #tpu.memory_space<vmem>>, %arg24: memref<256x128xbf16, #tpu.memory_space<vmem>>, %arg25: memref<1x128xf32, #tpu.memory_space<vmem>>, %arg26: memref<128x4xf32, #tpu.memory_space<vmem>>) attributes {dimension_semantics = [#tpu.dimension_semantics<parallel>], iteration_bounds = array<i64: 2>, scalar_prefetch = 0 : i64, scratch_operands = 0 : i64, tpu.core_type = #tpu.core_type<tc>, window_params = [{transform_indices = @transform_0, window_bounds = array<i64: 128, 3>}, {pipeline_mode = #tpu.pipeline_mode<synchronous>, transform_indices = @transform_1, window_bounds = array<i64: 1, 128>}, {pipeline_mode = #tpu.pipeline_mode<synchronous>, transform_indices = @transform_2, window_bounds = array<i64: 1, 128>}, {pipeline_mode = #tpu.pipeline_mode<synchronous>, transform_indices = @transform_3, window_bounds = array<i64: 1, 128>}, {pipeline_mode = #tpu.pipeline_mode<synchronous>, transform_indices = @transform_4, window_bounds = array<i64: 1, 128>}, {pipeline_mode = #tpu.pipeline_mode<synchronous>, transform_indices = @transform_5, window_bounds = array<i64: 1, 128>}, {pipeline_mode = #tpu.pipeline_mode<synchronous>, transform_indices = @transform_6, window_bounds = array<i64: 1, 128>}, {pipeline_mode = #tpu.pipeline_mode<synchronous>, transform_indices = @transform_7, window_bounds = array<i64: 128, 512>}, {pipeline_mode = #tpu.pipeline_mode<synchronous>, transform_indices = @transform_8, window_bounds = array<i64: 1, 256>}, {pipeline_mode = #tpu.pipeline_mode<synchronous>, transform_indices = @transform_9, window_bounds = array<i64: 256, 256>}, {pipeline_mode = #tpu.pipeline_mode<synchronous>, transform_indices = @transform_10, window_bounds = array<i64: 1, 256>}, {pipeline_mode = #tpu.pipeline_mode<synchronous>, transform_indices = @transform_11, window_bounds = array<i64: 256, 256>}, {pipeline_mode = #tpu.pipeline_mode<synchronous>, transform_indices = @transform_12, window_bounds = array<i64: 1, 256>}, {pipeline_mode = #tpu.pipeline_mode<synchronous>, transform_indices = @transform_13, window_bounds = array<i64: 256, 256>}, {pipeline_mode = #tpu.pipeline_mode<synchronous>, transform_indices = @transform_14, window_bounds = array<i64: 1, 256>}, {pipeline_mode = #tpu.pipeline_mode<synchronous>, transform_indices = @transform_15, window_bounds = array<i64: 256, 256>}, {pipeline_mode = #tpu.pipeline_mode<synchronous>, transform_indices = @transform_16, window_bounds = array<i64: 1, 256>}, {pipeline_mode = #tpu.pipeline_mode<synchronous>, transform_indices = @transform_17, window_bounds = array<i64: 256, 256>}, {pipeline_mode = #tpu.pipeline_mode<synchronous>, transform_indices = @transform_18, window_bounds = array<i64: 1, 256>}, {pipeline_mode = #tpu.pipeline_mode<synchronous>, transform_indices = @transform_19, window_bounds = array<i64: 256, 256>}, {pipeline_mode = #tpu.pipeline_mode<synchronous>, transform_indices = @transform_20, window_bounds = array<i64: 1, 256>}, {pipeline_mode = #tpu.pipeline_mode<synchronous>, transform_indices = @transform_21, window_bounds = array<i64: 256, 256>}, {pipeline_mode = #tpu.pipeline_mode<synchronous>, transform_indices = @transform_22, window_bounds = array<i64: 1, 256>}, {pipeline_mode = #tpu.pipeline_mode<synchronous>, transform_indices = @transform_23, window_bounds = array<i64: 256, 128>}, {pipeline_mode = #tpu.pipeline_mode<synchronous>, transform_indices = @transform_24, window_bounds = array<i64: 1, 128>}, {transform_indices = @transform_25, window_bounds = array<i64: 128, 4>}]} {
    %c0 = arith.constant 0 : index
    %c0_0 = arith.constant 0 : index
    %0 = vector.load %arg1[%c0, %c0_0] : memref<128x3xf32, #tpu.memory_space<vmem>>, vector<128x3xf32>
    %1 = vector.extract_strided_slice %0 {offsets = [0, 0], sizes = [128, 1], strides = [1, 1]} : vector<128x3xf32> to vector<128x1xf32>
    %c0_1 = arith.constant 0 : index
    %c0_2 = arith.constant 0 : index
    %2 = vector.load %arg2[%c0_1, %c0_2] : memref<1x128xf32, #tpu.memory_space<vmem>>, vector<1x128xf32>
    %3 = vector.broadcast %1 : vector<128x1xf32> to vector<128x128xf32>
    %4 = vector.broadcast %2 : vector<1x128xf32> to vector<128x128xf32>
    %5 = arith.mulf %3, %4 : vector<128x128xf32>
    %6 = vector.extract_strided_slice %0 {offsets = [0, 1], sizes = [128, 1], strides = [1, 1]} : vector<128x3xf32> to vector<128x1xf32>
    %c0_3 = arith.constant 0 : index
    %c0_4 = arith.constant 0 : index
    %7 = vector.load %arg3[%c0_3, %c0_4] : memref<1x128xf32, #tpu.memory_space<vmem>>, vector<1x128xf32>
    %8 = vector.broadcast %6 : vector<128x1xf32> to vector<128x128xf32>
    %9 = vector.broadcast %7 : vector<1x128xf32> to vector<128x128xf32>
    %10 = arith.mulf %8, %9 : vector<128x128xf32>
    %11 = arith.addf %5, %10 : vector<128x128xf32>
    %12 = vector.extract_strided_slice %0 {offsets = [0, 2], sizes = [128, 1], strides = [1, 1]} : vector<128x3xf32> to vector<128x1xf32>
    %c0_5 = arith.constant 0 : index
    %c0_6 = arith.constant 0 : index
    %13 = vector.load %arg4[%c0_5, %c0_6] : memref<1x128xf32, #tpu.memory_space<vmem>>, vector<1x128xf32>
    %14 = vector.broadcast %12 : vector<128x1xf32> to vector<128x128xf32>
    %15 = vector.broadcast %13 : vector<1x128xf32> to vector<128x128xf32>
    %16 = arith.mulf %14, %15 : vector<128x128xf32>
    %17 = arith.addf %11, %16 : vector<128x128xf32>
    %c0_7 = arith.constant 0 : index
    %c0_8 = arith.constant 0 : index
    %18 = vector.load %arg5[%c0_7, %c0_8] : memref<1x128xf32, #tpu.memory_space<vmem>>, vector<1x128xf32>
    %19 = vector.broadcast %18 : vector<1x128xf32> to vector<128x128xf32>
    %20 = arith.mulf %19, %17 : vector<128x128xf32>
    %c0_9 = arith.constant 0 : index
    %c0_10 = arith.constant 0 : index
    %21 = vector.load %arg6[%c0_9, %c0_10] : memref<1x128xf32, #tpu.memory_space<vmem>>, vector<1x128xf32>
    %c0_11 = arith.constant 0 : index
    %c0_12 = arith.constant 0 : index
    %22 = vector.load %arg7[%c0_11, %c0_12] : memref<1x128xf32, #tpu.memory_space<vmem>>, vector<1x128xf32>
    %23 = vector.broadcast %22 : vector<1x128xf32> to vector<128x128xf32>
    %24 = arith.addf %17, %23 : vector<128x128xf32>
    %25 = math.sin %24 : vector<128x128xf32>
    %26 = vector.broadcast %21 : vector<1x128xf32> to vector<128x128xf32>
    %27 = arith.mulf %26, %25 : vector<128x128xf32>
    %28 = arith.addf %20, %27 : vector<128x128xf32>
    %29 = arith.truncf %28 : vector<128x128xf32> to vector<128x128xbf16>
    %c0_13 = arith.constant 0 : index
    %c0_14 = arith.constant 0 : index
    %30 = vector.load %arg8[%c0_13, %c0_14] : memref<128x512xbf16, #tpu.memory_space<vmem>>, vector<128x512xbf16>
    %cst = arith.constant dense<0.000000e+00> : vector<128x512xf32>
    %31 = tpu.matmul %29, %30, %cst {dimension_numbers = #tpu.dot_dimension_numbers<[1], [0], [0], [1], [0, 0, 1, 1], [], []>} : vector<128x128xbf16>, vector<128x512xbf16>, vector<128x512xf32> -> vector<128x512xf32>
    %32 = vector.extract_strided_slice %31 {offsets = [0, 256], sizes = [128, 256], strides = [1, 1]} : vector<128x512xf32> to vector<128x256xf32>
    %33 = vector.extract_strided_slice %31 {offsets = [0, 0], sizes = [128, 256], strides = [1, 1]} : vector<128x512xf32> to vector<128x256xf32>
    %c0_15 = arith.constant 0 : index
    %c0_16 = arith.constant 0 : index
    %34 = vector.load %arg9[%c0_15, %c0_16] : memref<1x256xf32, #tpu.memory_space<vmem>>, vector<1x256xf32>
    %35 = vector.broadcast %34 : vector<1x256xf32> to vector<128x256xf32>
    %36 = arith.addf %33, %35 : vector<128x256xf32>
    %cst_17 = arith.constant 0.000000e+00 : f32
    %37 = vector.broadcast %cst_17 : f32 to vector<128x256xf32>
    %38 = arith.maximumf %36, %37 : vector<128x256xf32>
    %39 = arith.truncf %38 : vector<128x256xf32> to vector<128x256xbf16>
    %c0_18 = arith.constant 0 : index
    %c0_19 = arith.constant 0 : index
    %40 = vector.load %arg10[%c0_18, %c0_19] : memref<256x256xbf16, #tpu.memory_space<vmem>>, vector<256x256xbf16>
    %cst_20 = arith.constant dense<0.000000e+00> : vector<128x256xf32>
    %41 = tpu.matmul %39, %40, %cst_20 {dimension_numbers = #tpu.dot_dimension_numbers<[1], [0], [0], [1], [0, 0, 1, 1], [], []>} : vector<128x256xbf16>, vector<256x256xbf16>, vector<128x256xf32> -> vector<128x256xf32>
    %c0_21 = arith.constant 0 : index
    %c0_22 = arith.constant 0 : index
    %42 = vector.load %arg11[%c0_21, %c0_22] : memref<1x256xf32, #tpu.memory_space<vmem>>, vector<1x256xf32>
    %43 = vector.broadcast %42 : vector<1x256xf32> to vector<128x256xf32>
    %44 = arith.addf %41, %43 : vector<128x256xf32>
    %cst_23 = arith.constant 0.000000e+00 : f32
    %45 = vector.broadcast %cst_23 : f32 to vector<128x256xf32>
    %46 = arith.maximumf %44, %45 : vector<128x256xf32>
    %47 = arith.truncf %46 : vector<128x256xf32> to vector<128x256xbf16>
    %c0_24 = arith.constant 0 : index
    %c0_25 = arith.constant 0 : index
    %48 = vector.load %arg12[%c0_24, %c0_25] : memref<256x256xbf16, #tpu.memory_space<vmem>>, vector<256x256xbf16>
    %cst_26 = arith.constant dense<0.000000e+00> : vector<128x256xf32>
    %49 = tpu.matmul %47, %48, %cst_26 {dimension_numbers = #tpu.dot_dimension_numbers<[1], [0], [0], [1], [0, 0, 1, 1], [], []>} : vector<128x256xbf16>, vector<256x256xbf16>, vector<128x256xf32> -> vector<128x256xf32>
    %c0_27 = arith.constant 0 : index
    %c0_28 = arith.constant 0 : index
    %50 = vector.load %arg13[%c0_27, %c0_28] : memref<1x256xf32, #tpu.memory_space<vmem>>, vector<1x256xf32>
    %51 = vector.broadcast %50 : vector<1x256xf32> to vector<128x256xf32>
    %52 = arith.addf %49, %51 : vector<128x256xf32>
    %cst_29 = arith.constant 0.000000e+00 : f32
    %53 = vector.broadcast %cst_29 : f32 to vector<128x256xf32>
    %54 = arith.maximumf %52, %53 : vector<128x256xf32>
    %55 = arith.truncf %54 : vector<128x256xf32> to vector<128x256xbf16>
    %c0_30 = arith.constant 0 : index
    %c0_31 = arith.constant 0 : index
    %56 = vector.load %arg14[%c0_30, %c0_31] : memref<256x256xbf16, #tpu.memory_space<vmem>>, vector<256x256xbf16>
    %cst_32 = arith.constant dense<0.000000e+00> : vector<128x256xf32>
    %57 = tpu.matmul %55, %56, %cst_32 {dimension_numbers = #tpu.dot_dimension_numbers<[1], [0], [0], [1], [0, 0, 1, 1], [], []>} : vector<128x256xbf16>, vector<256x256xbf16>, vector<128x256xf32> -> vector<128x256xf32>
    %c0_33 = arith.constant 0 : index
    %c0_34 = arith.constant 0 : index
    %58 = vector.load %arg15[%c0_33, %c0_34] : memref<1x256xf32, #tpu.memory_space<vmem>>, vector<1x256xf32>
    %59 = vector.broadcast %58 : vector<1x256xf32> to vector<128x256xf32>
    %60 = arith.addf %57, %59 : vector<128x256xf32>
    %cst_35 = arith.constant 0.000000e+00 : f32
    %61 = vector.broadcast %cst_35 : f32 to vector<128x256xf32>
    %62 = arith.maximumf %60, %61 : vector<128x256xf32>
    %63 = arith.truncf %62 : vector<128x256xf32> to vector<128x256xbf16>
    %c0_36 = arith.constant 0 : index
    %c0_37 = arith.constant 0 : index
    %64 = vector.load %arg16[%c0_36, %c0_37] : memref<256x256xbf16, #tpu.memory_space<vmem>>, vector<256x256xbf16>
    %cst_38 = arith.constant dense<0.000000e+00> : vector<128x256xf32>
    %65 = tpu.matmul %63, %64, %cst_38 {dimension_numbers = #tpu.dot_dimension_numbers<[1], [0], [0], [1], [0, 0, 1, 1], [], []>} : vector<128x256xbf16>, vector<256x256xbf16>, vector<128x256xf32> -> vector<128x256xf32>
    %66 = arith.addf %32, %65 : vector<128x256xf32>
    %c0_39 = arith.constant 0 : index
    %c0_40 = arith.constant 0 : index
    %67 = vector.load %arg17[%c0_39, %c0_40] : memref<1x256xf32, #tpu.memory_space<vmem>>, vector<1x256xf32>
    %68 = vector.broadcast %67 : vector<1x256xf32> to vector<128x256xf32>
    %69 = arith.addf %66, %68 : vector<128x256xf32>
    %cst_41 = arith.constant 0.000000e+00 : f32
    %70 = vector.broadcast %cst_41 : f32 to vector<128x256xf32>
    %71 = arith.maximumf %69, %70 : vector<128x256xf32>
    %72 = arith.truncf %71 : vector<128x256xf32> to vector<128x256xbf16>
    %c0_42 = arith.constant 0 : index
    %c0_43 = arith.constant 0 : index
    %73 = vector.load %arg18[%c0_42, %c0_43] : memref<256x256xbf16, #tpu.memory_space<vmem>>, vector<256x256xbf16>
    %cst_44 = arith.constant dense<0.000000e+00> : vector<128x256xf32>
    %74 = tpu.matmul %72, %73, %cst_44 {dimension_numbers = #tpu.dot_dimension_numbers<[1], [0], [0], [1], [0, 0, 1, 1], [], []>} : vector<128x256xbf16>, vector<256x256xbf16>, vector<128x256xf32> -> vector<128x256xf32>
    %c0_45 = arith.constant 0 : index
    %c0_46 = arith.constant 0 : index
    %75 = vector.load %arg19[%c0_45, %c0_46] : memref<1x256xf32, #tpu.memory_space<vmem>>, vector<1x256xf32>
    %76 = vector.broadcast %75 : vector<1x256xf32> to vector<128x256xf32>
    %77 = arith.addf %74, %76 : vector<128x256xf32>
    %cst_47 = arith.constant 0.000000e+00 : f32
    %78 = vector.broadcast %cst_47 : f32 to vector<128x256xf32>
    %79 = arith.maximumf %77, %78 : vector<128x256xf32>
    %80 = arith.truncf %79 : vector<128x256xf32> to vector<128x256xbf16>
    %c0_48 = arith.constant 0 : index
    %c0_49 = arith.constant 0 : index
    %81 = vector.load %arg20[%c0_48, %c0_49] : memref<256x256xbf16, #tpu.memory_space<vmem>>, vector<256x256xbf16>
    %cst_50 = arith.constant dense<0.000000e+00> : vector<128x256xf32>
    %82 = tpu.matmul %80, %81, %cst_50 {dimension_numbers = #tpu.dot_dimension_numbers<[1], [0], [0], [1], [0, 0, 1, 1], [], []>} : vector<128x256xbf16>, vector<256x256xbf16>, vector<128x256xf32> -> vector<128x256xf32>
    %c0_51 = arith.constant 0 : index
    %c0_52 = arith.constant 0 : index
    %83 = vector.load %arg21[%c0_51, %c0_52] : memref<1x256xf32, #tpu.memory_space<vmem>>, vector<1x256xf32>
    %84 = vector.broadcast %83 : vector<1x256xf32> to vector<128x256xf32>
    %85 = arith.addf %82, %84 : vector<128x256xf32>
    %cst_53 = arith.constant 0.000000e+00 : f32
    %86 = vector.broadcast %cst_53 : f32 to vector<128x256xf32>
    %87 = arith.maximumf %85, %86 : vector<128x256xf32>
    %88 = arith.truncf %87 : vector<128x256xf32> to vector<128x256xbf16>
    %c0_54 = arith.constant 0 : index
    %c0_55 = arith.constant 0 : index
    %89 = vector.load %arg22[%c0_54, %c0_55] : memref<256x256xbf16, #tpu.memory_space<vmem>>, vector<256x256xbf16>
    %cst_56 = arith.constant dense<0.000000e+00> : vector<128x256xf32>
    %90 = tpu.matmul %88, %89, %cst_56 {dimension_numbers = #tpu.dot_dimension_numbers<[1], [0], [0], [1], [0, 0, 1, 1], [], []>} : vector<128x256xbf16>, vector<256x256xbf16>, vector<128x256xf32> -> vector<128x256xf32>
    %c0_57 = arith.constant 0 : index
    %c0_58 = arith.constant 0 : index
    %91 = vector.load %arg23[%c0_57, %c0_58] : memref<1x256xf32, #tpu.memory_space<vmem>>, vector<1x256xf32>
    %92 = vector.broadcast %91 : vector<1x256xf32> to vector<128x256xf32>
    %93 = arith.addf %90, %92 : vector<128x256xf32>
    %cst_59 = arith.constant 0.000000e+00 : f32
    %94 = vector.broadcast %cst_59 : f32 to vector<128x256xf32>
    %95 = arith.maximumf %93, %94 : vector<128x256xf32>
    %96 = arith.truncf %95 : vector<128x256xf32> to vector<128x256xbf16>
    %c0_60 = arith.constant 0 : index
    %c0_61 = arith.constant 0 : index
    %97 = vector.load %arg24[%c0_60, %c0_61] : memref<256x128xbf16, #tpu.memory_space<vmem>>, vector<256x128xbf16>
    %cst_62 = arith.constant dense<0.000000e+00> : vector<128x128xf32>
    %98 = tpu.matmul %96, %97, %cst_62 {dimension_numbers = #tpu.dot_dimension_numbers<[1], [0], [0], [1], [0, 0, 1, 1], [], []>} : vector<128x256xbf16>, vector<256x128xbf16>, vector<128x128xf32> -> vector<128x128xf32>
    %c0_63 = arith.constant 0 : index
    %c0_64 = arith.constant 0 : index
    %99 = vector.load %arg25[%c0_63, %c0_64] : memref<1x128xf32, #tpu.memory_space<vmem>>, vector<1x128xf32>
    %100 = vector.broadcast %99 : vector<1x128xf32> to vector<128x128xf32>
    %101 = arith.addf %98, %100 : vector<128x128xf32>
    %102 = vector.extract_strided_slice %101 {offsets = [0, 0], sizes = [128, 4], strides = [1, 1]} : vector<128x128xf32> to vector<128x4xf32>
    %c0_65 = arith.constant 0 : index
    %c0_66 = arith.constant 0 : index
    %103 = vector.load %arg26[%c0_65, %c0_66] : memref<128x4xf32, #tpu.memory_space<vmem>>, vector<128x4xf32>
    tpu.vector_store %arg26[%c0_65, %c0_66], %102 {strides = array<i32>} : memref<128x4xf32, #tpu.memory_space<vmem>>, vector<128x4xf32>,
    return
  }
  func.func @transform_0(%arg0: i32) -> (i32, i32) {
    %c0_i32 = arith.constant 0 : i32
    %c0_i32_0 = arith.constant 0 : i32
    return %arg0, %c0_i32 : i32, i32
  }
  func.func @transform_1(%arg0: i32) -> (i32, i32) {
    %c0_i32 = arith.constant 0 : i32
    %c0_i32_0 = arith.constant 0 : i32
    %c0_i32_1 = arith.constant 0 : i32
    return %c0_i32, %c0_i32_0 : i32, i32
  }
  func.func @transform_2(%arg0: i32) -> (i32, i32) {
    %c0_i32 = arith.constant 0 : i32
    %c0_i32_0 = arith.constant 0 : i32
    %c0_i32_1 = arith.constant 0 : i32
    return %c0_i32, %c0_i32_0 : i32, i32
  }
  func.func @transform_3(%arg0: i32) -> (i32, i32) {
    %c0_i32 = arith.constant 0 : i32
    %c0_i32_0 = arith.constant 0 : i32
    %c0_i32_1 = arith.constant 0 : i32
    return %c0_i32, %c0_i32_0 : i32, i32
  }
  func.func @transform_4(%arg0: i32) -> (i32, i32) {
    %c0_i32 = arith.constant 0 : i32
    %c0_i32_0 = arith.constant 0 : i32
    %c0_i32_1 = arith.constant 0 : i32
    return %c0_i32, %c0_i32_0 : i32, i32
  }
  func.func @transform_5(%arg0: i32) -> (i32, i32) {
    %c0_i32 = arith.constant 0 : i32
    %c0_i32_0 = arith.constant 0 : i32
    %c0_i32_1 = arith.constant 0 : i32
    return %c0_i32, %c0_i32_0 : i32, i32
  }
  func.func @transform_6(%arg0: i32) -> (i32, i32) {
    %c0_i32 = arith.constant 0 : i32
    %c0_i32_0 = arith.constant 0 : i32
    %c0_i32_1 = arith.constant 0 : i32
    return %c0_i32, %c0_i32_0 : i32, i32
  }
  func.func @transform_7(%arg0: i32) -> (i32, i32) {
    %c0_i32 = arith.constant 0 : i32
    %c0_i32_0 = arith.constant 0 : i32
    %c0_i32_1 = arith.constant 0 : i32
    return %c0_i32, %c0_i32_0 : i32, i32
  }
  func.func @transform_8(%arg0: i32) -> (i32, i32) {
    %c0_i32 = arith.constant 0 : i32
    %c0_i32_0 = arith.constant 0 : i32
    %c0_i32_1 = arith.constant 0 : i32
    return %c0_i32, %c0_i32_0 : i32, i32
  }
  func.func @transform_9(%arg0: i32) -> (i32, i32) {
    %c0_i32 = arith.constant 0 : i32
    %c0_i32_0 = arith.constant 0 : i32
    %c0_i32_1 = arith.constant 0 : i32
    return %c0_i32, %c0_i32_0 : i32, i32
  }
  func.func @transform_10(%arg0: i32) -> (i32, i32) {
    %c0_i32 = arith.constant 0 : i32
    %c0_i32_0 = arith.constant 0 : i32
    %c0_i32_1 = arith.constant 0 : i32
    return %c0_i32, %c0_i32_0 : i32, i32
  }
  func.func @transform_11(%arg0: i32) -> (i32, i32) {
    %c0_i32 = arith.constant 0 : i32
    %c0_i32_0 = arith.constant 0 : i32
    %c0_i32_1 = arith.constant 0 : i32
    return %c0_i32, %c0_i32_0 : i32, i32
  }
  func.func @transform_12(%arg0: i32) -> (i32, i32) {
    %c0_i32 = arith.constant 0 : i32
    %c0_i32_0 = arith.constant 0 : i32
    %c0_i32_1 = arith.constant 0 : i32
    return %c0_i32, %c0_i32_0 : i32, i32
  }
  func.func @transform_13(%arg0: i32) -> (i32, i32) {
    %c0_i32 = arith.constant 0 : i32
    %c0_i32_0 = arith.constant 0 : i32
    %c0_i32_1 = arith.constant 0 : i32
    return %c0_i32, %c0_i32_0 : i32, i32
  }
  func.func @transform_14(%arg0: i32) -> (i32, i32) {
    %c0_i32 = arith.constant 0 : i32
    %c0_i32_0 = arith.constant 0 : i32
    %c0_i32_1 = arith.constant 0 : i32
    return %c0_i32, %c0_i32_0 : i32, i32
  }
  func.func @transform_15(%arg0: i32) -> (i32, i32) {
    %c0_i32 = arith.constant 0 : i32
    %c0_i32_0 = arith.constant 0 : i32
    %c0_i32_1 = arith.constant 0 : i32
    return %c0_i32, %c0_i32_0 : i32, i32
  }
  func.func @transform_16(%arg0: i32) -> (i32, i32) {
    %c0_i32 = arith.constant 0 : i32
    %c0_i32_0 = arith.constant 0 : i32
    %c0_i32_1 = arith.constant 0 : i32
    return %c0_i32, %c0_i32_0 : i32, i32
  }
  func.func @transform_17(%arg0: i32) -> (i32, i32) {
    %c0_i32 = arith.constant 0 : i32
    %c0_i32_0 = arith.constant 0 : i32
    %c0_i32_1 = arith.constant 0 : i32
    return %c0_i32, %c0_i32_0 : i32, i32
  }
  func.func @transform_18(%arg0: i32) -> (i32, i32) {
    %c0_i32 = arith.constant 0 : i32
    %c0_i32_0 = arith.constant 0 : i32
    %c0_i32_1 = arith.constant 0 : i32
    return %c0_i32, %c0_i32_0 : i32, i32
  }
  func.func @transform_19(%arg0: i32) -> (i32, i32) {
    %c0_i32 = arith.constant 0 : i32
    %c0_i32_0 = arith.constant 0 : i32
    %c0_i32_1 = arith.constant 0 : i32
    return %c0_i32, %c0_i32_0 : i32, i32
  }
  func.func @transform_20(%arg0: i32) -> (i32, i32) {
    %c0_i32 = arith.constant 0 : i32
    %c0_i32_0 = arith.constant 0 : i32
    %c0_i32_1 = arith.constant 0 : i32
    return %c0_i32, %c0_i32_0 : i32, i32
  }
  func.func @transform_21(%arg0: i32) -> (i32, i32) {
    %c0_i32 = arith.constant 0 : i32
    %c0_i32_0 = arith.constant 0 : i32
    %c0_i32_1 = arith.constant 0 : i32
    return %c0_i32, %c0_i32_0 : i32, i32
  }
  func.func @transform_22(%arg0: i32) -> (i32, i32) {
    %c0_i32 = arith.constant 0 : i32
    %c0_i32_0 = arith.constant 0 : i32
    %c0_i32_1 = arith.constant 0 : i32
    return %c0_i32, %c0_i32_0 : i32, i32
  }
  func.func @transform_23(%arg0: i32) -> (i32, i32) {
    %c0_i32 = arith.constant 0 : i32
    %c0_i32_0 = arith.constant 0 : i32
    %c0_i32_1 = arith.constant 0 : i32
    return %c0_i32, %c0_i32_0 : i32, i32
  }
  func.func @transform_24(%arg0: i32) -> (i32, i32) {
    %c0_i32 = arith.constant 0 : i32
    %c0_i32_0 = arith.constant 0 : i32
    %c0_i32_1 = arith.constant 0 : i32
    return %c0_i32, %c0_i32_0 : i32, i32
  }
  func.func @transform_25(%arg0: i32) -> (i32, i32) {
    %c0_i32 = arith.constant 0 : i32
    %c0_i32_0 = arith.constant 0 : i32
    return %arg0, %c0_i32 : i32, i32
  }
}

</mosaic_0001>

<llo_original>
// kernel: tpu_custom_call.1
$region0: #{tpu_custom_call.1}
  #allocation0 [shape = 'u32[]', space=smem, size = 0x4, offset = 0x4, fixed_abs, tag = 'smem constant byte address 0x4 - core index']
  #allocation1 [shape = 'u32[72,128]{1,0:T(1,128)}', space=vmem, size = 0x9000, scoped, tag = 'internal scratch']
  %s0 = inlined_call_operand.vmem [shape: f32[256,3], index: 0, kind: input, shape index: {}]
  %s1 = inlined_call_operand.hbm [shape: f32[1,128], index: 1, kind: input, shape index: {}]
  %s2 = inlined_call_operand.hbm [shape: f32[1,128], index: 2, kind: input, shape index: {}]
  %s3 = inlined_call_operand.hbm [shape: f32[1,128], index: 3, kind: input, shape index: {}]
  %s4 = inlined_call_operand.hbm [shape: f32[1,128], index: 4, kind: input, shape index: {}]
  %s5 = inlined_call_operand.hbm [shape: f32[1,128], index: 5, kind: input, shape index: {}]
  %s6 = inlined_call_operand.hbm [shape: f32[1,128], index: 6, kind: input, shape index: {}]
  %s7 = inlined_call_operand.vmem [shape: bf16[128,512], index: 7, kind: input, shape index: {}]
  %s8 = inlined_call_operand.vmem [shape: f32[1,256], index: 8, kind: input, shape index: {}]
  %s9 = inlined_call_operand.hbm [shape: bf16[256,256], index: 9, kind: input, shape index: {}]
  %s10 = inlined_call_operand.vmem [shape: f32[1,256], index: 10, kind: input, shape index: {}]
  %s11 = inlined_call_operand.hbm [shape: bf16[256,256], index: 11, kind: input, shape index: {}]
  %s12 = inlined_call_operand.vmem [shape: f32[1,256], index: 12, kind: input, shape index: {}]
  %s13 = inlined_call_operand.hbm [shape: bf16[256,256], index: 13, kind: input, shape index: {}]
  %s14 = inlined_call_operand.vmem [shape: f32[1,256], index: 14, kind: input, shape index: {}]
  %s15 = inlined_call_operand.hbm [shape: bf16[256,256], index: 15, kind: input, shape index: {}]
  %s16 = inlined_call_operand.vmem [shape: f32[1,256], index: 16, kind: input, shape index: {}]
  %s17 = inlined_call_operand.hbm [shape: bf16[256,256], index: 17, kind: input, shape index: {}]
  %s18 = inlined_call_operand.vmem [shape: f32[1,256], index: 18, kind: input, shape index: {}]
  %s19 = inlined_call_operand.hbm [shape: bf16[256,256], index: 19, kind: input, shape index: {}]
  %s20 = inlined_call_operand.vmem [shape: f32[1,256], index: 20, kind: input, shape index: {}]
  %s21 = inlined_call_operand.hbm [shape: bf16[256,256], index: 21, kind: input, shape index: {}]
  %s22 = inlined_call_operand.vmem [shape: f32[1,256], index: 22, kind: input, shape index: {}]
  %s23 = inlined_call_operand.hbm [shape: bf16[256,128], index: 23, kind: input, shape index: {}]
  %s24 = inlined_call_operand.vmem [shape: f32[1,128], index: 24, kind: input, shape index: {}]
  %s25 = inlined_call_operand.vmem [shape: f32[256,4], index: 25, kind: output, shape index: {}]
  %s26 = sld [smem:[#allocation0]]
  $region189: #{tpu_custom_call.1} parent=0
    _
  %s28 = ssub.s32 1, %s26
  %s29 = scalar_select 0, %s28, %s26
  $region1: #{tpu_custom_call.1} parent=0
    #allocation2 [shape = 'u8[512]{0}', space=vmem, size = 0x400, scoped, tag = 'input window, operand 1, single buffered']
    #allocation3 [shape = 's32[2]{0}', space=sflag, size = 0x8, scoped, tag = 'scoped memory for tpu_custom_call.1']
    #allocation4 [shape = 'u8[512]{0}', space=vmem, size = 0x400, scoped, tag = 'input window, operand 2, single buffered']
    #allocation5 [shape = 's32[1]{0}', space=sflag, size = 0x4, scoped, tag = 'scoped memory for tpu_custom_call.1']
    #allocation6 [shape = 'u8[512]{0}', space=vmem, size = 0x400, scoped, tag = 'input window, operand 3, single buffered']
    #allocation7 [shape = 'u8[512]{0}', space=vmem, size = 0x400, scoped, tag = 'input window, operand 4, single buffered']
    #allocation8 [shape = 's32[1]{0}', space=sflag, size = 0x4, scoped, tag = 'scoped memory for tpu_custom_call.1']
    #allocation9 [shape = 'u8[512]{0}', space=vmem, size = 0x400, scoped, tag = 'input window, operand 5, single buffered']
    #allocation10 [shape = 'u8[512]{0}', space=vmem, size = 0x400, scoped, tag = 'input window, operand 6, single buffered']
    #allocation11 [shape = 's32[1]{0}', space=sflag, size = 0x4, scoped, tag = 'scoped memory for tpu_custom_call.1']
    #allocation12 [shape = 'u8[131072]{0}', space=vmem, size = 0x20000, scoped, tag = 'input window, operand 9, single buffered']
    #allocation13 [shape = 'u8[131072]{0}', space=vmem, size = 0x20000, scoped, tag = 'input window, operand 11, single buffered']
    #allocation14 [shape = 's32[1]{0}', space=sflag, size = 0x4, scoped, tag = 'scoped memory for tpu_custom_call.1']
    #allocation15 [shape = 'u8[131072]{0}', space=vmem, size = 0x20000, scoped, tag = 'input window, operand 13, single buffered']
    #allocation16 [shape = 'u8[131072]{0}', space=vmem, size = 0x20000, scoped, tag = 'input window, operand 15, single buffered']
    #allocation17 [shape = 's32[1]{0}', space=sflag, size = 0x4, scoped, tag = 'scoped memory for tpu_custom_call.1']
    #allocation18 [shape = 'u8[131072]{0}', space=vmem, size = 0x20000, scoped, tag = 'input window, operand 17, single buffered']
    #allocation19 [shape = 'u8[131072]{0}', space=vmem, size = 0x20000, scoped, tag = 'input window, operand 19, single buffered']
    #allocation20 [shape = 's32[1]{0}', space=sflag, size = 0x4, scoped, tag = 'scoped memory for tpu_custom_call.1']
    #allocation21 [shape = 'u8[131072]{0}', space=vmem, size = 0x20000, scoped, tag = 'input window, operand 21, single buffered']
    #allocation22 [shape = 'u8[65536]{0}', space=vmem, size = 0x10000, scoped, tag = 'input window, operand 23, single buffered']
    #allocation23 [shape = 's32[1]{0}', space=sflag, size = 0x4, scoped, tag = 'scoped memory for tpu_custom_call.1']
    %30 = vsyncpa [#allocation3], 0
    %31 = vsyncpa [#allocation5], 0
    %32 = vsyncpa [#allocation8], 0
    %33 = vsyncpa [#allocation11], 0
    %34 = vsyncpa [#allocation14], 0
    %35 = vsyncpa [#allocation17], 0
    %36 = vsyncpa [#allocation20], 0
    %37 = vsyncpa [#allocation23], 0
    loop: start=0, step=1, limit=4
    $region2: #{tpu_custom_call.1} parent=1 // loop_pre_header
      _
    $region3: #{tpu_custom_call.1} parent=1 // loop_header
      %s39 = sphi 0, %s43
      %p40 = scmp.ge.s32.totalorder %s39, 4
      %s49 = sphi 0, %s51
      %s52 = sphi 0, %s49
      %s53 = sphi 0, %s52
      %s69 = sphi 0, %s53
      %s73 = sphi 0, %s73
      %s75 = sphi 0, %s73
      %s76 = sphi 0, %s75
      %s90 = sphi 0, %s76
      %s94 = sphi 0, %s94
      %s96 = sphi 0, %s94
      %s97 = sphi 0, %s96
      %s111 = sphi 0, %s97
      %s115 = sphi 0, %s115
      %s117 = sphi 0, %s115
      %s118 = sphi 0, %s117
      %s132 = sphi 0, %s118
      %s136 = sphi 0, %s136
      %s138 = sphi 0, %s136
      %s139 = sphi 0, %s138
      %s153 = sphi 0, %s139
      %s157 = sphi 0, %s157
      %s159 = sphi 0, %s157
      %s160 = sphi 0, %s159
      %s174 = sphi 0, %s160
      %s178 = sphi 0, %s178
      %s180 = sphi 0, %s178
      %s181 = sphi 0, %s180
      %s195 = sphi 0, %s181
      %s199 = sphi 0, %s199
      %s201 = sphi 0, %s199
      %s202 = sphi 0, %s201
      %s216 = sphi 0, %s202
      %s220 = sphi 0, %s220
      %s222 = sphi 0, %s220
      %s223 = sphi 0, %s222
      %s237 = sphi 0, %s223
      %s241 = sphi 0, %s241
      %s243 = sphi 0, %s241
      %s244 = sphi 0, %s243
      %s258 = sphi 0, %s244
      %s262 = sphi 0, %s262
      %s264 = sphi 0, %s262
      %s265 = sphi 0, %s264
      %s279 = sphi 0, %s265
      %s283 = sphi 0, %s283
      %s285 = sphi 0, %s283
      %s286 = sphi 0, %s285
      %s300 = sphi 0, %s286
      %s304 = sphi 0, %s304
      %s306 = sphi 0, %s304
      %s307 = sphi 0, %s306
      %s321 = sphi 0, %s307
      %s325 = sphi 0, %s325
      %s327 = sphi 0, %s325
      %s328 = sphi 0, %s327
      %s342 = sphi 0, %s328
      %s346 = sphi 0, %s346
      %s348 = sphi 0, %s346
      %s349 = sphi 0, %s348
      %s363 = sphi 0, %s349
      %s367 = sphi 0, %s367
      %s369 = sphi 0, %s367
      %s370 = sphi 0, %s369
      %s384 = sphi 0, %s370
      %s388 = sphi 0, %s388
      %s390 = sphi 0, %s388
      %s391 = sphi 0, %s390
      %s405 = sphi 0, %s391
      %s409 = sphi 0, %s409
      %s411 = sphi 0, %s409
      %s412 = sphi 0, %s411
      %s426 = sphi 0, %s412
      %s430 = sphi 0, %s430
      %s432 = sphi 0, %s430
      %s433 = sphi 0, %s432
      %s447 = sphi 0, %s433
      %s451 = sphi 0, %s451
      %s453 = sphi 0, %s451
      %s454 = sphi 0, %s453
      %s468 = sphi 0, %s454
      %s472 = sphi 0, %s472
      %s474 = sphi 0, %s472
      %s475 = sphi 0, %s474
      %s489 = sphi 0, %s475
      %s493 = sphi 0, %s493
      %s495 = sphi 0, %s493
      %s496 = sphi 0, %s495
      %s510 = sphi 0, %s496
      %s514 = sphi 0, %s514
      %s516 = sphi 0, %s514
      %s517 = sphi 0, %s516
      %s531 = sphi 0, %s517
      %s535 = sphi 0, %s535
      %s537 = sphi 0, %s535
      %s538 = sphi 0, %s537
      %s552 = sphi 0, %s538
      %s556 = sphi 0, %s556
      %s558 = sphi 0, %s556
      %s559 = sphi 0, %s558
      %s573 = sphi 0, %s559
      %s579 = sphi 0, %s581
      %s582 = sphi 0, %s579
      %s583 = sphi 0, %s582
      %s599 = sphi 0, %s583
    $region4: #{tpu_custom_call.1} parent=1 // loop_header_branch
      %42 = sbr.rel (%p40) target = $region8
    $region5: #{tpu_custom_call.1} parent=1 // loop_body
      %s44 = ssub.s32 %s39, 1
      %s45 = ssub.s32 %s39, 2
      %s46 = sadd.s32 %s39, 1
      %s47 = ssub.s32 %s39, %s46
      %p48 = scmp.eq.s32.totalorder %s47, 0
      %s50 = sadd.s32 %s49, 1
      %s51 = scalar_select %p48, %s49, %s50
      %p54 = pneg %p48
      %p55 = scmp.eq.s32.totalorder %s39, 1
      %p56 = por %p54, %p55
      %p57 = scmp.ne.s32.totalorder %s49, %s52
      %p58 = scmp.eq.s32.totalorder %s39, 0
      %p59 = por %p57, %p58
      %p60 = scmp.ne.s32.totalorder %s49, %s52
      %p61 = scmp.eq.s32.totalorder %s44, 1
      %p62 = por %p60, %p61
      %p63 = scmp.ne.s32.totalorder %s52, %s53
      %p64 = scmp.eq.s32.totalorder %s44, 0
      %p65 = por %p63, %p64
      %p66 = scmp.ne.s32.totalorder %s52, %s53
      %p67 = scmp.eq.s32.totalorder %s45, 1
      %p68 = por %p66, %p67
      %p70 = scmp.ne.s32.totalorder %s53, %s69
      %p71 = scmp.eq.s32.totalorder %s45, 0
      %p72 = por %p70, %p71
      %s74 = sadd.s32 %s73, 1
      %p77 = scmp.eq.s32.totalorder %s39, 1
      %p78 = scmp.ne.s32.totalorder %s73, %s75
      %p79 = scmp.eq.s32.totalorder %s39, 0
      %p80 = por %p78, %p79
      %p81 = scmp.ne.s32.totalorder %s73, %s75
      %p82 = scmp.eq.s32.totalorder %s44, 1
      %p83 = por %p81, %p82
      %p84 = scmp.ne.s32.totalorder %s75, %s76
      %p85 = scmp.eq.s32.totalorder %s44, 0
      %p86 = por %p84, %p85
      %p87 = scmp.ne.s32.totalorder %s75, %s76
      %p88 = scmp.eq.s32.totalorder %s45, 1
      %p89 = por %p87, %p88
      %p91 = scmp.ne.s32.totalorder %s76, %s90
      %p92 = scmp.eq.s32.totalorder %s45, 0
      %p93 = por %p91, %p92
      %s95 = sadd.s32 %s94, 1
      %p98 = scmp.eq.s32.totalorder %s39, 1
      %p99 = scmp.ne.s32.totalorder %s94, %s96
      %p100 = scmp.eq.s32.totalorder %s39, 0
      %p101 = por %p99, %p100
      %p102 = scmp.ne.s32.totalorder %s94, %s96
      %p103 = scmp.eq.s32.totalorder %s44, 1
      %p104 = por %p102, %p103
      %p105 = scmp.ne.s32.totalorder %s96, %s97
      %p106 = scmp.eq.s32.totalorder %s44, 0
      %p107 = por %p105, %p106
      %p108 = scmp.ne.s32.totalorder %s96, %s97
      %p109 = scmp.eq.s32.totalorder %s45, 1
      %p110 = por %p108, %p109
      %p112 = scmp.ne.s32.totalorder %s97, %s111
      %p113 = scmp.eq.s32.totalorder %s45, 0
      %p114 = por %p112, %p113
      %s116 = sadd.s32 %s115, 1
      %p119 = scmp.eq.s32.totalorder %s39, 1
      %p120 = scmp.ne.s32.totalorder %s115, %s117
      %p121 = scmp.eq.s32.totalorder %s39, 0
      %p122 = por %p120, %p121
      %p123 = scmp.ne.s32.totalorder %s115, %s117
      %p124 = scmp.eq.s32.totalorder %s44, 1
      %p125 = por %p123, %p124
      %p126 = scmp.ne.s32.totalorder %s117, %s118
      %p127 = scmp.eq.s32.totalorder %s44, 0
      %p128 = por %p126, %p127
      %p129 = scmp.ne.s32.totalorder %s117, %s118
      %p130 = scmp.eq.s32.totalorder %s45, 1
      %p131 = por %p129, %p130
      %p133 = scmp.ne.s32.totalorder %s118, %s132
      %p134 = scmp.eq.s32.totalorder %s45, 0
      %p135 = por %p133, %p134
      %s137 = sadd.s32 %s136, 1
      %p140 = scmp.eq.s32.totalorder %s39, 1
      %p141 = scmp.ne.s32.totalorder %s136, %s138
      %p142 = scmp.eq.s32.totalorder %s39, 0
      %p143 = por %p141, %p142
      %p144 = scmp.ne.s32.totalorder %s136, %s138
      %p145 = scmp.eq.s32.totalorder %s44, 1
      %p146 = por %p144, %p145
      %p147 = scmp.ne.s32.totalorder %s138, %s139
      %p148 = scmp.eq.s32.totalorder %s44, 0
      %p149 = por %p147, %p148
      %p150 = scmp.ne.s32.totalorder %s138, %s139
      %p151 = scmp.eq.s32.totalorder %s45, 1
      %p152 = por %p150, %p151
      %p154 = scmp.ne.s32.totalorder %s139, %s153
      %p155 = scmp.eq.s32.totalorder %s45, 0
      %p156 = por %p154, %p155
      %s158 = sadd.s32 %s157, 1
      %p161 = scmp.eq.s32.totalorder %s39, 1
      %p162 = scmp.ne.s32.totalorder %s157, %s159
      %p163 = scmp.eq.s32.totalorder %s39, 0
      %p164 = por %p162, %p163
      %p165 = scmp.ne.s32.totalorder %s157, %s159
      %p166 = scmp.eq.s32.totalorder %s44, 1
      %p167 = por %p165, %p166
      %p168 = scmp.ne.s32.totalorder %s159, %s160
      %p169 = scmp.eq.s32.totalorder %s44, 0
      %p170 = por %p168, %p169
      %p171 = scmp.ne.s32.totalorder %s159, %s160
      %p172 = scmp.eq.s32.totalorder %s45, 1
      %p173 = por %p171, %p172
      %p175 = scmp.ne.s32.totalorder %s160, %s174
      %p176 = scmp.eq.s32.totalorder %s45, 0
      %p177 = por %p175, %p176
      %s179 = sadd.s32 %s178, 1
      %p182 = scmp.eq.s32.totalorder %s39, 1
      %p183 = scmp.ne.s32.totalorder %s178, %s180
      %p184 = scmp.eq.s32.totalorder %s39, 0
      %p185 = por %p183, %p184
      %p186 = scmp.ne.s32.totalorder %s178, %s180
      %p187 = scmp.eq.s32.totalorder %s44, 1
      %p188 = por %p186, %p187
      %p189 = scmp.ne.s32.totalorder %s180, %s181
      %p190 = scmp.eq.s32.totalorder %s44, 0
      %p191 = por %p189, %p190
      %p192 = scmp.ne.s32.totalorder %s180, %s181
      %p193 = scmp.eq.s32.totalorder %s45, 1
      %p194 = por %p192, %p193
      %p196 = scmp.ne.s32.totalorder %s181, %s195
      %p197 = scmp.eq.s32.totalorder %s45, 0
      %p198 = por %p196, %p197
      %s200 = sadd.s32 %s199, 1
      %p203 = scmp.eq.s32.totalorder %s39, 1
      %p204 = scmp.ne.s32.totalorder %s199, %s201
      %p205 = scmp.eq.s32.totalorder %s39, 0
      %p206 = por %p204, %p205
      %p207 = scmp.ne.s32.totalorder %s199, %s201
      %p208 = scmp.eq.s32.totalorder %s44, 1
      %p209 = por %p207, %p208
      %p210 = scmp.ne.s32.totalorder %s201, %s202
      %p211 = scmp.eq.s32.totalorder %s44, 0
      %p212 = por %p210, %p211
      %p213 = scmp.ne.s32.totalorder %s201, %s202
      %p214 = scmp.eq.s32.totalorder %s45, 1
      %p215 = por %p213, %p214
      %p217 = scmp.ne.s32.totalorder %s202, %s216
      %p218 = scmp.eq.s32.totalorder %s45, 0
      %p219 = por %p217, %p218
      %s221 = sadd.s32 %s220, 1
      %p224 = scmp.eq.s32.totalorder %s39, 1
      %p225 = scmp.ne.s32.totalorder %s220, %s222
      %p226 = scmp.eq.s32.totalorder %s39, 0
      %p227 = por %p225, %p226
      %p228 = scmp.ne.s32.totalorder %s220, %s222
      %p229 = scmp.eq.s32.totalorder %s44, 1
      %p230 = por %p228, %p229
      %p231 = scmp.ne.s32.totalorder %s222, %s223
      %p232 = scmp.eq.s32.totalorder %s44, 0
      %p233 = por %p231, %p232
      %p234 = scmp.ne.s32.totalorder %s222, %s223
      %p235 = scmp.eq.s32.totalorder %s45, 1
      %p236 = por %p234, %p235
      %p238 = scmp.ne.s32.totalorder %s223, %s237
      %p239 = scmp.eq.s32.totalorder %s45, 0
      %p240 = por %p238, %p239
      %s242 = sadd.s32 %s241, 1
      %p245 = scmp.eq.s32.totalorder %s39, 1
      %p246 = scmp.ne.s32.totalorder %s241, %s243
      %p247 = scmp.eq.s32.totalorder %s39, 0
      %p248 = por %p246, %p247
      %p249 = scmp.ne.s32.totalorder %s241, %s243
      %p250 = scmp.eq.s32.totalorder %s44, 1
      %p251 = por %p249, %p250
      %p252 = scmp.ne.s32.totalorder %s243, %s244
      %p253 = scmp.eq.s32.totalorder %s44, 0
      %p254 = por %p252, %p253
      %p255 = scmp.ne.s32.totalorder %s243, %s244
      %p256 = scmp.eq.s32.totalorder %s45, 1
      %p257 = por %p255, %p256
      %p259 = scmp.ne.s32.totalorder %s244, %s258
      %p260 = scmp.eq.s32.totalorder %s45, 0
      %p261 = por %p259, %p260
      %s263 = sadd.s32 %s262, 1
      %p266 = scmp.eq.s32.totalorder %s39, 1
      %p267 = scmp.ne.s32.totalorder %s262, %s264
      %p268 = scmp.eq.s32.totalorder %s39, 0
      %p269 = por %p267, %p268
      %p270 = scmp.ne.s32.totalorder %s262, %s264
      %p271 = scmp.eq.s32.totalorder %s44, 1
      %p272 = por %p270, %p271
      %p273 = scmp.ne.s32.totalorder %s264, %s265
      %p274 = scmp.eq.s32.totalorder %s44, 0
      %p275 = por %p273, %p274
      %p276 = scmp.ne.s32.totalorder %s264, %s265
      %p277 = scmp.eq.s32.totalorder %s45, 1
      %p278 = por %p276, %p277
      %p280 = scmp.ne.s32.totalorder %s265, %s279
      %p281 = scmp.eq.s32.totalorder %s45, 0
      %p282 = por %p280, %p281
      %s284 = sadd.s32 %s283, 1
      %p287 = scmp.eq.s32.totalorder %s39, 1
      %p288 = scmp.ne.s32.totalorder %s283, %s285
      %p289 = scmp.eq.s32.totalorder %s39, 0
      %p290 = por %p288, %p289
      %p291 = scmp.ne.s32.totalorder %s283, %s285
      %p292 = scmp.eq.s32.totalorder %s44, 1
      %p293 = por %p291, %p292
      %p294 = scmp.ne.s32.totalorder %s285, %s286
      %p295 = scmp.eq.s32.totalorder %s44, 0
      %p296 = por %p294, %p295
      %p297 = scmp.ne.s32.totalorder %s285, %s286
      %p298 = scmp.eq.s32.totalorder %s45, 1
      %p299 = por %p297, %p298
      %p301 = scmp.ne.s32.totalorder %s286, %s300
      %p302 = scmp.eq.s32.totalorder %s45, 0
      %p303 = por %p301, %p302
      %s305 = sadd.s32 %s304, 1
      %p308 = scmp.eq.s32.totalorder %s39, 1
      %p309 = scmp.ne.s32.totalorder %s304, %s306
      %p310 = scmp.eq.s32.totalorder %s39, 0
      %p311 = por %p309, %p310
      %p312 = scmp.ne.s32.totalorder %s304, %s306
      %p313 = scmp.eq.s32.totalorder %s44, 1
      %p314 = por %p312, %p313
      %p315 = scmp.ne.s32.totalorder %s306, %s307
      %p316 = scmp.eq.s32.totalorder %s44, 0
      %p317 = por %p315, %p316
      %p318 = scmp.ne.s32.totalorder %s306, %s307
      %p319 = scmp.eq.s32.totalorder %s45, 1
      %p320 = por %p318, %p319
      %p322 = scmp.ne.s32.totalorder %s307, %s321
      %p323 = scmp.eq.s32.totalorder %s45, 0
      %p324 = por %p322, %p323
      %s326 = sadd.s32 %s325, 1
      %p329 = scmp.eq.s32.totalorder %s39, 1
      %p330 = scmp.ne.s32.totalorder %s325, %s327
      %p331 = scmp.eq.s32.totalorder %s39, 0
      %p332 = por %p330, %p331
      %p333 = scmp.ne.s32.totalorder %s325, %s327
      %p334 = scmp.eq.s32.totalorder %s44, 1
      %p335 = por %p333, %p334
      %p336 = scmp.ne.s32.totalorder %s327, %s328
      %p337 = scmp.eq.s32.totalorder %s44, 0
      %p338 = por %p336, %p337
      %p339 = scmp.ne.s32.totalorder %s327, %s328
      %p340 = scmp.eq.s32.totalorder %s45, 1
      %p341 = por %p339, %p340
      %p343 = scmp.ne.s32.totalorder %s328, %s342
      %p344 = scmp.eq.s32.totalorder %s45, 0
      %p345 = por %p343, %p344
      %s347 = sadd.s32 %s346, 1
      %p350 = scmp.eq.s32.totalorder %s39, 1
      %p351 = scmp.ne.s32.totalorder %s346, %s348
      %p352 = scmp.eq.s32.totalorder %s39, 0
      %p353 = por %p351, %p352
      %p354 = scmp.ne.s32.totalorder %s346, %s348
      %p355 = scmp.eq.s32.totalorder %s44, 1
      %p356 = por %p354, %p355
      %p357 = scmp.ne.s32.totalorder %s348, %s349
      %p358 = scmp.eq.s32.totalorder %s44, 0
      %p359 = por %p357, %p358
      %p360 = scmp.ne.s32.totalorder %s348, %s349
      %p361 = scmp.eq.s32.totalorder %s45, 1
      %p362 = por %p360, %p361
      %p364 = scmp.ne.s32.totalorder %s349, %s363
      %p365 = scmp.eq.s32.totalorder %s45, 0
      %p366 = por %p364, %p365
      %s368 = sadd.s32 %s367, 1
      %p371 = scmp.eq.s32.totalorder %s39, 1
      %p372 = scmp.ne.s32.totalorder %s367, %s369
      %p373 = scmp.eq.s32.totalorder %s39, 0
      %p374 = por %p372, %p373
      %p375 = scmp.ne.s32.totalorder %s367, %s369
      %p376 = scmp.eq.s32.totalorder %s44, 1
      %p377 = por %p375, %p376
      %p378 = scmp.ne.s32.totalorder %s369, %s370
      %p379 = scmp.eq.s32.totalorder %s44, 0
      %p380 = por %p378, %p379
      %p381 = scmp.ne.s32.totalorder %s369, %s370
      %p382 = scmp.eq.s32.totalorder %s45, 1
      %p383 = por %p381, %p382
      %p385 = scmp.ne.s32.totalorder %s370, %s384
      %p386 = scmp.eq.s32.totalorder %s45, 0
      %p387 = por %p385, %p386
      %s389 = sadd.s32 %s388, 1
      %p392 = scmp.eq.s32.totalorder %s39, 1
      %p393 = scmp.ne.s32.totalorder %s388, %s390
      %p394 = scmp.eq.s32.totalorder %s39, 0
      %p395 = por %p393, %p394
      %p396 = scmp.ne.s32.totalorder %s388, %s390
      %p397 = scmp.eq.s32.totalorder %s44, 1
      %p398 = por %p396, %p397
      %p399 = scmp.ne.s32.totalorder %s390, %s391
      %p400 = scmp.eq.s32.totalorder %s44, 0
      %p401 = por %p399, %p400
      %p402 = scmp.ne.s32.totalorder %s390, %s391
      %p403 = scmp.eq.s32.totalorder %s45, 1
      %p404 = por %p402, %p403
      %p406 = scmp.ne.s32.totalorder %s391, %s405
      %p407 = scmp.eq.s32.totalorder %s45, 0
      %p408 = por %p406, %p407
      %s410 = sadd.s32 %s409, 1
      %p413 = scmp.eq.s32.totalorder %s39, 1
      %p414 = scmp.ne.s32.totalorder %s409, %s411
      %p415 = scmp.eq.s32.totalorder %s39, 0
      %p416 = por %p414, %p415
      %p417 = scmp.ne.s32.totalorder %s409, %s411
      %p418 = scmp.eq.s32.totalorder %s44, 1
      %p419 = por %p417, %p418
      %p420 = scmp.ne.s32.totalorder %s411, %s412
      %p421 = scmp.eq.s32.totalorder %s44, 0
      %p422 = por %p420, %p421
      %p423 = scmp.ne.s32.totalorder %s411, %s412
      %p424 = scmp.eq.s32.totalorder %s45, 1
      %p425 = por %p423, %p424
      %p427 = scmp.ne.s32.totalorder %s412, %s426
      %p428 = scmp.eq.s32.totalorder %s45, 0
      %p429 = por %p427, %p428
      %s431 = sadd.s32 %s430, 1
      %p434 = scmp.eq.s32.totalorder %s39, 1
      %p435 = scmp.ne.s32.totalorder %s430, %s432
      %p436 = scmp.eq.s32.totalorder %s39, 0
      %p437 = por %p435, %p436
      %p438 = scmp.ne.s32.totalorder %s430, %s432
      %p439 = scmp.eq.s32.totalorder %s44, 1
      %p440 = por %p438, %p439
      %p441 = scmp.ne.s32.totalorder %s432, %s433
      %p442 = scmp.eq.s32.totalorder %s44, 0
      %p443 = por %p441, %p442
      %p444 = scmp.ne.s32.totalorder %s432, %s433
      %p445 = scmp.eq.s32.totalorder %s45, 1
      %p446 = por %p444, %p445
      %p448 = scmp.ne.s32.totalorder %s433, %s447
      %p449 = scmp.eq.s32.totalorder %s45, 0
      %p450 = por %p448, %p449
      %s452 = sadd.s32 %s451, 1
      %p455 = scmp.eq.s32.totalorder %s39, 1
      %p456 = scmp.ne.s32.totalorder %s451, %s453
      %p457 = scmp.eq.s32.totalorder %s39, 0
      %p458 = por %p456, %p457
      %p459 = scmp.ne.s32.totalorder %s451, %s453
      %p460 = scmp.eq.s32.totalorder %s44, 1
      %p461 = por %p459, %p460
      %p462 = scmp.ne.s32.totalorder %s453, %s454
      %p463 = scmp.eq.s32.totalorder %s44, 0
      %p464 = por %p462, %p463
      %p465 = scmp.ne.s32.totalorder %s453, %s454
      %p466 = scmp.eq.s32.totalorder %s45, 1
      %p467 = por %p465, %p466
      %p469 = scmp.ne.s32.totalorder %s454, %s468
      %p470 = scmp.eq.s32.totalorder %s45, 0
      %p471 = por %p469, %p470
      %s473 = sadd.s32 %s472, 1
      %p476 = scmp.eq.s32.totalorder %s39, 1
      %p477 = scmp.ne.s32.totalorder %s472, %s474
      %p478 = scmp.eq.s32.totalorder %s39, 0
      %p479 = por %p477, %p478
      %p480 = scmp.ne.s32.totalorder %s472, %s474
      %p481 = scmp.eq.s32.totalorder %s44, 1
      %p482 = por %p480, %p481
      %p483 = scmp.ne.s32.totalorder %s474, %s475
      %p484 = scmp.eq.s32.totalorder %s44, 0
      %p485 = por %p483, %p484
      %p486 = scmp.ne.s32.totalorder %s474, %s475
      %p487 = scmp.eq.s32.totalorder %s45, 1
      %p488 = por %p486, %p487
      %p490 = scmp.ne.s32.totalorder %s475, %s489
      %p491 = scmp.eq.s32.totalorder %s45, 0
      %p492 = por %p490, %p491
      %s494 = sadd.s32 %s493, 1
      %p497 = scmp.eq.s32.totalorder %s39, 1
      %p498 = scmp.ne.s32.totalorder %s493, %s495
      %p499 = scmp.eq.s32.totalorder %s39, 0
      %p500 = por %p498, %p499
      %p501 = scmp.ne.s32.totalorder %s493, %s495
      %p502 = scmp.eq.s32.totalorder %s44, 1
      %p503 = por %p501, %p502
      %p504 = scmp.ne.s32.totalorder %s495, %s496
      %p505 = scmp.eq.s32.totalorder %s44, 0
      %p506 = por %p504, %p505
      %p507 = scmp.ne.s32.totalorder %s495, %s496
      %p508 = scmp.eq.s32.totalorder %s45, 1
      %p509 = por %p507, %p508
      %p511 = scmp.ne.s32.totalorder %s496, %s510
      %p512 = scmp.eq.s32.totalorder %s45, 0
      %p513 = por %p511, %p512
      %s515 = sadd.s32 %s514, 1
      %p518 = scmp.eq.s32.totalorder %s39, 1
      %p519 = scmp.ne.s32.totalorder %s514, %s516
      %p520 = scmp.eq.s32.totalorder %s39, 0
      %p521 = por %p519, %p520
      %p522 = scmp.ne.s32.totalorder %s514, %s516
      %p523 = scmp.eq.s32.totalorder %s44, 1
      %p524 = por %p522, %p523
      %p525 = scmp.ne.s32.totalorder %s516, %s517
      %p526 = scmp.eq.s32.totalorder %s44, 0
      %p527 = por %p525, %p526
      %p528 = scmp.ne.s32.totalorder %s516, %s517
      %p529 = scmp.eq.s32.totalorder %s45, 1
      %p530 = por %p528, %p529
      %p532 = scmp.ne.s32.totalorder %s517, %s531
      %p533 = scmp.eq.s32.totalorder %s45, 0
      %p534 = por %p532, %p533
      %s536 = sadd.s32 %s535, 1
      %p539 = scmp.eq.s32.totalorder %s39, 1
      %p540 = scmp.ne.s32.totalorder %s535, %s537
      %p541 = scmp.eq.s32.totalorder %s39, 0
      %p542 = por %p540, %p541
      %p543 = scmp.ne.s32.totalorder %s535, %s537
      %p544 = scmp.eq.s32.totalorder %s44, 1
      %p545 = por %p543, %p544
      %p546 = scmp.ne.s32.totalorder %s537, %s538
      %p547 = scmp.eq.s32.totalorder %s44, 0
      %p548 = por %p546, %p547
      %p549 = scmp.ne.s32.totalorder %s537, %s538
      %p550 = scmp.eq.s32.totalorder %s45, 1
      %p551 = por %p549, %p550
      %p553 = scmp.ne.s32.totalorder %s538, %s552
      %p554 = scmp.eq.s32.totalorder %s45, 0
      %p555 = por %p553, %p554
      %s557 = sadd.s32 %s556, 1
      %p560 = scmp.eq.s32.totalorder %s39, 1
      %p561 = scmp.ne.s32.totalorder %s556, %s558
      %p562 = scmp.eq.s32.totalorder %s39, 0
      %p563 = por %p561, %p562
      %p564 = scmp.ne.s32.totalorder %s556, %s558
      %p565 = scmp.eq.s32.totalorder %s44, 1
      %p566 = por %p564, %p565
      %p567 = scmp.ne.s32.totalorder %s558, %s559
      %p568 = scmp.eq.s32.totalorder %s44, 0
      %p569 = por %p567, %p568
      %p570 = scmp.ne.s32.totalorder %s558, %s559
      %p571 = scmp.eq.s32.totalorder %s45, 1
      %p572 = por %p570, %p571
      %p574 = scmp.ne.s32.totalorder %s559, %s573
      %p575 = scmp.eq.s32.totalorder %s45, 0
      %p576 = por %p574, %p575
      %s577 = ssub.s32 %s39, %s46
      %p578 = scmp.eq.s32.totalorder %s577, 0
      %s580 = sadd.s32 %s579, 1
      %s581 = scalar_select %p578, %s579, %s580
      %p584 = pneg %p578
      %p585 = scmp.eq.s32.totalorder %s39, 1
      %p586 = por %p584, %p585
      %p587 = scmp.ne.s32.totalorder %s579, %s582
      %p588 = scmp.eq.s32.totalorder %s39, 0
      %p589 = por %p587, %p588
      %p590 = scmp.ne.s32.totalorder %s579, %s582
      %p591 = scmp.eq.s32.totalorder %s44, 1
      %p592 = por %p590, %p591
      %p593 = scmp.ne.s32.totalorder %s582, %s583
      %p594 = scmp.eq.s32.totalorder %s44, 0
      %p595 = por %p593, %p594
      %p596 = scmp.ne.s32.totalorder %s582, %s583
      %p597 = scmp.eq.s32.totalorder %s45, 1
      %p598 = por %p596, %p597
      %p600 = scmp.ne.s32.totalorder %s583, %s599
      %p601 = scmp.eq.s32.totalorder %s45, 0
      %p602 = por %p600, %p601
      %p603 = scmp.le.s32.totalorder 1, %s39
      %p604 = scmp.lt.s32.totalorder %s39, 3
      %p605 = pnand %p603, %p604
      %p606 = pneg %p605
      // Predicated region
      $region9: #{tpu_custom_call.1} parent=5 // pred_check
        _
      $region10: #{tpu_custom_call.1} parent=5 // pred_check_branch
        %608 = sbr.rel (%p605) target = $region12
      $region11: #{tpu_custom_call.1} parent=5 // pred_region
        %s609 = ssub.s32 %s39, 1
        // Predicated region
        $region13: #{tpu_custom_call.1} parent=11 // pred_check
          %p610 = pneg %p86
        $region14: #{tpu_custom_call.1} parent=11 // pred_check_branch
          %612 = sbr.rel (%p610) target = $region16
        $region15: #{tpu_custom_call.1} parent=11 // pred_region
          %614 = vsyncadd [#allocation3], 0
          %s616 = sshll.u32 %s1, 4
          %s617 = int_to_ptr.hbm [resolvable:$true] %s616
          %s618 = sshll.u32 [#allocation2], 4
          %s619 = int_to_ptr.vmem [resolvable:$true] %s618
          %621 = dma.hbm_to_vmem [thread:$0]  %s617, 16, %s619, [#allocation3]
        $region16: #{tpu_custom_call.1} parent=11 // pred_fallthru
          _
        // Predicated region
        $region17: #{tpu_custom_call.1} parent=11 // pred_check
          %p622 = pneg %p107
        $region18: #{tpu_custom_call.1} parent=11 // pred_check_branch
          %624 = sbr.rel (%p622) target = $region20
        $region19: #{tpu_custom_call.1} parent=11 // pred_region
          %626 = vsyncadd [#allocation5], 0
          %s628 = sshll.u32 %s2, 4
          %s629 = int_to_ptr.hbm [resolvable:$true] %s628
          %s630 = sshll.u32 [#allocation4], 4
          %s631 = int_to_ptr.vmem [resolvable:$true] %s630
          %633 = dma.hbm_to_vmem [thread:$0]  %s629, 16, %s631, [#allocation5]
        $region20: #{tpu_custom_call.1} parent=11 // pred_fallthru
          _
        // Predicated region
        $region21: #{tpu_custom_call.1} parent=11 // pred_check
          %p634 = pneg %p128
        $region22: #{tpu_custom_call.1} parent=11 // pred_check_branch
          %636 = sbr.rel (%p634) target = $region24
        $region23: #{tpu_custom_call.1} parent=11 // pred_region
          %638 = vsyncadd [#allocation5], 0
          %s640 = sshll.u32 %s3, 4
          %s641 = int_to_ptr.hbm [resolvable:$true] %s640
          %s642 = sshll.u32 [#allocation6], 4
          %s643 = int_to_ptr.vmem [resolvable:$true] %s642
          %645 = dma.hbm_to_vmem [thread:$0]  %s641, 16, %s643, [#allocation5]
        $region24: #{tpu_custom_call.1} parent=11 // pred_fallthru
          _
        // Predicated region
        $region25: #{tpu_custom_call.1} parent=11 // pred_check
          %p646 = pneg %p149
        $region26: #{tpu_custom_call.1} parent=11 // pred_check_branch
          %648 = sbr.rel (%p646) target = $region28
        $region27: #{tpu_custom_call.1} parent=11 // pred_region
          %650 = vsyncadd [#allocation8], 0
          %s652 = sshll.u32 %s4, 4
          %s653 = int_to_ptr.hbm [resolvable:$true] %s652
          %s654 = sshll.u32 [#allocation7], 4
          %s655 = int_to_ptr.vmem [resolvable:$true] %s654
          %657 = dma.hbm_to_vmem [thread:$0]  %s653, 16, %s655, [#allocation8]
        $region28: #{tpu_custom_call.1} parent=11 // pred_fallthru
          _
        // Predicated region
        $region29: #{tpu_custom_call.1} parent=11 // pred_check
          %p658 = pneg %p170
        $region30: #{tpu_custom_call.1} parent=11 // pred_check_branch
          %660 = sbr.rel (%p658) target = $region32
        $region31: #{tpu_custom_call.1} parent=11 // pred_region
          %662 = vsyncadd [#allocation8], 0
          %s664 = sshll.u32 %s5, 4
          %s665 = int_to_ptr.hbm [resolvable:$true] %s664
          %s666 = sshll.u32 [#allocation9], 4
          %s667 = int_to_ptr.vmem [resolvable:$true] %s666
          %669 = dma.hbm_to_vmem [thread:$0]  %s665, 16, %s667, [#allocation8]
        $region32: #{tpu_custom_call.1} parent=11 // pred_fallthru
          _
        // Predicated region
        $region33: #{tpu_custom_call.1} parent=11 // pred_check
          %p670 = pneg %p191
        $region34: #{tpu_custom_call.1} parent=11 // pred_check_branch
          %672 = sbr.rel (%p670) target = $region36
        $region35: #{tpu_custom_call.1} parent=11 // pred_region
          %674 = vsyncadd [#allocation11], 0
          %s676 = sshll.u32 %s6, 4
          %s677 = int_to_ptr.hbm [resolvable:$true] %s676
          %s678 = sshll.u32 [#allocation10], 4
          %s679 = int_to_ptr.vmem [resolvable:$true] %s678
          %681 = dma.hbm_to_vmem [thread:$0]  %s677, 16, %s679, [#allocation11]
        $region36: #{tpu_custom_call.1} parent=11 // pred_fallthru
          _
        // Predicated region
        $region37: #{tpu_custom_call.1} parent=11 // pred_check
          %p682 = pneg %p212
        $region38: #{tpu_custom_call.1} parent=11 // pred_check_branch
          %684 = sbr.rel (%p682) target = $region40
        $region39: #{tpu_custom_call.1} parent=11 // pred_region
          _
        $region40: #{tpu_custom_call.1} parent=11 // pred_fallthru
          _
        // Predicated region
        $region41: #{tpu_custom_call.1} parent=11 // pred_check
          %p685 = pneg %p233
        $region42: #{tpu_custom_call.1} parent=11 // pred_check_branch
          %687 = sbr.rel (%p685) target = $region44
        $region43: #{tpu_custom_call.1} parent=11 // pred_region
          _
        $region44: #{tpu_custom_call.1} parent=11 // pred_fallthru
          _
        // Predicated region
        $region45: #{tpu_custom_call.1} parent=11 // pred_check
          %p688 = pneg %p254
        $region46: #{tpu_custom_call.1} parent=11 // pred_check_branch
          %690 = sbr.rel (%p688) target = $region48
        $region47: #{tpu_custom_call.1} parent=11 // pred_region
          %692 = vsyncadd [#allocation11], 0
          %s693 = sshll.u32 %s9, 4
          %s694 = int_to_ptr.hbm [resolvable:$true] %s693
          %s695 = sshll.u32 [#allocation12], 4
          %s696 = int_to_ptr.vmem [resolvable:$true] %s695
          %701 = dma.hbm_to_vmem [thread:$0]  %s694, 4096, %s696, [#allocation11], 128, 128, 8
        $region48: #{tpu_custom_call.1} parent=11 // pred_fallthru
          _
        // Predicated region
        $region49: #{tpu_custom_call.1} parent=11 // pred_check
          %p702 = pneg %p275
        $region50: #{tpu_custom_call.1} parent=11 // pred_check_branch
          %704 = sbr.rel (%p702) target = $region52
        $region51: #{tpu_custom_call.1} parent=11 // pred_region
          _
        $region52: #{tpu_custom_call.1} parent=11 // pred_fallthru
          _
        // Predicated region
        $region53: #{tpu_custom_call.1} parent=11 // pred_check
          %p705 = pneg %p296
        $region54: #{tpu_custom_call.1} parent=11 // pred_check_branch
          %707 = sbr.rel (%p705) target = $region56
        $region55: #{tpu_custom_call.1} parent=11 // pred_region
          %709 = vsyncadd [#allocation14], 0
          %s710 = sshll.u32 %s11, 4
          %s711 = int_to_ptr.hbm [resolvable:$true] %s710
          %s712 = sshll.u32 [#allocation13], 4
          %s713 = int_to_ptr.vmem [resolvable:$true] %s712
          %718 = dma.hbm_to_vmem [thread:$0]  %s711, 4096, %s713, [#allocation14], 128, 128, 8
        $region56: #{tpu_custom_call.1} parent=11 // pred_fallthru
          _
        // Predicated region
        $region57: #{tpu_custom_call.1} parent=11 // pred_check
          %p719 = pneg %p317
        $region58: #{tpu_custom_call.1} parent=11 // pred_check_branch
          %721 = sbr.rel (%p719) target = $region60
        $region59: #{tpu_custom_call.1} parent=11 // pred_region
          _
        $region60: #{tpu_custom_call.1} parent=11 // pred_fallthru
          _
        // Predicated region
        $region61: #{tpu_custom_call.1} parent=11 // pred_check
          %p722 = pneg %p338
        $region62: #{tpu_custom_call.1} parent=11 // pred_check_branch
          %724 = sbr.rel (%p722) target = $region64
        $region63: #{tpu_custom_call.1} parent=11 // pred_region
          %726 = vsyncadd [#allocation14], 0
          %s727 = sshll.u32 %s13, 4
          %s728 = int_to_ptr.hbm [resolvable:$true] %s727
          %s729 = sshll.u32 [#allocation15], 4
          %s730 = int_to_ptr.vmem [resolvable:$true] %s729
          %735 = dma.hbm_to_vmem [thread:$0]  %s728, 4096, %s730, [#allocation14], 128, 128, 8
        $region64: #{tpu_custom_call.1} parent=11 // pred_fallthru
          _
        // Predicated region
        $region65: #{tpu_custom_call.1} parent=11 // pred_check
          %p736 = pneg %p359
        $region66: #{tpu_custom_call.1} parent=11 // pred_check_branch
          %738 = sbr.rel (%p736) target = $region68
        $region67: #{tpu_custom_call.1} parent=11 // pred_region
          _
        $region68: #{tpu_custom_call.1} parent=11 // pred_fallthru
          _
        // Predicated region
        $region69: #{tpu_custom_call.1} parent=11 // pred_check
          %p739 = pneg %p380
        $region70: #{tpu_custom_call.1} parent=11 // pred_check_branch
          %741 = sbr.rel (%p739) target = $region72
        $region71: #{tpu_custom_call.1} parent=11 // pred_region
          %743 = vsyncadd [#allocation17], 0
          %s744 = sshll.u32 %s15, 4
          %s745 = int_to_ptr.hbm [resolvable:$true] %s744
          %s746 = sshll.u32 [#allocation16], 4
          %s747 = int_to_ptr.vmem [resolvable:$true] %s746
          %752 = dma.hbm_to_vmem [thread:$0]  %s745, 4096, %s747, [#allocation17], 128, 128, 8
        $region72: #{tpu_custom_call.1} parent=11 // pred_fallthru
          _
        // Predicated region
        $region73: #{tpu_custom_call.1} parent=11 // pred_check
          %p753 = pneg %p401
        $region74: #{tpu_custom_call.1} parent=11 // pred_check_branch
          %755 = sbr.rel (%p753) target = $region76
        $region75: #{tpu_custom_call.1} parent=11 // pred_region
          _
        $region76: #{tpu_custom_call.1} parent=11 // pred_fallthru
          _
        // Predicated region
        $region77: #{tpu_custom_call.1} parent=11 // pred_check
          %p756 = pneg %p422
        $region78: #{tpu_custom_call.1} parent=11 // pred_check_branch
          %758 = sbr.rel (%p756) target = $region80
        $region79: #{tpu_custom_call.1} parent=11 // pred_region
          %760 = vsyncadd [#allocation17], 0
          %s761 = sshll.u32 %s17, 4
          %s762 = int_to_ptr.hbm [resolvable:$true] %s761
          %s763 = sshll.u32 [#allocation18], 4
          %s764 = int_to_ptr.vmem [resolvable:$true] %s763
          %769 = dma.hbm_to_vmem [thread:$0]  %s762, 4096, %s764, [#allocation17], 128, 128, 8
        $region80: #{tpu_custom_call.1} parent=11 // pred_fallthru
          _
        // Predicated region
        $region81: #{tpu_custom_call.1} parent=11 // pred_check
          %p770 = pneg %p443
        $region82: #{tpu_custom_call.1} parent=11 // pred_check_branch
          %772 = sbr.rel (%p770) target = $region84
        $region83: #{tpu_custom_call.1} parent=11 // pred_region
          _
        $region84: #{tpu_custom_call.1} parent=11 // pred_fallthru
          _
        // Predicated region
        $region85: #{tpu_custom_call.1} parent=11 // pred_check
          %p773 = pneg %p464
        $region86: #{tpu_custom_call.1} parent=11 // pred_check_branch
          %775 = sbr.rel (%p773) target = $region88
        $region87: #{tpu_custom_call.1} parent=11 // pred_region
          %777 = vsyncadd [#allocation20], 0
          %s778 = sshll.u32 %s19, 4
          %s779 = int_to_ptr.hbm [resolvable:$true] %s778
          %s780 = sshll.u32 [#allocation19], 4
          %s781 = int_to_ptr.vmem [resolvable:$true] %s780
          %786 = dma.hbm_to_vmem [thread:$0]  %s779, 4096, %s781, [#allocation20], 128, 128, 8
        $region88: #{tpu_custom_call.1} parent=11 // pred_fallthru
          _
        // Predicated region
        $region89: #{tpu_custom_call.1} parent=11 // pred_check
          %p787 = pneg %p485
        $region90: #{tpu_custom_call.1} parent=11 // pred_check_branch
          %789 = sbr.rel (%p787) target = $region92
        $region91: #{tpu_custom_call.1} parent=11 // pred_region
          _
        $region92: #{tpu_custom_call.1} parent=11 // pred_fallthru
          _
        // Predicated region
        $region93: #{tpu_custom_call.1} parent=11 // pred_check
          %p790 = pneg %p506
        $region94: #{tpu_custom_call.1} parent=11 // pred_check_branch
          %792 = sbr.rel (%p790) target = $region96
        $region95: #{tpu_custom_call.1} parent=11 // pred_region
          %794 = vsyncadd [#allocation20], 0
          %s795 = sshll.u32 %s21, 4
          %s796 = int_to_ptr.hbm [resolvable:$true] %s795
          %s797 = sshll.u32 [#allocation21], 4
          %s798 = int_to_ptr.vmem [resolvable:$true] %s797
          %803 = dma.hbm_to_vmem [thread:$0]  %s796, 4096, %s798, [#allocation20], 128, 128, 8
        $region96: #{tpu_custom_call.1} parent=11 // pred_fallthru
          _
        // Predicated region
        $region97: #{tpu_custom_call.1} parent=11 // pred_check
          %p804 = pneg %p527
        $region98: #{tpu_custom_call.1} parent=11 // pred_check_branch
          %806 = sbr.rel (%p804) target = $region100
        $region99: #{tpu_custom_call.1} parent=11 // pred_region
          _
        $region100: #{tpu_custom_call.1} parent=11 // pred_fallthru
          _
        // Predicated region
        $region101: #{tpu_custom_call.1} parent=11 // pred_check
          %p807 = pneg %p548
        $region102: #{tpu_custom_call.1} parent=11 // pred_check_branch
          %809 = sbr.rel (%p807) target = $region104
        $region103: #{tpu_custom_call.1} parent=11 // pred_region
          %811 = vsyncadd [#allocation23], 0
          %s812 = sshll.u32 %s23, 4
          %s813 = int_to_ptr.hbm [resolvable:$true] %s812
          %s814 = sshll.u32 [#allocation22], 4
          %s815 = int_to_ptr.vmem [resolvable:$true] %s814
          %820 = dma.hbm_to_vmem [thread:$0]  %s813, 2048, %s815, [#allocation23], 64, 64, 4
        $region104: #{tpu_custom_call.1} parent=11 // pred_fallthru
          _
        // Predicated region
        $region105: #{tpu_custom_call.1} parent=11 // pred_check
          %p821 = pneg %p569
        $region106: #{tpu_custom_call.1} parent=11 // pred_check_branch
          %823 = sbr.rel (%p821) target = $region108
        $region107: #{tpu_custom_call.1} parent=11 // pred_region
          _
        $region108: #{tpu_custom_call.1} parent=11 // pred_fallthru
          _
      $region12: #{tpu_custom_call.1} parent=5 // pred_fallthru
        _
      %p824 = scmp.lt.s32.totalorder %s39, 2
      // Predicated region
      $region109: #{tpu_custom_call.1} parent=5 // pred_check
        %p825 = pneg %p824
      $region110: #{tpu_custom_call.1} parent=5 // pred_check_branch
        %827 = sbr.rel (%p825) target = $region112
      $region111: #{tpu_custom_call.1} parent=5 // pred_region
        // Predicated region
        $region113: #{tpu_custom_call.1} parent=111 // pred_check
          %p828 = pneg %p59
        $region114: #{tpu_custom_call.1} parent=111 // pred_check_branch
          %830 = sbr.rel (%p828) target = $region116
        $region115: #{tpu_custom_call.1} parent=111 // pred_region
          %s831 = smul.u32 16, %s39
          %p832 = scmp.lt.s32.totalorder %s831, 31
          %s833 = scalar_select %p832, %s831, 31
          %s834 = smul.addr %s833, 8
          %s835 = scalar_lea.vmem %s0, %s834
          %s836 = smul.u32 16, %s39
        $region116: #{tpu_custom_call.1} parent=111 // pred_fallthru
          _
      $region112: #{tpu_custom_call.1} parent=5 // pred_fallthru
        _
      %p837 = scmp.le.s32.totalorder 1, %s39
      %p838 = scmp.lt.s32.totalorder %s39, 3
      %p839 = pnand %p837, %p838
      %p840 = pneg %p839
      // Predicated region
      $region117: #{tpu_custom_call.1} parent=5 // pred_check
        _
      $region118: #{tpu_custom_call.1} parent=5 // pred_check_branch
        %842 = sbr.rel (%p839) target = $region120
      $region119: #{tpu_custom_call.1} parent=5 // pred_region
        %s843 = ssub.s32 %s39, 1
        // Predicated region
        $region121: #{tpu_custom_call.1} parent=119 // pred_check
          %p844 = pneg %p86
        $region122: #{tpu_custom_call.1} parent=119 // pred_check_branch
          %846 = sbr.rel (%p844) target = $region124
        $region123: #{tpu_custom_call.1} parent=119 // pred_region
          %848 = dma.done [#allocation3], 16
        $region124: #{tpu_custom_call.1} parent=119 // pred_fallthru
          _
        // Predicated region
        $region125: #{tpu_custom_call.1} parent=119 // pred_check
          %p849 = pneg %p107
        $region126: #{tpu_custom_call.1} parent=119 // pred_check_branch
          %851 = sbr.rel (%p849) target = $region128
        $region127: #{tpu_custom_call.1} parent=119 // pred_region
          %853 = dma.done [#allocation5], 16
        $region128: #{tpu_custom_call.1} parent=119 // pred_fallthru
          _
        // Predicated region
        $region129: #{tpu_custom_call.1} parent=119 // pred_check
          %p854 = pneg %p128
        $region130: #{tpu_custom_call.1} parent=119 // pred_check_branch
          %856 = sbr.rel (%p854) target = $region132
        $region131: #{tpu_custom_call.1} parent=119 // pred_region
          %858 = dma.done [#allocation5], 16
        $region132: #{tpu_custom_call.1} parent=119 // pred_fallthru
          _
        // Predicated region
        $region133: #{tpu_custom_call.1} parent=119 // pred_check
          %p859 = pneg %p149
        $region134: #{tpu_custom_call.1} parent=119 // pred_check_branch
          %861 = sbr.rel (%p859) target = $region136
        $region135: #{tpu_custom_call.1} parent=119 // pred_region
          %863 = dma.done [#allocation8], 16
        $region136: #{tpu_custom_call.1} parent=119 // pred_fallthru
          _
        // Predicated region
        $region137: #{tpu_custom_call.1} parent=119 // pred_check
          %p864 = pneg %p170
        $region138: #{tpu_custom_call.1} parent=119 // pred_check_branch
          %866 = sbr.rel (%p864) target = $region140
        $region139: #{tpu_custom_call.1} parent=119 // pred_region
          %868 = dma.done [#allocation8], 16
        $region140: #{tpu_custom_call.1} parent=119 // pred_fallthru
          _
        // Predicated region
        $region141: #{tpu_custom_call.1} parent=119 // pred_check
          %p869 = pneg %p191
        $region142: #{tpu_custom_call.1} parent=119 // pred_check_branch
          %871 = sbr.rel (%p869) target = $region144
        $region143: #{tpu_custom_call.1} parent=119 // pred_region
          %873 = dma.done [#allocation11], 16
        $region144: #{tpu_custom_call.1} parent=119 // pred_fallthru
          _
        // Predicated region
        $region145: #{tpu_custom_call.1} parent=119 // pred_check
          %p874 = pneg %p254
        $region146: #{tpu_custom_call.1} parent=119 // pred_check_branch
          %876 = sbr.rel (%p874) target = $region148
        $region147: #{tpu_custom_call.1} parent=119 // pred_region
          %878 = dma.done [#allocation11], 4096
        $region148: #{tpu_custom_call.1} parent=119 // pred_fallthru
          _
        // Predicated region
        $region149: #{tpu_custom_call.1} parent=119 // pred_check
          %p879 = pneg %p296
        $region150: #{tpu_custom_call.1} parent=119 // pred_check_branch
          %881 = sbr.rel (%p879) target = $region152
        $region151: #{tpu_custom_call.1} parent=119 // pred_region
          %883 = dma.done [#allocation14], 4096
        $region152: #{tpu_custom_call.1} parent=119 // pred_fallthru
          _
        // Predicated region
        $region153: #{tpu_custom_call.1} parent=119 // pred_check
          %p884 = pneg %p338
        $region154: #{tpu_custom_call.1} parent=119 // pred_check_branch
          %886 = sbr.rel (%p884) target = $region156
        $region155: #{tpu_custom_call.1} parent=119 // pred_region
          %888 = dma.done [#allocation14], 4096
        $region156: #{tpu_custom_call.1} parent=119 // pred_fallthru
          _
        // Predicated region
        $region157: #{tpu_custom_call.1} parent=119 // pred_check
          %p889 = pneg %p380
        $region158: #{tpu_custom_call.1} parent=119 // pred_check_branch
          %891 = sbr.rel (%p889) target = $region160
        $region159: #{tpu_custom_call.1} parent=119 // pred_region
          %893 = dma.done [#allocation17], 4096
        $region160: #{tpu_custom_call.1} parent=119 // pred_fallthru
          _
        // Predicated region
        $region161: #{tpu_custom_call.1} parent=119 // pred_check
          %p894 = pneg %p422
        $region162: #{tpu_custom_call.1} parent=119 // pred_check_branch
          %896 = sbr.rel (%p894) target = $region164
        $region163: #{tpu_custom_call.1} parent=119 // pred_region
          %898 = dma.done [#allocation17], 4096
        $region164: #{tpu_custom_call.1} parent=119 // pred_fallthru
          _
        // Predicated region
        $region165: #{tpu_custom_call.1} parent=119 // pred_check
          %p899 = pneg %p464
        $region166: #{tpu_custom_call.1} parent=119 // pred_check_branch
          %901 = sbr.rel (%p899) target = $region168
        $region167: #{tpu_custom_call.1} parent=119 // pred_region
          %903 = dma.done [#allocation20], 4096
        $region168: #{tpu_custom_call.1} parent=119 // pred_fallthru
          _
        // Predicated region
        $region169: #{tpu_custom_call.1} parent=119 // pred_check
          %p904 = pneg %p506
        $region170: #{tpu_custom_call.1} parent=119 // pred_check_branch
          %906 = sbr.rel (%p904) target = $region172
        $region171: #{tpu_custom_call.1} parent=119 // pred_region
          %908 = dma.done [#allocation20], 4096
        $region172: #{tpu_custom_call.1} parent=119 // pred_fallthru
          _
        // Predicated region
        $region173: #{tpu_custom_call.1} parent=119 // pred_check
          %p909 = pneg %p548
        $region174: #{tpu_custom_call.1} parent=119 // pred_check_branch
          %911 = sbr.rel (%p909) target = $region176
        $region175: #{tpu_custom_call.1} parent=119 // pred_region
          %913 = dma.done [#allocation23], 2048
        $region176: #{tpu_custom_call.1} parent=119 // pred_fallthru
          _
        %s914 = smul.u32 16, %s44
        %p915 = scmp.lt.s32.totalorder %s914, 31
        %s916 = scalar_select %p915, %s914, 31
        %s917 = smul.addr %s916, 8
        %s918 = scalar_lea.vmem %s0, %s917
        %p919 = pneg %p65
        %p920 = pneg %p62
        %p921 = pneg %p86
        %p922 = pneg %p83
        %p923 = pneg %p107
        %p924 = pneg %p104
        %p925 = pneg %p128
        %p926 = pneg %p125
        %p927 = pneg %p149
        %p928 = pneg %p146
        %p929 = pneg %p170
        %p930 = pneg %p167
        %p931 = pneg %p191
        %p932 = pneg %p188
        %p933 = pneg %p212
        %p934 = pneg %p209
        %p935 = pneg %p233
        %p936 = pneg %p230
        %p937 = pneg %p254
        %p938 = pneg %p251
        %p939 = pneg %p275
        %p940 = pneg %p272
        %p941 = pneg %p296
        %p942 = pneg %p293
        %p943 = pneg %p317
        %p944 = pneg %p314
        %p945 = pneg %p338
        %p946 = pneg %p335
        %p947 = pneg %p359
        %p948 = pneg %p356
        %p949 = pneg %p380
        %p950 = pneg %p377
        %p951 = pneg %p401
        %p952 = pneg %p398
        %p953 = pneg %p422
        %p954 = pneg %p419
        %p955 = pneg %p443
        %p956 = pneg %p440
        %p957 = pneg %p464
        %p958 = pneg %p461
        %p959 = pneg %p485
        %p960 = pneg %p482
        %p961 = pneg %p506
        %p962 = pneg %p503
        %p963 = pneg %p527
        %p964 = pneg %p524
        %p965 = pneg %p548
        %p966 = pneg %p545
        %p967 = pneg %p569
        %p968 = pneg %p566
        %p969 = pneg %p595
        %p970 = pneg %p592
        %s971 = smul.u32 16, %s44
        %p972 = scmp.lt.s32.totalorder %s971, 31
        %s973 = scalar_select %p972, %s971, 31
        %s974 = smul.addr %s973, 8
        %s975 = scalar_lea.vmem %s25, %s974
        %s976 = smul.u32 16, %s44
        %p977 = scmp.lt.s32.totalorder %s976, 31
        %s978 = scalar_select %p977, %s976, 31
        %s979 = smul.addr %s978, 8
        %s980 = scalar_lea.vmem %s0, %s979
        %s981 = smul.u32 16, %s44
        %s982 = smul.u32 16, %s44
        %p983 = scmp.lt.s32.totalorder %s982, 31
        %s984 = scalar_select %p983, %s982, 31
        %s985 = smul.addr %s984, 8
        %s986 = scalar_lea.vmem %s25, %s985
        %s987 = smul.u32 16, %s44
        %v988 = vld [vmem:[%s980] sm:$0xff]
        %v989 = vld [vmem:[%s980 + $0x8] sm:$0xff]
        %v990 = vld [vmem:[%s980 + $0x10] sm:$0xff]
        %v991 = vld [vmem:[%s980 + $0x18] sm:$0xff]
        %v992 = vld [vmem:[%s980 + $0x20] sm:$0xff]
        %v993 = vld [vmem:[%s980 + $0x28] sm:$0xff]
        %v994 = vld [vmem:[%s980 + $0x30] sm:$0xff]
        %v995 = vld [vmem:[%s980 + $0x38] sm:$0xff]
        %v996 = vld [vmem:[%s980 + $0x40] sm:$0xff]
        %v997 = vld [vmem:[%s980 + $0x48] sm:$0xff]
        %v998 = vld [vmem:[%s980 + $0x50] sm:$0xff]
        %v999 = vld [vmem:[%s980 + $0x58] sm:$0xff]
        %v1000 = vld [vmem:[%s980 + $0x60] sm:$0xff]
        %v1001 = vld [vmem:[%s980 + $0x68] sm:$0xff]
        %v1002 = vld [vmem:[%s980 + $0x70] sm:$0xff]
        %v1003 = vld [vmem:[%s980 + $0x78] sm:$0xff]
        %v1004 = vld [vmem:[#allocation2] sm:$0x1]
        %1006 = vset.pattern.permute.xlu0 0
        %1007 = vperm.xlu0 %1006, %v988
        %v1008 = vpop.permute.xlu0 %1007
        %1011 = vset.pattern.permute.xlu0 0
        %1012 = vperm.xlu0 %1011, %v989
        %v1013 = vpop.permute.xlu0 %1012
        %1016 = vset.pattern.permute.xlu0 0
        %1017 = vperm.xlu0 %1016, %v990
        %v1018 = vpop.permute.xlu0 %1017
        %1021 = vset.pattern.permute.xlu0 0
        %1022 = vperm.xlu0 %1021, %v991
        %v1023 = vpop.permute.xlu0 %1022
        %1026 = vset.pattern.permute.xlu0 0
        %1027 = vperm.xlu0 %1026, %v992
        %v1028 = vpop.permute.xlu0 %1027
        %1031 = vset.pattern.permute.xlu0 0
        %1032 = vperm.xlu0 %1031, %v993
        %v1033 = vpop.permute.xlu0 %1032
        %1036 = vset.pattern.permute.xlu0 0
        %1037 = vperm.xlu0 %1036, %v994
        %v1038 = vpop.permute.xlu0 %1037
        %1041 = vset.pattern.permute.xlu0 0
        %1042 = vperm.xlu0 %1041, %v995
        %v1043 = vpop.permute.xlu0 %1042
        %1046 = vset.pattern.permute.xlu0 0
        %1047 = vperm.xlu0 %1046, %v996
        %v1048 = vpop.permute.xlu0 %1047
        %1051 = vset.pattern.permute.xlu0 0
        %1052 = vperm.xlu0 %1051, %v997
        %v1053 = vpop.permute.xlu0 %1052
        %1056 = vset.pattern.permute.xlu0 0
        %1057 = vperm.xlu0 %1056, %v998
        %v1058 = vpop.permute.xlu0 %1057
        %1061 = vset.pattern.permute.xlu0 0
        %1062 = vperm.xlu0 %1061, %v999
        %v1063 = vpop.permute.xlu0 %1062
        %1066 = vset.pattern.permute.xlu0 0
        %1067 = vperm.xlu0 %1066, %v1000
        %v1068 = vpop.permute.xlu0 %1067
        %1071 = vset.pattern.permute.xlu0 0
        %1072 = vperm.xlu0 %1071, %v1001
        %v1073 = vpop.permute.xlu0 %1072
        %1076 = vset.pattern.permute.xlu0 0
        %1077 = vperm.xlu0 %1076, %v1002
        %v1078 = vpop.permute.xlu0 %1077
        %1081 = vset.pattern.permute.xlu0 0
        %1082 = vperm.xlu0 %1081, %v1003
        %v1083 = vpop.permute.xlu0 %1082
        %v1086 = vperm.slane %v1004, 0
        %v1088 = vmul.f32 %v1008, %v1086
        %v1089 = vmul.f32 %v1013, %v1086
        %v1090 = vmul.f32 %v1018, %v1086
        %v1091 = vmul.f32 %v1023, %v1086
        %v1092 = vmul.f32 %v1028, %v1086
        %v1093 = vmul.f32 %v1033, %v1086
        %v1094 = vmul.f32 %v1038, %v1086
        %v1095 = vmul.f32 %v1043, %v1086
        %v1096 = vmul.f32 %v1048, %v1086
        %v1097 = vmul.f32 %v1053, %v1086
        %v1098 = vmul.f32 %v1058, %v1086
        %v1099 = vmul.f32 %v1063, %v1086
        %v1100 = vmul.f32 %v1068, %v1086
        %v1101 = vmul.f32 %v1073, %v1086
        %v1102 = vmul.f32 %v1078, %v1086
        %v1103 = vmul.f32 %v1083, %v1086
        %v1104 = vld [vmem:[#allocation4] sm:$0x1]
        %1105 = vset.pattern.permute.xlu0 1
        %1106 = vperm.xlu0 %1105, %v988
        %v1107 = vpop.permute.xlu0 %1106
        %1109 = vset.pattern.permute.xlu0 1
        %1110 = vperm.xlu0 %1109, %v989
        %v1111 = vpop.permute.xlu0 %1110
        %1113 = vset.pattern.permute.xlu0 1
        %1114 = vperm.xlu0 %1113, %v990
        %v1115 = vpop.permute.xlu0 %1114
        %1117 = vset.pattern.permute.xlu0 1
        %1118 = vperm.xlu0 %1117, %v991
        %v1119 = vpop.permute.xlu0 %1118
        %1121 = vset.pattern.permute.xlu0 1
        %1122 = vperm.xlu0 %1121, %v992
        %v1123 = vpop.permute.xlu0 %1122
        %1125 = vset.pattern.permute.xlu0 1
        %1126 = vperm.xlu0 %1125, %v993
        %v1127 = vpop.permute.xlu0 %1126
        %1129 = vset.pattern.permute.xlu0 1
        %1130 = vperm.xlu0 %1129, %v994
        %v1131 = vpop.permute.xlu0 %1130
        %1133 = vset.pattern.permute.xlu0 1
        %1134 = vperm.xlu0 %1133, %v995
        %v1135 = vpop.permute.xlu0 %1134
        %1137 = vset.pattern.permute.xlu0 1
        %1138 = vperm.xlu0 %1137, %v996
        %v1139 = vpop.permute.xlu0 %1138
        %1141 = vset.pattern.permute.xlu0 1
        %1142 = vperm.xlu0 %1141, %v997
        %v1143 = vpop.permute.xlu0 %1142
        %1145 = vset.pattern.permute.xlu0 1
        %1146 = vperm.xlu0 %1145, %v998
        %v1147 = vpop.permute.xlu0 %1146
        %1149 = vset.pattern.permute.xlu0 1
        %1150 = vperm.xlu0 %1149, %v999
        %v1151 = vpop.permute.xlu0 %1150
        %1153 = vset.pattern.permute.xlu0 1
        %1154 = vperm.xlu0 %1153, %v1000
        %v1155 = vpop.permute.xlu0 %1154
        %1157 = vset.pattern.permute.xlu0 1
        %1158 = vperm.xlu0 %1157, %v1001
        %v1159 = vpop.permute.xlu0 %1158
        %1161 = vset.pattern.permute.xlu0 1
        %1162 = vperm.xlu0 %1161, %v1002
        %v1163 = vpop.permute.xlu0 %1162
        %1165 = vset.pattern.permute.xlu0 1
        %1166 = vperm.xlu0 %1165, %v1003
        %v1167 = vpop.permute.xlu0 %1166
        %v1170 = vperm.slane %v1104, 0
        %v1172 = vmul.f32 %v1107, %v1170
        %v1173 = vmul.f32 %v1111, %v1170
        %v1174 = vmul.f32 %v1115, %v1170
        %v1175 = vmul.f32 %v1119, %v1170
        %v1176 = vmul.f32 %v1123, %v1170
        %v1177 = vmul.f32 %v1127, %v1170
        %v1178 = vmul.f32 %v1131, %v1170
        %v1179 = vmul.f32 %v1135, %v1170
        %v1180 = vmul.f32 %v1139, %v1170
        %v1181 = vmul.f32 %v1143, %v1170
        %v1182 = vmul.f32 %v1147, %v1170
        %v1183 = vmul.f32 %v1151, %v1170
        %v1184 = vmul.f32 %v1155, %v1170
        %v1185 = vmul.f32 %v1159, %v1170
        %v1186 = vmul.f32 %v1163, %v1170
        %v1187 = vmul.f32 %v1167, %v1170
        %v1188 = vadd.f32 %v1088, %v1172
        %v1189 = vadd.f32 %v1089, %v1173
        %v1190 = vadd.f32 %v1090, %v1174
        %v1191 = vadd.f32 %v1091, %v1175
        %v1192 = vadd.f32 %v1092, %v1176
        %v1193 = vadd.f32 %v1093, %v1177
        %v1194 = vadd.f32 %v1094, %v1178
        %v1195 = vadd.f32 %v1095, %v1179
        %v1196 = vadd.f32 %v1096, %v1180
        %v1197 = vadd.f32 %v1097, %v1181
        %v1198 = vadd.f32 %v1098, %v1182
        %v1199 = vadd.f32 %v1099, %v1183
        %v1200 = vadd.f32 %v1100, %v1184
        %v1201 = vadd.f32 %v1101, %v1185
        %v1202 = vadd.f32 %v1102, %v1186
        %v1203 = vadd.f32 %v1103, %v1187
        %v1204 = vld [vmem:[#allocation6] sm:$0x1]
        %1205 = vset.pattern.permute.xlu0 2
        %1206 = vperm.xlu0 %1205, %v988
        %v1207 = vpop.permute.xlu0 %1206
        %1209 = vset.pattern.permute.xlu0 2
        %1210 = vperm.xlu0 %1209, %v989
        %v1211 = vpop.permute.xlu0 %1210
        %1213 = vset.pattern.permute.xlu0 2
        %1214 = vperm.xlu0 %1213, %v990
        %v1215 = vpop.permute.xlu0 %1214
        %1217 = vset.pattern.permute.xlu0 2
        %1218 = vperm.xlu0 %1217, %v991
        %v1219 = vpop.permute.xlu0 %1218
        %1221 = vset.pattern.permute.xlu0 2
        %1222 = vperm.xlu0 %1221, %v992
        %v1223 = vpop.permute.xlu0 %1222
        %1225 = vset.pattern.permute.xlu0 2
        %1226 = vperm.xlu0 %1225, %v993
        %v1227 = vpop.permute.xlu0 %1226
        %1229 = vset.pattern.permute.xlu0 2
        %1230 = vperm.xlu0 %1229, %v994
        %v1231 = vpop.permute.xlu0 %1230
        %1233 = vset.pattern.permute.xlu0 2
        %1234 = vperm.xlu0 %1233, %v995
        %v1235 = vpop.permute.xlu0 %1234
        %1237 = vset.pattern.permute.xlu0 2
        %1238 = vperm.xlu0 %1237, %v996
        %v1239 = vpop.permute.xlu0 %1238
        %1241 = vset.pattern.permute.xlu0 2
        %1242 = vperm.xlu0 %1241, %v997
        %v1243 = vpop.permute.xlu0 %1242
        %1245 = vset.pattern.permute.xlu0 2
        %1246 = vperm.xlu0 %1245, %v998
        %v1247 = vpop.permute.xlu0 %1246
        %1249 = vset.pattern.permute.xlu0 2
        %1250 = vperm.xlu0 %1249, %v999
        %v1251 = vpop.permute.xlu0 %1250
        %1253 = vset.pattern.permute.xlu0 2
        %1254 = vperm.xlu0 %1253, %v1000
        %v1255 = vpop.permute.xlu0 %1254
        %1257 = vset.pattern.permute.xlu0 2
        %1258 = vperm.xlu0 %1257, %v1001
        %v1259 = vpop.permute.xlu0 %1258
        %1261 = vset.pattern.permute.xlu0 2
        %1262 = vperm.xlu0 %1261, %v1002
        %v1263 = vpop.permute.xlu0 %1262
        %1265 = vset.pattern.permute.xlu0 2
        %1266 = vperm.xlu0 %1265, %v1003
        %v1267 = vpop.permute.xlu0 %1266
        %v1270 = vperm.slane %v1204, 0
        %v1272 = vmul.f32 %v1207, %v1270
        %v1273 = vmul.f32 %v1211, %v1270
        %v1274 = vmul.f32 %v1215, %v1270
        %v1275 = vmul.f32 %v1219, %v1270
        %v1276 = vmul.f32 %v1223, %v1270
        %v1277 = vmul.f32 %v1227, %v1270
        %v1278 = vmul.f32 %v1231, %v1270
        %v1279 = vmul.f32 %v1235, %v1270
        %v1280 = vmul.f32 %v1239, %v1270
        %v1281 = vmul.f32 %v1243, %v1270
        %v1282 = vmul.f32 %v1247, %v1270
        %v1283 = vmul.f32 %v1251, %v1270
        %v1284 = vmul.f32 %v1255, %v1270
        %v1285 = vmul.f32 %v1259, %v1270
        %v1286 = vmul.f32 %v1263, %v1270
        %v1287 = vmul.f32 %v1267, %v1270
        %v1288 = vadd.f32 %v1188, %v1272
        %v1289 = vadd.f32 %v1189, %v1273
        %v1290 = vadd.f32 %v1190, %v1274
        %v1291 = vadd.f32 %v1191, %v1275
        %v1292 = vadd.f32 %v1192, %v1276
        %v1293 = vadd.f32 %v1193, %v1277
        %v1294 = vadd.f32 %v1194, %v1278
        %v1295 = vadd.f32 %v1195, %v1279
        %v1296 = vadd.f32 %v1196, %v1280
        %v1297 = vadd.f32 %v1197, %v1281
        %v1298 = vadd.f32 %v1198, %v1282
        %v1299 = vadd.f32 %v1199, %v1283
        %v1300 = vadd.f32 %v1200, %v1284
        %v1301 = vadd.f32 %v1201, %v1285
        %v1302 = vadd.f32 %v1202, %v1286
        %v1303 = vadd.f32 %v1203, %v1287
        %v1304 = vld [vmem:[#allocation7] sm:$0x1]
        %v1306 = vperm.slane %v1304, 0
        %v1308 = vmul.f32 %v1306, %v1288
        %v1309 = vmul.f32 %v1306, %v1289
        %v1310 = vmul.f32 %v1306, %v1290
        %v1311 = vmul.f32 %v1306, %v1291
        %v1312 = vmul.f32 %v1306, %v1292
        %v1313 = vmul.f32 %v1306, %v1293
        %v1314 = vmul.f32 %v1306, %v1294
        %v1315 = vmul.f32 %v1306, %v1295
        %v1316 = vmul.f32 %v1306, %v1296
        %v1317 = vmul.f32 %v1306, %v1297
        %v1318 = vmul.f32 %v1306, %v1298
        %v1319 = vmul.f32 %v1306, %v1299
        %v1320 = vmul.f32 %v1306, %v1300
        %v1321 = vmul.f32 %v1306, %v1301
        %v1322 = vmul.f32 %v1306, %v1302
        %v1323 = vmul.f32 %v1306, %v1303
        %v1324 = vld [vmem:[#allocation9] sm:$0x1]
        %v1325 = vld [vmem:[#allocation10] sm:$0x1]
        %v1327 = vperm.slane %v1325, 0
        %v1329 = vadd.f32 %v1288, %v1327
        %v1330 = vadd.f32 %v1289, %v1327
        %v1331 = vadd.f32 %v1290, %v1327
        %v1332 = vadd.f32 %v1291, %v1327
        %v1333 = vadd.f32 %v1292, %v1327
        %v1334 = vadd.f32 %v1293, %v1327
        %v1335 = vadd.f32 %v1294, %v1327
        %v1336 = vadd.f32 %v1295, %v1327
        %v1337 = vadd.f32 %v1296, %v1327
        %v1338 = vadd.f32 %v1297, %v1327
        %v1339 = vadd.f32 %v1298, %v1327
        %v1340 = vadd.f32 %v1299, %v1327
        %v1341 = vadd.f32 %v1300, %v1327
        %v1342 = vadd.f32 %v1301, %v1327
        %v1343 = vadd.f32 %v1302, %v1327
        %v1344 = vadd.f32 %v1303, %v1327
        %v1345 = vand.u32 2147483647, %v1329
        %vm1346 = vcmp.le.f32.partialorder %v1345, 0.7853982
        %vm1347 = vcmp.lt.s32.totalorder %v1329, 0
        %v1348 = vand.u32 %v1329, 2139095040
        %v1349 = vshrl.u32 %v1348, 23
        %v1350 = vsub.s32 %v1349, 127
        %v1351 = vand.u32 2147483647, %v1329
        %v1352 = vand.u32 %v1351, 8388607
        %v1353 = vor.u32 %v1352, 8388608
        %v1354 = vsub.s32 0, %v1353
        %v1355 = vadd.s32 %v1350, 1
        %vm1356 = vcmp.gt.s32.totalorder %v1355, 0
        %v1357 = vsel %vm1356, %v1355, 0
        %v1358 = vshrl.u32 %v1357, 5
        %v1359 = vand.u32 %v1357, 31
        %v1360 = vsub.s32 32, %v1359
        %v1361 = vshrl.u32 683565275, %v1360
        %v1362 = vshll.u32 683565275, %v1359
        %v1363 = vshrl.u32 2475754826, %v1360
        %v1364 = vor.u32 %v1362, %v1363
        %v1365 = vshll.u32 2475754826, %v1359
        %v1366 = vshrl.u32 2131351028, %v1360
        %v1367 = vor.u32 %v1365, %v1366
        %v1368 = vshll.u32 2131351028, %v1359
        %v1369 = vshrl.u32 2102212464, %v1360
        %v1370 = vor.u32 %v1368, %v1369
        %v1371 = vshll.u32 2102212464, %v1359
        %v1372 = vshrl.u32 920167782, %v1360
        %v1373 = vor.u32 %v1371, %v1372
        %v1374 = vshll.u32 920167782, %v1359
        %v1375 = vshrl.u32 1326507024, %v1360
        %v1376 = vor.u32 %v1374, %v1375
        %vm1377 = vcmp.lt.s32.totalorder %v1358, 1
        %vm1378 = vcmp.lt.s32.totalorder %v1358, 2
        %vm1379 = vcmp.lt.s32.totalorder %v1358, 3
        %vm1380 = vcmp.lt.s32.totalorder %v1358, 4
        %v1381 = vsel %vm1377, %v1361, %v1364
        %v1382 = vsel %vm1380, %v1370, 2102212464
        %v1383 = vsel %vm1379, %v1367, %v1382
        %v1384 = vsel %vm1378, %v1381, %v1383
        %v1385 = vsel %vm1377, %v1364, %v1367
        %v1386 = vsel %vm1380, %v1373, 920167782
        %v1387 = vsel %vm1379, %v1370, %v1386
        %v1388 = vsel %vm1378, %v1385, %v1387
        %v1389 = vsel %vm1377, %v1367, %v1370
        %v1390 = vsel %vm1380, %v1376, 1326507024
        %v1391 = vsel %vm1379, %v1373, %v1390
        %v1392 = vsel %vm1378, %v1389, %v1391
        %v1393 = vshll.u32 %v1353, 8
        %v1394 = vand.u32 %v1393, 65535
        %v1395 = vshrl.u32 %v1393, 16
        %v1396 = vand.u32 %v1392, 65535
        %v1397 = vshrl.u32 %v1392, 16
        %v1398 = vmul.u32 %v1394, %v1396
        %v1399 = vmul.u32 %v1394, %v1397
        %v1400 = vmul.u32 %v1395, %v1396
        %v1401 = vmul.u32 %v1395, %v1397
        %v1402 = vshll.u32 %v1399, 16
        %v1403 = vshrl.u32 %v1399, 16
        %v1404 = vshll.u32 %v1400, 16
        %v1405 = vshrl.u32 %v1400, 16
        %vm1406 = vc.u32 %v1398, %v1402
        %v1407 = vsel %vm1406, 1, 0
        %v1408 = vadd.s32 %v1398, %v1402
        %v1409 = vadd.s32 %v1401, %v1407
        %vm1410 = vc.u32 %v1408, %v1404
        %v1411 = vsel %vm1410, 1, 0
        %v1412 = vadd.s32 %v1408, %v1404
        %v1413 = vadd.s32 %v1409, %v1411
        %v1414 = vadd.s32 %v1413, %v1403
        %v1415 = vadd.s32 %v1414, %v1405
        %v1416 = vand.u32 %v1393, 65535
        %v1417 = vshrl.u32 %v1393, 16
        %v1418 = vand.u32 %v1388, 65535
        %v1419 = vshrl.u32 %v1388, 16
        %v1420 = vmul.u32 %v1416, %v1418
        %v1421 = vmul.u32 %v1416, %v1419
        %v1422 = vmul.u32 %v1417, %v1418
        %v1423 = vmul.u32 %v1417, %v1419
        %v1424 = vshll.u32 %v1421, 16
        %v1425 = vshrl.u32 %v1421, 16
        %v1426 = vshll.u32 %v1422, 16
        %v1427 = vshrl.u32 %v1422, 16
        %vm1428 = vc.u32 %v1420, %v1424
        %v1429 = vsel %vm1428, 1, 0
        %v1430 = vadd.s32 %v1420, %v1424
        %v1431 = vadd.s32 %v1423, %v1429
        %vm1432 = vc.u32 %v1430, %v1426
        %v1433 = vsel %vm1432, 1, 0
        %v1434 = vadd.s32 %v1430, %v1426
        %v1435 = vadd.s32 %v1431, %v1433
        %v1436 = vadd.s32 %v1435, %v1425
        %v1437 = vadd.s32 %v1436, %v1427
        %v1438 = vmul.u32 %v1393, %v1384
        %v1439 = vadd.s32 %v1415, %v1434
        %vm1440 = vc.u32 %v1415, %v1434
        %v1441 = vadd.s32 %v1437, 1
        %v1442 = vsel %vm1440, %v1441, %v1437
        %v1443 = vadd.s32 %v1438, %v1442
        %v1444 = vadd.s32 %v1443, 536870912
        %v1445 = vshrl.u32 %v1444, 30
        %v1446 = vshll.u32 %v1445, 30
        %v1447 = vsub.s32 %v1443, %v1446
        %vm1448 = vcmp.lt.s32.totalorder %v1447, 0
        %v1449 = vsub.s32 0, %v1447
        %v1450 = vsel %vm1448, %v1449, %v1447
        %v1451 = vclz %v1450
        %v1452 = vsub.s32 %v1451, 2
        %vm1453 = vcmp.gt.s32.totalorder 0, %v1452
        %v1454 = vsel %vm1453, 0, %v1452
        %v1455 = vsub.s32 32, %v1454
        %v1456 = vshll.u32 %v1447, %v1454
        %v1457 = vshrl.u32 %v1439, %v1455
        %v1458 = vor.u32 %v1456, %v1457
        %v1459 = vsub.s32 4294967266, %v1454
        %v1460 = vadd.s32 %v1459, 127
        %v1461 = vshll.u32 %v1460, 23
        %v1462 = vor.u32 4788187, %v1461
        %v1463 = vand.u32 2147483647, %v1462
        %v1465 = vcvt.s32.f32 %v1458
        %v1466 = vmul.f32 %v1465, %v1463
        %v1467 = vxor.u32 %v1466, 2147483648
        %v1468 = vsel %vm1347, %v1467, %v1466
        %v1469 = vsub.s32 4, %v1445
        %v1470 = vsel %vm1347, %v1469, %v1445
        %v1471 = vsel %vm1346, %v1329, %v1468
        %v1472 = vsel %vm1346, 0, %v1470
        %v1473 = vmul.f32 %v1471, %v1471
        %v1474 = vmul.f32 %v1473, -0.001358992
        %v1475 = vadd.f32 %v1474, 0.041655596
        %v1476 = vmul.f32 %v1473, %v1475
        %v1477 = vadd.f32 %v1476, -0.4999988
        %v1478 = vmul.f32 %v1473, %v1477
        %v1479 = vadd.f32 1.0, %v1478
        %v1480 = vmul.f32 %v1471, %v1471
        %v1481 = vmul.f32 %v1480, -0.00019511016
        %v1482 = vadd.f32 %v1481, 0.008332121
        %v1483 = vmul.f32 %v1480, %v1482
        %v1484 = vadd.f32 %v1483, -0.16666654
        %v1485 = vmul.f32 %v1480, %v1484
        %v1486 = vadd.f32 %v1485, 1.0
        %v1487 = vmul.f32 %v1486, %v1471
        %vm1488 = vweird.f32 %v1329
        %v1489 = vadd.s32 %v1472, 3
        %v1490 = vand.u32 %v1489, 3
        %vm1491 = vcmp.lt.s32.totalorder %v1490, 2
        %vm1492 = vcmp.eq.s32.totalorder %v1490, 0
        %v1493 = vxor.u32 %v1487, 2147483648
        %v1494 = vsel %vm1492, %v1479, %v1493
        %vm1495 = vcmp.eq.s32.totalorder %v1490, 2
        %v1496 = vxor.u32 %v1479, 2147483648
        %v1497 = vsel %vm1495, %v1496, %v1487
        %v1498 = vsel %vm1491, %v1494, %v1497
        %v1499 = vsel %vm1488, nan, %v1498
        %v1500 = vand.u32 2147483647, %v1330
        %vm1501 = vcmp.le.f32.partialorder %v1500, 0.7853982
        %vm1502 = vcmp.lt.s32.totalorder %v1330, 0
        %v1503 = vand.u32 %v1330, 2139095040
        %v1504 = vshrl.u32 %v1503, 23
        %v1505 = vsub.s32 %v1504, 127
        %v1506 = vand.u32 2147483647, %v1330
        %v1507 = vand.u32 %v1506, 8388607
        %v1508 = vor.u32 %v1507, 8388608
        %v1509 = vsub.s32 0, %v1508
        %v1510 = vadd.s32 %v1505, 1
        %vm1511 = vcmp.gt.s32.totalorder %v1510, 0
        %v1512 = vsel %vm1511, %v1510, 0
        %v1513 = vshrl.u32 %v1512, 5
        %v1514 = vand.u32 %v1512, 31
        %v1515 = vsub.s32 32, %v1514
        %v1516 = vshrl.u32 683565275, %v1515
        %v1517 = vshll.u32 683565275, %v1514
        %v1518 = vshrl.u32 2475754826, %v1515
        %v1519 = vor.u32 %v1517, %v1518
        %v1520 = vshll.u32 2475754826, %v1514
        %v1521 = vshrl.u32 2131351028, %v1515
        %v1522 = vor.u32 %v1520, %v1521
        %v1523 = vshll.u32 2131351028, %v1514
        %v1524 = vshrl.u32 2102212464, %v1515
        %v1525 = vor.u32 %v1523, %v1524
        %v1526 = vshll.u32 2102212464, %v1514
        %v1527 = vshrl.u32 920167782, %v1515
        %v1528 = vor.u32 %v1526, %v1527
        %v1529 = vshll.u32 920167782, %v1514
        %v1530 = vshrl.u32 1326507024, %v1515
        %v1531 = vor.u32 %v1529, %v1530
        %vm1532 = vcmp.lt.s32.totalorder %v1513, 1
        %vm1533 = vcmp.lt.s32.totalorder %v1513, 2
        %vm1534 = vcmp.lt.s32.totalorder %v1513, 3
        %vm1535 = vcmp.lt.s32.totalorder %v1513, 4
        %v1536 = vsel %vm1532, %v1516, %v1519
        %v1537 = vsel %vm1535, %v1525, 2102212464
        %v1538 = vsel %vm1534, %v1522, %v1537
        %v1539 = vsel %vm1533, %v1536, %v1538
        %v1540 = vsel %vm1532, %v1519, %v1522
        %v1541 = vsel %vm1535, %v1528, 920167782
        %v1542 = vsel %vm1534, %v1525, %v1541
        %v1543 = vsel %vm1533, %v1540, %v1542
        %v1544 = vsel %vm1532, %v1522, %v1525
        %v1545 = vsel %vm1535, %v1531, 1326507024
        %v1546 = vsel %vm1534, %v1528, %v1545
        %v1547 = vsel %vm1533, %v1544, %v1546
        %v1548 = vshll.u32 %v1508, 8
        %v1549 = vand.u32 %v1548, 65535
        %v1550 = vshrl.u32 %v1548, 16
        %v1551 = vand.u32 %v1547, 65535
        %v1552 = vshrl.u32 %v1547, 16
        %v1553 = vmul.u32 %v1549, %v1551
        %v1554 = vmul.u32 %v1549, %v1552
        %v1555 = vmul.u32 %v1550, %v1551
        %v1556 = vmul.u32 %v1550, %v1552
        %v1557 = vshll.u32 %v1554, 16
        %v1558 = vshrl.u32 %v1554, 16
        %v1559 = vshll.u32 %v1555, 16
        %v1560 = vshrl.u32 %v1555, 16
        %vm1561 = vc.u32 %v1553, %v1557
        %v1562 = vsel %vm1561, 1, 0
        %v1563 = vadd.s32 %v1553, %v1557
        %v1564 = vadd.s32 %v1556, %v1562
        %vm1565 = vc.u32 %v1563, %v1559
        %v1566 = vsel %vm1565, 1, 0
        %v1567 = vadd.s32 %v1563, %v1559
        %v1568 = vadd.s32 %v1564, %v1566
        %v1569 = vadd.s32 %v1568, %v1558
        %v1570 = vadd.s32 %v1569, %v1560
        %v1571 = vand.u32 %v1548, 65535
        %v1572 = vshrl.u32 %v1548, 16
        %v1573 = vand.u32 %v1543, 65535
        %v1574 = vshrl.u32 %v1543, 16
        %v1575 = vmul.u32 %v1571, %v1573
        %v1576 = vmul.u32 %v1571, %v1574
        %v1577 = vmul.u32 %v1572, %v1573
        %v1578 = vmul.u32 %v1572, %v1574
        %v1579 = vshll.u32 %v1576, 16
        %v1580 = vshrl.u32 %v1576, 16
        %v1581 = vshll.u32 %v1577, 16
        %v1582 = vshrl.u32 %v1577, 16
        %vm1583 = vc.u32 %v1575, %v1579
        %v1584 = vsel %vm1583, 1, 0
        %v1585 = vadd.s32 %v1575, %v1579
        %v1586 = vadd.s32 %v1578, %v1584
        %vm1587 = vc.u32 %v1585, %v1581
        %v1588 = vsel %vm1587, 1, 0
        %v1589 = vadd.s32 %v1585, %v1581
        %v1590 = vadd.s32 %v1586, %v1588
        %v1591 = vadd.s32 %v1590, %v1580
        %v1592 = vadd.s32 %v1591, %v1582
        %v1593 = vmul.u32 %v1548, %v1539
        %v1594 = vadd.s32 %v1570, %v1589
        %vm1595 = vc.u32 %v1570, %v1589
        %v1596 = vadd.s32 %v1592, 1
        %v1597 = vsel %vm1595, %v1596, %v1592
        %v1598 = vadd.s32 %v1593, %v1597
        %v1599 = vadd.s32 %v1598, 536870912
        %v1600 = vshrl.u32 %v1599, 30
        %v1601 = vshll.u32 %v1600, 30
        %v1602 = vsub.s32 %v1598, %v1601
        %vm1603 = vcmp.lt.s32.totalorder %v1602, 0
        %v1604 = vsub.s32 0, %v1602
        %v1605 = vsel %vm1603, %v1604, %v1602
        %v1606 = vclz %v1605
        %v1607 = vsub.s32 %v1606, 2
        %vm1608 = vcmp.gt.s32.totalorder 0, %v1607
        %v1609 = vsel %vm1608, 0, %v1607
        %v1610 = vsub.s32 32, %v1609
        %v1611 = vshll.u32 %v1602, %v1609
        %v1612 = vshrl.u32 %v1594, %v1610
        %v1613 = vor.u32 %v1611, %v1612
        %v1614 = vsub.s32 4294967266, %v1609
        %v1615 = vadd.s32 %v1614, 127
        %v1616 = vshll.u32 %v1615, 23
        %v1617 = vor.u32 4788187, %v1616
        %v1618 = vand.u32 2147483647, %v1617
        %v1620 = vcvt.s32.f32 %v1613
        %v1621 = vmul.f32 %v1620, %v1618
        %v1622 = vxor.u32 %v1621, 2147483648
        %v1623 = vsel %vm1502, %v1622, %v1621
        %v1624 = vsub.s32 4, %v1600
        %v1625 = vsel %vm1502, %v1624, %v1600
        %v1626 = vsel %vm1501, %v1330, %v1623
        %v1627 = vsel %vm1501, 0, %v1625
        %v1628 = vmul.f32 %v1626, %v1626
        %v1629 = vmul.f32 %v1628, -0.001358992
        %v1630 = vadd.f32 %v1629, 0.041655596
        %v1631 = vmul.f32 %v1628, %v1630
        %v1632 = vadd.f32 %v1631, -0.4999988
        %v1633 = vmul.f32 %v1628, %v1632
        %v1634 = vadd.f32 1.0, %v1633
        %v1635 = vmul.f32 %v1626, %v1626
        %v1636 = vmul.f32 %v1635, -0.00019511016
        %v1637 = vadd.f32 %v1636, 0.008332121
        %v1638 = vmul.f32 %v1635, %v1637
        %v1639 = vadd.f32 %v1638, -0.16666654
        %v1640 = vmul.f32 %v1635, %v1639
        %v1641 = vadd.f32 %v1640, 1.0
        %v1642 = vmul.f32 %v1641, %v1626
        %vm1643 = vweird.f32 %v1330
        %v1644 = vadd.s32 %v1627, 3
        %v1645 = vand.u32 %v1644, 3
        %vm1646 = vcmp.lt.s32.totalorder %v1645, 2
        %vm1647 = vcmp.eq.s32.totalorder %v1645, 0
        %v1648 = vxor.u32 %v1642, 2147483648
        %v1649 = vsel %vm1647, %v1634, %v1648
        %vm1650 = vcmp.eq.s32.totalorder %v1645, 2
        %v1651 = vxor.u32 %v1634, 2147483648
        %v1652 = vsel %vm1650, %v1651, %v1642
        %v1653 = vsel %vm1646, %v1649, %v1652
        %v1654 = vsel %vm1643, nan, %v1653
        %v1655 = vand.u32 2147483647, %v1331
        %vm1656 = vcmp.le.f32.partialorder %v1655, 0.7853982
        %vm1657 = vcmp.lt.s32.totalorder %v1331, 0
        %v1658 = vand.u32 %v1331, 2139095040
        %v1659 = vshrl.u32 %v1658, 23
        %v1660 = vsub.s32 %v1659, 127
        %v1661 = vand.u32 2147483647, %v1331
        %v1662 = vand.u32 %v1661, 8388607
        %v1663 = vor.u32 %v1662, 8388608
        %v1664 = vsub.s32 0, %v1663
        %v1665 = vadd.s32 %v1660, 1
        %vm1666 = vcmp.gt.s32.totalorder %v1665, 0
        %v1667 = vsel %vm1666, %v1665, 0
        %v1668 = vshrl.u32 %v1667, 5
        %v1669 = vand.u32 %v1667, 31
        %v1670 = vsub.s32 32, %v1669
        %v1671 = vshrl.u32 683565275, %v1670
        %v1672 = vshll.u32 683565275, %v1669
        %v1673 = vshrl.u32 2475754826, %v1670
        %v1674 = vor.u32 %v1672, %v1673
        %v1675 = vshll.u32 2475754826, %v1669
        %v1676 = vshrl.u32 2131351028, %v1670
        %v1677 = vor.u32 %v1675, %v1676
        %v1678 = vshll.u32 2131351028, %v1669
        %v1679 = vshrl.u32 2102212464, %v1670
        %v1680 = vor.u32 %v1678, %v1679
        %v1681 = vshll.u32 2102212464, %v1669
        %v1682 = vshrl.u32 920167782, %v1670
        %v1683 = vor.u32 %v1681, %v1682
        %v1684 = vshll.u32 920167782, %v1669
        %v1685 = vshrl.u32 1326507024, %v1670
        %v1686 = vor.u32 %v1684, %v1685
        %vm1687 = vcmp.lt.s32.totalorder %v1668, 1
        %vm1688 = vcmp.lt.s32.totalorder %v1668, 2
        %vm1689 = vcmp.lt.s32.totalorder %v1668, 3
        %vm1690 = vcmp.lt.s32.totalorder %v1668, 4
        %v1691 = vsel %vm1687, %v1671, %v1674
        %v1692 = vsel %vm1690, %v1680, 2102212464
        %v1693 = vsel %vm1689, %v1677, %v1692
        %v1694 = vsel %vm1688, %v1691, %v1693
        %v1695 = vsel %vm1687, %v1674, %v1677
        %v1696 = vsel %vm1690, %v1683, 920167782
        %v1697 = vsel %vm1689, %v1680, %v1696
        %v1698 = vsel %vm1688, %v1695, %v1697
        %v1699 = vsel %vm1687, %v1677, %v1680
        %v1700 = vsel %vm1690, %v1686, 1326507024
        %v1701 = vsel %vm1689, %v1683, %v1700
        %v1702 = vsel %vm1688, %v1699, %v1701
        %v1703 = vshll.u32 %v1663, 8
        %v1704 = vand.u32 %v1703, 65535
        %v1705 = vshrl.u32 %v1703, 16
        %v1706 = vand.u32 %v1702, 65535
        %v1707 = vshrl.u32 %v1702, 16
        %v1708 = vmul.u32 %v1704, %v1706
        %v1709 = vmul.u32 %v1704, %v1707
        %v1710 = vmul.u32 %v1705, %v1706
        %v1711 = vmul.u32 %v1705, %v1707
        %v1712 = vshll.u32 %v1709, 16
        %v1713 = vshrl.u32 %v1709, 16
        %v1714 = vshll.u32 %v1710, 16
        %v1715 = vshrl.u32 %v1710, 16
        %vm1716 = vc.u32 %v1708, %v1712
        %v1717 = vsel %vm1716, 1, 0
        %v1718 = vadd.s32 %v1708, %v1712
        %v1719 = vadd.s32 %v1711, %v1717
        %vm1720 = vc.u32 %v1718, %v1714
        %v1721 = vsel %vm1720, 1, 0
        %v1722 = vadd.s32 %v1718, %v1714
        %v1723 = vadd.s32 %v1719, %v1721
        %v1724 = vadd.s32 %v1723, %v1713
        %v1725 = vadd.s32 %v1724, %v1715
        %v1726 = vand.u32 %v1703, 65535
        %v1727 = vshrl.u32 %v1703, 16
        %v1728 = vand.u32 %v1698, 65535
        %v1729 = vshrl.u32 %v1698, 16
        %v1730 = vmul.u32 %v1726, %v1728
        %v1731 = vmul.u32 %v1726, %v1729
        %v1732 = vmul.u32 %v1727, %v1728
        %v1733 = vmul.u32 %v1727, %v1729
        %v1734 = vshll.u32 %v1731, 16
        %v1735 = vshrl.u32 %v1731, 16
        %v1736 = vshll.u32 %v1732, 16
        %v1737 = vshrl.u32 %v1732, 16
        %vm1738 = vc.u32 %v1730, %v1734
        %v1739 = vsel %vm1738, 1, 0
        %v1740 = vadd.s32 %v1730, %v1734
        %v1741 = vadd.s32 %v1733, %v1739
        %vm1742 = vc.u32 %v1740, %v1736
        %v1743 = vsel %vm1742, 1, 0
        %v1744 = vadd.s32 %v1740, %v1736
        %v1745 = vadd.s32 %v1741, %v1743
        %v1746 = vadd.s32 %v1745, %v1735
        %v1747 = vadd.s32 %v1746, %v1737
        %v1748 = vmul.u32 %v1703, %v1694
        %v1749 = vadd.s32 %v1725, %v1744
        %vm1750 = vc.u32 %v1725, %v1744
        %v1751 = vadd.s32 %v1747, 1
        %v1752 = vsel %vm1750, %v1751, %v1747
        %v1753 = vadd.s32 %v1748, %v1752
        %v1754 = vadd.s32 %v1753, 536870912
        %v1755 = vshrl.u32 %v1754, 30
        %v1756 = vshll.u32 %v1755, 30
        %v1757 = vsub.s32 %v1753, %v1756
        %vm1758 = vcmp.lt.s32.totalorder %v1757, 0
        %v1759 = vsub.s32 0, %v1757
        %v1760 = vsel %vm1758, %v1759, %v1757
        %v1761 = vclz %v1760
        %v1762 = vsub.s32 %v1761, 2
        %vm1763 = vcmp.gt.s32.totalorder 0, %v1762
        %v1764 = vsel %vm1763, 0, %v1762
        %v1765 = vsub.s32 32, %v1764
        %v1766 = vshll.u32 %v1757, %v1764
        %v1767 = vshrl.u32 %v1749, %v1765
        %v1768 = vor.u32 %v1766, %v1767
        %v1769 = vsub.s32 4294967266, %v1764
        %v1770 = vadd.s32 %v1769, 127
        %v1771 = vshll.u32 %v1770, 23
        %v1772 = vor.u32 4788187, %v1771
        %v1773 = vand.u32 2147483647, %v1772
        %v1775 = vcvt.s32.f32 %v1768
        %v1776 = vmul.f32 %v1775, %v1773
        %v1777 = vxor.u32 %v1776, 2147483648
        %v1778 = vsel %vm1657, %v1777, %v1776
        %v1779 = vsub.s32 4, %v1755
        %v1780 = vsel %vm1657, %v1779, %v1755
        %v1781 = vsel %vm1656, %v1331, %v1778
        %v1782 = vsel %vm1656, 0, %v1780
        %v1783 = vmul.f32 %v1781, %v1781
        %v1784 = vmul.f32 %v1783, -0.001358992
        %v1785 = vadd.f32 %v1784, 0.041655596
        %v1786 = vmul.f32 %v1783, %v1785
        %v1787 = vadd.f32 %v1786, -0.4999988
        %v1788 = vmul.f32 %v1783, %v1787
        %v1789 = vadd.f32 1.0, %v1788
        %v1790 = vmul.f32 %v1781, %v1781
        %v1791 = vmul.f32 %v1790, -0.00019511016
        %v1792 = vadd.f32 %v1791, 0.008332121
        %v1793 = vmul.f32 %v1790, %v1792
        %v1794 = vadd.f32 %v1793, -0.16666654
        %v1795 = vmul.f32 %v1790, %v1794
        %v1796 = vadd.f32 %v1795, 1.0
        %v1797 = vmul.f32 %v1796, %v1781
        %vm1798 = vweird.f32 %v1331
        %v1799 = vadd.s32 %v1782, 3
        %v1800 = vand.u32 %v1799, 3
        %vm1801 = vcmp.lt.s32.totalorder %v1800, 2
        %vm1802 = vcmp.eq.s32.totalorder %v1800, 0
        %v1803 = vxor.u32 %v1797, 2147483648
        %v1804 = vsel %vm1802, %v1789, %v1803
        %vm1805 = vcmp.eq.s32.totalorder %v1800, 2
        %v1806 = vxor.u32 %v1789, 2147483648
        %v1807 = vsel %vm1805, %v1806, %v1797
        %v1808 = vsel %vm1801, %v1804, %v1807
        %v1809 = vsel %vm1798, nan, %v1808
        %v1810 = vand.u32 2147483647, %v1332
        %vm1811 = vcmp.le.f32.partialorder %v1810, 0.7853982
        %vm1812 = vcmp.lt.s32.totalorder %v1332, 0
        %v1813 = vand.u32 %v1332, 2139095040
        %v1814 = vshrl.u32 %v1813, 23
        %v1815 = vsub.s32 %v1814, 127
        %v1816 = vand.u32 2147483647, %v1332
        %v1817 = vand.u32 %v1816, 8388607
        %v1818 = vor.u32 %v1817, 8388608
        %v1819 = vsub.s32 0, %v1818
        %v1820 = vadd.s32 %v1815, 1
        %vm1821 = vcmp.gt.s32.totalorder %v1820, 0
        %v1822 = vsel %vm1821, %v1820, 0
        %v1823 = vshrl.u32 %v1822, 5
        %v1824 = vand.u32 %v1822, 31
        %v1825 = vsub.s32 32, %v1824
        %v1826 = vshrl.u32 683565275, %v1825
        %v1827 = vshll.u32 683565275, %v1824
        %v1828 = vshrl.u32 2475754826, %v1825
        %v1829 = vor.u32 %v1827, %v1828
        %v1830 = vshll.u32 2475754826, %v1824
        %v1831 = vshrl.u32 2131351028, %v1825
        %v1832 = vor.u32 %v1830, %v1831
        %v1833 = vshll.u32 2131351028, %v1824
        %v1834 = vshrl.u32 2102212464, %v1825
        %v1835 = vor.u32 %v1833, %v1834
        %v1836 = vshll.u32 2102212464, %v1824
        %v1837 = vshrl.u32 920167782, %v1825
        %v1838 = vor.u32 %v1836, %v1837
        %v1839 = vshll.u32 920167782, %v1824
        %v1840 = vshrl.u32 1326507024, %v1825
        %v1841 = vor.u32 %v1839, %v1840
        %vm1842 = vcmp.lt.s32.totalorder %v1823, 1
        %vm1843 = vcmp.lt.s32.totalorder %v1823, 2
        %vm1844 = vcmp.lt.s32.totalorder %v1823, 3
        %vm1845 = vcmp.lt.s32.totalorder %v1823, 4
        %v1846 = vsel %vm1842, %v1826, %v1829
        %v1847 = vsel %vm1845, %v1835, 2102212464
        %v1848 = vsel %vm1844, %v1832, %v1847
        %v1849 = vsel %vm1843, %v1846, %v1848
        %v1850 = vsel %vm1842, %v1829, %v1832
        %v1851 = vsel %vm1845, %v1838, 920167782
        %v1852 = vsel %vm1844, %v1835, %v1851
        %v1853 = vsel %vm1843, %v1850, %v1852
        %v1854 = vsel %vm1842, %v1832, %v1835
        %v1855 = vsel %vm1845, %v1841, 1326507024
        %v1856 = vsel %vm1844, %v1838, %v1855
        %v1857 = vsel %vm1843, %v1854, %v1856
        %v1858 = vshll.u32 %v1818, 8
        %v1859 = vand.u32 %v1858, 65535
        %v1860 = vshrl.u32 %v1858, 16
        %v1861 = vand.u32 %v1857, 65535
        %v1862 = vshrl.u32 %v1857, 16
        %v1863 = vmul.u32 %v1859, %v1861
        %v1864 = vmul.u32 %v1859, %v1862
        %v1865 = vmul.u32 %v1860, %v1861
        %v1866 = vmul.u32 %v1860, %v1862
        %v1867 = vshll.u32 %v1864, 16
        %v1868 = vshrl.u32 %v1864, 16
        %v1869 = vshll.u32 %v1865, 16
        %v1870 = vshrl.u32 %v1865, 16
        %vm1871 = vc.u32 %v1863, %v1867
        %v1872 = vsel %vm1871, 1, 0
        %v1873 = vadd.s32 %v1863, %v1867
        %v1874 = vadd.s32 %v1866, %v1872
        %vm1875 = vc.u32 %v1873, %v1869
        %v1876 = vsel %vm1875, 1, 0
        %v1877 = vadd.s32 %v1873, %v1869
        %v1878 = vadd.s32 %v1874, %v1876
        %v1879 = vadd.s32 %v1878, %v1868
        %v1880 = vadd.s32 %v1879, %v1870
        %v1881 = vand.u32 %v1858, 65535
        %v1882 = vshrl.u32 %v1858, 16
        %v1883 = vand.u32 %v1853, 65535
        %v1884 = vshrl.u32 %v1853, 16
        %v1885 = vmul.u32 %v1881, %v1883
        %v1886 = vmul.u32 %v1881, %v1884
        %v1887 = vmul.u32 %v1882, %v1883
        %v1888 = vmul.u32 %v1882, %v1884
        %v1889 = vshll.u32 %v1886, 16
        %v1890 = vshrl.u32 %v1886, 16
        %v1891 = vshll.u32 %v1887, 16
        %v1892 = vshrl.u32 %v1887, 16
        %vm1893 = vc.u32 %v1885, %v1889
        %v1894 = vsel %vm1893, 1, 0
        %v1895 = vadd.s32 %v1885, %v1889
        %v1896 = vadd.s32 %v1888, %v1894
        %vm1897 = vc.u32 %v1895, %v1891
        %v1898 = vsel %vm1897, 1, 0
        %v1899 = vadd.s32 %v1895, %v1891
        %v1900 = vadd.s32 %v1896, %v1898
        %v1901 = vadd.s32 %v1900, %v1890
        %v1902 = vadd.s32 %v1901, %v1892
        %v1903 = vmul.u32 %v1858, %v1849
        %v1904 = vadd.s32 %v1880, %v1899
        %vm1905 = vc.u32 %v1880, %v1899
        %v1906 = vadd.s32 %v1902, 1
        %v1907 = vsel %vm1905, %v1906, %v1902
        %v1908 = vadd.s32 %v1903, %v1907
        %v1909 = vadd.s32 %v1908, 536870912
        %v1910 = vshrl.u32 %v1909, 30
        %v1911 = vshll.u32 %v1910, 30
        %v1912 = vsub.s32 %v1908, %v1911
        %vm1913 = vcmp.lt.s32.totalorder %v1912, 0
        %v1914 = vsub.s32 0, %v1912
        %v1915 = vsel %vm1913, %v1914, %v1912
        %v1916 = vclz %v1915
        %v1917 = vsub.s32 %v1916, 2
        %vm1918 = vcmp.gt.s32.totalorder 0, %v1917
        %v1919 = vsel %vm1918, 0, %v1917
        %v1920 = vsub.s32 32, %v1919
        %v1921 = vshll.u32 %v1912, %v1919
        %v1922 = vshrl.u32 %v1904, %v1920
        %v1923 = vor.u32 %v1921, %v1922
        %v1924 = vsub.s32 4294967266, %v1919
        %v1925 = vadd.s32 %v1924, 127
        %v1926 = vshll.u32 %v1925, 23
        %v1927 = vor.u32 4788187, %v1926
        %v1928 = vand.u32 2147483647, %v1927
        %v1930 = vcvt.s32.f32 %v1923
        %v1931 = vmul.f32 %v1930, %v1928
        %v1932 = vxor.u32 %v1931, 2147483648
        %v1933 = vsel %vm1812, %v1932, %v1931
        %v1934 = vsub.s32 4, %v1910
        %v1935 = vsel %vm1812, %v1934, %v1910
        %v1936 = vsel %vm1811, %v1332, %v1933
        %v1937 = vsel %vm1811, 0, %v1935
        %v1938 = vmul.f32 %v1936, %v1936
        %v1939 = vmul.f32 %v1938, -0.001358992
        %v1940 = vadd.f32 %v1939, 0.041655596
        %v1941 = vmul.f32 %v1938, %v1940
        %v1942 = vadd.f32 %v1941, -0.4999988
        %v1943 = vmul.f32 %v1938, %v1942
        %v1944 = vadd.f32 1.0, %v1943
        %v1945 = vmul.f32 %v1936, %v1936
        %v1946 = vmul.f32 %v1945, -0.00019511016
        %v1947 = vadd.f32 %v1946, 0.008332121
        %v1948 = vmul.f32 %v1945, %v1947
        %v1949 = vadd.f32 %v1948, -0.16666654
        %v1950 = vmul.f32 %v1945, %v1949
        %v1951 = vadd.f32 %v1950, 1.0
        %v1952 = vmul.f32 %v1951, %v1936
        %vm1953 = vweird.f32 %v1332
        %v1954 = vadd.s32 %v1937, 3
        %v1955 = vand.u32 %v1954, 3
        %vm1956 = vcmp.lt.s32.totalorder %v1955, 2
        %vm1957 = vcmp.eq.s32.totalorder %v1955, 0
        %v1958 = vxor.u32 %v1952, 2147483648
        %v1959 = vsel %vm1957, %v1944, %v1958
        %vm1960 = vcmp.eq.s32.totalorder %v1955, 2
        %v1961 = vxor.u32 %v1944, 2147483648
        %v1962 = vsel %vm1960, %v1961, %v1952
        %v1963 = vsel %vm1956, %v1959, %v1962
        %v1964 = vsel %vm1953, nan, %v1963
        %v1965 = vand.u32 2147483647, %v1333
        %vm1966 = vcmp.le.f32.partialorder %v1965, 0.7853982
        %vm1967 = vcmp.lt.s32.totalorder %v1333, 0
        %v1968 = vand.u32 %v1333, 2139095040
        %v1969 = vshrl.u32 %v1968, 23
        %v1970 = vsub.s32 %v1969, 127
        %v1971 = vand.u32 2147483647, %v1333
        %v1972 = vand.u32 %v1971, 8388607
        %v1973 = vor.u32 %v1972, 8388608
        %v1974 = vsub.s32 0, %v1973
        %v1975 = vadd.s32 %v1970, 1
        %vm1976 = vcmp.gt.s32.totalorder %v1975, 0
        %v1977 = vsel %vm1976, %v1975, 0
        %v1978 = vshrl.u32 %v1977, 5
        %v1979 = vand.u32 %v1977, 31
        %v1980 = vsub.s32 32, %v1979
        %v1981 = vshrl.u32 683565275, %v1980
        %v1982 = vshll.u32 683565275, %v1979
        %v1983 = vshrl.u32 2475754826, %v1980
        %v1984 = vor.u32 %v1982, %v1983
        %v1985 = vshll.u32 2475754826, %v1979
        %v1986 = vshrl.u32 2131351028, %v1980
        %v1987 = vor.u32 %v1985, %v1986
        %v1988 = vshll.u32 2131351028, %v1979
        %v1989 = vshrl.u32 2102212464, %v1980
        %v1990 = vor.u32 %v1988, %v1989
        %v1991 = vshll.u32 2102212464, %v1979
        %v1992 = vshrl.u32 920167782, %v1980
        %v1993 = vor.u32 %v1991, %v1992
        %v1994 = vshll.u32 920167782, %v1979
        %v1995 = vshrl.u32 1326507024, %v1980
        %v1996 = vor.u32 %v1994, %v1995
        %vm1997 = vcmp.lt.s32.totalorder %v1978, 1
        %vm1998 = vcmp.lt.s32.totalorder %v1978, 2
        %vm1999 = vcmp.lt.s32.totalorder %v1978, 3
        %vm2000 = vcmp.lt.s32.totalorder %v1978, 4
        %v2001 = vsel %vm1997, %v1981, %v1984
        %v2002 = vsel %vm2000, %v1990, 2102212464
        %v2003 = vsel %vm1999, %v1987, %v2002
        %v2004 = vsel %vm1998, %v2001, %v2003
        %v2005 = vsel %vm1997, %v1984, %v1987
        %v2006 = vsel %vm2000, %v1993, 920167782
        %v2007 = vsel %vm1999, %v1990, %v2006
        %v2008 = vsel %vm1998, %v2005, %v2007
        %v2009 = vsel %vm1997, %v1987, %v1990
        %v2010 = vsel %vm2000, %v1996, 1326507024
        %v2011 = vsel %vm1999, %v1993, %v2010
        %v2012 = vsel %vm1998, %v2009, %v2011
        %v2013 = vshll.u32 %v1973, 8
        %v2014 = vand.u32 %v2013, 65535
        %v2015 = vshrl.u32 %v2013, 16
        %v2016 = vand.u32 %v2012, 65535
        %v2017 = vshrl.u32 %v2012, 16
        %v2018 = vmul.u32 %v2014, %v2016
        %v2019 = vmul.u32 %v2014, %v2017
        %v2020 = vmul.u32 %v2015, %v2016
        %v2021 = vmul.u32 %v2015, %v2017
        %v2022 = vshll.u32 %v2019, 16
        %v2023 = vshrl.u32 %v2019, 16
        %v2024 = vshll.u32 %v2020, 16
        %v2025 = vshrl.u32 %v2020, 16
        %vm2026 = vc.u32 %v2018, %v2022
        %v2027 = vsel %vm2026, 1, 0
        %v2028 = vadd.s32 %v2018, %v2022
        %v2029 = vadd.s32 %v2021, %v2027
        %vm2030 = vc.u32 %v2028, %v2024
        %v2031 = vsel %vm2030, 1, 0
        %v2032 = vadd.s32 %v2028, %v2024
        %v2033 = vadd.s32 %v2029, %v2031
        %v2034 = vadd.s32 %v2033, %v2023
        %v2035 = vadd.s32 %v2034, %v2025
        %v2036 = vand.u32 %v2013, 65535
        %v2037 = vshrl.u32 %v2013, 16
        %v2038 = vand.u32 %v2008, 65535
        %v2039 = vshrl.u32 %v2008, 16
        %v2040 = vmul.u32 %v2036, %v2038
        %v2041 = vmul.u32 %v2036, %v2039
        %v2042 = vmul.u32 %v2037, %v2038
        %v2043 = vmul.u32 %v2037, %v2039
        %v2044 = vshll.u32 %v2041, 16
        %v2045 = vshrl.u32 %v2041, 16
        %v2046 = vshll.u32 %v2042, 16
        %v2047 = vshrl.u32 %v2042, 16
        %vm2048 = vc.u32 %v2040, %v2044
        %v2049 = vsel %vm2048, 1, 0
        %v2050 = vadd.s32 %v2040, %v2044
        %v2051 = vadd.s32 %v2043, %v2049
        %vm2052 = vc.u32 %v2050, %v2046
        %v2053 = vsel %vm2052, 1, 0
        %v2054 = vadd.s32 %v2050, %v2046
        %v2055 = vadd.s32 %v2051, %v2053
        %v2056 = vadd.s32 %v2055, %v2045
        %v2057 = vadd.s32 %v2056, %v2047
        %v2058 = vmul.u32 %v2013, %v2004
        %v2059 = vadd.s32 %v2035, %v2054
        %vm2060 = vc.u32 %v2035, %v2054
        %v2061 = vadd.s32 %v2057, 1
        %v2062 = vsel %vm2060, %v2061, %v2057
        %v2063 = vadd.s32 %v2058, %v2062
        %v2064 = vadd.s32 %v2063, 536870912
        %v2065 = vshrl.u32 %v2064, 30
        %v2066 = vshll.u32 %v2065, 30
        %v2067 = vsub.s32 %v2063, %v2066
        %vm2068 = vcmp.lt.s32.totalorder %v2067, 0
        %v2069 = vsub.s32 0, %v2067
        %v2070 = vsel %vm2068, %v2069, %v2067
        %v2071 = vclz %v2070
        %v2072 = vsub.s32 %v2071, 2
        %vm2073 = vcmp.gt.s32.totalorder 0, %v2072
        %v2074 = vsel %vm2073, 0, %v2072
        %v2075 = vsub.s32 32, %v2074
        %v2076 = vshll.u32 %v2067, %v2074
        %v2077 = vshrl.u32 %v2059, %v2075
        %v2078 = vor.u32 %v2076, %v2077
        %v2079 = vsub.s32 4294967266, %v2074
        %v2080 = vadd.s32 %v2079, 127
        %v2081 = vshll.u32 %v2080, 23
        %v2082 = vor.u32 4788187, %v2081
        %v2083 = vand.u32 2147483647, %v2082
        %v2085 = vcvt.s32.f32 %v2078
        %v2086 = vmul.f32 %v2085, %v2083
        %v2087 = vxor.u32 %v2086, 2147483648
        %v2088 = vsel %vm1967, %v2087, %v2086
        %v2089 = vsub.s32 4, %v2065
        %v2090 = vsel %vm1967, %v2089, %v2065
        %v2091 = vsel %vm1966, %v1333, %v2088
        %v2092 = vsel %vm1966, 0, %v2090
        %v2093 = vmul.f32 %v2091, %v2091
        %v2094 = vmul.f32 %v2093, -0.001358992
        %v2095 = vadd.f32 %v2094, 0.041655596
        %v2096 = vmul.f32 %v2093, %v2095
        %v2097 = vadd.f32 %v2096, -0.4999988
        %v2098 = vmul.f32 %v2093, %v2097
        %v2099 = vadd.f32 1.0, %v2098
        %v2100 = vmul.f32 %v2091, %v2091
        %v2101 = vmul.f32 %v2100, -0.00019511016
        %v2102 = vadd.f32 %v2101, 0.008332121
        %v2103 = vmul.f32 %v2100, %v2102
        %v2104 = vadd.f32 %v2103, -0.16666654
        %v2105 = vmul.f32 %v2100, %v2104
        %v2106 = vadd.f32 %v2105, 1.0
        %v2107 = vmul.f32 %v2106, %v2091
        %vm2108 = vweird.f32 %v1333
        %v2109 = vadd.s32 %v2092, 3
        %v2110 = vand.u32 %v2109, 3
        %vm2111 = vcmp.lt.s32.totalorder %v2110, 2
        %vm2112 = vcmp.eq.s32.totalorder %v2110, 0
        %v2113 = vxor.u32 %v2107, 2147483648
        %v2114 = vsel %vm2112, %v2099, %v2113
        %vm2115 = vcmp.eq.s32.totalorder %v2110, 2
        %v2116 = vxor.u32 %v2099, 2147483648
        %v2117 = vsel %vm2115, %v2116, %v2107
        %v2118 = vsel %vm2111, %v2114, %v2117
        %v2119 = vsel %vm2108, nan, %v2118
        %v2120 = vand.u32 2147483647, %v1334
        %vm2121 = vcmp.le.f32.partialorder %v2120, 0.7853982
        %vm2122 = vcmp.lt.s32.totalorder %v1334, 0
        %v2123 = vand.u32 %v1334, 2139095040
        %v2124 = vshrl.u32 %v2123, 23
        %v2125 = vsub.s32 %v2124, 127
        %v2126 = vand.u32 2147483647, %v1334
        %v2127 = vand.u32 %v2126, 8388607
        %v2128 = vor.u32 %v2127, 8388608
        %v2129 = vsub.s32 0, %v2128
        %v2130 = vadd.s32 %v2125, 1
        %vm2131 = vcmp.gt.s32.totalorder %v2130, 0
        %v2132 = vsel %vm2131, %v2130, 0
        %v2133 = vshrl.u32 %v2132, 5
        %v2134 = vand.u32 %v2132, 31
        %v2135 = vsub.s32 32, %v2134
        %v2136 = vshrl.u32 683565275, %v2135
        %v2137 = vshll.u32 683565275, %v2134
        %v2138 = vshrl.u32 2475754826, %v2135
        %v2139 = vor.u32 %v2137, %v2138
        %v2140 = vshll.u32 2475754826, %v2134
        %v2141 = vshrl.u32 2131351028, %v2135
        %v2142 = vor.u32 %v2140, %v2141
        %v2143 = vshll.u32 2131351028, %v2134
        %v2144 = vshrl.u32 2102212464, %v2135
        %v2145 = vor.u32 %v2143, %v2144
        %v2146 = vshll.u32 2102212464, %v2134
        %v2147 = vshrl.u32 920167782, %v2135
        %v2148 = vor.u32 %v2146, %v2147
        %v2149 = vshll.u32 920167782, %v2134
        %v2150 = vshrl.u32 1326507024, %v2135
        %v2151 = vor.u32 %v2149, %v2150
        %vm2152 = vcmp.lt.s32.totalorder %v2133, 1
        %vm2153 = vcmp.lt.s32.totalorder %v2133, 2
        %vm2154 = vcmp.lt.s32.totalorder %v2133, 3
        %vm2155 = vcmp.lt.s32.totalorder %v2133, 4
        %v2156 = vsel %vm2152, %v2136, %v2139
        %v2157 = vsel %vm2155, %v2145, 2102212464
        %v2158 = vsel %vm2154, %v2142, %v2157
        %v2159 = vsel %vm2153, %v2156, %v2158
        %v2160 = vsel %vm2152, %v2139, %v2142
        %v2161 = vsel %vm2155, %v2148, 920167782
        %v2162 = vsel %vm2154, %v2145, %v2161
        %v2163 = vsel %vm2153, %v2160, %v2162
        %v2164 = vsel %vm2152, %v2142, %v2145
        %v2165 = vsel %vm2155, %v2151, 1326507024
        %v2166 = vsel %vm2154, %v2148, %v2165
        %v2167 = vsel %vm2153, %v2164, %v2166
        %v2168 = vshll.u32 %v2128, 8
        %v2169 = vand.u32 %v2168, 65535
        %v2170 = vshrl.u32 %v2168, 16
        %v2171 = vand.u32 %v2167, 65535
        %v2172 = vshrl.u32 %v2167, 16
        %v2173 = vmul.u32 %v2169, %v2171
        %v2174 = vmul.u32 %v2169, %v2172
        %v2175 = vmul.u32 %v2170, %v2171
        %v2176 = vmul.u32 %v2170, %v2172
        %v2177 = vshll.u32 %v2174, 16
        %v2178 = vshrl.u32 %v2174, 16
        %v2179 = vshll.u32 %v2175, 16
        %v2180 = vshrl.u32 %v2175, 16
        %vm2181 = vc.u32 %v2173, %v2177
        %v2182 = vsel %vm2181, 1, 0
        %v2183 = vadd.s32 %v2173, %v2177
        %v2184 = vadd.s32 %v2176, %v2182
        %vm2185 = vc.u32 %v2183, %v2179
        %v2186 = vsel %vm2185, 1, 0
        %v2187 = vadd.s32 %v2183, %v2179
        %v2188 = vadd.s32 %v2184, %v2186
        %v2189 = vadd.s32 %v2188, %v2178
        %v2190 = vadd.s32 %v2189, %v2180
        %v2191 = vand.u32 %v2168, 65535
        %v2192 = vshrl.u32 %v2168, 16
        %v2193 = vand.u32 %v2163, 65535
        %v2194 = vshrl.u32 %v2163, 16
        %v2195 = vmul.u32 %v2191, %v2193
        %v2196 = vmul.u32 %v2191, %v2194
        %v2197 = vmul.u32 %v2192, %v2193
        %v2198 = vmul.u32 %v2192, %v2194
        %v2199 = vshll.u32 %v2196, 16
        %v2200 = vshrl.u32 %v2196, 16
        %v2201 = vshll.u32 %v2197, 16
        %v2202 = vshrl.u32 %v2197, 16
        %vm2203 = vc.u32 %v2195, %v2199
        %v2204 = vsel %vm2203, 1, 0
        %v2205 = vadd.s32 %v2195, %v2199
        %v2206 = vadd.s32 %v2198, %v2204
        %vm2207 = vc.u32 %v2205, %v2201
        %v2208 = vsel %vm2207, 1, 0
        %v2209 = vadd.s32 %v2205, %v2201
        %v2210 = vadd.s32 %v2206, %v2208
        %v2211 = vadd.s32 %v2210, %v2200
        %v2212 = vadd.s32 %v2211, %v2202
        %v2213 = vmul.u32 %v2168, %v2159
        %v2214 = vadd.s32 %v2190, %v2209
        %vm2215 = vc.u32 %v2190, %v2209
        %v2216 = vadd.s32 %v2212, 1
        %v2217 = vsel %vm2215, %v2216, %v2212
        %v2218 = vadd.s32 %v2213, %v2217
        %v2219 = vadd.s32 %v2218, 536870912
        %v2220 = vshrl.u32 %v2219, 30
        %v2221 = vshll.u32 %v2220, 30
        %v2222 = vsub.s32 %v2218, %v2221
        %vm2223 = vcmp.lt.s32.totalorder %v2222, 0
        %v2224 = vsub.s32 0, %v2222
        %v2225 = vsel %vm2223, %v2224, %v2222
        %v2226 = vclz %v2225
        %v2227 = vsub.s32 %v2226, 2
        %vm2228 = vcmp.gt.s32.totalorder 0, %v2227
        %v2229 = vsel %vm2228, 0, %v2227
        %v2230 = vsub.s32 32, %v2229
        %v2231 = vshll.u32 %v2222, %v2229
        %v2232 = vshrl.u32 %v2214, %v2230
        %v2233 = vor.u32 %v2231, %v2232
        %v2234 = vsub.s32 4294967266, %v2229
        %v2235 = vadd.s32 %v2234, 127
        %v2236 = vshll.u32 %v2235, 23
        %v2237 = vor.u32 4788187, %v2236
        %v2238 = vand.u32 2147483647, %v2237
        %v2240 = vcvt.s32.f32 %v2233
        %v2241 = vmul.f32 %v2240, %v2238
        %v2242 = vxor.u32 %v2241, 2147483648
        %v2243 = vsel %vm2122, %v2242, %v2241
        %v2244 = vsub.s32 4, %v2220
        %v2245 = vsel %vm2122, %v2244, %v2220
        %v2246 = vsel %vm2121, %v1334, %v2243
        %v2247 = vsel %vm2121, 0, %v2245
        %v2248 = vmul.f32 %v2246, %v2246
        %v2249 = vmul.f32 %v2248, -0.001358992
        %v2250 = vadd.f32 %v2249, 0.041655596
        %v2251 = vmul.f32 %v2248, %v2250
        %v2252 = vadd.f32 %v2251, -0.4999988
        %v2253 = vmul.f32 %v2248, %v2252
        %v2254 = vadd.f32 1.0, %v2253
        %v2255 = vmul.f32 %v2246, %v2246
        %v2256 = vmul.f32 %v2255, -0.00019511016
        %v2257 = vadd.f32 %v2256, 0.008332121
        %v2258 = vmul.f32 %v2255, %v2257
        %v2259 = vadd.f32 %v2258, -0.16666654
        %v2260 = vmul.f32 %v2255, %v2259
        %v2261 = vadd.f32 %v2260, 1.0
        %v2262 = vmul.f32 %v2261, %v2246
        %vm2263 = vweird.f32 %v1334
        %v2264 = vadd.s32 %v2247, 3
        %v2265 = vand.u32 %v2264, 3
        %vm2266 = vcmp.lt.s32.totalorder %v2265, 2
        %vm2267 = vcmp.eq.s32.totalorder %v2265, 0
        %v2268 = vxor.u32 %v2262, 2147483648
        %v2269 = vsel %vm2267, %v2254, %v2268
        %vm2270 = vcmp.eq.s32.totalorder %v2265, 2
        %v2271 = vxor.u32 %v2254, 2147483648
        %v2272 = vsel %vm2270, %v2271, %v2262
        %v2273 = vsel %vm2266, %v2269, %v2272
        %v2274 = vsel %vm2263, nan, %v2273
        %v2275 = vand.u32 2147483647, %v1335
        %vm2276 = vcmp.le.f32.partialorder %v2275, 0.7853982
        %vm2277 = vcmp.lt.s32.totalorder %v1335, 0
        %v2278 = vand.u32 %v1335, 2139095040
        %v2279 = vshrl.u32 %v2278, 23
        %v2280 = vsub.s32 %v2279, 127
        %v2281 = vand.u32 2147483647, %v1335
        %v2282 = vand.u32 %v2281, 8388607
        %v2283 = vor.u32 %v2282, 8388608
        %v2284 = vsub.s32 0, %v2283
        %v2285 = vadd.s32 %v2280, 1
        %vm2286 = vcmp.gt.s32.totalorder %v2285, 0
        %v2287 = vsel %vm2286, %v2285, 0
        %v2288 = vshrl.u32 %v2287, 5
        %v2289 = vand.u32 %v2287, 31
        %v2290 = vsub.s32 32, %v2289
        %v2291 = vshrl.u32 683565275, %v2290
        %v2292 = vshll.u32 683565275, %v2289
        %v2293 = vshrl.u32 2475754826, %v2290
        %v2294 = vor.u32 %v2292, %v2293
        %v2295 = vshll.u32 2475754826, %v2289
        %v2296 = vshrl.u32 2131351028, %v2290
        %v2297 = vor.u32 %v2295, %v2296
        %v2298 = vshll.u32 2131351028, %v2289
        %v2299 = vshrl.u32 2102212464, %v2290
        %v2300 = vor.u32 %v2298, %v2299
        %v2301 = vshll.u32 2102212464, %v2289
        %v2302 = vshrl.u32 920167782, %v2290
        %v2303 = vor.u32 %v2301, %v2302
        %v2304 = vshll.u32 920167782, %v2289
        %v2305 = vshrl.u32 1326507024, %v2290
        %v2306 = vor.u32 %v2304, %v2305
        %vm2307 = vcmp.lt.s32.totalorder %v2288, 1
        %vm2308 = vcmp.lt.s32.totalorder %v2288, 2
        %vm2309 = vcmp.lt.s32.totalorder %v2288, 3
        %vm2310 = vcmp.lt.s32.totalorder %v2288, 4
        %v2311 = vsel %vm2307, %v2291, %v2294
        %v2312 = vsel %vm2310, %v2300, 2102212464
        %v2313 = vsel %vm2309, %v2297, %v2312
        %v2314 = vsel %vm2308, %v2311, %v2313
        %v2315 = vsel %vm2307, %v2294, %v2297
        %v2316 = vsel %vm2310, %v2303, 920167782
        %v2317 = vsel %vm2309, %v2300, %v2316
        %v2318 = vsel %vm2308, %v2315, %v2317
        %v2319 = vsel %vm2307, %v2297, %v2300
        %v2320 = vsel %vm2310, %v2306, 1326507024
        %v2321 = vsel %vm2309, %v2303, %v2320
        %v2322 = vsel %vm2308, %v2319, %v2321
        %v2323 = vshll.u32 %v2283, 8
        %v2324 = vand.u32 %v2323, 65535
        %v2325 = vshrl.u32 %v2323, 16
        %v2326 = vand.u32 %v2322, 65535
        %v2327 = vshrl.u32 %v2322, 16
        %v2328 = vmul.u32 %v2324, %v2326
        %v2329 = vmul.u32 %v2324, %v2327
        %v2330 = vmul.u32 %v2325, %v2326
        %v2331 = vmul.u32 %v2325, %v2327
        %v2332 = vshll.u32 %v2329, 16
        %v2333 = vshrl.u32 %v2329, 16
        %v2334 = vshll.u32 %v2330, 16
        %v2335 = vshrl.u32 %v2330, 16
        %vm2336 = vc.u32 %v2328, %v2332
        %v2337 = vsel %vm2336, 1, 0
        %v2338 = vadd.s32 %v2328, %v2332
        %v2339 = vadd.s32 %v2331, %v2337
        %vm2340 = vc.u32 %v2338, %v2334
        %v2341 = vsel %vm2340, 1, 0
        %v2342 = vadd.s32 %v2338, %v2334
        %v2343 = vadd.s32 %v2339, %v2341
        %v2344 = vadd.s32 %v2343, %v2333
        %v2345 = vadd.s32 %v2344, %v2335
        %v2346 = vand.u32 %v2323, 65535
        %v2347 = vshrl.u32 %v2323, 16
        %v2348 = vand.u32 %v2318, 65535
        %v2349 = vshrl.u32 %v2318, 16
        %v2350 = vmul.u32 %v2346, %v2348
        %v2351 = vmul.u32 %v2346, %v2349
        %v2352 = vmul.u32 %v2347, %v2348
        %v2353 = vmul.u32 %v2347, %v2349
        %v2354 = vshll.u32 %v2351, 16
        %v2355 = vshrl.u32 %v2351, 16
        %v2356 = vshll.u32 %v2352, 16
        %v2357 = vshrl.u32 %v2352, 16
        %vm2358 = vc.u32 %v2350, %v2354
        %v2359 = vsel %vm2358, 1, 0
        %v2360 = vadd.s32 %v2350, %v2354
        %v2361 = vadd.s32 %v2353, %v2359
        %vm2362 = vc.u32 %v2360, %v2356
        %v2363 = vsel %vm2362, 1, 0
        %v2364 = vadd.s32 %v2360, %v2356
        %v2365 = vadd.s32 %v2361, %v2363
        %v2366 = vadd.s32 %v2365, %v2355
        %v2367 = vadd.s32 %v2366, %v2357
        %v2368 = vmul.u32 %v2323, %v2314
        %v2369 = vadd.s32 %v2345, %v2364
        %vm2370 = vc.u32 %v2345, %v2364
        %v2371 = vadd.s32 %v2367, 1
        %v2372 = vsel %vm2370, %v2371, %v2367
        %v2373 = vadd.s32 %v2368, %v2372
        %v2374 = vadd.s32 %v2373, 536870912
        %v2375 = vshrl.u32 %v2374, 30
        %v2376 = vshll.u32 %v2375, 30
        %v2377 = vsub.s32 %v2373, %v2376
        %vm2378 = vcmp.lt.s32.totalorder %v2377, 0
        %v2379 = vsub.s32 0, %v2377
        %v2380 = vsel %vm2378, %v2379, %v2377
        %v2381 = vclz %v2380
        %v2382 = vsub.s32 %v2381, 2
        %vm2383 = vcmp.gt.s32.totalorder 0, %v2382
        %v2384 = vsel %vm2383, 0, %v2382
        %v2385 = vsub.s32 32, %v2384
        %v2386 = vshll.u32 %v2377, %v2384
        %v2387 = vshrl.u32 %v2369, %v2385
        %v2388 = vor.u32 %v2386, %v2387
        %v2389 = vsub.s32 4294967266, %v2384
        %v2390 = vadd.s32 %v2389, 127
        %v2391 = vshll.u32 %v2390, 23
        %v2392 = vor.u32 4788187, %v2391
        %v2393 = vand.u32 2147483647, %v2392
        %v2395 = vcvt.s32.f32 %v2388
        %v2396 = vmul.f32 %v2395, %v2393
        %v2397 = vxor.u32 %v2396, 2147483648
        %v2398 = vsel %vm2277, %v2397, %v2396
        %v2399 = vsub.s32 4, %v2375
        %v2400 = vsel %vm2277, %v2399, %v2375
        %v2401 = vsel %vm2276, %v1335, %v2398
        %v2402 = vsel %vm2276, 0, %v2400
        %v2403 = vmul.f32 %v2401, %v2401
        %v2404 = vmul.f32 %v2403, -0.001358992
        %v2405 = vadd.f32 %v2404, 0.041655596
        %v2406 = vmul.f32 %v2403, %v2405
        %v2407 = vadd.f32 %v2406, -0.4999988
        %v2408 = vmul.f32 %v2403, %v2407
        %v2409 = vadd.f32 1.0, %v2408
        %v2410 = vmul.f32 %v2401, %v2401
        %v2411 = vmul.f32 %v2410, -0.00019511016
        %v2412 = vadd.f32 %v2411, 0.008332121
        %v2413 = vmul.f32 %v2410, %v2412
        %v2414 = vadd.f32 %v2413, -0.16666654
        %v2415 = vmul.f32 %v2410, %v2414
        %v2416 = vadd.f32 %v2415, 1.0
        %v2417 = vmul.f32 %v2416, %v2401
        %vm2418 = vweird.f32 %v1335
        %v2419 = vadd.s32 %v2402, 3
        %v2420 = vand.u32 %v2419, 3
        %vm2421 = vcmp.lt.s32.totalorder %v2420, 2
        %vm2422 = vcmp.eq.s32.totalorder %v2420, 0
        %v2423 = vxor.u32 %v2417, 2147483648
        %v2424 = vsel %vm2422, %v2409, %v2423
        %vm2425 = vcmp.eq.s32.totalorder %v2420, 2
        %v2426 = vxor.u32 %v2409, 2147483648
        %v2427 = vsel %vm2425, %v2426, %v2417
        %v2428 = vsel %vm2421, %v2424, %v2427
        %v2429 = vsel %vm2418, nan, %v2428
        %v2430 = vand.u32 2147483647, %v1336
        %vm2431 = vcmp.le.f32.partialorder %v2430, 0.7853982
        %vm2432 = vcmp.lt.s32.totalorder %v1336, 0
        %v2433 = vand.u32 %v1336, 2139095040
        %v2434 = vshrl.u32 %v2433, 23
        %v2435 = vsub.s32 %v2434, 127
        %v2436 = vand.u32 2147483647, %v1336
        %v2437 = vand.u32 %v2436, 8388607
        %v2438 = vor.u32 %v2437, 8388608
        %v2439 = vsub.s32 0, %v2438
        %v2440 = vadd.s32 %v2435, 1
        %vm2441 = vcmp.gt.s32.totalorder %v2440, 0
        %v2442 = vsel %vm2441, %v2440, 0
        %v2443 = vshrl.u32 %v2442, 5
        %v2444 = vand.u32 %v2442, 31
        %v2445 = vsub.s32 32, %v2444
        %v2446 = vshrl.u32 683565275, %v2445
        %v2447 = vshll.u32 683565275, %v2444
        %v2448 = vshrl.u32 2475754826, %v2445
        %v2449 = vor.u32 %v2447, %v2448
        %v2450 = vshll.u32 2475754826, %v2444
        %v2451 = vshrl.u32 2131351028, %v2445
        %v2452 = vor.u32 %v2450, %v2451
        %v2453 = vshll.u32 2131351028, %v2444
        %v2454 = vshrl.u32 2102212464, %v2445
        %v2455 = vor.u32 %v2453, %v2454
        %v2456 = vshll.u32 2102212464, %v2444
        %v2457 = vshrl.u32 920167782, %v2445
        %v2458 = vor.u32 %v2456, %v2457
        %v2459 = vshll.u32 920167782, %v2444
        %v2460 = vshrl.u32 1326507024, %v2445
        %v2461 = vor.u32 %v2459, %v2460
        %vm2462 = vcmp.lt.s32.totalorder %v2443, 1
        %vm2463 = vcmp.lt.s32.totalorder %v2443, 2
        %vm2464 = vcmp.lt.s32.totalorder %v2443, 3
        %vm2465 = vcmp.lt.s32.totalorder %v2443, 4
        %v2466 = vsel %vm2462, %v2446, %v2449
        %v2467 = vsel %vm2465, %v2455, 2102212464
        %v2468 = vsel %vm2464, %v2452, %v2467
        %v2469 = vsel %vm2463, %v2466, %v2468
        %v2470 = vsel %vm2462, %v2449, %v2452
        %v2471 = vsel %vm2465, %v2458, 920167782
        %v2472 = vsel %vm2464, %v2455, %v2471
        %v2473 = vsel %vm2463, %v2470, %v2472
        %v2474 = vsel %vm2462, %v2452, %v2455
        %v2475 = vsel %vm2465, %v2461, 1326507024
        %v2476 = vsel %vm2464, %v2458, %v2475
        %v2477 = vsel %vm2463, %v2474, %v2476
        %v2478 = vshll.u32 %v2438, 8
        %v2479 = vand.u32 %v2478, 65535
        %v2480 = vshrl.u32 %v2478, 16
        %v2481 = vand.u32 %v2477, 65535
        %v2482 = vshrl.u32 %v2477, 16
        %v2483 = vmul.u32 %v2479, %v2481
        %v2484 = vmul.u32 %v2479, %v2482
        %v2485 = vmul.u32 %v2480, %v2481
        %v2486 = vmul.u32 %v2480, %v2482
        %v2487 = vshll.u32 %v2484, 16
        %v2488 = vshrl.u32 %v2484, 16
        %v2489 = vshll.u32 %v2485, 16
        %v2490 = vshrl.u32 %v2485, 16
        %vm2491 = vc.u32 %v2483, %v2487
        %v2492 = vsel %vm2491, 1, 0
        %v2493 = vadd.s32 %v2483, %v2487
        %v2494 = vadd.s32 %v2486, %v2492
        %vm2495 = vc.u32 %v2493, %v2489
        %v2496 = vsel %vm2495, 1, 0
        %v2497 = vadd.s32 %v2493, %v2489
        %v2498 = vadd.s32 %v2494, %v2496
        %v2499 = vadd.s32 %v2498, %v2488
        %v2500 = vadd.s32 %v2499, %v2490
        %v2501 = vand.u32 %v2478, 65535
        %v2502 = vshrl.u32 %v2478, 16
        %v2503 = vand.u32 %v2473, 65535
        %v2504 = vshrl.u32 %v2473, 16
        %v2505 = vmul.u32 %v2501, %v2503
        %v2506 = vmul.u32 %v2501, %v2504
        %v2507 = vmul.u32 %v2502, %v2503
        %v2508 = vmul.u32 %v2502, %v2504
        %v2509 = vshll.u32 %v2506, 16
        %v2510 = vshrl.u32 %v2506, 16
        %v2511 = vshll.u32 %v2507, 16
        %v2512 = vshrl.u32 %v2507, 16
        %vm2513 = vc.u32 %v2505, %v2509
        %v2514 = vsel %vm2513, 1, 0
        %v2515 = vadd.s32 %v2505, %v2509
        %v2516 = vadd.s32 %v2508, %v2514
        %vm2517 = vc.u32 %v2515, %v2511
        %v2518 = vsel %vm2517, 1, 0
        %v2519 = vadd.s32 %v2515, %v2511
        %v2520 = vadd.s32 %v2516, %v2518
        %v2521 = vadd.s32 %v2520, %v2510
        %v2522 = vadd.s32 %v2521, %v2512
        %v2523 = vmul.u32 %v2478, %v2469
        %v2524 = vadd.s32 %v2500, %v2519
        %vm2525 = vc.u32 %v2500, %v2519
        %v2526 = vadd.s32 %v2522, 1
        %v2527 = vsel %vm2525, %v2526, %v2522
        %v2528 = vadd.s32 %v2523, %v2527
        %v2529 = vadd.s32 %v2528, 536870912
        %v2530 = vshrl.u32 %v2529, 30
        %v2531 = vshll.u32 %v2530, 30
        %v2532 = vsub.s32 %v2528, %v2531
        %vm2533 = vcmp.lt.s32.totalorder %v2532, 0
        %v2534 = vsub.s32 0, %v2532
        %v2535 = vsel %vm2533, %v2534, %v2532
        %v2536 = vclz %v2535
        %v2537 = vsub.s32 %v2536, 2
        %vm2538 = vcmp.gt.s32.totalorder 0, %v2537
        %v2539 = vsel %vm2538, 0, %v2537
        %v2540 = vsub.s32 32, %v2539
        %v2541 = vshll.u32 %v2532, %v2539
        %v2542 = vshrl.u32 %v2524, %v2540
        %v2543 = vor.u32 %v2541, %v2542
        %v2544 = vsub.s32 4294967266, %v2539
        %v2545 = vadd.s32 %v2544, 127
        %v2546 = vshll.u32 %v2545, 23
        %v2547 = vor.u32 4788187, %v2546
        %v2548 = vand.u32 2147483647, %v2547
        %v2550 = vcvt.s32.f32 %v2543
        %v2551 = vmul.f32 %v2550, %v2548
        %v2552 = vxor.u32 %v2551, 2147483648
        %v2553 = vsel %vm2432, %v2552, %v2551
        %v2554 = vsub.s32 4, %v2530
        %v2555 = vsel %vm2432, %v2554, %v2530
        %v2556 = vsel %vm2431, %v1336, %v2553
        %v2557 = vsel %vm2431, 0, %v2555
        %v2558 = vmul.f32 %v2556, %v2556
        %v2559 = vmul.f32 %v2558, -0.001358992
        %v2560 = vadd.f32 %v2559, 0.041655596
        %v2561 = vmul.f32 %v2558, %v2560
        %v2562 = vadd.f32 %v2561, -0.4999988
        %v2563 = vmul.f32 %v2558, %v2562
        %v2564 = vadd.f32 1.0, %v2563
        %v2565 = vmul.f32 %v2556, %v2556
        %v2566 = vmul.f32 %v2565, -0.00019511016
        %v2567 = vadd.f32 %v2566, 0.008332121
        %v2568 = vmul.f32 %v2565, %v2567
        %v2569 = vadd.f32 %v2568, -0.16666654
        %v2570 = vmul.f32 %v2565, %v2569
        %v2571 = vadd.f32 %v2570, 1.0
        %v2572 = vmul.f32 %v2571, %v2556
        %vm2573 = vweird.f32 %v1336
        %v2574 = vadd.s32 %v2557, 3
        %v2575 = vand.u32 %v2574, 3
        %vm2576 = vcmp.lt.s32.totalorder %v2575, 2
        %vm2577 = vcmp.eq.s32.totalorder %v2575, 0
        %v2578 = vxor.u32 %v2572, 2147483648
        %v2579 = vsel %vm2577, %v2564, %v2578
        %vm2580 = vcmp.eq.s32.totalorder %v2575, 2
        %v2581 = vxor.u32 %v2564, 2147483648
        %v2582 = vsel %vm2580, %v2581, %v2572
        %v2583 = vsel %vm2576, %v2579, %v2582
        %v2584 = vsel %vm2573, nan, %v2583
        %v2585 = vand.u32 2147483647, %v1337
        %vm2586 = vcmp.le.f32.partialorder %v2585, 0.7853982
        %vm2587 = vcmp.lt.s32.totalorder %v1337, 0
        %v2588 = vand.u32 %v1337, 2139095040
        %v2589 = vshrl.u32 %v2588, 23
        %v2590 = vsub.s32 %v2589, 127
        %v2591 = vand.u32 2147483647, %v1337
        %v2592 = vand.u32 %v2591, 8388607
        %v2593 = vor.u32 %v2592, 8388608
        %v2594 = vsub.s32 0, %v2593
        %v2595 = vadd.s32 %v2590, 1
        %vm2596 = vcmp.gt.s32.totalorder %v2595, 0
        %v2597 = vsel %vm2596, %v2595, 0
        %v2598 = vshrl.u32 %v2597, 5
        %v2599 = vand.u32 %v2597, 31
        %v2600 = vsub.s32 32, %v2599
        %v2601 = vshrl.u32 683565275, %v2600
        %v2602 = vshll.u32 683565275, %v2599
        %v2603 = vshrl.u32 2475754826, %v2600
        %v2604 = vor.u32 %v2602, %v2603
        %v2605 = vshll.u32 2475754826, %v2599
        %v2606 = vshrl.u32 2131351028, %v2600
        %v2607 = vor.u32 %v2605, %v2606
        %v2608 = vshll.u32 2131351028, %v2599
        %v2609 = vshrl.u32 2102212464, %v2600
        %v2610 = vor.u32 %v2608, %v2609
        %v2611 = vshll.u32 2102212464, %v2599
        %v2612 = vshrl.u32 920167782, %v2600
        %v2613 = vor.u32 %v2611, %v2612
        %v2614 = vshll.u32 920167782, %v2599
        %v2615 = vshrl.u32 1326507024, %v2600
        %v2616 = vor.u32 %v2614, %v2615
        %vm2617 = vcmp.lt.s32.totalorder %v2598, 1
        %vm2618 = vcmp.lt.s32.totalorder %v2598, 2
        %vm2619 = vcmp.lt.s32.totalorder %v2598, 3
        %vm2620 = vcmp.lt.s32.totalorder %v2598, 4
        %v2621 = vsel %vm2617, %v2601, %v2604
        %v2622 = vsel %vm2620, %v2610, 2102212464
        %v2623 = vsel %vm2619, %v2607, %v2622
        %v2624 = vsel %vm2618, %v2621, %v2623
        %v2625 = vsel %vm2617, %v2604, %v2607
        %v2626 = vsel %vm2620, %v2613, 920167782
        %v2627 = vsel %vm2619, %v2610, %v2626
        %v2628 = vsel %vm2618, %v2625, %v2627
        %v2629 = vsel %vm2617, %v2607, %v2610
        %v2630 = vsel %vm2620, %v2616, 1326507024
        %v2631 = vsel %vm2619, %v2613, %v2630
        %v2632 = vsel %vm2618, %v2629, %v2631
        %v2633 = vshll.u32 %v2593, 8
        %v2634 = vand.u32 %v2633, 65535
        %v2635 = vshrl.u32 %v2633, 16
        %v2636 = vand.u32 %v2632, 65535
        %v2637 = vshrl.u32 %v2632, 16
        %v2638 = vmul.u32 %v2634, %v2636
        %v2639 = vmul.u32 %v2634, %v2637
        %v2640 = vmul.u32 %v2635, %v2636
        %v2641 = vmul.u32 %v2635, %v2637
        %v2642 = vshll.u32 %v2639, 16
        %v2643 = vshrl.u32 %v2639, 16
        %v2644 = vshll.u32 %v2640, 16
        %v2645 = vshrl.u32 %v2640, 16
        %vm2646 = vc.u32 %v2638, %v2642
        %v2647 = vsel %vm2646, 1, 0
        %v2648 = vadd.s32 %v2638, %v2642
        %v2649 = vadd.s32 %v2641, %v2647
        %vm2650 = vc.u32 %v2648, %v2644
        %v2651 = vsel %vm2650, 1, 0
        %v2652 = vadd.s32 %v2648, %v2644
        %v2653 = vadd.s32 %v2649, %v2651
        %v2654 = vadd.s32 %v2653, %v2643
        %v2655 = vadd.s32 %v2654, %v2645
        %v2656 = vand.u32 %v2633, 65535
        %v2657 = vshrl.u32 %v2633, 16
        %v2658 = vand.u32 %v2628, 65535
        %v2659 = vshrl.u32 %v2628, 16
        %v2660 = vmul.u32 %v2656, %v2658
        %v2661 = vmul.u32 %v2656, %v2659
        %v2662 = vmul.u32 %v2657, %v2658
        %v2663 = vmul.u32 %v2657, %v2659
        %v2664 = vshll.u32 %v2661, 16
        %v2665 = vshrl.u32 %v2661, 16
        %v2666 = vshll.u32 %v2662, 16
        %v2667 = vshrl.u32 %v2662, 16
        %vm2668 = vc.u32 %v2660, %v2664
        %v2669 = vsel %vm2668, 1, 0
        %v2670 = vadd.s32 %v2660, %v2664
        %v2671 = vadd.s32 %v2663, %v2669
        %vm2672 = vc.u32 %v2670, %v2666
        %v2673 = vsel %vm2672, 1, 0
        %v2674 = vadd.s32 %v2670, %v2666
        %v2675 = vadd.s32 %v2671, %v2673
        %v2676 = vadd.s32 %v2675, %v2665
        %v2677 = vadd.s32 %v2676, %v2667
        %v2678 = vmul.u32 %v2633, %v2624
        %v2679 = vadd.s32 %v2655, %v2674
        %vm2680 = vc.u32 %v2655, %v2674
        %v2681 = vadd.s32 %v2677, 1
        %v2682 = vsel %vm2680, %v2681, %v2677
        %v2683 = vadd.s32 %v2678, %v2682
        %v2684 = vadd.s32 %v2683, 536870912
        %v2685 = vshrl.u32 %v2684, 30
        %v2686 = vshll.u32 %v2685, 30
        %v2687 = vsub.s32 %v2683, %v2686
        %vm2688 = vcmp.lt.s32.totalorder %v2687, 0
        %v2689 = vsub.s32 0, %v2687
        %v2690 = vsel %vm2688, %v2689, %v2687
        %v2691 = vclz %v2690
        %v2692 = vsub.s32 %v2691, 2
        %vm2693 = vcmp.gt.s32.totalorder 0, %v2692
        %v2694 = vsel %vm2693, 0, %v2692
        %v2695 = vsub.s32 32, %v2694
        %v2696 = vshll.u32 %v2687, %v2694
        %v2697 = vshrl.u32 %v2679, %v2695
        %v2698 = vor.u32 %v2696, %v2697
        %v2699 = vsub.s32 4294967266, %v2694
        %v2700 = vadd.s32 %v2699, 127
        %v2701 = vshll.u32 %v2700, 23
        %v2702 = vor.u32 4788187, %v2701
        %v2703 = vand.u32 2147483647, %v2702
        %v2705 = vcvt.s32.f32 %v2698
        %v2706 = vmul.f32 %v2705, %v2703
        %v2707 = vxor.u32 %v2706, 2147483648
        %v2708 = vsel %vm2587, %v2707, %v2706
        %v2709 = vsub.s32 4, %v2685
        %v2710 = vsel %vm2587, %v2709, %v2685
        %v2711 = vsel %vm2586, %v1337, %v2708
        %v2712 = vsel %vm2586, 0, %v2710
        %v2713 = vmul.f32 %v2711, %v2711
        %v2714 = vmul.f32 %v2713, -0.001358992
        %v2715 = vadd.f32 %v2714, 0.041655596
        %v2716 = vmul.f32 %v2713, %v2715
        %v2717 = vadd.f32 %v2716, -0.4999988
        %v2718 = vmul.f32 %v2713, %v2717
        %v2719 = vadd.f32 1.0, %v2718
        %v2720 = vmul.f32 %v2711, %v2711
        %v2721 = vmul.f32 %v2720, -0.00019511016
        %v2722 = vadd.f32 %v2721, 0.008332121
        %v2723 = vmul.f32 %v2720, %v2722
        %v2724 = vadd.f32 %v2723, -0.16666654
        %v2725 = vmul.f32 %v2720, %v2724
        %v2726 = vadd.f32 %v2725, 1.0
        %v2727 = vmul.f32 %v2726, %v2711
        %vm2728 = vweird.f32 %v1337
        %v2729 = vadd.s32 %v2712, 3
        %v2730 = vand.u32 %v2729, 3
        %vm2731 = vcmp.lt.s32.totalorder %v2730, 2
        %vm2732 = vcmp.eq.s32.totalorder %v2730, 0
        %v2733 = vxor.u32 %v2727, 2147483648
        %v2734 = vsel %vm2732, %v2719, %v2733
        %vm2735 = vcmp.eq.s32.totalorder %v2730, 2
        %v2736 = vxor.u32 %v2719, 2147483648
        %v2737 = vsel %vm2735, %v2736, %v2727
        %v2738 = vsel %vm2731, %v2734, %v2737
        %v2739 = vsel %vm2728, nan, %v2738
        %v2740 = vand.u32 2147483647, %v1338
        %vm2741 = vcmp.le.f32.partialorder %v2740, 0.7853982
        %vm2742 = vcmp.lt.s32.totalorder %v1338, 0
        %v2743 = vand.u32 %v1338, 2139095040
        %v2744 = vshrl.u32 %v2743, 23
        %v2745 = vsub.s32 %v2744, 127
        %v2746 = vand.u32 2147483647, %v1338
        %v2747 = vand.u32 %v2746, 8388607
        %v2748 = vor.u32 %v2747, 8388608
        %v2749 = vsub.s32 0, %v2748
        %v2750 = vadd.s32 %v2745, 1
        %vm2751 = vcmp.gt.s32.totalorder %v2750, 0
        %v2752 = vsel %vm2751, %v2750, 0
        %v2753 = vshrl.u32 %v2752, 5
        %v2754 = vand.u32 %v2752, 31
        %v2755 = vsub.s32 32, %v2754
        %v2756 = vshrl.u32 683565275, %v2755
        %v2757 = vshll.u32 683565275, %v2754
        %v2758 = vshrl.u32 2475754826, %v2755
        %v2759 = vor.u32 %v2757, %v2758
        %v2760 = vshll.u32 2475754826, %v2754
        %v2761 = vshrl.u32 2131351028, %v2755
        %v2762 = vor.u32 %v2760, %v2761
        %v2763 = vshll.u32 2131351028, %v2754
        %v2764 = vshrl.u32 2102212464, %v2755
        %v2765 = vor.u32 %v2763, %v2764
        %v2766 = vshll.u32 2102212464, %v2754
        %v2767 = vshrl.u32 920167782, %v2755
        %v2768 = vor.u32 %v2766, %v2767
        %v2769 = vshll.u32 920167782, %v2754
        %v2770 = vshrl.u32 1326507024, %v2755
        %v2771 = vor.u32 %v2769, %v2770
        %vm2772 = vcmp.lt.s32.totalorder %v2753, 1
        %vm2773 = vcmp.lt.s32.totalorder %v2753, 2
        %vm2774 = vcmp.lt.s32.totalorder %v2753, 3
        %vm2775 = vcmp.lt.s32.totalorder %v2753, 4
        %v2776 = vsel %vm2772, %v2756, %v2759
        %v2777 = vsel %vm2775, %v2765, 2102212464
        %v2778 = vsel %vm2774, %v2762, %v2777
        %v2779 = vsel %vm2773, %v2776, %v2778
        %v2780 = vsel %vm2772, %v2759, %v2762
        %v2781 = vsel %vm2775, %v2768, 920167782
        %v2782 = vsel %vm2774, %v2765, %v2781
        %v2783 = vsel %vm2773, %v2780, %v2782
        %v2784 = vsel %vm2772, %v2762, %v2765
        %v2785 = vsel %vm2775, %v2771, 1326507024
        %v2786 = vsel %vm2774, %v2768, %v2785
        %v2787 = vsel %vm2773, %v2784, %v2786
        %v2788 = vshll.u32 %v2748, 8
        %v2789 = vand.u32 %v2788, 65535
        %v2790 = vshrl.u32 %v2788, 16
        %v2791 = vand.u32 %v2787, 65535
        %v2792 = vshrl.u32 %v2787, 16
        %v2793 = vmul.u32 %v2789, %v2791
        %v2794 = vmul.u32 %v2789, %v2792
        %v2795 = vmul.u32 %v2790, %v2791
        %v2796 = vmul.u32 %v2790, %v2792
        %v2797 = vshll.u32 %v2794, 16
        %v2798 = vshrl.u32 %v2794, 16
        %v2799 = vshll.u32 %v2795, 16
        %v2800 = vshrl.u32 %v2795, 16
        %vm2801 = vc.u32 %v2793, %v2797
        %v2802 = vsel %vm2801, 1, 0
        %v2803 = vadd.s32 %v2793, %v2797
        %v2804 = vadd.s32 %v2796, %v2802
        %vm2805 = vc.u32 %v2803, %v2799
        %v2806 = vsel %vm2805, 1, 0
        %v2807 = vadd.s32 %v2803, %v2799
        %v2808 = vadd.s32 %v2804, %v2806
        %v2809 = vadd.s32 %v2808, %v2798
        %v2810 = vadd.s32 %v2809, %v2800
        %v2811 = vand.u32 %v2788, 65535
        %v2812 = vshrl.u32 %v2788, 16
        %v2813 = vand.u32 %v2783, 65535
        %v2814 = vshrl.u32 %v2783, 16
        %v2815 = vmul.u32 %v2811, %v2813
        %v2816 = vmul.u32 %v2811, %v2814
        %v2817 = vmul.u32 %v2812, %v2813
        %v2818 = vmul.u32 %v2812, %v2814
        %v2819 = vshll.u32 %v2816, 16
        %v2820 = vshrl.u32 %v2816, 16
        %v2821 = vshll.u32 %v2817, 16
        %v2822 = vshrl.u32 %v2817, 16
        %vm2823 = vc.u32 %v2815, %v2819
        %v2824 = vsel %vm2823, 1, 0
        %v2825 = vadd.s32 %v2815, %v2819
        %v2826 = vadd.s32 %v2818, %v2824
        %vm2827 = vc.u32 %v2825, %v2821
        %v2828 = vsel %vm2827, 1, 0
        %v2829 = vadd.s32 %v2825, %v2821
        %v2830 = vadd.s32 %v2826, %v2828
        %v2831 = vadd.s32 %v2830, %v2820
        %v2832 = vadd.s32 %v2831, %v2822
        %v2833 = vmul.u32 %v2788, %v2779
        %v2834 = vadd.s32 %v2810, %v2829
        %vm2835 = vc.u32 %v2810, %v2829
        %v2836 = vadd.s32 %v2832, 1
        %v2837 = vsel %vm2835, %v2836, %v2832
        %v2838 = vadd.s32 %v2833, %v2837
        %v2839 = vadd.s32 %v2838, 536870912
        %v2840 = vshrl.u32 %v2839, 30
        %v2841 = vshll.u32 %v2840, 30
        %v2842 = vsub.s32 %v2838, %v2841
        %vm2843 = vcmp.lt.s32.totalorder %v2842, 0
        %v2844 = vsub.s32 0, %v2842
        %v2845 = vsel %vm2843, %v2844, %v2842
        %v2846 = vclz %v2845
        %v2847 = vsub.s32 %v2846, 2
        %vm2848 = vcmp.gt.s32.totalorder 0, %v2847
        %v2849 = vsel %vm2848, 0, %v2847
        %v2850 = vsub.s32 32, %v2849
        %v2851 = vshll.u32 %v2842, %v2849
        %v2852 = vshrl.u32 %v2834, %v2850
        %v2853 = vor.u32 %v2851, %v2852
        %v2854 = vsub.s32 4294967266, %v2849
        %v2855 = vadd.s32 %v2854, 127
        %v2856 = vshll.u32 %v2855, 23
        %v2857 = vor.u32 4788187, %v2856
        %v2858 = vand.u32 2147483647, %v2857
        %v2860 = vcvt.s32.f32 %v2853
        %v2861 = vmul.f32 %v2860, %v2858
        %v2862 = vxor.u32 %v2861, 2147483648
        %v2863 = vsel %vm2742, %v2862, %v2861
        %v2864 = vsub.s32 4, %v2840
        %v2865 = vsel %vm2742, %v2864, %v2840
        %v2866 = vsel %vm2741, %v1338, %v2863
        %v2867 = vsel %vm2741, 0, %v2865
        %v2868 = vmul.f32 %v2866, %v2866
        %v2869 = vmul.f32 %v2868, -0.001358992
        %v2870 = vadd.f32 %v2869, 0.041655596
        %v2871 = vmul.f32 %v2868, %v2870
        %v2872 = vadd.f32 %v2871, -0.4999988
        %v2873 = vmul.f32 %v2868, %v2872
        %v2874 = vadd.f32 1.0, %v2873
        %v2875 = vmul.f32 %v2866, %v2866
        %v2876 = vmul.f32 %v2875, -0.00019511016
        %v2877 = vadd.f32 %v2876, 0.008332121
        %v2878 = vmul.f32 %v2875, %v2877
        %v2879 = vadd.f32 %v2878, -0.16666654
        %v2880 = vmul.f32 %v2875, %v2879
        %v2881 = vadd.f32 %v2880, 1.0
        %v2882 = vmul.f32 %v2881, %v2866
        %vm2883 = vweird.f32 %v1338
        %v2884 = vadd.s32 %v2867, 3
        %v2885 = vand.u32 %v2884, 3
        %vm2886 = vcmp.lt.s32.totalorder %v2885, 2
        %vm2887 = vcmp.eq.s32.totalorder %v2885, 0
        %v2888 = vxor.u32 %v2882, 2147483648
        %v2889 = vsel %vm2887, %v2874, %v2888
        %vm2890 = vcmp.eq.s32.totalorder %v2885, 2
        %v2891 = vxor.u32 %v2874, 2147483648
        %v2892 = vsel %vm2890, %v2891, %v2882
        %v2893 = vsel %vm2886, %v2889, %v2892
        %v2894 = vsel %vm2883, nan, %v2893
        %v2895 = vand.u32 2147483647, %v1339
        %vm2896 = vcmp.le.f32.partialorder %v2895, 0.7853982
        %vm2897 = vcmp.lt.s32.totalorder %v1339, 0
        %v2898 = vand.u32 %v1339, 2139095040
        %v2899 = vshrl.u32 %v2898, 23
        %v2900 = vsub.s32 %v2899, 127
        %v2901 = vand.u32 2147483647, %v1339
        %v2902 = vand.u32 %v2901, 8388607
        %v2903 = vor.u32 %v2902, 8388608
        %v2904 = vsub.s32 0, %v2903
        %v2905 = vadd.s32 %v2900, 1
        %vm2906 = vcmp.gt.s32.totalorder %v2905, 0
        %v2907 = vsel %vm2906, %v2905, 0
        %v2908 = vshrl.u32 %v2907, 5
        %v2909 = vand.u32 %v2907, 31
        %v2910 = vsub.s32 32, %v2909
        %v2911 = vshrl.u32 683565275, %v2910
        %v2912 = vshll.u32 683565275, %v2909
        %v2913 = vshrl.u32 2475754826, %v2910
        %v2914 = vor.u32 %v2912, %v2913
        %v2915 = vshll.u32 2475754826, %v2909
        %v2916 = vshrl.u32 2131351028, %v2910
        %v2917 = vor.u32 %v2915, %v2916
        %v2918 = vshll.u32 2131351028, %v2909
        %v2919 = vshrl.u32 2102212464, %v2910
        %v2920 = vor.u32 %v2918, %v2919
        %v2921 = vshll.u32 2102212464, %v2909
        %v2922 = vshrl.u32 920167782, %v2910
        %v2923 = vor.u32 %v2921, %v2922
        %v2924 = vshll.u32 920167782, %v2909
        %v2925 = vshrl.u32 1326507024, %v2910
        %v2926 = vor.u32 %v2924, %v2925
        %vm2927 = vcmp.lt.s32.totalorder %v2908, 1
        %vm2928 = vcmp.lt.s32.totalorder %v2908, 2
        %vm2929 = vcmp.lt.s32.totalorder %v2908, 3
        %vm2930 = vcmp.lt.s32.totalorder %v2908, 4
        %v2931 = vsel %vm2927, %v2911, %v2914
        %v2932 = vsel %vm2930, %v2920, 2102212464
        %v2933 = vsel %vm2929, %v2917, %v2932
        %v2934 = vsel %vm2928, %v2931, %v2933
        %v2935 = vsel %vm2927, %v2914, %v2917
        %v2936 = vsel %vm2930, %v2923, 920167782
        %v2937 = vsel %vm2929, %v2920, %v2936
        %v2938 = vsel %vm2928, %v2935, %v2937
        %v2939 = vsel %vm2927, %v2917, %v2920
        %v2940 = vsel %vm2930, %v2926, 1326507024
        %v2941 = vsel %vm2929, %v2923, %v2940
        %v2942 = vsel %vm2928, %v2939, %v2941
        %v2943 = vshll.u32 %v2903, 8
        %v2944 = vand.u32 %v2943, 65535
        %v2945 = vshrl.u32 %v2943, 16
        %v2946 = vand.u32 %v2942, 65535
        %v2947 = vshrl.u32 %v2942, 16
        %v2948 = vmul.u32 %v2944, %v2946
        %v2949 = vmul.u32 %v2944, %v2947
        %v2950 = vmul.u32 %v2945, %v2946
        %v2951 = vmul.u32 %v2945, %v2947
        %v2952 = vshll.u32 %v2949, 16
        %v2953 = vshrl.u32 %v2949, 16
        %v2954 = vshll.u32 %v2950, 16
        %v2955 = vshrl.u32 %v2950, 16
        %vm2956 = vc.u32 %v2948, %v2952
        %v2957 = vsel %vm2956, 1, 0
        %v2958 = vadd.s32 %v2948, %v2952
        %v2959 = vadd.s32 %v2951, %v2957
        %vm2960 = vc.u32 %v2958, %v2954
        %v2961 = vsel %vm2960, 1, 0
        %v2962 = vadd.s32 %v2958, %v2954
        %v2963 = vadd.s32 %v2959, %v2961
        %v2964 = vadd.s32 %v2963, %v2953
        %v2965 = vadd.s32 %v2964, %v2955
        %v2966 = vand.u32 %v2943, 65535
        %v2967 = vshrl.u32 %v2943, 16
        %v2968 = vand.u32 %v2938, 65535
        %v2969 = vshrl.u32 %v2938, 16
        %v2970 = vmul.u32 %v2966, %v2968
        %v2971 = vmul.u32 %v2966, %v2969
        %v2972 = vmul.u32 %v2967, %v2968
        %v2973 = vmul.u32 %v2967, %v2969
        %v2974 = vshll.u32 %v2971, 16
        %v2975 = vshrl.u32 %v2971, 16
        %v2976 = vshll.u32 %v2972, 16
        %v2977 = vshrl.u32 %v2972, 16
        %vm2978 = vc.u32 %v2970, %v2974
        %v2979 = vsel %vm2978, 1, 0
        %v2980 = vadd.s32 %v2970, %v2974
        %v2981 = vadd.s32 %v2973, %v2979
        %vm2982 = vc.u32 %v2980, %v2976
        %v2983 = vsel %vm2982, 1, 0
        %v2984 = vadd.s32 %v2980, %v2976
        %v2985 = vadd.s32 %v2981, %v2983
        %v2986 = vadd.s32 %v2985, %v2975
        %v2987 = vadd.s32 %v2986, %v2977
        %v2988 = vmul.u32 %v2943, %v2934
        %v2989 = vadd.s32 %v2965, %v2984
        %vm2990 = vc.u32 %v2965, %v2984
        %v2991 = vadd.s32 %v2987, 1
        %v2992 = vsel %vm2990, %v2991, %v2987
        %v2993 = vadd.s32 %v2988, %v2992
        %v2994 = vadd.s32 %v2993, 536870912
        %v2995 = vshrl.u32 %v2994, 30
        %v2996 = vshll.u32 %v2995, 30
        %v2997 = vsub.s32 %v2993, %v2996
        %vm2998 = vcmp.lt.s32.totalorder %v2997, 0
        %v2999 = vsub.s32 0, %v2997
        %v3000 = vsel %vm2998, %v2999, %v2997
        %v3001 = vclz %v3000
        %v3002 = vsub.s32 %v3001, 2
        %vm3003 = vcmp.gt.s32.totalorder 0, %v3002
        %v3004 = vsel %vm3003, 0, %v3002
        %v3005 = vsub.s32 32, %v3004
        %v3006 = vshll.u32 %v2997, %v3004
        %v3007 = vshrl.u32 %v2989, %v3005
        %v3008 = vor.u32 %v3006, %v3007
        %v3009 = vsub.s32 4294967266, %v3004
        %v3010 = vadd.s32 %v3009, 127
        %v3011 = vshll.u32 %v3010, 23
        %v3012 = vor.u32 4788187, %v3011
        %v3013 = vand.u32 2147483647, %v3012
        %v3015 = vcvt.s32.f32 %v3008
        %v3016 = vmul.f32 %v3015, %v3013
        %v3017 = vxor.u32 %v3016, 2147483648
        %v3018 = vsel %vm2897, %v3017, %v3016
        %v3019 = vsub.s32 4, %v2995
        %v3020 = vsel %vm2897, %v3019, %v2995
        %v3021 = vsel %vm2896, %v1339, %v3018
        %v3022 = vsel %vm2896, 0, %v3020
        %v3023 = vmul.f32 %v3021, %v3021
        %v3024 = vmul.f32 %v3023, -0.001358992
        %v3025 = vadd.f32 %v3024, 0.041655596
        %v3026 = vmul.f32 %v3023, %v3025
        %v3027 = vadd.f32 %v3026, -0.4999988
        %v3028 = vmul.f32 %v3023, %v3027
        %v3029 = vadd.f32 1.0, %v3028
        %v3030 = vmul.f32 %v3021, %v3021
        %v3031 = vmul.f32 %v3030, -0.00019511016
        %v3032 = vadd.f32 %v3031, 0.008332121
        %v3033 = vmul.f32 %v3030, %v3032
        %v3034 = vadd.f32 %v3033, -0.16666654
        %v3035 = vmul.f32 %v3030, %v3034
        %v3036 = vadd.f32 %v3035, 1.0
        %v3037 = vmul.f32 %v3036, %v3021
        %vm3038 = vweird.f32 %v1339
        %v3039 = vadd.s32 %v3022, 3
        %v3040 = vand.u32 %v3039, 3
        %vm3041 = vcmp.lt.s32.totalorder %v3040, 2
        %vm3042 = vcmp.eq.s32.totalorder %v3040, 0
        %v3043 = vxor.u32 %v3037, 2147483648
        %v3044 = vsel %vm3042, %v3029, %v3043
        %vm3045 = vcmp.eq.s32.totalorder %v3040, 2
        %v3046 = vxor.u32 %v3029, 2147483648
        %v3047 = vsel %vm3045, %v3046, %v3037
        %v3048 = vsel %vm3041, %v3044, %v3047
        %v3049 = vsel %vm3038, nan, %v3048
        %v3050 = vand.u32 2147483647, %v1340
        %vm3051 = vcmp.le.f32.partialorder %v3050, 0.7853982
        %vm3052 = vcmp.lt.s32.totalorder %v1340, 0
        %v3053 = vand.u32 %v1340, 2139095040
        %v3054 = vshrl.u32 %v3053, 23
        %v3055 = vsub.s32 %v3054, 127
        %v3056 = vand.u32 2147483647, %v1340
        %v3057 = vand.u32 %v3056, 8388607
        %v3058 = vor.u32 %v3057, 8388608
        %v3059 = vsub.s32 0, %v3058
        %v3060 = vadd.s32 %v3055, 1
        %vm3061 = vcmp.gt.s32.totalorder %v3060, 0
        %v3062 = vsel %vm3061, %v3060, 0
        %v3063 = vshrl.u32 %v3062, 5
        %v3064 = vand.u32 %v3062, 31
        %v3065 = vsub.s32 32, %v3064
        %v3066 = vshrl.u32 683565275, %v3065
        %v3067 = vshll.u32 683565275, %v3064
        %v3068 = vshrl.u32 2475754826, %v3065
        %v3069 = vor.u32 %v3067, %v3068
        %v3070 = vshll.u32 2475754826, %v3064
        %v3071 = vshrl.u32 2131351028, %v3065
        %v3072 = vor.u32 %v3070, %v3071
        %v3073 = vshll.u32 2131351028, %v3064
        %v3074 = vshrl.u32 2102212464, %v3065
        %v3075 = vor.u32 %v3073, %v3074
        %v3076 = vshll.u32 2102212464, %v3064
        %v3077 = vshrl.u32 920167782, %v3065
        %v3078 = vor.u32 %v3076, %v3077
        %v3079 = vshll.u32 920167782, %v3064
        %v3080 = vshrl.u32 1326507024, %v3065
        %v3081 = vor.u32 %v3079, %v3080
        %vm3082 = vcmp.lt.s32.totalorder %v3063, 1
        %vm3083 = vcmp.lt.s32.totalorder %v3063, 2
        %vm3084 = vcmp.lt.s32.totalorder %v3063, 3
        %vm3085 = vcmp.lt.s32.totalorder %v3063, 4
        %v3086 = vsel %vm3082, %v3066, %v3069
        %v3087 = vsel %vm3085, %v3075, 2102212464
        %v3088 = vsel %vm3084, %v3072, %v3087
        %v3089 = vsel %vm3083, %v3086, %v3088
        %v3090 = vsel %vm3082, %v3069, %v3072
        %v3091 = vsel %vm3085, %v3078, 920167782
        %v3092 = vsel %vm3084, %v3075, %v3091
        %v3093 = vsel %vm3083, %v3090, %v3092
        %v3094 = vsel %vm3082, %v3072, %v3075
        %v3095 = vsel %vm3085, %v3081, 1326507024
        %v3096 = vsel %vm3084, %v3078, %v3095
        %v3097 = vsel %vm3083, %v3094, %v3096
        %v3098 = vshll.u32 %v3058, 8
        %v3099 = vand.u32 %v3098, 65535
        %v3100 = vshrl.u32 %v3098, 16
        %v3101 = vand.u32 %v3097, 65535
        %v3102 = vshrl.u32 %v3097, 16
        %v3103 = vmul.u32 %v3099, %v3101
        %v3104 = vmul.u32 %v3099, %v3102
        %v3105 = vmul.u32 %v3100, %v3101
        %v3106 = vmul.u32 %v3100, %v3102
        %v3107 = vshll.u32 %v3104, 16
        %v3108 = vshrl.u32 %v3104, 16
        %v3109 = vshll.u32 %v3105, 16
        %v3110 = vshrl.u32 %v3105, 16
        %vm3111 = vc.u32 %v3103, %v3107
        %v3112 = vsel %vm3111, 1, 0
        %v3113 = vadd.s32 %v3103, %v3107
        %v3114 = vadd.s32 %v3106, %v3112
        %vm3115 = vc.u32 %v3113, %v3109
        %v3116 = vsel %vm3115, 1, 0
        %v3117 = vadd.s32 %v3113, %v3109
        %v3118 = vadd.s32 %v3114, %v3116
        %v3119 = vadd.s32 %v3118, %v3108
        %v3120 = vadd.s32 %v3119, %v3110
        %v3121 = vand.u32 %v3098, 65535
        %v3122 = vshrl.u32 %v3098, 16
        %v3123 = vand.u32 %v3093, 65535
        %v3124 = vshrl.u32 %v3093, 16
        %v3125 = vmul.u32 %v3121, %v3123
        %v3126 = vmul.u32 %v3121, %v3124
        %v3127 = vmul.u32 %v3122, %v3123
        %v3128 = vmul.u32 %v3122, %v3124
        %v3129 = vshll.u32 %v3126, 16
        %v3130 = vshrl.u32 %v3126, 16
        %v3131 = vshll.u32 %v3127, 16
        %v3132 = vshrl.u32 %v3127, 16
        %vm3133 = vc.u32 %v3125, %v3129
        %v3134 = vsel %vm3133, 1, 0
        %v3135 = vadd.s32 %v3125, %v3129
        %v3136 = vadd.s32 %v3128, %v3134
        %vm3137 = vc.u32 %v3135, %v3131
        %v3138 = vsel %vm3137, 1, 0
        %v3139 = vadd.s32 %v3135, %v3131
        %v3140 = vadd.s32 %v3136, %v3138
        %v3141 = vadd.s32 %v3140, %v3130
        %v3142 = vadd.s32 %v3141, %v3132
        %v3143 = vmul.u32 %v3098, %v3089
        %v3144 = vadd.s32 %v3120, %v3139
        %vm3145 = vc.u32 %v3120, %v3139
        %v3146 = vadd.s32 %v3142, 1
        %v3147 = vsel %vm3145, %v3146, %v3142
        %v3148 = vadd.s32 %v3143, %v3147
        %v3149 = vadd.s32 %v3148, 536870912
        %v3150 = vshrl.u32 %v3149, 30
        %v3151 = vshll.u32 %v3150, 30
        %v3152 = vsub.s32 %v3148, %v3151
        %vm3153 = vcmp.lt.s32.totalorder %v3152, 0
        %v3154 = vsub.s32 0, %v3152
        %v3155 = vsel %vm3153, %v3154, %v3152
        %v3156 = vclz %v3155
        %v3157 = vsub.s32 %v3156, 2
        %vm3158 = vcmp.gt.s32.totalorder 0, %v3157
        %v3159 = vsel %vm3158, 0, %v3157
        %v3160 = vsub.s32 32, %v3159
        %v3161 = vshll.u32 %v3152, %v3159
        %v3162 = vshrl.u32 %v3144, %v3160
        %v3163 = vor.u32 %v3161, %v3162
        %v3164 = vsub.s32 4294967266, %v3159
        %v3165 = vadd.s32 %v3164, 127
        %v3166 = vshll.u32 %v3165, 23
        %v3167 = vor.u32 4788187, %v3166
        %v3168 = vand.u32 2147483647, %v3167
        %v3170 = vcvt.s32.f32 %v3163
        %v3171 = vmul.f32 %v3170, %v3168
        %v3172 = vxor.u32 %v3171, 2147483648
        %v3173 = vsel %vm3052, %v3172, %v3171
        %v3174 = vsub.s32 4, %v3150
        %v3175 = vsel %vm3052, %v3174, %v3150
        %v3176 = vsel %vm3051, %v1340, %v3173
        %v3177 = vsel %vm3051, 0, %v3175
        %v3178 = vmul.f32 %v3176, %v3176
        %v3179 = vmul.f32 %v3178, -0.001358992
        %v3180 = vadd.f32 %v3179, 0.041655596
        %v3181 = vmul.f32 %v3178, %v3180
        %v3182 = vadd.f32 %v3181, -0.4999988
        %v3183 = vmul.f32 %v3178, %v3182
        %v3184 = vadd.f32 1.0, %v3183
        %v3185 = vmul.f32 %v3176, %v3176
        %v3186 = vmul.f32 %v3185, -0.00019511016
        %v3187 = vadd.f32 %v3186, 0.008332121
        %v3188 = vmul.f32 %v3185, %v3187
        %v3189 = vadd.f32 %v3188, -0.16666654
        %v3190 = vmul.f32 %v3185, %v3189
        %v3191 = vadd.f32 %v3190, 1.0
        %v3192 = vmul.f32 %v3191, %v3176
        %vm3193 = vweird.f32 %v1340
        %v3194 = vadd.s32 %v3177, 3
        %v3195 = vand.u32 %v3194, 3
        %vm3196 = vcmp.lt.s32.totalorder %v3195, 2
        %vm3197 = vcmp.eq.s32.totalorder %v3195, 0
        %v3198 = vxor.u32 %v3192, 2147483648
        %v3199 = vsel %vm3197, %v3184, %v3198
        %vm3200 = vcmp.eq.s32.totalorder %v3195, 2
        %v3201 = vxor.u32 %v3184, 2147483648
        %v3202 = vsel %vm3200, %v3201, %v3192
        %v3203 = vsel %vm3196, %v3199, %v3202
        %v3204 = vsel %vm3193, nan, %v3203
        %v3205 = vand.u32 2147483647, %v1341
        %vm3206 = vcmp.le.f32.partialorder %v3205, 0.7853982
        %vm3207 = vcmp.lt.s32.totalorder %v1341, 0
        %v3208 = vand.u32 %v1341, 2139095040
        %v3209 = vshrl.u32 %v3208, 23
        %v3210 = vsub.s32 %v3209, 127
        %v3211 = vand.u32 2147483647, %v1341
        %v3212 = vand.u32 %v3211, 8388607
        %v3213 = vor.u32 %v3212, 8388608
        %v3214 = vsub.s32 0, %v3213
        %v3215 = vadd.s32 %v3210, 1
        %vm3216 = vcmp.gt.s32.totalorder %v3215, 0
        %v3217 = vsel %vm3216, %v3215, 0
        %v3218 = vshrl.u32 %v3217, 5
        %v3219 = vand.u32 %v3217, 31
        %v3220 = vsub.s32 32, %v3219
        %v3221 = vshrl.u32 683565275, %v3220
        %v3222 = vshll.u32 683565275, %v3219
        %v3223 = vshrl.u32 2475754826, %v3220
        %v3224 = vor.u32 %v3222, %v3223
        %v3225 = vshll.u32 2475754826, %v3219
        %v3226 = vshrl.u32 2131351028, %v3220
        %v3227 = vor.u32 %v3225, %v3226
        %v3228 = vshll.u32 2131351028, %v3219
        %v3229 = vshrl.u32 2102212464, %v3220
        %v3230 = vor.u32 %v3228, %v3229
        %v3231 = vshll.u32 2102212464, %v3219
        %v3232 = vshrl.u32 920167782, %v3220
        %v3233 = vor.u32 %v3231, %v3232
        %v3234 = vshll.u32 920167782, %v3219
        %v3235 = vshrl.u32 1326507024, %v3220
        %v3236 = vor.u32 %v3234, %v3235
        %vm3237 = vcmp.lt.s32.totalorder %v3218, 1
        %vm3238 = vcmp.lt.s32.totalorder %v3218, 2
        %vm3239 = vcmp.lt.s32.totalorder %v3218, 3
        %vm3240 = vcmp.lt.s32.totalorder %v3218, 4
        %v3241 = vsel %vm3237, %v3221, %v3224
        %v3242 = vsel %vm3240, %v3230, 2102212464
        %v3243 = vsel %vm3239, %v3227, %v3242
        %v3244 = vsel %vm3238, %v3241, %v3243
        %v3245 = vsel %vm3237, %v3224, %v3227
        %v3246 = vsel %vm3240, %v3233, 920167782
        %v3247 = vsel %vm3239, %v3230, %v3246
        %v3248 = vsel %vm3238, %v3245, %v3247
        %v3249 = vsel %vm3237, %v3227, %v3230
        %v3250 = vsel %vm3240, %v3236, 1326507024
        %v3251 = vsel %vm3239, %v3233, %v3250
        %v3252 = vsel %vm3238, %v3249, %v3251
        %v3253 = vshll.u32 %v3213, 8
        %v3254 = vand.u32 %v3253, 65535
        %v3255 = vshrl.u32 %v3253, 16
        %v3256 = vand.u32 %v3252, 65535
        %v3257 = vshrl.u32 %v3252, 16
        %v3258 = vmul.u32 %v3254, %v3256
        %v3259 = vmul.u32 %v3254, %v3257
        %v3260 = vmul.u32 %v3255, %v3256
        %v3261 = vmul.u32 %v3255, %v3257
        %v3262 = vshll.u32 %v3259, 16
        %v3263 = vshrl.u32 %v3259, 16
        %v3264 = vshll.u32 %v3260, 16
        %v3265 = vshrl.u32 %v3260, 16
        %vm3266 = vc.u32 %v3258, %v3262
        %v3267 = vsel %vm3266, 1, 0
        %v3268 = vadd.s32 %v3258, %v3262
        %v3269 = vadd.s32 %v3261, %v3267
        %vm3270 = vc.u32 %v3268, %v3264
        %v3271 = vsel %vm3270, 1, 0
        %v3272 = vadd.s32 %v3268, %v3264
        %v3273 = vadd.s32 %v3269, %v3271
        %v3274 = vadd.s32 %v3273, %v3263
        %v3275 = vadd.s32 %v3274, %v3265
        %v3276 = vand.u32 %v3253, 65535
        %v3277 = vshrl.u32 %v3253, 16
        %v3278 = vand.u32 %v3248, 65535
        %v3279 = vshrl.u32 %v3248, 16
        %v3280 = vmul.u32 %v3276, %v3278
        %v3281 = vmul.u32 %v3276, %v3279
        %v3282 = vmul.u32 %v3277, %v3278
        %v3283 = vmul.u32 %v3277, %v3279
        %v3284 = vshll.u32 %v3281, 16
        %v3285 = vshrl.u32 %v3281, 16
        %v3286 = vshll.u32 %v3282, 16
        %v3287 = vshrl.u32 %v3282, 16
        %vm3288 = vc.u32 %v3280, %v3284
        %v3289 = vsel %vm3288, 1, 0
        %v3290 = vadd.s32 %v3280, %v3284
        %v3291 = vadd.s32 %v3283, %v3289
        %vm3292 = vc.u32 %v3290, %v3286
        %v3293 = vsel %vm3292, 1, 0
        %v3294 = vadd.s32 %v3290, %v3286
        %v3295 = vadd.s32 %v3291, %v3293
        %v3296 = vadd.s32 %v3295, %v3285
        %v3297 = vadd.s32 %v3296, %v3287
        %v3298 = vmul.u32 %v3253, %v3244
        %v3299 = vadd.s32 %v3275, %v3294
        %vm3300 = vc.u32 %v3275, %v3294
        %v3301 = vadd.s32 %v3297, 1
        %v3302 = vsel %vm3300, %v3301, %v3297
        %v3303 = vadd.s32 %v3298, %v3302
        %v3304 = vadd.s32 %v3303, 536870912
        %v3305 = vshrl.u32 %v3304, 30
        %v3306 = vshll.u32 %v3305, 30
        %v3307 = vsub.s32 %v3303, %v3306
        %vm3308 = vcmp.lt.s32.totalorder %v3307, 0
        %v3309 = vsub.s32 0, %v3307
        %v3310 = vsel %vm3308, %v3309, %v3307
        %v3311 = vclz %v3310
        %v3312 = vsub.s32 %v3311, 2
        %vm3313 = vcmp.gt.s32.totalorder 0, %v3312
        %v3314 = vsel %vm3313, 0, %v3312
        %v3315 = vsub.s32 32, %v3314
        %v3316 = vshll.u32 %v3307, %v3314
        %v3317 = vshrl.u32 %v3299, %v3315
        %v3318 = vor.u32 %v3316, %v3317
        %v3319 = vsub.s32 4294967266, %v3314
        %v3320 = vadd.s32 %v3319, 127
        %v3321 = vshll.u32 %v3320, 23
        %v3322 = vor.u32 4788187, %v3321
        %v3323 = vand.u32 2147483647, %v3322
        %v3325 = vcvt.s32.f32 %v3318
        %v3326 = vmul.f32 %v3325, %v3323
        %v3327 = vxor.u32 %v3326, 2147483648
        %v3328 = vsel %vm3207, %v3327, %v3326
        %v3329 = vsub.s32 4, %v3305
        %v3330 = vsel %vm3207, %v3329, %v3305
        %v3331 = vsel %vm3206, %v1341, %v3328
        %v3332 = vsel %vm3206, 0, %v3330
        %v3333 = vmul.f32 %v3331, %v3331
        %v3334 = vmul.f32 %v3333, -0.001358992
        %v3335 = vadd.f32 %v3334, 0.041655596
        %v3336 = vmul.f32 %v3333, %v3335
        %v3337 = vadd.f32 %v3336, -0.4999988
        %v3338 = vmul.f32 %v3333, %v3337
        %v3339 = vadd.f32 1.0, %v3338
        %v3340 = vmul.f32 %v3331, %v3331
        %v3341 = vmul.f32 %v3340, -0.00019511016
        %v3342 = vadd.f32 %v3341, 0.008332121
        %v3343 = vmul.f32 %v3340, %v3342
        %v3344 = vadd.f32 %v3343, -0.16666654
        %v3345 = vmul.f32 %v3340, %v3344
        %v3346 = vadd.f32 %v3345, 1.0
        %v3347 = vmul.f32 %v3346, %v3331
        %vm3348 = vweird.f32 %v1341
        %v3349 = vadd.s32 %v3332, 3
        %v3350 = vand.u32 %v3349, 3
        %vm3351 = vcmp.lt.s32.totalorder %v3350, 2
        %vm3352 = vcmp.eq.s32.totalorder %v3350, 0
        %v3353 = vxor.u32 %v3347, 2147483648
        %v3354 = vsel %vm3352, %v3339, %v3353
        %vm3355 = vcmp.eq.s32.totalorder %v3350, 2
        %v3356 = vxor.u32 %v3339, 2147483648
        %v3357 = vsel %vm3355, %v3356, %v3347
        %v3358 = vsel %vm3351, %v3354, %v3357
        %v3359 = vsel %vm3348, nan, %v3358
        %v3360 = vand.u32 2147483647, %v1342
        %vm3361 = vcmp.le.f32.partialorder %v3360, 0.7853982
        %vm3362 = vcmp.lt.s32.totalorder %v1342, 0
        %v3363 = vand.u32 %v1342, 2139095040
        %v3364 = vshrl.u32 %v3363, 23
        %v3365 = vsub.s32 %v3364, 127
        %v3366 = vand.u32 2147483647, %v1342
        %v3367 = vand.u32 %v3366, 8388607
        %v3368 = vor.u32 %v3367, 8388608
        %v3369 = vsub.s32 0, %v3368
        %v3370 = vadd.s32 %v3365, 1
        %vm3371 = vcmp.gt.s32.totalorder %v3370, 0
        %v3372 = vsel %vm3371, %v3370, 0
        %v3373 = vshrl.u32 %v3372, 5
        %v3374 = vand.u32 %v3372, 31
        %v3375 = vsub.s32 32, %v3374
        %v3376 = vshrl.u32 683565275, %v3375
        %v3377 = vshll.u32 683565275, %v3374
        %v3378 = vshrl.u32 2475754826, %v3375
        %v3379 = vor.u32 %v3377, %v3378
        %v3380 = vshll.u32 2475754826, %v3374
        %v3381 = vshrl.u32 2131351028, %v3375
        %v3382 = vor.u32 %v3380, %v3381
        %v3383 = vshll.u32 2131351028, %v3374
        %v3384 = vshrl.u32 2102212464, %v3375
        %v3385 = vor.u32 %v3383, %v3384
        %v3386 = vshll.u32 2102212464, %v3374
        %v3387 = vshrl.u32 920167782, %v3375
        %v3388 = vor.u32 %v3386, %v3387
        %v3389 = vshll.u32 920167782, %v3374
        %v3390 = vshrl.u32 1326507024, %v3375
        %v3391 = vor.u32 %v3389, %v3390
        %vm3392 = vcmp.lt.s32.totalorder %v3373, 1
        %vm3393 = vcmp.lt.s32.totalorder %v3373, 2
        %vm3394 = vcmp.lt.s32.totalorder %v3373, 3
        %vm3395 = vcmp.lt.s32.totalorder %v3373, 4
        %v3396 = vsel %vm3392, %v3376, %v3379
        %v3397 = vsel %vm3395, %v3385, 2102212464
        %v3398 = vsel %vm3394, %v3382, %v3397
        %v3399 = vsel %vm3393, %v3396, %v3398
        %v3400 = vsel %vm3392, %v3379, %v3382
        %v3401 = vsel %vm3395, %v3388, 920167782
        %v3402 = vsel %vm3394, %v3385, %v3401
        %v3403 = vsel %vm3393, %v3400, %v3402
        %v3404 = vsel %vm3392, %v3382, %v3385
        %v3405 = vsel %vm3395, %v3391, 1326507024
        %v3406 = vsel %vm3394, %v3388, %v3405
        %v3407 = vsel %vm3393, %v3404, %v3406
        %v3408 = vshll.u32 %v3368, 8
        %v3409 = vand.u32 %v3408, 65535
        %v3410 = vshrl.u32 %v3408, 16
        %v3411 = vand.u32 %v3407, 65535
        %v3412 = vshrl.u32 %v3407, 16
        %v3413 = vmul.u32 %v3409, %v3411
        %v3414 = vmul.u32 %v3409, %v3412
        %v3415 = vmul.u32 %v3410, %v3411
        %v3416 = vmul.u32 %v3410, %v3412
        %v3417 = vshll.u32 %v3414, 16
        %v3418 = vshrl.u32 %v3414, 16
        %v3419 = vshll.u32 %v3415, 16
        %v3420 = vshrl.u32 %v3415, 16
        %vm3421 = vc.u32 %v3413, %v3417
        %v3422 = vsel %vm3421, 1, 0
        %v3423 = vadd.s32 %v3413, %v3417
        %v3424 = vadd.s32 %v3416, %v3422
        %vm3425 = vc.u32 %v3423, %v3419
        %v3426 = vsel %vm3425, 1, 0
        %v3427 = vadd.s32 %v3423, %v3419
        %v3428 = vadd.s32 %v3424, %v3426
        %v3429 = vadd.s32 %v3428, %v3418
        %v3430 = vadd.s32 %v3429, %v3420
        %v3431 = vand.u32 %v3408, 65535
        %v3432 = vshrl.u32 %v3408, 16
        %v3433 = vand.u32 %v3403, 65535
        %v3434 = vshrl.u32 %v3403, 16
        %v3435 = vmul.u32 %v3431, %v3433
        %v3436 = vmul.u32 %v3431, %v3434
        %v3437 = vmul.u32 %v3432, %v3433
        %v3438 = vmul.u32 %v3432, %v3434
        %v3439 = vshll.u32 %v3436, 16
        %v3440 = vshrl.u32 %v3436, 16
        %v3441 = vshll.u32 %v3437, 16
        %v3442 = vshrl.u32 %v3437, 16
        %vm3443 = vc.u32 %v3435, %v3439
        %v3444 = vsel %vm3443, 1, 0
        %v3445 = vadd.s32 %v3435, %v3439
        %v3446 = vadd.s32 %v3438, %v3444
        %vm3447 = vc.u32 %v3445, %v3441
        %v3448 = vsel %vm3447, 1, 0
        %v3449 = vadd.s32 %v3445, %v3441
        %v3450 = vadd.s32 %v3446, %v3448
        %v3451 = vadd.s32 %v3450, %v3440
        %v3452 = vadd.s32 %v3451, %v3442
        %v3453 = vmul.u32 %v3408, %v3399
        %v3454 = vadd.s32 %v3430, %v3449
        %vm3455 = vc.u32 %v3430, %v3449
        %v3456 = vadd.s32 %v3452, 1
        %v3457 = vsel %vm3455, %v3456, %v3452
        %v3458 = vadd.s32 %v3453, %v3457
        %v3459 = vadd.s32 %v3458, 536870912
        %v3460 = vshrl.u32 %v3459, 30
        %v3461 = vshll.u32 %v3460, 30
        %v3462 = vsub.s32 %v3458, %v3461
        %vm3463 = vcmp.lt.s32.totalorder %v3462, 0
        %v3464 = vsub.s32 0, %v3462
        %v3465 = vsel %vm3463, %v3464, %v3462
        %v3466 = vclz %v3465
        %v3467 = vsub.s32 %v3466, 2
        %vm3468 = vcmp.gt.s32.totalorder 0, %v3467
        %v3469 = vsel %vm3468, 0, %v3467
        %v3470 = vsub.s32 32, %v3469
        %v3471 = vshll.u32 %v3462, %v3469
        %v3472 = vshrl.u32 %v3454, %v3470
        %v3473 = vor.u32 %v3471, %v3472
        %v3474 = vsub.s32 4294967266, %v3469
        %v3475 = vadd.s32 %v3474, 127
        %v3476 = vshll.u32 %v3475, 23
        %v3477 = vor.u32 4788187, %v3476
        %v3478 = vand.u32 2147483647, %v3477
        %v3480 = vcvt.s32.f32 %v3473
        %v3481 = vmul.f32 %v3480, %v3478
        %v3482 = vxor.u32 %v3481, 2147483648
        %v3483 = vsel %vm3362, %v3482, %v3481
        %v3484 = vsub.s32 4, %v3460
        %v3485 = vsel %vm3362, %v3484, %v3460
        %v3486 = vsel %vm3361, %v1342, %v3483
        %v3487 = vsel %vm3361, 0, %v3485
        %v3488 = vmul.f32 %v3486, %v3486
        %v3489 = vmul.f32 %v3488, -0.001358992
        %v3490 = vadd.f32 %v3489, 0.041655596
        %v3491 = vmul.f32 %v3488, %v3490
        %v3492 = vadd.f32 %v3491, -0.4999988
        %v3493 = vmul.f32 %v3488, %v3492
        %v3494 = vadd.f32 1.0, %v3493
        %v3495 = vmul.f32 %v3486, %v3486
        %v3496 = vmul.f32 %v3495, -0.00019511016
        %v3497 = vadd.f32 %v3496, 0.008332121
        %v3498 = vmul.f32 %v3495, %v3497
        %v3499 = vadd.f32 %v3498, -0.16666654
        %v3500 = vmul.f32 %v3495, %v3499
        %v3501 = vadd.f32 %v3500, 1.0
        %v3502 = vmul.f32 %v3501, %v3486
        %vm3503 = vweird.f32 %v1342
        %v3504 = vadd.s32 %v3487, 3
        %v3505 = vand.u32 %v3504, 3
        %vm3506 = vcmp.lt.s32.totalorder %v3505, 2
        %vm3507 = vcmp.eq.s32.totalorder %v3505, 0
        %v3508 = vxor.u32 %v3502, 2147483648
        %v3509 = vsel %vm3507, %v3494, %v3508
        %vm3510 = vcmp.eq.s32.totalorder %v3505, 2
        %v3511 = vxor.u32 %v3494, 2147483648
        %v3512 = vsel %vm3510, %v3511, %v3502
        %v3513 = vsel %vm3506, %v3509, %v3512
        %v3514 = vsel %vm3503, nan, %v3513
        %v3515 = vand.u32 2147483647, %v1343
        %vm3516 = vcmp.le.f32.partialorder %v3515, 0.7853982
        %vm3517 = vcmp.lt.s32.totalorder %v1343, 0
        %v3518 = vand.u32 %v1343, 2139095040
        %v3519 = vshrl.u32 %v3518, 23
        %v3520 = vsub.s32 %v3519, 127
        %v3521 = vand.u32 2147483647, %v1343
        %v3522 = vand.u32 %v3521, 8388607
        %v3523 = vor.u32 %v3522, 8388608
        %v3524 = vsub.s32 0, %v3523
        %v3525 = vadd.s32 %v3520, 1
        %vm3526 = vcmp.gt.s32.totalorder %v3525, 0
        %v3527 = vsel %vm3526, %v3525, 0
        %v3528 = vshrl.u32 %v3527, 5
        %v3529 = vand.u32 %v3527, 31
        %v3530 = vsub.s32 32, %v3529
        %v3531 = vshrl.u32 683565275, %v3530
        %v3532 = vshll.u32 683565275, %v3529
        %v3533 = vshrl.u32 2475754826, %v3530
        %v3534 = vor.u32 %v3532, %v3533
        %v3535 = vshll.u32 2475754826, %v3529
        %v3536 = vshrl.u32 2131351028, %v3530
        %v3537 = vor.u32 %v3535, %v3536
        %v3538 = vshll.u32 2131351028, %v3529
        %v3539 = vshrl.u32 2102212464, %v3530
        %v3540 = vor.u32 %v3538, %v3539
        %v3541 = vshll.u32 2102212464, %v3529
        %v3542 = vshrl.u32 920167782, %v3530
        %v3543 = vor.u32 %v3541, %v3542
        %v3544 = vshll.u32 920167782, %v3529
        %v3545 = vshrl.u32 1326507024, %v3530
        %v3546 = vor.u32 %v3544, %v3545
        %vm3547 = vcmp.lt.s32.totalorder %v3528, 1
        %vm3548 = vcmp.lt.s32.totalorder %v3528, 2
        %vm3549 = vcmp.lt.s32.totalorder %v3528, 3
        %vm3550 = vcmp.lt.s32.totalorder %v3528, 4
        %v3551 = vsel %vm3547, %v3531, %v3534
        %v3552 = vsel %vm3550, %v3540, 2102212464
        %v3553 = vsel %vm3549, %v3537, %v3552
        %v3554 = vsel %vm3548, %v3551, %v3553
        %v3555 = vsel %vm3547, %v3534, %v3537
        %v3556 = vsel %vm3550, %v3543, 920167782
        %v3557 = vsel %vm3549, %v3540, %v3556
        %v3558 = vsel %vm3548, %v3555, %v3557
        %v3559 = vsel %vm3547, %v3537, %v3540
        %v3560 = vsel %vm3550, %v3546, 1326507024
        %v3561 = vsel %vm3549, %v3543, %v3560
        %v3562 = vsel %vm3548, %v3559, %v3561
        %v3563 = vshll.u32 %v3523, 8
        %v3564 = vand.u32 %v3563, 65535
        %v3565 = vshrl.u32 %v3563, 16
        %v3566 = vand.u32 %v3562, 65535
        %v3567 = vshrl.u32 %v3562, 16
        %v3568 = vmul.u32 %v3564, %v3566
        %v3569 = vmul.u32 %v3564, %v3567
        %v3570 = vmul.u32 %v3565, %v3566
        %v3571 = vmul.u32 %v3565, %v3567
        %v3572 = vshll.u32 %v3569, 16
        %v3573 = vshrl.u32 %v3569, 16
        %v3574 = vshll.u32 %v3570, 16
        %v3575 = vshrl.u32 %v3570, 16
        %vm3576 = vc.u32 %v3568, %v3572
        %v3577 = vsel %vm3576, 1, 0
        %v3578 = vadd.s32 %v3568, %v3572
        %v3579 = vadd.s32 %v3571, %v3577
        %vm3580 = vc.u32 %v3578, %v3574
        %v3581 = vsel %vm3580, 1, 0
        %v3582 = vadd.s32 %v3578, %v3574
        %v3583 = vadd.s32 %v3579, %v3581
        %v3584 = vadd.s32 %v3583, %v3573
        %v3585 = vadd.s32 %v3584, %v3575
        %v3586 = vand.u32 %v3563, 65535
        %v3587 = vshrl.u32 %v3563, 16
        %v3588 = vand.u32 %v3558, 65535
        %v3589 = vshrl.u32 %v3558, 16
        %v3590 = vmul.u32 %v3586, %v3588
        %v3591 = vmul.u32 %v3586, %v3589
        %v3592 = vmul.u32 %v3587, %v3588
        %v3593 = vmul.u32 %v3587, %v3589
        %v3594 = vshll.u32 %v3591, 16
        %v3595 = vshrl.u32 %v3591, 16
        %v3596 = vshll.u32 %v3592, 16
        %v3597 = vshrl.u32 %v3592, 16
        %vm3598 = vc.u32 %v3590, %v3594
        %v3599 = vsel %vm3598, 1, 0
        %v3600 = vadd.s32 %v3590, %v3594
        %v3601 = vadd.s32 %v3593, %v3599
        %vm3602 = vc.u32 %v3600, %v3596
        %v3603 = vsel %vm3602, 1, 0
        %v3604 = vadd.s32 %v3600, %v3596
        %v3605 = vadd.s32 %v3601, %v3603
        %v3606 = vadd.s32 %v3605, %v3595
        %v3607 = vadd.s32 %v3606, %v3597
        %v3608 = vmul.u32 %v3563, %v3554
        %v3609 = vadd.s32 %v3585, %v3604
        %vm3610 = vc.u32 %v3585, %v3604
        %v3611 = vadd.s32 %v3607, 1
        %v3612 = vsel %vm3610, %v3611, %v3607
        %v3613 = vadd.s32 %v3608, %v3612
        %v3614 = vadd.s32 %v3613, 536870912
        %v3615 = vshrl.u32 %v3614, 30
        %v3616 = vshll.u32 %v3615, 30
        %v3617 = vsub.s32 %v3613, %v3616
        %vm3618 = vcmp.lt.s32.totalorder %v3617, 0
        %v3619 = vsub.s32 0, %v3617
        %v3620 = vsel %vm3618, %v3619, %v3617
        %v3621 = vclz %v3620
        %v3622 = vsub.s32 %v3621, 2
        %vm3623 = vcmp.gt.s32.totalorder 0, %v3622
        %v3624 = vsel %vm3623, 0, %v3622
        %v3625 = vsub.s32 32, %v3624
        %v3626 = vshll.u32 %v3617, %v3624
        %v3627 = vshrl.u32 %v3609, %v3625
        %v3628 = vor.u32 %v3626, %v3627
        %v3629 = vsub.s32 4294967266, %v3624
        %v3630 = vadd.s32 %v3629, 127
        %v3631 = vshll.u32 %v3630, 23
        %v3632 = vor.u32 4788187, %v3631
        %v3633 = vand.u32 2147483647, %v3632
        %v3635 = vcvt.s32.f32 %v3628
        %v3636 = vmul.f32 %v3635, %v3633
        %v3637 = vxor.u32 %v3636, 2147483648
        %v3638 = vsel %vm3517, %v3637, %v3636
        %v3639 = vsub.s32 4, %v3615
        %v3640 = vsel %vm3517, %v3639, %v3615
        %v3641 = vsel %vm3516, %v1343, %v3638
        %v3642 = vsel %vm3516, 0, %v3640
        %v3643 = vmul.f32 %v3641, %v3641
        %v3644 = vmul.f32 %v3643, -0.001358992
        %v3645 = vadd.f32 %v3644, 0.041655596
        %v3646 = vmul.f32 %v3643, %v3645
        %v3647 = vadd.f32 %v3646, -0.4999988
        %v3648 = vmul.f32 %v3643, %v3647
        %v3649 = vadd.f32 1.0, %v3648
        %v3650 = vmul.f32 %v3641, %v3641
        %v3651 = vmul.f32 %v3650, -0.00019511016
        %v3652 = vadd.f32 %v3651, 0.008332121
        %v3653 = vmul.f32 %v3650, %v3652
        %v3654 = vadd.f32 %v3653, -0.16666654
        %v3655 = vmul.f32 %v3650, %v3654
        %v3656 = vadd.f32 %v3655, 1.0
        %v3657 = vmul.f32 %v3656, %v3641
        %vm3658 = vweird.f32 %v1343
        %v3659 = vadd.s32 %v3642, 3
        %v3660 = vand.u32 %v3659, 3
        %vm3661 = vcmp.lt.s32.totalorder %v3660, 2
        %vm3662 = vcmp.eq.s32.totalorder %v3660, 0
        %v3663 = vxor.u32 %v3657, 2147483648
        %v3664 = vsel %vm3662, %v3649, %v3663
        %vm3665 = vcmp.eq.s32.totalorder %v3660, 2
        %v3666 = vxor.u32 %v3649, 2147483648
        %v3667 = vsel %vm3665, %v3666, %v3657
        %v3668 = vsel %vm3661, %v3664, %v3667
        %v3669 = vsel %vm3658, nan, %v3668
        %v3670 = vand.u32 2147483647, %v1344
        %vm3671 = vcmp.le.f32.partialorder %v3670, 0.7853982
        %vm3672 = vcmp.lt.s32.totalorder %v1344, 0
        %v3673 = vand.u32 %v1344, 2139095040
        %v3674 = vshrl.u32 %v3673, 23
        %v3675 = vsub.s32 %v3674, 127
        %v3676 = vand.u32 2147483647, %v1344
        %v3677 = vand.u32 %v3676, 8388607
        %v3678 = vor.u32 %v3677, 8388608
        %v3679 = vsub.s32 0, %v3678
        %v3680 = vadd.s32 %v3675, 1
        %vm3681 = vcmp.gt.s32.totalorder %v3680, 0
        %v3682 = vsel %vm3681, %v3680, 0
        %v3683 = vshrl.u32 %v3682, 5
        %v3684 = vand.u32 %v3682, 31
        %v3685 = vsub.s32 32, %v3684
        %v3686 = vshrl.u32 683565275, %v3685
        %v3687 = vshll.u32 683565275, %v3684
        %v3688 = vshrl.u32 2475754826, %v3685
        %v3689 = vor.u32 %v3687, %v3688
        %v3690 = vshll.u32 2475754826, %v3684
        %v3691 = vshrl.u32 2131351028, %v3685
        %v3692 = vor.u32 %v3690, %v3691
        %v3693 = vshll.u32 2131351028, %v3684
        %v3694 = vshrl.u32 2102212464, %v3685
        %v3695 = vor.u32 %v3693, %v3694
        %v3696 = vshll.u32 2102212464, %v3684
        %v3697 = vshrl.u32 920167782, %v3685
        %v3698 = vor.u32 %v3696, %v3697
        %v3699 = vshll.u32 920167782, %v3684
        %v3700 = vshrl.u32 1326507024, %v3685
        %v3701 = vor.u32 %v3699, %v3700
        %vm3702 = vcmp.lt.s32.totalorder %v3683, 1
        %vm3703 = vcmp.lt.s32.totalorder %v3683, 2
        %vm3704 = vcmp.lt.s32.totalorder %v3683, 3
        %vm3705 = vcmp.lt.s32.totalorder %v3683, 4
        %v3706 = vsel %vm3702, %v3686, %v3689
        %v3707 = vsel %vm3705, %v3695, 2102212464
        %v3708 = vsel %vm3704, %v3692, %v3707
        %v3709 = vsel %vm3703, %v3706, %v3708
        %v3710 = vsel %vm3702, %v3689, %v3692
        %v3711 = vsel %vm3705, %v3698, 920167782
        %v3712 = vsel %vm3704, %v3695, %v3711
        %v3713 = vsel %vm3703, %v3710, %v3712
        %v3714 = vsel %vm3702, %v3692, %v3695
        %v3715 = vsel %vm3705, %v3701, 1326507024
        %v3716 = vsel %vm3704, %v3698, %v3715
        %v3717 = vsel %vm3703, %v3714, %v3716
        %v3718 = vshll.u32 %v3678, 8
        %v3719 = vand.u32 %v3718, 65535
        %v3720 = vshrl.u32 %v3718, 16
        %v3721 = vand.u32 %v3717, 65535
        %v3722 = vshrl.u32 %v3717, 16
        %v3723 = vmul.u32 %v3719, %v3721
        %v3724 = vmul.u32 %v3719, %v3722
        %v3725 = vmul.u32 %v3720, %v3721
        %v3726 = vmul.u32 %v3720, %v3722
        %v3727 = vshll.u32 %v3724, 16
        %v3728 = vshrl.u32 %v3724, 16
        %v3729 = vshll.u32 %v3725, 16
        %v3730 = vshrl.u32 %v3725, 16
        %vm3731 = vc.u32 %v3723, %v3727
        %v3732 = vsel %vm3731, 1, 0
        %v3733 = vadd.s32 %v3723, %v3727
        %v3734 = vadd.s32 %v3726, %v3732
        %vm3735 = vc.u32 %v3733, %v3729
        %v3736 = vsel %vm3735, 1, 0
        %v3737 = vadd.s32 %v3733, %v3729
        %v3738 = vadd.s32 %v3734, %v3736
        %v3739 = vadd.s32 %v3738, %v3728
        %v3740 = vadd.s32 %v3739, %v3730
        %v3741 = vand.u32 %v3718, 65535
        %v3742 = vshrl.u32 %v3718, 16
        %v3743 = vand.u32 %v3713, 65535
        %v3744 = vshrl.u32 %v3713, 16
        %v3745 = vmul.u32 %v3741, %v3743
        %v3746 = vmul.u32 %v3741, %v3744
        %v3747 = vmul.u32 %v3742, %v3743
        %v3748 = vmul.u32 %v3742, %v3744
        %v3749 = vshll.u32 %v3746, 16
        %v3750 = vshrl.u32 %v3746, 16
        %v3751 = vshll.u32 %v3747, 16
        %v3752 = vshrl.u32 %v3747, 16
        %vm3753 = vc.u32 %v3745, %v3749
        %v3754 = vsel %vm3753, 1, 0
        %v3755 = vadd.s32 %v3745, %v3749
        %v3756 = vadd.s32 %v3748, %v3754
        %vm3757 = vc.u32 %v3755, %v3751
        %v3758 = vsel %vm3757, 1, 0
        %v3759 = vadd.s32 %v3755, %v3751
        %v3760 = vadd.s32 %v3756, %v3758
        %v3761 = vadd.s32 %v3760, %v3750
        %v3762 = vadd.s32 %v3761, %v3752
        %v3763 = vmul.u32 %v3718, %v3709
        %v3764 = vadd.s32 %v3740, %v3759
        %vm3765 = vc.u32 %v3740, %v3759
        %v3766 = vadd.s32 %v3762, 1
        %v3767 = vsel %vm3765, %v3766, %v3762
        %v3768 = vadd.s32 %v3763, %v3767
        %v3769 = vadd.s32 %v3768, 536870912
        %v3770 = vshrl.u32 %v3769, 30
        %v3771 = vshll.u32 %v3770, 30
        %v3772 = vsub.s32 %v3768, %v3771
        %vm3773 = vcmp.lt.s32.totalorder %v3772, 0
        %v3774 = vsub.s32 0, %v3772
        %v3775 = vsel %vm3773, %v3774, %v3772
        %v3776 = vclz %v3775
        %v3777 = vsub.s32 %v3776, 2
        %vm3778 = vcmp.gt.s32.totalorder 0, %v3777
        %v3779 = vsel %vm3778, 0, %v3777
        %v3780 = vsub.s32 32, %v3779
        %v3781 = vshll.u32 %v3772, %v3779
        %v3782 = vshrl.u32 %v3764, %v3780
        %v3783 = vor.u32 %v3781, %v3782
        %v3784 = vsub.s32 4294967266, %v3779
        %v3785 = vadd.s32 %v3784, 127
        %v3786 = vshll.u32 %v3785, 23
        %v3787 = vor.u32 4788187, %v3786
        %v3788 = vand.u32 2147483647, %v3787
        %v3790 = vcvt.s32.f32 %v3783
        %v3791 = vmul.f32 %v3790, %v3788
        %v3792 = vxor.u32 %v3791, 2147483648
        %v3793 = vsel %vm3672, %v3792, %v3791
        %v3794 = vsub.s32 4, %v3770
        %v3795 = vsel %vm3672, %v3794, %v3770
        %v3796 = vsel %vm3671, %v1344, %v3793
        %v3797 = vsel %vm3671, 0, %v3795
        %v3798 = vmul.f32 %v3796, %v3796
        %v3799 = vmul.f32 %v3798, -0.001358992
        %v3800 = vadd.f32 %v3799, 0.041655596
        %v3801 = vmul.f32 %v3798, %v3800
        %v3802 = vadd.f32 %v3801, -0.4999988
        %v3803 = vmul.f32 %v3798, %v3802
        %v3804 = vadd.f32 1.0, %v3803
        %v3805 = vmul.f32 %v3796, %v3796
        %v3806 = vmul.f32 %v3805, -0.00019511016
        %v3807 = vadd.f32 %v3806, 0.008332121
        %v3808 = vmul.f32 %v3805, %v3807
        %v3809 = vadd.f32 %v3808, -0.16666654
        %v3810 = vmul.f32 %v3805, %v3809
        %v3811 = vadd.f32 %v3810, 1.0
        %v3812 = vmul.f32 %v3811, %v3796
        %vm3813 = vweird.f32 %v1344
        %v3814 = vadd.s32 %v3797, 3
        %v3815 = vand.u32 %v3814, 3
        %vm3816 = vcmp.lt.s32.totalorder %v3815, 2
        %vm3817 = vcmp.eq.s32.totalorder %v3815, 0
        %v3818 = vxor.u32 %v3812, 2147483648
        %v3819 = vsel %vm3817, %v3804, %v3818
        %vm3820 = vcmp.eq.s32.totalorder %v3815, 2
        %v3821 = vxor.u32 %v3804, 2147483648
        %v3822 = vsel %vm3820, %v3821, %v3812
        %v3823 = vsel %vm3816, %v3819, %v3822
        %v3824 = vsel %vm3813, nan, %v3823
        %v3826 = vperm.slane %v1324, 0
        %v3828 = vmul.f32 %v3826, %v1499
        %v3829 = vmul.f32 %v3826, %v1654
        %v3830 = vmul.f32 %v3826, %v1809
        %v3831 = vmul.f32 %v3826, %v1964
        %v3832 = vmul.f32 %v3826, %v2119
        %v3833 = vmul.f32 %v3826, %v2274
        %v3834 = vmul.f32 %v3826, %v2429
        %v3835 = vmul.f32 %v3826, %v2584
        %v3836 = vmul.f32 %v3826, %v2739
        %v3837 = vmul.f32 %v3826, %v2894
        %v3838 = vmul.f32 %v3826, %v3049
        %v3839 = vmul.f32 %v3826, %v3204
        %v3840 = vmul.f32 %v3826, %v3359
        %v3841 = vmul.f32 %v3826, %v3514
        %v3842 = vmul.f32 %v3826, %v3669
        %v3843 = vmul.f32 %v3826, %v3824
        %v3844 = vadd.f32 %v1308, %v3828
        %v3845 = vadd.f32 %v1309, %v3829
        %v3846 = vadd.f32 %v1310, %v3830
        %v3847 = vadd.f32 %v1311, %v3831
        %v3848 = vadd.f32 %v1312, %v3832
        %v3849 = vadd.f32 %v1313, %v3833
        %v3850 = vadd.f32 %v1314, %v3834
        %v3851 = vadd.f32 %v1315, %v3835
        %v3852 = vadd.f32 %v1316, %v3836
        %v3853 = vadd.f32 %v1317, %v3837
        %v3854 = vadd.f32 %v1318, %v3838
        %v3855 = vadd.f32 %v1319, %v3839
        %v3856 = vadd.f32 %v1320, %v3840
        %v3857 = vadd.f32 %v1321, %v3841
        %v3858 = vadd.f32 %v1322, %v3842
        %v3859 = vadd.f32 %v1323, %v3843
        %v3860 = vpack.c.bf16 %v3845, %v3844
        %v3861 = vpack.c.bf16 %v3847, %v3846
        %v3862 = vpack.c.bf16 %v3849, %v3848
        %v3863 = vpack.c.bf16 %v3851, %v3850
        %v3864 = vpack.c.bf16 %v3853, %v3852
        %v3865 = vpack.c.bf16 %v3855, %v3854
        %v3866 = vpack.c.bf16 %v3857, %v3856
        %v3867 = vpack.c.bf16 %v3859, %v3858
        %v3868 = vld [vmem:[%s7] sm:$0xff]
        %v3869 = vld [vmem:[%s7 + $0x8] sm:$0xff]
        %v3870 = vld [vmem:[%s7 + $0x10] sm:$0xff]
        %v3871 = vld [vmem:[%s7 + $0x18] sm:$0xff]
        %v3872 = vld [vmem:[%s7 + $0x20] sm:$0xff]
        %v3873 = vld [vmem:[%s7 + $0x28] sm:$0xff]
        %v3874 = vld [vmem:[%s7 + $0x30] sm:$0xff]
        %v3875 = vld [vmem:[%s7 + $0x38] sm:$0xff]
        %v3876 = vld [vmem:[%s7 + $0x40] sm:$0xff]
        %v3877 = vld [vmem:[%s7 + $0x48] sm:$0xff]
        %v3878 = vld [vmem:[%s7 + $0x50] sm:$0xff]
        %v3879 = vld [vmem:[%s7 + $0x58] sm:$0xff]
        %v3880 = vld [vmem:[%s7 + $0x60] sm:$0xff]
        %v3881 = vld [vmem:[%s7 + $0x68] sm:$0xff]
        %v3882 = vld [vmem:[%s7 + $0x70] sm:$0xff]
        %v3883 = vld [vmem:[%s7 + $0x78] sm:$0xff]
        %v3884 = vld [vmem:[%s7 + $0x80] sm:$0xff]
        %v3885 = vld [vmem:[%s7 + $0x88] sm:$0xff]
        %v3886 = vld [vmem:[%s7 + $0x90] sm:$0xff]
        %v3887 = vld [vmem:[%s7 + $0x98] sm:$0xff]
        %v3888 = vld [vmem:[%s7 + $0xa0] sm:$0xff]
        %v3889 = vld [vmem:[%s7 + $0xa8] sm:$0xff]
        %v3890 = vld [vmem:[%s7 + $0xb0] sm:$0xff]
        %v3891 = vld [vmem:[%s7 + $0xb8] sm:$0xff]
        %v3892 = vld [vmem:[%s7 + $0xc0] sm:$0xff]
        %v3893 = vld [vmem:[%s7 + $0xc8] sm:$0xff]
        %v3894 = vld [vmem:[%s7 + $0xd0] sm:$0xff]
        %v3895 = vld [vmem:[%s7 + $0xd8] sm:$0xff]
        %v3896 = vld [vmem:[%s7 + $0xe0] sm:$0xff]
        %v3897 = vld [vmem:[%s7 + $0xe8] sm:$0xff]
        %v3898 = vld [vmem:[%s7 + $0xf0] sm:$0xff]
        %v3899 = vld [vmem:[%s7 + $0xf8] sm:$0xff]
        %v3932 = vunpack.c.l.b16 %v3868
        %v3933 = vunpack.c.h.b16 %v3868
        %v3934 = vunpack.c.l.b16 %v3869
        %v3935 = vunpack.c.h.b16 %v3869
        %v3936 = vunpack.c.l.b16 %v3870
        %v3937 = vunpack.c.h.b16 %v3870
        %v3938 = vunpack.c.l.b16 %v3871
        %v3939 = vunpack.c.h.b16 %v3871
        %v3940 = vunpack.c.l.b16 %v3872
        %v3941 = vunpack.c.h.b16 %v3872
        %v3942 = vunpack.c.l.b16 %v3873
        %v3943 = vunpack.c.h.b16 %v3873
        %v3944 = vunpack.c.l.b16 %v3874
        %v3945 = vunpack.c.h.b16 %v3874
        %v3946 = vunpack.c.l.b16 %v3875
        %v3947 = vunpack.c.h.b16 %v3875
        %v3948 = vunpack.c.l.b16 %v3876
        %v3949 = vunpack.c.h.b16 %v3876
        %v3950 = vunpack.c.l.b16 %v3877
        %v3951 = vunpack.c.h.b16 %v3877
        %v3952 = vunpack.c.l.b16 %v3878
        %v3953 = vunpack.c.h.b16 %v3878
        %v3954 = vunpack.c.l.b16 %v3879
        %v3955 = vunpack.c.h.b16 %v3879
        %v3956 = vunpack.c.l.b16 %v3880
        %v3957 = vunpack.c.h.b16 %v3880
        %v3958 = vunpack.c.l.b16 %v3881
        %v3959 = vunpack.c.h.b16 %v3881
        %v3960 = vunpack.c.l.b16 %v3882
        %v3961 = vunpack.c.h.b16 %v3882
        %v3962 = vunpack.c.l.b16 %v3883
        %v3963 = vunpack.c.h.b16 %v3883
        %v3964 = vunpack.c.l.b16 %v3884
        %v3965 = vunpack.c.h.b16 %v3884
        %v3966 = vunpack.c.l.b16 %v3885
        %v3967 = vunpack.c.h.b16 %v3885
        %v3968 = vunpack.c.l.b16 %v3886
        %v3969 = vunpack.c.h.b16 %v3886
        %v3970 = vunpack.c.l.b16 %v3887
        %v3971 = vunpack.c.h.b16 %v3887
        %v3972 = vunpack.c.l.b16 %v3888
        %v3973 = vunpack.c.h.b16 %v3888
        %v3974 = vunpack.c.l.b16 %v3889
        %v3975 = vunpack.c.h.b16 %v3889
        %v3976 = vunpack.c.l.b16 %v3890
        %v3977 = vunpack.c.h.b16 %v3890
        %v3978 = vunpack.c.l.b16 %v3891
        %v3979 = vunpack.c.h.b16 %v3891
        %v3980 = vunpack.c.l.b16 %v3892
        %v3981 = vunpack.c.h.b16 %v3892
        %v3982 = vunpack.c.l.b16 %v3893
        %v3983 = vunpack.c.h.b16 %v3893
        %v3984 = vunpack.c.l.b16 %v3894
        %v3985 = vunpack.c.h.b16 %v3894
        %v3986 = vunpack.c.l.b16 %v3895
        %v3987 = vunpack.c.h.b16 %v3895
        %v3988 = vunpack.c.l.b16 %v3896
        %v3989 = vunpack.c.h.b16 %v3896
        %v3990 = vunpack.c.l.b16 %v3897
        %v3991 = vunpack.c.h.b16 %v3897
        %v3992 = vunpack.c.l.b16 %v3898
        %v3993 = vunpack.c.h.b16 %v3898
        %v3994 = vunpack.c.l.b16 %v3899
        %v3995 = vunpack.c.h.b16 %v3899
        %v3996 = vpack.c.b16 %v3936, %v3932
        %v3997 = vpack.c.b16 %v3937, %v3933
        %v3998 = vpack.c.b16 %v3938, %v3934
        %v3999 = vpack.c.b16 %v3939, %v3935
        %v4000 = vpack.c.b16 %v3944, %v3940
        %v4001 = vpack.c.b16 %v3945, %v3941
        %v4002 = vpack.c.b16 %v3946, %v3942
        %v4003 = vpack.c.b16 %v3947, %v3943
        %v4004 = vpack.c.b16 %v3952, %v3948
        %v4005 = vpack.c.b16 %v3953, %v3949
        %v4006 = vpack.c.b16 %v3954, %v3950
        %v4007 = vpack.c.b16 %v3955, %v3951
        %v4008 = vpack.c.b16 %v3960, %v3956
        %v4009 = vpack.c.b16 %v3961, %v3957
        %v4010 = vpack.c.b16 %v3962, %v3958
        %v4011 = vpack.c.b16 %v3963, %v3959
        %v4012 = vpack.c.b16 %v3968, %v3964
        %v4013 = vpack.c.b16 %v3969, %v3965
        %v4014 = vpack.c.b16 %v3970, %v3966
        %v4015 = vpack.c.b16 %v3971, %v3967
        %v4016 = vpack.c.b16 %v3976, %v3972
        %v4017 = vpack.c.b16 %v3977, %v3973
        %v4018 = vpack.c.b16 %v3978, %v3974
        %v4019 = vpack.c.b16 %v3979, %v3975
        %v4020 = vpack.c.b16 %v3984, %v3980
        %v4021 = vpack.c.b16 %v3985, %v3981
        %v4022 = vpack.c.b16 %v3986, %v3982
        %v4023 = vpack.c.b16 %v3987, %v3983
        %v4024 = vpack.c.b16 %v3992, %v3988
        %v4025 = vpack.c.b16 %v3993, %v3989
        %v4026 = vpack.c.b16 %v3994, %v3990
        %v4027 = vpack.c.b16 %v3995, %v3991
        %4060 = vmatpush.bf16.msra.mxu0 %v4024
        %4061 = vmatpush.bf16.msra.mxu0 %v4020
        %4062 = vmatpush.bf16.msra.mxu0 %v4016
        %4063 = vmatpush.bf16.msra.mxu0 %v4012
        %4064 = vmatpush.bf16.msra.mxu0 %v4008
        %4065 = vmatpush.bf16.msra.mxu0 %v4004
        %4066 = vmatpush.bf16.msra.mxu0 %v4000
        %4067 = vmatpush.bf16.msra.mxu0 %v3996
        %4068 = vmatmul.bf16.gmra.mxu0 %v3860
        %v4069 = vpop.f32.mrf.mxu0
        %v4070 = vadd.f32 0.0, %v4069
        %v4071 = vpop.f32.mrf.mxu0
        %v4072 = vadd.f32 0.0, %v4071
        %4073 = vmatmul.bf16.gmra.mxu0 %v3861
        %v4074 = vpop.f32.mrf.mxu0
        %v4075 = vadd.f32 0.0, %v4074
        %v4076 = vpop.f32.mrf.mxu0
        %v4077 = vadd.f32 0.0, %v4076
        %4078 = vmatmul.bf16.gmra.mxu0 %v3862
        %v4079 = vpop.f32.mrf.mxu0
        %v4080 = vadd.f32 0.0, %v4079
        %v4081 = vpop.f32.mrf.mxu0
        %v4082 = vadd.f32 0.0, %v4081
        %4083 = vmatmul.bf16.gmra.mxu0 %v3863
        %v4084 = vpop.f32.mrf.mxu0
        %v4085 = vadd.f32 0.0, %v4084
        %v4086 = vpop.f32.mrf.mxu0
        %v4087 = vadd.f32 0.0, %v4086
        %4088 = vmatmul.bf16.gmra.mxu0 %v3864
        %v4089 = vpop.f32.mrf.mxu0
        %v4090 = vadd.f32 0.0, %v4089
        %v4091 = vpop.f32.mrf.mxu0
        %v4092 = vadd.f32 0.0, %v4091
        %4093 = vmatmul.bf16.gmra.mxu0 %v3865
        %v4094 = vpop.f32.mrf.mxu0
        %v4095 = vadd.f32 0.0, %v4094
        %v4096 = vpop.f32.mrf.mxu0
        %v4097 = vadd.f32 0.0, %v4096
        %4098 = vmatmul.bf16.gmra.mxu0 %v3866
        %v4099 = vpop.f32.mrf.mxu0
        %v4100 = vadd.f32 0.0, %v4099
        %v4101 = vpop.f32.mrf.mxu0
        %v4102 = vadd.f32 0.0, %v4101
        %4103 = vmatmul.bf16.gmra.mxu0 %v3867
        %v4104 = vpop.f32.mrf.mxu0
        %v4105 = vadd.f32 0.0, %v4104
        %v4106 = vpop.f32.mrf.mxu0
        %v4107 = vadd.f32 0.0, %v4106
        %4108 = vdwg.mxu0
        %4109 = vmatpush.bf16.msra.mxu0 %v4025
        %4110 = vmatpush.bf16.msra.mxu0 %v4021
        %4111 = vmatpush.bf16.msra.mxu0 %v4017
        %4112 = vmatpush.bf16.msra.mxu0 %v4013
        %4113 = vmatpush.bf16.msra.mxu0 %v4009
        %4114 = vmatpush.bf16.msra.mxu0 %v4005
        %4115 = vmatpush.bf16.msra.mxu0 %v4001
        %4116 = vmatpush.bf16.msra.mxu0 %v3997
        %4117 = vmatmul.bf16.gmra.mxu0 %v3860
        %v4118 = vpop.f32.mrf.mxu0
        %v4119 = vadd.f32 0.0, %v4118
        %v4120 = vpop.f32.mrf.mxu0
        %v4121 = vadd.f32 0.0, %v4120
        %4122 = vmatmul.bf16.gmra.mxu0 %v3861
        %v4123 = vpop.f32.mrf.mxu0
        %v4124 = vadd.f32 0.0, %v4123
        %v4125 = vpop.f32.mrf.mxu0
        %v4126 = vadd.f32 0.0, %v4125
        %4127 = vmatmul.bf16.gmra.mxu0 %v3862
        %v4128 = vpop.f32.mrf.mxu0
        %v4129 = vadd.f32 0.0, %v4128
        %v4130 = vpop.f32.mrf.mxu0
        %v4131 = vadd.f32 0.0, %v4130
        %4132 = vmatmul.bf16.gmra.mxu0 %v3863
        %v4133 = vpop.f32.mrf.mxu0
        %v4134 = vadd.f32 0.0, %v4133
        %v4135 = vpop.f32.mrf.mxu0
        %v4136 = vadd.f32 0.0, %v4135
        %4137 = vmatmul.bf16.gmra.mxu0 %v3864
        %v4138 = vpop.f32.mrf.mxu0
        %v4139 = vadd.f32 0.0, %v4138
        %v4140 = vpop.f32.mrf.mxu0
        %v4141 = vadd.f32 0.0, %v4140
        %4142 = vmatmul.bf16.gmra.mxu0 %v3865
        %v4143 = vpop.f32.mrf.mxu0
        %v4144 = vadd.f32 0.0, %v4143
        %v4145 = vpop.f32.mrf.mxu0
        %v4146 = vadd.f32 0.0, %v4145
        %4147 = vmatmul.bf16.gmra.mxu0 %v3866
        %v4148 = vpop.f32.mrf.mxu0
        %v4149 = vadd.f32 0.0, %v4148
        %v4150 = vpop.f32.mrf.mxu0
        %v4151 = vadd.f32 0.0, %v4150
        %4152 = vmatmul.bf16.gmra.mxu0 %v3867
        %v4153 = vpop.f32.mrf.mxu0
        %v4154 = vadd.f32 0.0, %v4153
        %v4155 = vpop.f32.mrf.mxu0
        %v4156 = vadd.f32 0.0, %v4155
        %4157 = vdwg.mxu0
        %4158 = vmatpush.bf16.msra.mxu0 %v4026
        %4159 = vmatpush.bf16.msra.mxu0 %v4022
        %4160 = vmatpush.bf16.msra.mxu0 %v4018
        %4161 = vmatpush.bf16.msra.mxu0 %v4014
        %4162 = vmatpush.bf16.msra.mxu0 %v4010
        %4163 = vmatpush.bf16.msra.mxu0 %v4006
        %4164 = vmatpush.bf16.msra.mxu0 %v4002
        %4165 = vmatpush.bf16.msra.mxu0 %v3998
        %4166 = vmatmul.bf16.gmra.mxu0 %v3860
        %v4167 = vpop.f32.mrf.mxu0
        %v4168 = vadd.f32 0.0, %v4167
        %v4169 = vpop.f32.mrf.mxu0
        %v4170 = vadd.f32 0.0, %v4169
        %4171 = vmatmul.bf16.gmra.mxu0 %v3861
        %v4172 = vpop.f32.mrf.mxu0
        %v4173 = vadd.f32 0.0, %v4172
        %v4174 = vpop.f32.mrf.mxu0
        %v4175 = vadd.f32 0.0, %v4174
        %4176 = vmatmul.bf16.gmra.mxu0 %v3862
        %v4177 = vpop.f32.mrf.mxu0
        %v4178 = vadd.f32 0.0, %v4177
        %v4179 = vpop.f32.mrf.mxu0
        %v4180 = vadd.f32 0.0, %v4179
        %4181 = vmatmul.bf16.gmra.mxu0 %v3863
        %v4182 = vpop.f32.mrf.mxu0
        %v4183 = vadd.f32 0.0, %v4182
        %v4184 = vpop.f32.mrf.mxu0
        %v4185 = vadd.f32 0.0, %v4184
        %4186 = vmatmul.bf16.gmra.mxu0 %v3864
        %v4187 = vpop.f32.mrf.mxu0
        %v4188 = vadd.f32 0.0, %v4187
        %v4189 = vpop.f32.mrf.mxu0
        %v4190 = vadd.f32 0.0, %v4189
        %4191 = vmatmul.bf16.gmra.mxu0 %v3865
        %v4192 = vpop.f32.mrf.mxu0
        %v4193 = vadd.f32 0.0, %v4192
        %v4194 = vpop.f32.mrf.mxu0
        %v4195 = vadd.f32 0.0, %v4194
        %4196 = vmatmul.bf16.gmra.mxu0 %v3866
        %v4197 = vpop.f32.mrf.mxu0
        %v4198 = vadd.f32 0.0, %v4197
        %v4199 = vpop.f32.mrf.mxu0
        %v4200 = vadd.f32 0.0, %v4199
        %4201 = vmatmul.bf16.gmra.mxu0 %v3867
        %v4202 = vpop.f32.mrf.mxu0
        %v4203 = vadd.f32 0.0, %v4202
        %v4204 = vpop.f32.mrf.mxu0
        %v4205 = vadd.f32 0.0, %v4204
        %4206 = vdwg.mxu0
        %4207 = vmatpush.bf16.msra.mxu0 %v4027
        %4208 = vmatpush.bf16.msra.mxu0 %v4023
        %4209 = vmatpush.bf16.msra.mxu0 %v4019
        %4210 = vmatpush.bf16.msra.mxu0 %v4015
        %4211 = vmatpush.bf16.msra.mxu0 %v4011
        %4212 = vmatpush.bf16.msra.mxu0 %v4007
        %4213 = vmatpush.bf16.msra.mxu0 %v4003
        %4214 = vmatpush.bf16.msra.mxu0 %v3999
        %4215 = vmatmul.bf16.gmra.mxu0 %v3860
        %v4216 = vpop.f32.mrf.mxu0
        %v4217 = vadd.f32 0.0, %v4216
        %v4218 = vpop.f32.mrf.mxu0
        %v4219 = vadd.f32 0.0, %v4218
        %4220 = vmatmul.bf16.gmra.mxu0 %v3861
        %v4221 = vpop.f32.mrf.mxu0
        %v4222 = vadd.f32 0.0, %v4221
        %v4223 = vpop.f32.mrf.mxu0
        %v4224 = vadd.f32 0.0, %v4223
        %4225 = vmatmul.bf16.gmra.mxu0 %v3862
        %v4226 = vpop.f32.mrf.mxu0
        %v4227 = vadd.f32 0.0, %v4226
        %v4228 = vpop.f32.mrf.mxu0
        %v4229 = vadd.f32 0.0, %v4228
        %4230 = vmatmul.bf16.gmra.mxu0 %v3863
        %v4231 = vpop.f32.mrf.mxu0
        %v4232 = vadd.f32 0.0, %v4231
        %v4233 = vpop.f32.mrf.mxu0
        %v4234 = vadd.f32 0.0, %v4233
        %4235 = vmatmul.bf16.gmra.mxu0 %v3864
        %v4236 = vpop.f32.mrf.mxu0
        %v4237 = vadd.f32 0.0, %v4236
        %v4238 = vpop.f32.mrf.mxu0
        %v4239 = vadd.f32 0.0, %v4238
        %4240 = vmatmul.bf16.gmra.mxu0 %v3865
        %v4241 = vpop.f32.mrf.mxu0
        %v4242 = vadd.f32 0.0, %v4241
        %v4243 = vpop.f32.mrf.mxu0
        %v4244 = vadd.f32 0.0, %v4243
        %4245 = vmatmul.bf16.gmra.mxu0 %v3866
        %v4246 = vpop.f32.mrf.mxu0
        %v4247 = vadd.f32 0.0, %v4246
        %v4248 = vpop.f32.mrf.mxu0
        %v4249 = vadd.f32 0.0, %v4248
        %4250 = vmatmul.bf16.gmra.mxu0 %v3867
        %v4251 = vpop.f32.mrf.mxu0
        %v4252 = vadd.f32 0.0, %v4251
        %v4253 = vpop.f32.mrf.mxu0
        %v4254 = vadd.f32 0.0, %v4253
        %4255 = vdwg.mxu0
        %v4256 = vld [vmem:[%s8] sm:$0x3]
        %v4258 = vperm.slane %v4256, 0
        %v4259 = vperm.slane %v4256, 1
        %v4262 = vadd.f32 %v4070, %v4258
        %v4263 = vadd.f32 %v4119, %v4259
        %v4264 = vadd.f32 %v4072, %v4258
        %v4265 = vadd.f32 %v4121, %v4259
        %v4266 = vadd.f32 %v4075, %v4258
        %v4267 = vadd.f32 %v4124, %v4259
        %v4268 = vadd.f32 %v4077, %v4258
        %v4269 = vadd.f32 %v4126, %v4259
        %v4270 = vadd.f32 %v4080, %v4258
        %v4271 = vadd.f32 %v4129, %v4259
        %v4272 = vadd.f32 %v4082, %v4258
        %v4273 = vadd.f32 %v4131, %v4259
        %v4274 = vadd.f32 %v4085, %v4258
        %v4275 = vadd.f32 %v4134, %v4259
        %v4276 = vadd.f32 %v4087, %v4258
        %v4277 = vadd.f32 %v4136, %v4259
        %v4278 = vadd.f32 %v4090, %v4258
        %v4279 = vadd.f32 %v4139, %v4259
        %v4280 = vadd.f32 %v4092, %v4258
        %v4281 = vadd.f32 %v4141, %v4259
        %v4282 = vadd.f32 %v4095, %v4258
        %v4283 = vadd.f32 %v4144, %v4259
        %v4284 = vadd.f32 %v4097, %v4258
        %v4285 = vadd.f32 %v4146, %v4259
        %v4286 = vadd.f32 %v4100, %v4258
        %v4287 = vadd.f32 %v4149, %v4259
        %v4288 = vadd.f32 %v4102, %v4258
        %v4289 = vadd.f32 %v4151, %v4259
        %v4290 = vadd.f32 %v4105, %v4258
        %v4291 = vadd.f32 %v4154, %v4259
        %v4292 = vadd.f32 %v4107, %v4258
        %v4293 = vadd.f32 %v4156, %v4259
        %v4294 = vmax.f32 %v4262, 0.0
        %v4295 = vmax.f32 %v4263, 0.0
        %v4296 = vmax.f32 %v4264, 0.0
        %v4297 = vmax.f32 %v4265, 0.0
        %v4298 = vmax.f32 %v4266, 0.0
        %v4299 = vmax.f32 %v4267, 0.0
        %v4300 = vmax.f32 %v4268, 0.0
        %v4301 = vmax.f32 %v4269, 0.0
        %v4302 = vmax.f32 %v4270, 0.0
        %v4303 = vmax.f32 %v4271, 0.0
        %v4304 = vmax.f32 %v4272, 0.0
        %v4305 = vmax.f32 %v4273, 0.0
        %v4306 = vmax.f32 %v4274, 0.0
        %v4307 = vmax.f32 %v4275, 0.0
        %v4308 = vmax.f32 %v4276, 0.0
        %v4309 = vmax.f32 %v4277, 0.0
        %v4310 = vmax.f32 %v4278, 0.0
        %v4311 = vmax.f32 %v4279, 0.0
        %v4312 = vmax.f32 %v4280, 0.0
        %v4313 = vmax.f32 %v4281, 0.0
        %v4314 = vmax.f32 %v4282, 0.0
        %v4315 = vmax.f32 %v4283, 0.0
        %v4316 = vmax.f32 %v4284, 0.0
        %v4317 = vmax.f32 %v4285, 0.0
        %v4318 = vmax.f32 %v4286, 0.0
        %v4319 = vmax.f32 %v4287, 0.0
        %v4320 = vmax.f32 %v4288, 0.0
        %v4321 = vmax.f32 %v4289, 0.0
        %v4322 = vmax.f32 %v4290, 0.0
        %v4323 = vmax.f32 %v4291, 0.0
        %v4324 = vmax.f32 %v4292, 0.0
        %v4325 = vmax.f32 %v4293, 0.0
        %v4326 = vpack.c.bf16 %v4296, %v4294
        %v4327 = vpack.c.bf16 %v4297, %v4295
        %v4328 = vpack.c.bf16 %v4300, %v4298
        %v4329 = vpack.c.bf16 %v4301, %v4299
        %v4330 = vpack.c.bf16 %v4304, %v4302
        %v4331 = vpack.c.bf16 %v4305, %v4303
        %v4332 = vpack.c.bf16 %v4308, %v4306
        %v4333 = vpack.c.bf16 %v4309, %v4307
        %v4334 = vpack.c.bf16 %v4312, %v4310
        %v4335 = vpack.c.bf16 %v4313, %v4311
        %v4336 = vpack.c.bf16 %v4316, %v4314
        %v4337 = vpack.c.bf16 %v4317, %v4315
        %v4338 = vpack.c.bf16 %v4320, %v4318
        %v4339 = vpack.c.bf16 %v4321, %v4319
        %v4340 = vpack.c.bf16 %v4324, %v4322
        %v4341 = vpack.c.bf16 %v4325, %v4323
        %v4342 = vld [vmem:[#allocation12] sm:$0xff]
        %v4343 = vld [vmem:[#allocation12 + $0x8] sm:$0xff]
        %v4344 = vld [vmem:[#allocation12 + $0x10] sm:$0xff]
        %v4345 = vld [vmem:[#allocation12 + $0x18] sm:$0xff]
        %v4346 = vld [vmem:[#allocation12 + $0x20] sm:$0xff]
        %v4347 = vld [vmem:[#allocation12 + $0x28] sm:$0xff]
        %v4348 = vld [vmem:[#allocation12 + $0x30] sm:$0xff]
        %v4349 = vld [vmem:[#allocation12 + $0x38] sm:$0xff]
        %v4350 = vld [vmem:[#allocation12 + $0x40] sm:$0xff]
        %v4351 = vld [vmem:[#allocation12 + $0x48] sm:$0xff]
        %v4352 = vld [vmem:[#allocation12 + $0x50] sm:$0xff]
        %v4353 = vld [vmem:[#allocation12 + $0x58] sm:$0xff]
        %v4354 = vld [vmem:[#allocation12 + $0x60] sm:$0xff]
        %v4355 = vld [vmem:[#allocation12 + $0x68] sm:$0xff]
        %v4356 = vld [vmem:[#allocation12 + $0x70] sm:$0xff]
        %v4357 = vld [vmem:[#allocation12 + $0x78] sm:$0xff]
        %v4358 = vld [vmem:[#allocation12 + $0x80] sm:$0xff]
        %v4359 = vld [vmem:[#allocation12 + $0x88] sm:$0xff]
        %v4360 = vld [vmem:[#allocation12 + $0x90] sm:$0xff]
        %v4361 = vld [vmem:[#allocation12 + $0x98] sm:$0xff]
        %v4362 = vld [vmem:[#allocation12 + $0xa0] sm:$0xff]
        %v4363 = vld [vmem:[#allocation12 + $0xa8] sm:$0xff]
        %v4364 = vld [vmem:[#allocation12 + $0xb0] sm:$0xff]
        %v4365 = vld [vmem:[#allocation12 + $0xb8] sm:$0xff]
        %v4366 = vld [vmem:[#allocation12 + $0xc0] sm:$0xff]
        %v4367 = vld [vmem:[#allocation12 + $0xc8] sm:$0xff]
        %v4368 = vld [vmem:[#allocation12 + $0xd0] sm:$0xff]
        %v4369 = vld [vmem:[#allocation12 + $0xd8] sm:$0xff]
        %v4370 = vld [vmem:[#allocation12 + $0xe0] sm:$0xff]
        %v4371 = vld [vmem:[#allocation12 + $0xe8] sm:$0xff]
        %v4372 = vld [vmem:[#allocation12 + $0xf0] sm:$0xff]
        %v4373 = vld [vmem:[#allocation12 + $0xf8] sm:$0xff]
        %v4374 = vld [vmem:[%s10] sm:$0x3]
        %v4376 = vperm.slane %v4374, 0
        %v4377 = vperm.slane %v4374, 1
        %v4412 = vunpack.c.l.b16 %v4342
        %v4413 = vunpack.c.h.b16 %v4342
        %v4414 = vunpack.c.l.b16 %v4343
        %v4415 = vunpack.c.h.b16 %v4343
        %v4416 = vunpack.c.l.b16 %v4344
        %v4417 = vunpack.c.h.b16 %v4344
        %v4418 = vunpack.c.l.b16 %v4345
        %v4419 = vunpack.c.h.b16 %v4345
        %v4420 = vunpack.c.l.b16 %v4346
        %v4421 = vunpack.c.h.b16 %v4346
        %v4422 = vunpack.c.l.b16 %v4347
        %v4423 = vunpack.c.h.b16 %v4347
        %v4424 = vunpack.c.l.b16 %v4348
        %v4425 = vunpack.c.h.b16 %v4348
        %v4426 = vunpack.c.l.b16 %v4349
        %v4427 = vunpack.c.h.b16 %v4349
        %v4428 = vunpack.c.l.b16 %v4350
        %v4429 = vunpack.c.h.b16 %v4350
        %v4430 = vunpack.c.l.b16 %v4351
        %v4431 = vunpack.c.h.b16 %v4351
        %v4432 = vunpack.c.l.b16 %v4352
        %v4433 = vunpack.c.h.b16 %v4352
        %v4434 = vunpack.c.l.b16 %v4353
        %v4435 = vunpack.c.h.b16 %v4353
        %v4436 = vunpack.c.l.b16 %v4354
        %v4437 = vunpack.c.h.b16 %v4354
        %v4438 = vunpack.c.l.b16 %v4355
        %v4439 = vunpack.c.h.b16 %v4355
        %v4440 = vunpack.c.l.b16 %v4356
        %v4441 = vunpack.c.h.b16 %v4356
        %v4442 = vunpack.c.l.b16 %v4357
        %v4443 = vunpack.c.h.b16 %v4357
        %v4444 = vunpack.c.l.b16 %v4358
        %v4445 = vunpack.c.h.b16 %v4358
        %v4446 = vunpack.c.l.b16 %v4359
        %v4447 = vunpack.c.h.b16 %v4359
        %v4448 = vunpack.c.l.b16 %v4360
        %v4449 = vunpack.c.h.b16 %v4360
        %v4450 = vunpack.c.l.b16 %v4361
        %v4451 = vunpack.c.h.b16 %v4361
        %v4452 = vunpack.c.l.b16 %v4362
        %v4453 = vunpack.c.h.b16 %v4362
        %v4454 = vunpack.c.l.b16 %v4363
        %v4455 = vunpack.c.h.b16 %v4363
        %v4456 = vunpack.c.l.b16 %v4364
        %v4457 = vunpack.c.h.b16 %v4364
        %v4458 = vunpack.c.l.b16 %v4365
        %v4459 = vunpack.c.h.b16 %v4365
        %v4460 = vunpack.c.l.b16 %v4366
        %v4461 = vunpack.c.h.b16 %v4366
        %v4462 = vunpack.c.l.b16 %v4367
        %v4463 = vunpack.c.h.b16 %v4367
        %v4464 = vunpack.c.l.b16 %v4368
        %v4465 = vunpack.c.h.b16 %v4368
        %v4466 = vunpack.c.l.b16 %v4369
        %v4467 = vunpack.c.h.b16 %v4369
        %v4468 = vunpack.c.l.b16 %v4370
        %v4469 = vunpack.c.h.b16 %v4370
        %v4470 = vunpack.c.l.b16 %v4371
        %v4471 = vunpack.c.h.b16 %v4371
        %v4472 = vunpack.c.l.b16 %v4372
        %v4473 = vunpack.c.h.b16 %v4372
        %v4474 = vunpack.c.l.b16 %v4373
        %v4475 = vunpack.c.h.b16 %v4373
        %v4476 = vpack.c.b16 %v4414, %v4412
        %v4477 = vpack.c.b16 %v4415, %v4413
        %v4478 = vpack.c.b16 %v4418, %v4416
        %v4479 = vpack.c.b16 %v4419, %v4417
        %v4480 = vpack.c.b16 %v4422, %v4420
        %v4481 = vpack.c.b16 %v4423, %v4421
        %v4482 = vpack.c.b16 %v4426, %v4424
        %v4483 = vpack.c.b16 %v4427, %v4425
        %v4484 = vpack.c.b16 %v4430, %v4428
        %v4485 = vpack.c.b16 %v4431, %v4429
        %v4486 = vpack.c.b16 %v4434, %v4432
        %v4487 = vpack.c.b16 %v4435, %v4433
        %v4488 = vpack.c.b16 %v4438, %v4436
        %v4489 = vpack.c.b16 %v4439, %v4437
        %v4490 = vpack.c.b16 %v4442, %v4440
        %v4491 = vpack.c.b16 %v4443, %v4441
        %v4492 = vpack.c.b16 %v4446, %v4444
        %v4493 = vpack.c.b16 %v4447, %v4445
        %v4494 = vpack.c.b16 %v4450, %v4448
        %v4495 = vpack.c.b16 %v4451, %v4449
        %v4496 = vpack.c.b16 %v4454, %v4452
        %v4497 = vpack.c.b16 %v4455, %v4453
        %v4498 = vpack.c.b16 %v4458, %v4456
        %v4499 = vpack.c.b16 %v4459, %v4457
        %v4500 = vpack.c.b16 %v4462, %v4460
        %v4501 = vpack.c.b16 %v4463, %v4461
        %v4502 = vpack.c.b16 %v4466, %v4464
        %v4503 = vpack.c.b16 %v4467, %v4465
        %v4504 = vpack.c.b16 %v4470, %v4468
        %v4505 = vpack.c.b16 %v4471, %v4469
        %v4506 = vpack.c.b16 %v4474, %v4472
        %v4507 = vpack.c.b16 %v4475, %v4473
        %4540 = vmatpush.bf16.msra.mxu0 %v4490
        %4541 = vmatpush.bf16.msra.mxu0 %v4488
        %4542 = vmatpush.bf16.msra.mxu0 %v4486
        %4543 = vmatpush.bf16.msra.mxu0 %v4484
        %4544 = vmatpush.bf16.msra.mxu0 %v4482
        %4545 = vmatpush.bf16.msra.mxu0 %v4480
        %4546 = vmatpush.bf16.msra.mxu0 %v4478
        %4547 = vmatpush.bf16.msra.mxu0 %v4476
        %4548 = vmatmul.bf16.gmra.mxu0 %v4326
        %v4549 = vpop.f32.mrf.mxu0
        %v4550 = vadd.f32 %v4376, %v4549
        %v4551 = vpop.f32.mrf.mxu0
        %v4552 = vadd.f32 %v4376, %v4551
        %4553 = vmatmul.bf16.gmra.mxu0 %v4328
        %v4554 = vpop.f32.mrf.mxu0
        %v4555 = vadd.f32 %v4376, %v4554
        %v4556 = vpop.f32.mrf.mxu0
        %v4557 = vadd.f32 %v4376, %v4556
        %4558 = vmatmul.bf16.gmra.mxu0 %v4330
        %v4559 = vpop.f32.mrf.mxu0
        %v4560 = vadd.f32 %v4376, %v4559
        %v4561 = vpop.f32.mrf.mxu0
        %v4562 = vadd.f32 %v4376, %v4561
        %4563 = vmatmul.bf16.gmra.mxu0 %v4332
        %v4564 = vpop.f32.mrf.mxu0
        %v4565 = vadd.f32 %v4376, %v4564
        %v4566 = vpop.f32.mrf.mxu0
        %v4567 = vadd.f32 %v4376, %v4566
        %4568 = vmatmul.bf16.gmra.mxu0 %v4334
        %v4569 = vpop.f32.mrf.mxu0
        %v4570 = vadd.f32 %v4376, %v4569
        %v4571 = vpop.f32.mrf.mxu0
        %v4572 = vadd.f32 %v4376, %v4571
        %4573 = vmatmul.bf16.gmra.mxu0 %v4336
        %v4574 = vpop.f32.mrf.mxu0
        %v4575 = vadd.f32 %v4376, %v4574
        %v4576 = vpop.f32.mrf.mxu0
        %v4577 = vadd.f32 %v4376, %v4576
        %4578 = vmatmul.bf16.gmra.mxu0 %v4338
        %v4579 = vpop.f32.mrf.mxu0
        %v4580 = vadd.f32 %v4376, %v4579
        %v4581 = vpop.f32.mrf.mxu0
        %v4582 = vadd.f32 %v4376, %v4581
        %4583 = vmatmul.bf16.gmra.mxu0 %v4340
        %v4584 = vpop.f32.mrf.mxu0
        %v4585 = vadd.f32 %v4376, %v4584
        %v4586 = vpop.f32.mrf.mxu0
        %v4587 = vadd.f32 %v4376, %v4586
        %4588 = vdwg.mxu0
        %4589 = vmatpush.bf16.msra.mxu0 %v4506
        %4590 = vmatpush.bf16.msra.mxu0 %v4504
        %4591 = vmatpush.bf16.msra.mxu0 %v4502
        %4592 = vmatpush.bf16.msra.mxu0 %v4500
        %4593 = vmatpush.bf16.msra.mxu0 %v4498
        %4594 = vmatpush.bf16.msra.mxu0 %v4496
        %4595 = vmatpush.bf16.msra.mxu0 %v4494
        %4596 = vmatpush.bf16.msra.mxu0 %v4492
        %4597 = vmatmul.bf16.gmra.mxu0 %v4327
        %v4598 = vpop.f32.mrf.mxu0
        %v4599 = vadd.f32 %v4550, %v4598
        %v4600 = vpop.f32.mrf.mxu0
        %v4601 = vadd.f32 %v4552, %v4600
        %4602 = vmatmul.bf16.gmra.mxu0 %v4329
        %v4603 = vpop.f32.mrf.mxu0
        %v4604 = vadd.f32 %v4555, %v4603
        %v4605 = vpop.f32.mrf.mxu0
        %v4606 = vadd.f32 %v4557, %v4605
        %4607 = vmatmul.bf16.gmra.mxu0 %v4331
        %v4608 = vpop.f32.mrf.mxu0
        %v4609 = vadd.f32 %v4560, %v4608
        %v4610 = vpop.f32.mrf.mxu0
        %v4611 = vadd.f32 %v4562, %v4610
        %4612 = vmatmul.bf16.gmra.mxu0 %v4333
        %v4613 = vpop.f32.mrf.mxu0
        %v4614 = vadd.f32 %v4565, %v4613
        %v4615 = vpop.f32.mrf.mxu0
        %v4616 = vadd.f32 %v4567, %v4615
        %4617 = vmatmul.bf16.gmra.mxu0 %v4335
        %v4618 = vpop.f32.mrf.mxu0
        %v4619 = vadd.f32 %v4570, %v4618
        %v4620 = vpop.f32.mrf.mxu0
        %v4621 = vadd.f32 %v4572, %v4620
        %4622 = vmatmul.bf16.gmra.mxu0 %v4337
        %v4623 = vpop.f32.mrf.mxu0
        %v4624 = vadd.f32 %v4575, %v4623
        %v4625 = vpop.f32.mrf.mxu0
        %v4626 = vadd.f32 %v4577, %v4625
        %4627 = vmatmul.bf16.gmra.mxu0 %v4339
        %v4628 = vpop.f32.mrf.mxu0
        %v4629 = vadd.f32 %v4580, %v4628
        %v4630 = vpop.f32.mrf.mxu0
        %v4631 = vadd.f32 %v4582, %v4630
        %4632 = vmatmul.bf16.gmra.mxu0 %v4341
        %v4633 = vpop.f32.mrf.mxu0
        %v4634 = vadd.f32 %v4585, %v4633
        %v4635 = vpop.f32.mrf.mxu0
        %v4636 = vadd.f32 %v4587, %v4635
        %4637 = vdwg.mxu0
        %4638 = vmatpush.bf16.msra.mxu0 %v4491
        %4639 = vmatpush.bf16.msra.mxu0 %v4489
        %4640 = vmatpush.bf16.msra.mxu0 %v4487
        %4641 = vmatpush.bf16.msra.mxu0 %v4485
        %4642 = vmatpush.bf16.msra.mxu0 %v4483
        %4643 = vmatpush.bf16.msra.mxu0 %v4481
        %4644 = vmatpush.bf16.msra.mxu0 %v4479
        %4645 = vmatpush.bf16.msra.mxu0 %v4477
        %4646 = vmatmul.bf16.gmra.mxu0 %v4326
        %v4647 = vpop.f32.mrf.mxu0
        %v4648 = vadd.f32 %v4377, %v4647
        %v4649 = vpop.f32.mrf.mxu0
        %v4650 = vadd.f32 %v4377, %v4649
        %4651 = vmatmul.bf16.gmra.mxu0 %v4328
        %v4652 = vpop.f32.mrf.mxu0
        %v4653 = vadd.f32 %v4377, %v4652
        %v4654 = vpop.f32.mrf.mxu0
        %v4655 = vadd.f32 %v4377, %v4654
        %4656 = vmatmul.bf16.gmra.mxu0 %v4330
        %v4657 = vpop.f32.mrf.mxu0
        %v4658 = vadd.f32 %v4377, %v4657
        %v4659 = vpop.f32.mrf.mxu0
        %v4660 = vadd.f32 %v4377, %v4659
        %4661 = vmatmul.bf16.gmra.mxu0 %v4332
        %v4662 = vpop.f32.mrf.mxu0
        %v4663 = vadd.f32 %v4377, %v4662
        %v4664 = vpop.f32.mrf.mxu0
        %v4665 = vadd.f32 %v4377, %v4664
        %4666 = vmatmul.bf16.gmra.mxu0 %v4334
        %v4667 = vpop.f32.mrf.mxu0
        %v4668 = vadd.f32 %v4377, %v4667
        %v4669 = vpop.f32.mrf.mxu0
        %v4670 = vadd.f32 %v4377, %v4669
        %4671 = vmatmul.bf16.gmra.mxu0 %v4336
        %v4672 = vpop.f32.mrf.mxu0
        %v4673 = vadd.f32 %v4377, %v4672
        %v4674 = vpop.f32.mrf.mxu0
        %v4675 = vadd.f32 %v4377, %v4674
        %4676 = vmatmul.bf16.gmra.mxu0 %v4338
        %v4677 = vpop.f32.mrf.mxu0
        %v4678 = vadd.f32 %v4377, %v4677
        %v4679 = vpop.f32.mrf.mxu0
        %v4680 = vadd.f32 %v4377, %v4679
        %4681 = vmatmul.bf16.gmra.mxu0 %v4340
        %v4682 = vpop.f32.mrf.mxu0
        %v4683 = vadd.f32 %v4377, %v4682
        %v4684 = vpop.f32.mrf.mxu0
        %v4685 = vadd.f32 %v4377, %v4684
        %4686 = vdwg.mxu0
        %4687 = vmatpush.bf16.msra.mxu0 %v4507
        %4688 = vmatpush.bf16.msra.mxu0 %v4505
        %4689 = vmatpush.bf16.msra.mxu0 %v4503
        %4690 = vmatpush.bf16.msra.mxu0 %v4501
        %4691 = vmatpush.bf16.msra.mxu0 %v4499
        %4692 = vmatpush.bf16.msra.mxu0 %v4497
        %4693 = vmatpush.bf16.msra.mxu0 %v4495
        %4694 = vmatpush.bf16.msra.mxu0 %v4493
        %4695 = vmatmul.bf16.gmra.mxu0 %v4327
        %v4696 = vpop.f32.mrf.mxu0
        %v4697 = vadd.f32 %v4648, %v4696
        %v4698 = vpop.f32.mrf.mxu0
        %v4699 = vadd.f32 %v4650, %v4698
        %4700 = vmatmul.bf16.gmra.mxu0 %v4329
        %v4701 = vpop.f32.mrf.mxu0
        %v4702 = vadd.f32 %v4653, %v4701
        %v4703 = vpop.f32.mrf.mxu0
        %v4704 = vadd.f32 %v4655, %v4703
        %4705 = vmatmul.bf16.gmra.mxu0 %v4331
        %v4706 = vpop.f32.mrf.mxu0
        %v4707 = vadd.f32 %v4658, %v4706
        %v4708 = vpop.f32.mrf.mxu0
        %v4709 = vadd.f32 %v4660, %v4708
        %4710 = vmatmul.bf16.gmra.mxu0 %v4333
        %v4711 = vpop.f32.mrf.mxu0
        %v4712 = vadd.f32 %v4663, %v4711
        %v4713 = vpop.f32.mrf.mxu0
        %v4714 = vadd.f32 %v4665, %v4713
        %4715 = vmatmul.bf16.gmra.mxu0 %v4335
        %v4716 = vpop.f32.mrf.mxu0
        %v4717 = vadd.f32 %v4668, %v4716
        %v4718 = vpop.f32.mrf.mxu0
        %v4719 = vadd.f32 %v4670, %v4718
        %4720 = vmatmul.bf16.gmra.mxu0 %v4337
        %v4721 = vpop.f32.mrf.mxu0
        %v4722 = vadd.f32 %v4673, %v4721
        %v4723 = vpop.f32.mrf.mxu0
        %v4724 = vadd.f32 %v4675, %v4723
        %4725 = vmatmul.bf16.gmra.mxu0 %v4339
        %v4726 = vpop.f32.mrf.mxu0
        %v4727 = vadd.f32 %v4678, %v4726
        %v4728 = vpop.f32.mrf.mxu0
        %v4729 = vadd.f32 %v4680, %v4728
        %4730 = vmatmul.bf16.gmra.mxu0 %v4341
        %v4731 = vpop.f32.mrf.mxu0
        %v4732 = vadd.f32 %v4683, %v4731
        %v4733 = vpop.f32.mrf.mxu0
        %v4734 = vadd.f32 %v4685, %v4733
        %4735 = vdwg.mxu0
        %v4736 = vmax.f32 %v4599, 0.0
        %v4737 = vmax.f32 %v4697, 0.0
        %v4738 = vmax.f32 %v4601, 0.0
        %v4739 = vmax.f32 %v4699, 0.0
        %v4740 = vmax.f32 %v4604, 0.0
        %v4741 = vmax.f32 %v4702, 0.0
        %v4742 = vmax.f32 %v4606, 0.0
        %v4743 = vmax.f32 %v4704, 0.0
        %v4744 = vmax.f32 %v4609, 0.0
        %v4745 = vmax.f32 %v4707, 0.0
        %v4746 = vmax.f32 %v4611, 0.0
        %v4747 = vmax.f32 %v4709, 0.0
        %v4748 = vmax.f32 %v4614, 0.0
        %v4749 = vmax.f32 %v4712, 0.0
        %v4750 = vmax.f32 %v4616, 0.0
        %v4751 = vmax.f32 %v4714, 0.0
        %v4752 = vmax.f32 %v4619, 0.0
        %v4753 = vmax.f32 %v4717, 0.0
        %v4754 = vmax.f32 %v4621, 0.0
        %v4755 = vmax.f32 %v4719, 0.0
        %v4756 = vmax.f32 %v4624, 0.0
        %v4757 = vmax.f32 %v4722, 0.0
        %v4758 = vmax.f32 %v4626, 0.0
        %v4759 = vmax.f32 %v4724, 0.0
        %v4760 = vmax.f32 %v4629, 0.0
        %v4761 = vmax.f32 %v4727, 0.0
        %v4762 = vmax.f32 %v4631, 0.0
        %v4763 = vmax.f32 %v4729, 0.0
        %v4764 = vmax.f32 %v4634, 0.0
        %v4765 = vmax.f32 %v4732, 0.0
        %v4766 = vmax.f32 %v4636, 0.0
        %v4767 = vmax.f32 %v4734, 0.0
        %v4768 = vpack.c.bf16 %v4738, %v4736
        %v4769 = vpack.c.bf16 %v4739, %v4737
        %v4770 = vpack.c.bf16 %v4742, %v4740
        %v4771 = vpack.c.bf16 %v4743, %v4741
        %v4772 = vpack.c.bf16 %v4746, %v4744
        %v4773 = vpack.c.bf16 %v4747, %v4745
        %v4774 = vpack.c.bf16 %v4750, %v4748
        %v4775 = vpack.c.bf16 %v4751, %v4749
        %v4776 = vpack.c.bf16 %v4754, %v4752
        %v4777 = vpack.c.bf16 %v4755, %v4753
        %v4778 = vpack.c.bf16 %v4758, %v4756
        %v4779 = vpack.c.bf16 %v4759, %v4757
        %v4780 = vpack.c.bf16 %v4762, %v4760
        %v4781 = vpack.c.bf16 %v4763, %v4761
        %v4782 = vpack.c.bf16 %v4766, %v4764
        %v4783 = vpack.c.bf16 %v4767, %v4765
        %v4784 = vld [vmem:[#allocation13] sm:$0xff]
        %v4785 = vld [vmem:[#allocation13 + $0x8] sm:$0xff]
        %v4786 = vld [vmem:[#allocation13 + $0x10] sm:$0xff]
        %v4787 = vld [vmem:[#allocation13 + $0x18] sm:$0xff]
        %v4788 = vld [vmem:[#allocation13 + $0x20] sm:$0xff]
        %v4789 = vld [vmem:[#allocation13 + $0x28] sm:$0xff]
        %v4790 = vld [vmem:[#allocation13 + $0x30] sm:$0xff]
        %v4791 = vld [vmem:[#allocation13 + $0x38] sm:$0xff]
        %v4792 = vld [vmem:[#allocation13 + $0x40] sm:$0xff]
        %v4793 = vld [vmem:[#allocation13 + $0x48] sm:$0xff]
        %v4794 = vld [vmem:[#allocation13 + $0x50] sm:$0xff]
        %v4795 = vld [vmem:[#allocation13 + $0x58] sm:$0xff]
        %v4796 = vld [vmem:[#allocation13 + $0x60] sm:$0xff]
        %v4797 = vld [vmem:[#allocation13 + $0x68] sm:$0xff]
        %v4798 = vld [vmem:[#allocation13 + $0x70] sm:$0xff]
        %v4799 = vld [vmem:[#allocation13 + $0x78] sm:$0xff]
        %v4800 = vld [vmem:[#allocation13 + $0x80] sm:$0xff]
        %v4801 = vld [vmem:[#allocation13 + $0x88] sm:$0xff]
        %v4802 = vld [vmem:[#allocation13 + $0x90] sm:$0xff]
        %v4803 = vld [vmem:[#allocation13 + $0x98] sm:$0xff]
        %v4804 = vld [vmem:[#allocation13 + $0xa0] sm:$0xff]
        %v4805 = vld [vmem:[#allocation13 + $0xa8] sm:$0xff]
        %v4806 = vld [vmem:[#allocation13 + $0xb0] sm:$0xff]
        %v4807 = vld [vmem:[#allocation13 + $0xb8] sm:$0xff]
        %v4808 = vld [vmem:[#allocation13 + $0xc0] sm:$0xff]
        %v4809 = vld [vmem:[#allocation13 + $0xc8] sm:$0xff]
        %v4810 = vld [vmem:[#allocation13 + $0xd0] sm:$0xff]
        %v4811 = vld [vmem:[#allocation13 + $0xd8] sm:$0xff]
        %v4812 = vld [vmem:[#allocation13 + $0xe0] sm:$0xff]
        %v4813 = vld [vmem:[#allocation13 + $0xe8] sm:$0xff]
        %v4814 = vld [vmem:[#allocation13 + $0xf0] sm:$0xff]
        %v4815 = vld [vmem:[#allocation13 + $0xf8] sm:$0xff]
        %v4816 = vld [vmem:[%s12] sm:$0x3]
        %v4818 = vperm.slane %v4816, 0
        %v4819 = vperm.slane %v4816, 1
        %v4854 = vunpack.c.l.b16 %v4784
        %v4855 = vunpack.c.h.b16 %v4784
        %v4856 = vunpack.c.l.b16 %v4785
        %v4857 = vunpack.c.h.b16 %v4785
        %v4858 = vunpack.c.l.b16 %v4786
        %v4859 = vunpack.c.h.b16 %v4786
        %v4860 = vunpack.c.l.b16 %v4787
        %v4861 = vunpack.c.h.b16 %v4787
        %v4862 = vunpack.c.l.b16 %v4788
        %v4863 = vunpack.c.h.b16 %v4788
        %v4864 = vunpack.c.l.b16 %v4789
        %v4865 = vunpack.c.h.b16 %v4789
        %v4866 = vunpack.c.l.b16 %v4790
        %v4867 = vunpack.c.h.b16 %v4790
        %v4868 = vunpack.c.l.b16 %v4791
        %v4869 = vunpack.c.h.b16 %v4791
        %v4870 = vunpack.c.l.b16 %v4792
        %v4871 = vunpack.c.h.b16 %v4792
        %v4872 = vunpack.c.l.b16 %v4793
        %v4873 = vunpack.c.h.b16 %v4793
        %v4874 = vunpack.c.l.b16 %v4794
        %v4875 = vunpack.c.h.b16 %v4794
        %v4876 = vunpack.c.l.b16 %v4795
        %v4877 = vunpack.c.h.b16 %v4795
        %v4878 = vunpack.c.l.b16 %v4796
        %v4879 = vunpack.c.h.b16 %v4796
        %v4880 = vunpack.c.l.b16 %v4797
        %v4881 = vunpack.c.h.b16 %v4797
        %v4882 = vunpack.c.l.b16 %v4798
        %v4883 = vunpack.c.h.b16 %v4798
        %v4884 = vunpack.c.l.b16 %v4799
        %v4885 = vunpack.c.h.b16 %v4799
        %v4886 = vunpack.c.l.b16 %v4800
        %v4887 = vunpack.c.h.b16 %v4800
        %v4888 = vunpack.c.l.b16 %v4801
        %v4889 = vunpack.c.h.b16 %v4801
        %v4890 = vunpack.c.l.b16 %v4802
        %v4891 = vunpack.c.h.b16 %v4802
        %v4892 = vunpack.c.l.b16 %v4803
        %v4893 = vunpack.c.h.b16 %v4803
        %v4894 = vunpack.c.l.b16 %v4804
        %v4895 = vunpack.c.h.b16 %v4804
        %v4896 = vunpack.c.l.b16 %v4805
        %v4897 = vunpack.c.h.b16 %v4805
        %v4898 = vunpack.c.l.b16 %v4806
        %v4899 = vunpack.c.h.b16 %v4806
        %v4900 = vunpack.c.l.b16 %v4807
        %v4901 = vunpack.c.h.b16 %v4807
        %v4902 = vunpack.c.l.b16 %v4808
        %v4903 = vunpack.c.h.b16 %v4808
        %v4904 = vunpack.c.l.b16 %v4809
        %v4905 = vunpack.c.h.b16 %v4809
        %v4906 = vunpack.c.l.b16 %v4810
        %v4907 = vunpack.c.h.b16 %v4810
        %v4908 = vunpack.c.l.b16 %v4811
        %v4909 = vunpack.c.h.b16 %v4811
        %v4910 = vunpack.c.l.b16 %v4812
        %v4911 = vunpack.c.h.b16 %v4812
        %v4912 = vunpack.c.l.b16 %v4813
        %v4913 = vunpack.c.h.b16 %v4813
        %v4914 = vunpack.c.l.b16 %v4814
        %v4915 = vunpack.c.h.b16 %v4814
        %v4916 = vunpack.c.l.b16 %v4815
        %v4917 = vunpack.c.h.b16 %v4815
        %v4918 = vpack.c.b16 %v4856, %v4854
        %v4919 = vpack.c.b16 %v4857, %v4855
        %v4920 = vpack.c.b16 %v4860, %v4858
        %v4921 = vpack.c.b16 %v4861, %v4859
        %v4922 = vpack.c.b16 %v4864, %v4862
        %v4923 = vpack.c.b16 %v4865, %v4863
        %v4924 = vpack.c.b16 %v4868, %v4866
        %v4925 = vpack.c.b16 %v4869, %v4867
        %v4926 = vpack.c.b16 %v4872, %v4870
        %v4927 = vpack.c.b16 %v4873, %v4871
        %v4928 = vpack.c.b16 %v4876, %v4874
        %v4929 = vpack.c.b16 %v4877, %v4875
        %v4930 = vpack.c.b16 %v4880, %v4878
        %v4931 = vpack.c.b16 %v4881, %v4879
        %v4932 = vpack.c.b16 %v4884, %v4882
        %v4933 = vpack.c.b16 %v4885, %v4883
        %v4934 = vpack.c.b16 %v4888, %v4886
        %v4935 = vpack.c.b16 %v4889, %v4887
        %v4936 = vpack.c.b16 %v4892, %v4890
        %v4937 = vpack.c.b16 %v4893, %v4891
        %v4938 = vpack.c.b16 %v4896, %v4894
        %v4939 = vpack.c.b16 %v4897, %v4895
        %v4940 = vpack.c.b16 %v4900, %v4898
        %v4941 = vpack.c.b16 %v4901, %v4899
        %v4942 = vpack.c.b16 %v4904, %v4902
        %v4943 = vpack.c.b16 %v4905, %v4903
        %v4944 = vpack.c.b16 %v4908, %v4906
        %v4945 = vpack.c.b16 %v4909, %v4907
        %v4946 = vpack.c.b16 %v4912, %v4910
        %v4947 = vpack.c.b16 %v4913, %v4911
        %v4948 = vpack.c.b16 %v4916, %v4914
        %v4949 = vpack.c.b16 %v4917, %v4915
        %4982 = vmatpush.bf16.msra.mxu0 %v4932
        %4983 = vmatpush.bf16.msra.mxu0 %v4930
        %4984 = vmatpush.bf16.msra.mxu0 %v4928
        %4985 = vmatpush.bf16.msra.mxu0 %v4926
        %4986 = vmatpush.bf16.msra.mxu0 %v4924
        %4987 = vmatpush.bf16.msra.mxu0 %v4922
        %4988 = vmatpush.bf16.msra.mxu0 %v4920
        %4989 = vmatpush.bf16.msra.mxu0 %v4918
        %4990 = vmatmul.bf16.gmra.mxu0 %v4768
        %v4991 = vpop.f32.mrf.mxu0
        %v4992 = vadd.f32 %v4818, %v4991
        %v4993 = vpop.f32.mrf.mxu0
        %v4994 = vadd.f32 %v4818, %v4993
        %4995 = vmatmul.bf16.gmra.mxu0 %v4770
        %v4996 = vpop.f32.mrf.mxu0
        %v4997 = vadd.f32 %v4818, %v4996
        %v4998 = vpop.f32.mrf.mxu0
        %v4999 = vadd.f32 %v4818, %v4998
        %5000 = vmatmul.bf16.gmra.mxu0 %v4772
        %v5001 = vpop.f32.mrf.mxu0
        %v5002 = vadd.f32 %v4818, %v5001
        %v5003 = vpop.f32.mrf.mxu0
        %v5004 = vadd.f32 %v4818, %v5003
        %5005 = vmatmul.bf16.gmra.mxu0 %v4774
        %v5006 = vpop.f32.mrf.mxu0
        %v5007 = vadd.f32 %v4818, %v5006
        %v5008 = vpop.f32.mrf.mxu0
        %v5009 = vadd.f32 %v4818, %v5008
        %5010 = vmatmul.bf16.gmra.mxu0 %v4776
        %v5011 = vpop.f32.mrf.mxu0
        %v5012 = vadd.f32 %v4818, %v5011
        %v5013 = vpop.f32.mrf.mxu0
        %v5014 = vadd.f32 %v4818, %v5013
        %5015 = vmatmul.bf16.gmra.mxu0 %v4778
        %v5016 = vpop.f32.mrf.mxu0
        %v5017 = vadd.f32 %v4818, %v5016
        %v5018 = vpop.f32.mrf.mxu0
        %v5019 = vadd.f32 %v4818, %v5018
        %5020 = vmatmul.bf16.gmra.mxu0 %v4780
        %v5021 = vpop.f32.mrf.mxu0
        %v5022 = vadd.f32 %v4818, %v5021
        %v5023 = vpop.f32.mrf.mxu0
        %v5024 = vadd.f32 %v4818, %v5023
        %5025 = vmatmul.bf16.gmra.mxu0 %v4782
        %v5026 = vpop.f32.mrf.mxu0
        %v5027 = vadd.f32 %v4818, %v5026
        %v5028 = vpop.f32.mrf.mxu0
        %v5029 = vadd.f32 %v4818, %v5028
        %5030 = vdwg.mxu0
        %5031 = vmatpush.bf16.msra.mxu0 %v4948
        %5032 = vmatpush.bf16.msra.mxu0 %v4946
        %5033 = vmatpush.bf16.msra.mxu0 %v4944
        %5034 = vmatpush.bf16.msra.mxu0 %v4942
        %5035 = vmatpush.bf16.msra.mxu0 %v4940
        %5036 = vmatpush.bf16.msra.mxu0 %v4938
        %5037 = vmatpush.bf16.msra.mxu0 %v4936
        %5038 = vmatpush.bf16.msra.mxu0 %v4934
        %5039 = vmatmul.bf16.gmra.mxu0 %v4769
        %v5040 = vpop.f32.mrf.mxu0
        %v5041 = vadd.f32 %v4992, %v5040
        %v5042 = vpop.f32.mrf.mxu0
        %v5043 = vadd.f32 %v4994, %v5042
        %5044 = vmatmul.bf16.gmra.mxu0 %v4771
        %v5045 = vpop.f32.mrf.mxu0
        %v5046 = vadd.f32 %v4997, %v5045
        %v5047 = vpop.f32.mrf.mxu0
        %v5048 = vadd.f32 %v4999, %v5047
        %5049 = vmatmul.bf16.gmra.mxu0 %v4773
        %v5050 = vpop.f32.mrf.mxu0
        %v5051 = vadd.f32 %v5002, %v5050
        %v5052 = vpop.f32.mrf.mxu0
        %v5053 = vadd.f32 %v5004, %v5052
        %5054 = vmatmul.bf16.gmra.mxu0 %v4775
        %v5055 = vpop.f32.mrf.mxu0
        %v5056 = vadd.f32 %v5007, %v5055
        %v5057 = vpop.f32.mrf.mxu0
        %v5058 = vadd.f32 %v5009, %v5057
        %5059 = vmatmul.bf16.gmra.mxu0 %v4777
        %v5060 = vpop.f32.mrf.mxu0
        %v5061 = vadd.f32 %v5012, %v5060
        %v5062 = vpop.f32.mrf.mxu0
        %v5063 = vadd.f32 %v5014, %v5062
        %5064 = vmatmul.bf16.gmra.mxu0 %v4779
        %v5065 = vpop.f32.mrf.mxu0
        %v5066 = vadd.f32 %v5017, %v5065
        %v5067 = vpop.f32.mrf.mxu0
        %v5068 = vadd.f32 %v5019, %v5067
        %5069 = vmatmul.bf16.gmra.mxu0 %v4781
        %v5070 = vpop.f32.mrf.mxu0
        %v5071 = vadd.f32 %v5022, %v5070
        %v5072 = vpop.f32.mrf.mxu0
        %v5073 = vadd.f32 %v5024, %v5072
        %5074 = vmatmul.bf16.gmra.mxu0 %v4783
        %v5075 = vpop.f32.mrf.mxu0
        %v5076 = vadd.f32 %v5027, %v5075
        %v5077 = vpop.f32.mrf.mxu0
        %v5078 = vadd.f32 %v5029, %v5077
        %5079 = vdwg.mxu0
        %5080 = vmatpush.bf16.msra.mxu0 %v4933
        %5081 = vmatpush.bf16.msra.mxu0 %v4931
        %5082 = vmatpush.bf16.msra.mxu0 %v4929
        %5083 = vmatpush.bf16.msra.mxu0 %v4927
        %5084 = vmatpush.bf16.msra.mxu0 %v4925
        %5085 = vmatpush.bf16.msra.mxu0 %v4923
        %5086 = vmatpush.bf16.msra.mxu0 %v4921
        %5087 = vmatpush.bf16.msra.mxu0 %v4919
        %5088 = vmatmul.bf16.gmra.mxu0 %v4768
        %v5089 = vpop.f32.mrf.mxu0
        %v5090 = vadd.f32 %v4819, %v5089
        %v5091 = vpop.f32.mrf.mxu0
        %v5092 = vadd.f32 %v4819, %v5091
        %5093 = vmatmul.bf16.gmra.mxu0 %v4770
        %v5094 = vpop.f32.mrf.mxu0
        %v5095 = vadd.f32 %v4819, %v5094
        %v5096 = vpop.f32.mrf.mxu0
        %v5097 = vadd.f32 %v4819, %v5096
        %5098 = vmatmul.bf16.gmra.mxu0 %v4772
        %v5099 = vpop.f32.mrf.mxu0
        %v5100 = vadd.f32 %v4819, %v5099
        %v5101 = vpop.f32.mrf.mxu0
        %v5102 = vadd.f32 %v4819, %v5101
        %5103 = vmatmul.bf16.gmra.mxu0 %v4774
        %v5104 = vpop.f32.mrf.mxu0
        %v5105 = vadd.f32 %v4819, %v5104
        %v5106 = vpop.f32.mrf.mxu0
        %v5107 = vadd.f32 %v4819, %v5106
        %5108 = vmatmul.bf16.gmra.mxu0 %v4776
        %v5109 = vpop.f32.mrf.mxu0
        %v5110 = vadd.f32 %v4819, %v5109
        %v5111 = vpop.f32.mrf.mxu0
        %v5112 = vadd.f32 %v4819, %v5111
        %5113 = vmatmul.bf16.gmra.mxu0 %v4778
        %v5114 = vpop.f32.mrf.mxu0
        %v5115 = vadd.f32 %v4819, %v5114
        %v5116 = vpop.f32.mrf.mxu0
        %v5117 = vadd.f32 %v4819, %v5116
        %5118 = vmatmul.bf16.gmra.mxu0 %v4780
        %v5119 = vpop.f32.mrf.mxu0
        %v5120 = vadd.f32 %v4819, %v5119
        %v5121 = vpop.f32.mrf.mxu0
        %v5122 = vadd.f32 %v4819, %v5121
        %5123 = vmatmul.bf16.gmra.mxu0 %v4782
        %v5124 = vpop.f32.mrf.mxu0
        %v5125 = vadd.f32 %v4819, %v5124
        %v5126 = vpop.f32.mrf.mxu0
        %v5127 = vadd.f32 %v4819, %v5126
        %5128 = vdwg.mxu0
        %5129 = vmatpush.bf16.msra.mxu0 %v4949
        %5130 = vmatpush.bf16.msra.mxu0 %v4947
        %5131 = vmatpush.bf16.msra.mxu0 %v4945
        %5132 = vmatpush.bf16.msra.mxu0 %v4943
        %5133 = vmatpush.bf16.msra.mxu0 %v4941
        %5134 = vmatpush.bf16.msra.mxu0 %v4939
        %5135 = vmatpush.bf16.msra.mxu0 %v4937
        %5136 = vmatpush.bf16.msra.mxu0 %v4935
        %5137 = vmatmul.bf16.gmra.mxu0 %v4769
        %v5138 = vpop.f32.mrf.mxu0
        %v5139 = vadd.f32 %v5090, %v5138
        %v5140 = vpop.f32.mrf.mxu0
        %v5141 = vadd.f32 %v5092, %v5140
        %5142 = vmatmul.bf16.gmra.mxu0 %v4771
        %v5143 = vpop.f32.mrf.mxu0
        %v5144 = vadd.f32 %v5095, %v5143
        %v5145 = vpop.f32.mrf.mxu0
        %v5146 = vadd.f32 %v5097, %v5145
        %5147 = vmatmul.bf16.gmra.mxu0 %v4773
        %v5148 = vpop.f32.mrf.mxu0
        %v5149 = vadd.f32 %v5100, %v5148
        %v5150 = vpop.f32.mrf.mxu0
        %v5151 = vadd.f32 %v5102, %v5150
        %5152 = vmatmul.bf16.gmra.mxu0 %v4775
        %v5153 = vpop.f32.mrf.mxu0
        %v5154 = vadd.f32 %v5105, %v5153
        %v5155 = vpop.f32.mrf.mxu0
        %v5156 = vadd.f32 %v5107, %v5155
        %5157 = vmatmul.bf16.gmra.mxu0 %v4777
        %v5158 = vpop.f32.mrf.mxu0
        %v5159 = vadd.f32 %v5110, %v5158
        %v5160 = vpop.f32.mrf.mxu0
        %v5161 = vadd.f32 %v5112, %v5160
        %5162 = vmatmul.bf16.gmra.mxu0 %v4779
        %v5163 = vpop.f32.mrf.mxu0
        %v5164 = vadd.f32 %v5115, %v5163
        %v5165 = vpop.f32.mrf.mxu0
        %v5166 = vadd.f32 %v5117, %v5165
        %5167 = vmatmul.bf16.gmra.mxu0 %v4781
        %v5168 = vpop.f32.mrf.mxu0
        %v5169 = vadd.f32 %v5120, %v5168
        %v5170 = vpop.f32.mrf.mxu0
        %v5171 = vadd.f32 %v5122, %v5170
        %5172 = vmatmul.bf16.gmra.mxu0 %v4783
        %v5173 = vpop.f32.mrf.mxu0
        %v5174 = vadd.f32 %v5125, %v5173
        %v5175 = vpop.f32.mrf.mxu0
        %v5176 = vadd.f32 %v5127, %v5175
        %5177 = vdwg.mxu0
        %v5178 = vmax.f32 %v5041, 0.0
        %v5179 = vmax.f32 %v5139, 0.0
        %v5180 = vmax.f32 %v5043, 0.0
        %v5181 = vmax.f32 %v5141, 0.0
        %v5182 = vmax.f32 %v5046, 0.0
        %v5183 = vmax.f32 %v5144, 0.0
        %v5184 = vmax.f32 %v5048, 0.0
        %v5185 = vmax.f32 %v5146, 0.0
        %v5186 = vmax.f32 %v5051, 0.0
        %v5187 = vmax.f32 %v5149, 0.0
        %v5188 = vmax.f32 %v5053, 0.0
        %v5189 = vmax.f32 %v5151, 0.0
        %v5190 = vmax.f32 %v5056, 0.0
        %v5191 = vmax.f32 %v5154, 0.0
        %v5192 = vmax.f32 %v5058, 0.0
        %v5193 = vmax.f32 %v5156, 0.0
        %v5194 = vmax.f32 %v5061, 0.0
        %v5195 = vmax.f32 %v5159, 0.0
        %v5196 = vmax.f32 %v5063, 0.0
        %v5197 = vmax.f32 %v5161, 0.0
        %v5198 = vmax.f32 %v5066, 0.0
        %v5199 = vmax.f32 %v5164, 0.0
        %v5200 = vmax.f32 %v5068, 0.0
        %v5201 = vmax.f32 %v5166, 0.0
        %v5202 = vmax.f32 %v5071, 0.0
        %v5203 = vmax.f32 %v5169, 0.0
        %v5204 = vmax.f32 %v5073, 0.0
        %v5205 = vmax.f32 %v5171, 0.0
        %v5206 = vmax.f32 %v5076, 0.0
        %v5207 = vmax.f32 %v5174, 0.0
        %v5208 = vmax.f32 %v5078, 0.0
        %v5209 = vmax.f32 %v5176, 0.0
        %v5210 = vpack.c.bf16 %v5180, %v5178
        %v5211 = vpack.c.bf16 %v5181, %v5179
        %v5212 = vpack.c.bf16 %v5184, %v5182
        %v5213 = vpack.c.bf16 %v5185, %v5183
        %v5214 = vpack.c.bf16 %v5188, %v5186
        %v5215 = vpack.c.bf16 %v5189, %v5187
        %v5216 = vpack.c.bf16 %v5192, %v5190
        %v5217 = vpack.c.bf16 %v5193, %v5191
        %v5218 = vpack.c.bf16 %v5196, %v5194
        %v5219 = vpack.c.bf16 %v5197, %v5195
        %v5220 = vpack.c.bf16 %v5200, %v5198
        %v5221 = vpack.c.bf16 %v5201, %v5199
        %v5222 = vpack.c.bf16 %v5204, %v5202
        %v5223 = vpack.c.bf16 %v5205, %v5203
        %v5224 = vpack.c.bf16 %v5208, %v5206
        %v5225 = vpack.c.bf16 %v5209, %v5207
        %v5226 = vld [vmem:[#allocation15] sm:$0xff]
        %v5227 = vld [vmem:[#allocation15 + $0x8] sm:$0xff]
        %v5228 = vld [vmem:[#allocation15 + $0x10] sm:$0xff]
        %v5229 = vld [vmem:[#allocation15 + $0x18] sm:$0xff]
        %v5230 = vld [vmem:[#allocation15 + $0x20] sm:$0xff]
        %v5231 = vld [vmem:[#allocation15 + $0x28] sm:$0xff]
        %v5232 = vld [vmem:[#allocation15 + $0x30] sm:$0xff]
        %v5233 = vld [vmem:[#allocation15 + $0x38] sm:$0xff]
        %v5234 = vld [vmem:[#allocation15 + $0x40] sm:$0xff]
        %v5235 = vld [vmem:[#allocation15 + $0x48] sm:$0xff]
        %v5236 = vld [vmem:[#allocation15 + $0x50] sm:$0xff]
        %v5237 = vld [vmem:[#allocation15 + $0x58] sm:$0xff]
        %v5238 = vld [vmem:[#allocation15 + $0x60] sm:$0xff]
        %v5239 = vld [vmem:[#allocation15 + $0x68] sm:$0xff]
        %v5240 = vld [vmem:[#allocation15 + $0x70] sm:$0xff]
        %v5241 = vld [vmem:[#allocation15 + $0x78] sm:$0xff]
        %v5242 = vld [vmem:[#allocation15 + $0x80] sm:$0xff]
        %v5243 = vld [vmem:[#allocation15 + $0x88] sm:$0xff]
        %v5244 = vld [vmem:[#allocation15 + $0x90] sm:$0xff]
        %v5245 = vld [vmem:[#allocation15 + $0x98] sm:$0xff]
        %v5246 = vld [vmem:[#allocation15 + $0xa0] sm:$0xff]
        %v5247 = vld [vmem:[#allocation15 + $0xa8] sm:$0xff]
        %v5248 = vld [vmem:[#allocation15 + $0xb0] sm:$0xff]
        %v5249 = vld [vmem:[#allocation15 + $0xb8] sm:$0xff]
        %v5250 = vld [vmem:[#allocation15 + $0xc0] sm:$0xff]
        %v5251 = vld [vmem:[#allocation15 + $0xc8] sm:$0xff]
        %v5252 = vld [vmem:[#allocation15 + $0xd0] sm:$0xff]
        %v5253 = vld [vmem:[#allocation15 + $0xd8] sm:$0xff]
        %v5254 = vld [vmem:[#allocation15 + $0xe0] sm:$0xff]
        %v5255 = vld [vmem:[#allocation15 + $0xe8] sm:$0xff]
        %v5256 = vld [vmem:[#allocation15 + $0xf0] sm:$0xff]
        %v5257 = vld [vmem:[#allocation15 + $0xf8] sm:$0xff]
        %v5258 = vld [vmem:[%s14] sm:$0x3]
        %v5260 = vperm.slane %v5258, 0
        %v5261 = vperm.slane %v5258, 1
        %v5296 = vunpack.c.l.b16 %v5226
        %v5297 = vunpack.c.h.b16 %v5226
        %v5298 = vunpack.c.l.b16 %v5227
        %v5299 = vunpack.c.h.b16 %v5227
        %v5300 = vunpack.c.l.b16 %v5228
        %v5301 = vunpack.c.h.b16 %v5228
        %v5302 = vunpack.c.l.b16 %v5229
        %v5303 = vunpack.c.h.b16 %v5229
        %v5304 = vunpack.c.l.b16 %v5230
        %v5305 = vunpack.c.h.b16 %v5230
        %v5306 = vunpack.c.l.b16 %v5231
        %v5307 = vunpack.c.h.b16 %v5231
        %v5308 = vunpack.c.l.b16 %v5232
        %v5309 = vunpack.c.h.b16 %v5232
        %v5310 = vunpack.c.l.b16 %v5233
        %v5311 = vunpack.c.h.b16 %v5233
        %v5312 = vunpack.c.l.b16 %v5234
        %v5313 = vunpack.c.h.b16 %v5234
        %v5314 = vunpack.c.l.b16 %v5235
        %v5315 = vunpack.c.h.b16 %v5235
        %v5316 = vunpack.c.l.b16 %v5236
        %v5317 = vunpack.c.h.b16 %v5236
        %v5318 = vunpack.c.l.b16 %v5237
        %v5319 = vunpack.c.h.b16 %v5237
        %v5320 = vunpack.c.l.b16 %v5238
        %v5321 = vunpack.c.h.b16 %v5238
        %v5322 = vunpack.c.l.b16 %v5239
        %v5323 = vunpack.c.h.b16 %v5239
        %v5324 = vunpack.c.l.b16 %v5240
        %v5325 = vunpack.c.h.b16 %v5240
        %v5326 = vunpack.c.l.b16 %v5241
        %v5327 = vunpack.c.h.b16 %v5241
        %v5328 = vunpack.c.l.b16 %v5242
        %v5329 = vunpack.c.h.b16 %v5242
        %v5330 = vunpack.c.l.b16 %v5243
        %v5331 = vunpack.c.h.b16 %v5243
        %v5332 = vunpack.c.l.b16 %v5244
        %v5333 = vunpack.c.h.b16 %v5244
        %v5334 = vunpack.c.l.b16 %v5245
        %v5335 = vunpack.c.h.b16 %v5245
        %v5336 = vunpack.c.l.b16 %v5246
        %v5337 = vunpack.c.h.b16 %v5246
        %v5338 = vunpack.c.l.b16 %v5247
        %v5339 = vunpack.c.h.b16 %v5247
        %v5340 = vunpack.c.l.b16 %v5248
        %v5341 = vunpack.c.h.b16 %v5248
        %v5342 = vunpack.c.l.b16 %v5249
        %v5343 = vunpack.c.h.b16 %v5249
        %v5344 = vunpack.c.l.b16 %v5250
        %v5345 = vunpack.c.h.b16 %v5250
        %v5346 = vunpack.c.l.b16 %v5251
        %v5347 = vunpack.c.h.b16 %v5251
        %v5348 = vunpack.c.l.b16 %v5252
        %v5349 = vunpack.c.h.b16 %v5252
        %v5350 = vunpack.c.l.b16 %v5253
        %v5351 = vunpack.c.h.b16 %v5253
        %v5352 = vunpack.c.l.b16 %v5254
        %v5353 = vunpack.c.h.b16 %v5254
        %v5354 = vunpack.c.l.b16 %v5255
        %v5355 = vunpack.c.h.b16 %v5255
        %v5356 = vunpack.c.l.b16 %v5256
        %v5357 = vunpack.c.h.b16 %v5256
        %v5358 = vunpack.c.l.b16 %v5257
        %v5359 = vunpack.c.h.b16 %v5257
        %v5360 = vpack.c.b16 %v5298, %v5296
        %v5361 = vpack.c.b16 %v5299, %v5297
        %v5362 = vpack.c.b16 %v5302, %v5300
        %v5363 = vpack.c.b16 %v5303, %v5301
        %v5364 = vpack.c.b16 %v5306, %v5304
        %v5365 = vpack.c.b16 %v5307, %v5305
        %v5366 = vpack.c.b16 %v5310, %v5308
        %v5367 = vpack.c.b16 %v5311, %v5309
        %v5368 = vpack.c.b16 %v5314, %v5312
        %v5369 = vpack.c.b16 %v5315, %v5313
        %v5370 = vpack.c.b16 %v5318, %v5316
        %v5371 = vpack.c.b16 %v5319, %v5317
        %v5372 = vpack.c.b16 %v5322, %v5320
        %v5373 = vpack.c.b16 %v5323, %v5321
        %v5374 = vpack.c.b16 %v5326, %v5324
        %v5375 = vpack.c.b16 %v5327, %v5325
        %v5376 = vpack.c.b16 %v5330, %v5328
        %v5377 = vpack.c.b16 %v5331, %v5329
        %v5378 = vpack.c.b16 %v5334, %v5332
        %v5379 = vpack.c.b16 %v5335, %v5333
        %v5380 = vpack.c.b16 %v5338, %v5336
        %v5381 = vpack.c.b16 %v5339, %v5337
        %v5382 = vpack.c.b16 %v5342, %v5340
        %v5383 = vpack.c.b16 %v5343, %v5341
        %v5384 = vpack.c.b16 %v5346, %v5344
        %v5385 = vpack.c.b16 %v5347, %v5345
        %v5386 = vpack.c.b16 %v5350, %v5348
        %v5387 = vpack.c.b16 %v5351, %v5349
        %v5388 = vpack.c.b16 %v5354, %v5352
        %v5389 = vpack.c.b16 %v5355, %v5353
        %v5390 = vpack.c.b16 %v5358, %v5356
        %v5391 = vpack.c.b16 %v5359, %v5357
        %5424 = vmatpush.bf16.msra.mxu0 %v5374
        %5425 = vmatpush.bf16.msra.mxu0 %v5372
        %5426 = vmatpush.bf16.msra.mxu0 %v5370
        %5427 = vmatpush.bf16.msra.mxu0 %v5368
        %5428 = vmatpush.bf16.msra.mxu0 %v5366
        %5429 = vmatpush.bf16.msra.mxu0 %v5364
        %5430 = vmatpush.bf16.msra.mxu0 %v5362
        %5431 = vmatpush.bf16.msra.mxu0 %v5360
        %5432 = vmatmul.bf16.gmra.mxu0 %v5210
        %v5433 = vpop.f32.mrf.mxu0
        %v5434 = vadd.f32 %v5260, %v5433
        %v5435 = vpop.f32.mrf.mxu0
        %v5436 = vadd.f32 %v5260, %v5435
        %5437 = vmatmul.bf16.gmra.mxu0 %v5212
        %v5438 = vpop.f32.mrf.mxu0
        %v5439 = vadd.f32 %v5260, %v5438
        %v5440 = vpop.f32.mrf.mxu0
        %v5441 = vadd.f32 %v5260, %v5440
        %5442 = vmatmul.bf16.gmra.mxu0 %v5214
        %v5443 = vpop.f32.mrf.mxu0
        %v5444 = vadd.f32 %v5260, %v5443
        %v5445 = vpop.f32.mrf.mxu0
        %v5446 = vadd.f32 %v5260, %v5445
        %5447 = vmatmul.bf16.gmra.mxu0 %v5216
        %v5448 = vpop.f32.mrf.mxu0
        %v5449 = vadd.f32 %v5260, %v5448
        %v5450 = vpop.f32.mrf.mxu0
        %v5451 = vadd.f32 %v5260, %v5450
        %5452 = vmatmul.bf16.gmra.mxu0 %v5218
        %v5453 = vpop.f32.mrf.mxu0
        %v5454 = vadd.f32 %v5260, %v5453
        %v5455 = vpop.f32.mrf.mxu0
        %v5456 = vadd.f32 %v5260, %v5455
        %5457 = vmatmul.bf16.gmra.mxu0 %v5220
        %v5458 = vpop.f32.mrf.mxu0
        %v5459 = vadd.f32 %v5260, %v5458
        %v5460 = vpop.f32.mrf.mxu0
        %v5461 = vadd.f32 %v5260, %v5460
        %5462 = vmatmul.bf16.gmra.mxu0 %v5222
        %v5463 = vpop.f32.mrf.mxu0
        %v5464 = vadd.f32 %v5260, %v5463
        %v5465 = vpop.f32.mrf.mxu0
        %v5466 = vadd.f32 %v5260, %v5465
        %5467 = vmatmul.bf16.gmra.mxu0 %v5224
        %v5468 = vpop.f32.mrf.mxu0
        %v5469 = vadd.f32 %v5260, %v5468
        %v5470 = vpop.f32.mrf.mxu0
        %v5471 = vadd.f32 %v5260, %v5470
        %5472 = vdwg.mxu0
        %5473 = vmatpush.bf16.msra.mxu0 %v5390
        %5474 = vmatpush.bf16.msra.mxu0 %v5388
        %5475 = vmatpush.bf16.msra.mxu0 %v5386
        %5476 = vmatpush.bf16.msra.mxu0 %v5384
        %5477 = vmatpush.bf16.msra.mxu0 %v5382
        %5478 = vmatpush.bf16.msra.mxu0 %v5380
        %5479 = vmatpush.bf16.msra.mxu0 %v5378
        %5480 = vmatpush.bf16.msra.mxu0 %v5376
        %5481 = vmatmul.bf16.gmra.mxu0 %v5211
        %v5482 = vpop.f32.mrf.mxu0
        %v5483 = vadd.f32 %v5434, %v5482
        %v5484 = vpop.f32.mrf.mxu0
        %v5485 = vadd.f32 %v5436, %v5484
        %5486 = vmatmul.bf16.gmra.mxu0 %v5213
        %v5487 = vpop.f32.mrf.mxu0
        %v5488 = vadd.f32 %v5439, %v5487
        %v5489 = vpop.f32.mrf.mxu0
        %v5490 = vadd.f32 %v5441, %v5489
        %5491 = vmatmul.bf16.gmra.mxu0 %v5215
        %v5492 = vpop.f32.mrf.mxu0
        %v5493 = vadd.f32 %v5444, %v5492
        %v5494 = vpop.f32.mrf.mxu0
        %v5495 = vadd.f32 %v5446, %v5494
        %5496 = vmatmul.bf16.gmra.mxu0 %v5217
        %v5497 = vpop.f32.mrf.mxu0
        %v5498 = vadd.f32 %v5449, %v5497
        %v5499 = vpop.f32.mrf.mxu0
        %v5500 = vadd.f32 %v5451, %v5499
        %5501 = vmatmul.bf16.gmra.mxu0 %v5219
        %v5502 = vpop.f32.mrf.mxu0
        %v5503 = vadd.f32 %v5454, %v5502
        %v5504 = vpop.f32.mrf.mxu0
        %v5505 = vadd.f32 %v5456, %v5504
        %5506 = vmatmul.bf16.gmra.mxu0 %v5221
        %v5507 = vpop.f32.mrf.mxu0
        %v5508 = vadd.f32 %v5459, %v5507
        %v5509 = vpop.f32.mrf.mxu0
        %v5510 = vadd.f32 %v5461, %v5509
        %5511 = vmatmul.bf16.gmra.mxu0 %v5223
        %v5512 = vpop.f32.mrf.mxu0
        %v5513 = vadd.f32 %v5464, %v5512
        %v5514 = vpop.f32.mrf.mxu0
        %v5515 = vadd.f32 %v5466, %v5514
        %5516 = vmatmul.bf16.gmra.mxu0 %v5225
        %v5517 = vpop.f32.mrf.mxu0
        %v5518 = vadd.f32 %v5469, %v5517
        %v5519 = vpop.f32.mrf.mxu0
        %v5520 = vadd.f32 %v5471, %v5519
        %5521 = vdwg.mxu0
        %5522 = vmatpush.bf16.msra.mxu0 %v5375
        %5523 = vmatpush.bf16.msra.mxu0 %v5373
        %5524 = vmatpush.bf16.msra.mxu0 %v5371
        %5525 = vmatpush.bf16.msra.mxu0 %v5369
        %5526 = vmatpush.bf16.msra.mxu0 %v5367
        %5527 = vmatpush.bf16.msra.mxu0 %v5365
        %5528 = vmatpush.bf16.msra.mxu0 %v5363
        %5529 = vmatpush.bf16.msra.mxu0 %v5361
        %5530 = vmatmul.bf16.gmra.mxu0 %v5210
        %v5531 = vpop.f32.mrf.mxu0
        %v5532 = vadd.f32 %v5261, %v5531
        %v5533 = vpop.f32.mrf.mxu0
        %v5534 = vadd.f32 %v5261, %v5533
        %5535 = vmatmul.bf16.gmra.mxu0 %v5212
        %v5536 = vpop.f32.mrf.mxu0
        %v5537 = vadd.f32 %v5261, %v5536
        %v5538 = vpop.f32.mrf.mxu0
        %v5539 = vadd.f32 %v5261, %v5538
        %5540 = vmatmul.bf16.gmra.mxu0 %v5214
        %v5541 = vpop.f32.mrf.mxu0
        %v5542 = vadd.f32 %v5261, %v5541
        %v5543 = vpop.f32.mrf.mxu0
        %v5544 = vadd.f32 %v5261, %v5543
        %5545 = vmatmul.bf16.gmra.mxu0 %v5216
        %v5546 = vpop.f32.mrf.mxu0
        %v5547 = vadd.f32 %v5261, %v5546
        %v5548 = vpop.f32.mrf.mxu0
        %v5549 = vadd.f32 %v5261, %v5548
        %5550 = vmatmul.bf16.gmra.mxu0 %v5218
        %v5551 = vpop.f32.mrf.mxu0
        %v5552 = vadd.f32 %v5261, %v5551
        %v5553 = vpop.f32.mrf.mxu0
        %v5554 = vadd.f32 %v5261, %v5553
        %5555 = vmatmul.bf16.gmra.mxu0 %v5220
        %v5556 = vpop.f32.mrf.mxu0
        %v5557 = vadd.f32 %v5261, %v5556
        %v5558 = vpop.f32.mrf.mxu0
        %v5559 = vadd.f32 %v5261, %v5558
        %5560 = vmatmul.bf16.gmra.mxu0 %v5222
        %v5561 = vpop.f32.mrf.mxu0
        %v5562 = vadd.f32 %v5261, %v5561
        %v5563 = vpop.f32.mrf.mxu0
        %v5564 = vadd.f32 %v5261, %v5563
        %5565 = vmatmul.bf16.gmra.mxu0 %v5224
        %v5566 = vpop.f32.mrf.mxu0
        %v5567 = vadd.f32 %v5261, %v5566
        %v5568 = vpop.f32.mrf.mxu0
        %v5569 = vadd.f32 %v5261, %v5568
        %5570 = vdwg.mxu0
        %5571 = vmatpush.bf16.msra.mxu0 %v5391
        %5572 = vmatpush.bf16.msra.mxu0 %v5389
        %5573 = vmatpush.bf16.msra.mxu0 %v5387
        %5574 = vmatpush.bf16.msra.mxu0 %v5385
        %5575 = vmatpush.bf16.msra.mxu0 %v5383
        %5576 = vmatpush.bf16.msra.mxu0 %v5381
        %5577 = vmatpush.bf16.msra.mxu0 %v5379
        %5578 = vmatpush.bf16.msra.mxu0 %v5377
        %5579 = vmatmul.bf16.gmra.mxu0 %v5211
        %v5580 = vpop.f32.mrf.mxu0
        %v5581 = vadd.f32 %v5532, %v5580
        %v5582 = vpop.f32.mrf.mxu0
        %v5583 = vadd.f32 %v5534, %v5582
        %5584 = vmatmul.bf16.gmra.mxu0 %v5213
        %v5585 = vpop.f32.mrf.mxu0
        %v5586 = vadd.f32 %v5537, %v5585
        %v5587 = vpop.f32.mrf.mxu0
        %v5588 = vadd.f32 %v5539, %v5587
        %5589 = vmatmul.bf16.gmra.mxu0 %v5215
        %v5590 = vpop.f32.mrf.mxu0
        %v5591 = vadd.f32 %v5542, %v5590
        %v5592 = vpop.f32.mrf.mxu0
        %v5593 = vadd.f32 %v5544, %v5592
        %5594 = vmatmul.bf16.gmra.mxu0 %v5217
        %v5595 = vpop.f32.mrf.mxu0
        %v5596 = vadd.f32 %v5547, %v5595
        %v5597 = vpop.f32.mrf.mxu0
        %v5598 = vadd.f32 %v5549, %v5597
        %5599 = vmatmul.bf16.gmra.mxu0 %v5219
        %v5600 = vpop.f32.mrf.mxu0
        %v5601 = vadd.f32 %v5552, %v5600
        %v5602 = vpop.f32.mrf.mxu0
        %v5603 = vadd.f32 %v5554, %v5602
        %5604 = vmatmul.bf16.gmra.mxu0 %v5221
        %v5605 = vpop.f32.mrf.mxu0
        %v5606 = vadd.f32 %v5557, %v5605
        %v5607 = vpop.f32.mrf.mxu0
        %v5608 = vadd.f32 %v5559, %v5607
        %5609 = vmatmul.bf16.gmra.mxu0 %v5223
        %v5610 = vpop.f32.mrf.mxu0
        %v5611 = vadd.f32 %v5562, %v5610
        %v5612 = vpop.f32.mrf.mxu0
        %v5613 = vadd.f32 %v5564, %v5612
        %5614 = vmatmul.bf16.gmra.mxu0 %v5225
        %v5615 = vpop.f32.mrf.mxu0
        %v5616 = vadd.f32 %v5567, %v5615
        %v5617 = vpop.f32.mrf.mxu0
        %v5618 = vadd.f32 %v5569, %v5617
        %5619 = vdwg.mxu0
        %v5620 = vmax.f32 %v5483, 0.0
        %v5621 = vmax.f32 %v5581, 0.0
        %v5622 = vmax.f32 %v5485, 0.0
        %v5623 = vmax.f32 %v5583, 0.0
        %v5624 = vmax.f32 %v5488, 0.0
        %v5625 = vmax.f32 %v5586, 0.0
        %v5626 = vmax.f32 %v5490, 0.0
        %v5627 = vmax.f32 %v5588, 0.0
        %v5628 = vmax.f32 %v5493, 0.0
        %v5629 = vmax.f32 %v5591, 0.0
        %v5630 = vmax.f32 %v5495, 0.0
        %v5631 = vmax.f32 %v5593, 0.0
        %v5632 = vmax.f32 %v5498, 0.0
        %v5633 = vmax.f32 %v5596, 0.0
        %v5634 = vmax.f32 %v5500, 0.0
        %v5635 = vmax.f32 %v5598, 0.0
        %v5636 = vmax.f32 %v5503, 0.0
        %v5637 = vmax.f32 %v5601, 0.0
        %v5638 = vmax.f32 %v5505, 0.0
        %v5639 = vmax.f32 %v5603, 0.0
        %v5640 = vmax.f32 %v5508, 0.0
        %v5641 = vmax.f32 %v5606, 0.0
        %v5642 = vmax.f32 %v5510, 0.0
        %v5643 = vmax.f32 %v5608, 0.0
        %v5644 = vmax.f32 %v5513, 0.0
        %v5645 = vmax.f32 %v5611, 0.0
        %v5646 = vmax.f32 %v5515, 0.0
        %v5647 = vmax.f32 %v5613, 0.0
        %v5648 = vmax.f32 %v5518, 0.0
        %v5649 = vmax.f32 %v5616, 0.0
        %v5650 = vmax.f32 %v5520, 0.0
        %v5651 = vmax.f32 %v5618, 0.0
        %v5652 = vpack.c.bf16 %v5622, %v5620
        %v5653 = vpack.c.bf16 %v5623, %v5621
        %v5654 = vpack.c.bf16 %v5626, %v5624
        %v5655 = vpack.c.bf16 %v5627, %v5625
        %v5656 = vpack.c.bf16 %v5630, %v5628
        %v5657 = vpack.c.bf16 %v5631, %v5629
        %v5658 = vpack.c.bf16 %v5634, %v5632
        %v5659 = vpack.c.bf16 %v5635, %v5633
        %v5660 = vpack.c.bf16 %v5638, %v5636
        %v5661 = vpack.c.bf16 %v5639, %v5637
        %v5662 = vpack.c.bf16 %v5642, %v5640
        %v5663 = vpack.c.bf16 %v5643, %v5641
        %v5664 = vpack.c.bf16 %v5646, %v5644
        %v5665 = vpack.c.bf16 %v5647, %v5645
        %v5666 = vpack.c.bf16 %v5650, %v5648
        %v5667 = vpack.c.bf16 %v5651, %v5649
        %v5668 = vld [vmem:[#allocation16] sm:$0xff]
        %v5669 = vld [vmem:[#allocation16 + $0x8] sm:$0xff]
        %v5670 = vld [vmem:[#allocation16 + $0x10] sm:$0xff]
        %v5671 = vld [vmem:[#allocation16 + $0x18] sm:$0xff]
        %v5672 = vld [vmem:[#allocation16 + $0x20] sm:$0xff]
        %v5673 = vld [vmem:[#allocation16 + $0x28] sm:$0xff]
        %v5674 = vld [vmem:[#allocation16 + $0x30] sm:$0xff]
        %v5675 = vld [vmem:[#allocation16 + $0x38] sm:$0xff]
        %v5676 = vld [vmem:[#allocation16 + $0x40] sm:$0xff]
        %v5677 = vld [vmem:[#allocation16 + $0x48] sm:$0xff]
        %v5678 = vld [vmem:[#allocation16 + $0x50] sm:$0xff]
        %v5679 = vld [vmem:[#allocation16 + $0x58] sm:$0xff]
        %v5680 = vld [vmem:[#allocation16 + $0x60] sm:$0xff]
        %v5681 = vld [vmem:[#allocation16 + $0x68] sm:$0xff]
        %v5682 = vld [vmem:[#allocation16 + $0x70] sm:$0xff]
        %v5683 = vld [vmem:[#allocation16 + $0x78] sm:$0xff]
        %v5684 = vld [vmem:[#allocation16 + $0x80] sm:$0xff]
        %v5685 = vld [vmem:[#allocation16 + $0x88] sm:$0xff]
        %v5686 = vld [vmem:[#allocation16 + $0x90] sm:$0xff]
        %v5687 = vld [vmem:[#allocation16 + $0x98] sm:$0xff]
        %v5688 = vld [vmem:[#allocation16 + $0xa0] sm:$0xff]
        %v5689 = vld [vmem:[#allocation16 + $0xa8] sm:$0xff]
        %v5690 = vld [vmem:[#allocation16 + $0xb0] sm:$0xff]
        %v5691 = vld [vmem:[#allocation16 + $0xb8] sm:$0xff]
        %v5692 = vld [vmem:[#allocation16 + $0xc0] sm:$0xff]
        %v5693 = vld [vmem:[#allocation16 + $0xc8] sm:$0xff]
        %v5694 = vld [vmem:[#allocation16 + $0xd0] sm:$0xff]
        %v5695 = vld [vmem:[#allocation16 + $0xd8] sm:$0xff]
        %v5696 = vld [vmem:[#allocation16 + $0xe0] sm:$0xff]
        %v5697 = vld [vmem:[#allocation16 + $0xe8] sm:$0xff]
        %v5698 = vld [vmem:[#allocation16 + $0xf0] sm:$0xff]
        %v5699 = vld [vmem:[#allocation16 + $0xf8] sm:$0xff]
        %v5732 = vunpack.c.l.b16 %v5668
        %v5733 = vunpack.c.h.b16 %v5668
        %v5734 = vunpack.c.l.b16 %v5669
        %v5735 = vunpack.c.h.b16 %v5669
        %v5736 = vunpack.c.l.b16 %v5670
        %v5737 = vunpack.c.h.b16 %v5670
        %v5738 = vunpack.c.l.b16 %v5671
        %v5739 = vunpack.c.h.b16 %v5671
        %v5740 = vunpack.c.l.b16 %v5672
        %v5741 = vunpack.c.h.b16 %v5672
        %v5742 = vunpack.c.l.b16 %v5673
        %v5743 = vunpack.c.h.b16 %v5673
        %v5744 = vunpack.c.l.b16 %v5674
        %v5745 = vunpack.c.h.b16 %v5674
        %v5746 = vunpack.c.l.b16 %v5675
        %v5747 = vunpack.c.h.b16 %v5675
        %v5748 = vunpack.c.l.b16 %v5676
        %v5749 = vunpack.c.h.b16 %v5676
        %v5750 = vunpack.c.l.b16 %v5677
        %v5751 = vunpack.c.h.b16 %v5677
        %v5752 = vunpack.c.l.b16 %v5678
        %v5753 = vunpack.c.h.b16 %v5678
        %v5754 = vunpack.c.l.b16 %v5679
        %v5755 = vunpack.c.h.b16 %v5679
        %v5756 = vunpack.c.l.b16 %v5680
        %v5757 = vunpack.c.h.b16 %v5680
        %v5758 = vunpack.c.l.b16 %v5681
        %v5759 = vunpack.c.h.b16 %v5681
        %v5760 = vunpack.c.l.b16 %v5682
        %v5761 = vunpack.c.h.b16 %v5682
        %v5762 = vunpack.c.l.b16 %v5683
        %v5763 = vunpack.c.h.b16 %v5683
        %v5764 = vunpack.c.l.b16 %v5684
        %v5765 = vunpack.c.h.b16 %v5684
        %v5766 = vunpack.c.l.b16 %v5685
        %v5767 = vunpack.c.h.b16 %v5685
        %v5768 = vunpack.c.l.b16 %v5686
        %v5769 = vunpack.c.h.b16 %v5686
        %v5770 = vunpack.c.l.b16 %v5687
        %v5771 = vunpack.c.h.b16 %v5687
        %v5772 = vunpack.c.l.b16 %v5688
        %v5773 = vunpack.c.h.b16 %v5688
        %v5774 = vunpack.c.l.b16 %v5689
        %v5775 = vunpack.c.h.b16 %v5689
        %v5776 = vunpack.c.l.b16 %v5690
        %v5777 = vunpack.c.h.b16 %v5690
        %v5778 = vunpack.c.l.b16 %v5691
        %v5779 = vunpack.c.h.b16 %v5691
        %v5780 = vunpack.c.l.b16 %v5692
        %v5781 = vunpack.c.h.b16 %v5692
        %v5782 = vunpack.c.l.b16 %v5693
        %v5783 = vunpack.c.h.b16 %v5693
        %v5784 = vunpack.c.l.b16 %v5694
        %v5785 = vunpack.c.h.b16 %v5694
        %v5786 = vunpack.c.l.b16 %v5695
        %v5787 = vunpack.c.h.b16 %v5695
        %v5788 = vunpack.c.l.b16 %v5696
        %v5789 = vunpack.c.h.b16 %v5696
        %v5790 = vunpack.c.l.b16 %v5697
        %v5791 = vunpack.c.h.b16 %v5697
        %v5792 = vunpack.c.l.b16 %v5698
        %v5793 = vunpack.c.h.b16 %v5698
        %v5794 = vunpack.c.l.b16 %v5699
        %v5795 = vunpack.c.h.b16 %v5699
        %v5796 = vpack.c.b16 %v5734, %v5732
        %v5797 = vpack.c.b16 %v5735, %v5733
        %v5798 = vpack.c.b16 %v5738, %v5736
        %v5799 = vpack.c.b16 %v5739, %v5737
        %v5800 = vpack.c.b16 %v5742, %v5740
        %v5801 = vpack.c.b16 %v5743, %v5741
        %v5802 = vpack.c.b16 %v5746, %v5744
        %v5803 = vpack.c.b16 %v5747, %v5745
        %v5804 = vpack.c.b16 %v5750, %v5748
        %v5805 = vpack.c.b16 %v5751, %v5749
        %v5806 = vpack.c.b16 %v5754, %v5752
        %v5807 = vpack.c.b16 %v5755, %v5753
        %v5808 = vpack.c.b16 %v5758, %v5756
        %v5809 = vpack.c.b16 %v5759, %v5757
        %v5810 = vpack.c.b16 %v5762, %v5760
        %v5811 = vpack.c.b16 %v5763, %v5761
        %v5812 = vpack.c.b16 %v5766, %v5764
        %v5813 = vpack.c.b16 %v5767, %v5765
        %v5814 = vpack.c.b16 %v5770, %v5768
        %v5815 = vpack.c.b16 %v5771, %v5769
        %v5816 = vpack.c.b16 %v5774, %v5772
        %v5817 = vpack.c.b16 %v5775, %v5773
        %v5818 = vpack.c.b16 %v5778, %v5776
        %v5819 = vpack.c.b16 %v5779, %v5777
        %v5820 = vpack.c.b16 %v5782, %v5780
        %v5821 = vpack.c.b16 %v5783, %v5781
        %v5822 = vpack.c.b16 %v5786, %v5784
        %v5823 = vpack.c.b16 %v5787, %v5785
        %v5824 = vpack.c.b16 %v5790, %v5788
        %v5825 = vpack.c.b16 %v5791, %v5789
        %v5826 = vpack.c.b16 %v5794, %v5792
        %v5827 = vpack.c.b16 %v5795, %v5793
        %5860 = vmatpush.bf16.msra.mxu0 %v5810
        %5861 = vmatpush.bf16.msra.mxu0 %v5808
        %5862 = vmatpush.bf16.msra.mxu0 %v5806
        %5863 = vmatpush.bf16.msra.mxu0 %v5804
        %5864 = vmatpush.bf16.msra.mxu0 %v5802
        %5865 = vmatpush.bf16.msra.mxu0 %v5800
        %5866 = vmatpush.bf16.msra.mxu0 %v5798
        %5867 = vmatpush.bf16.msra.mxu0 %v5796
        %5868 = vmatmul.bf16.gmra.mxu0 %v5652
        %v5869 = vpop.f32.mrf.mxu0
        %v5870 = vadd.f32 0.0, %v5869
        %v5871 = vpop.f32.mrf.mxu0
        %v5872 = vadd.f32 0.0, %v5871
        %5873 = vmatmul.bf16.gmra.mxu0 %v5654
        %v5874 = vpop.f32.mrf.mxu0
        %v5875 = vadd.f32 0.0, %v5874
        %v5876 = vpop.f32.mrf.mxu0
        %v5877 = vadd.f32 0.0, %v5876
        %5878 = vmatmul.bf16.gmra.mxu0 %v5656
        %v5879 = vpop.f32.mrf.mxu0
        %v5880 = vadd.f32 0.0, %v5879
        %v5881 = vpop.f32.mrf.mxu0
        %v5882 = vadd.f32 0.0, %v5881
        %5883 = vmatmul.bf16.gmra.mxu0 %v5658
        %v5884 = vpop.f32.mrf.mxu0
        %v5885 = vadd.f32 0.0, %v5884
        %v5886 = vpop.f32.mrf.mxu0
        %v5887 = vadd.f32 0.0, %v5886
        %5888 = vmatmul.bf16.gmra.mxu0 %v5660
        %v5889 = vpop.f32.mrf.mxu0
        %v5890 = vadd.f32 0.0, %v5889
        %v5891 = vpop.f32.mrf.mxu0
        %v5892 = vadd.f32 0.0, %v5891
        %5893 = vmatmul.bf16.gmra.mxu0 %v5662
        %v5894 = vpop.f32.mrf.mxu0
        %v5895 = vadd.f32 0.0, %v5894
        %v5896 = vpop.f32.mrf.mxu0
        %v5897 = vadd.f32 0.0, %v5896
        %5898 = vmatmul.bf16.gmra.mxu0 %v5664
        %v5899 = vpop.f32.mrf.mxu0
        %v5900 = vadd.f32 0.0, %v5899
        %v5901 = vpop.f32.mrf.mxu0
        %v5902 = vadd.f32 0.0, %v5901
        %5903 = vmatmul.bf16.gmra.mxu0 %v5666
        %v5904 = vpop.f32.mrf.mxu0
        %v5905 = vadd.f32 0.0, %v5904
        %v5906 = vpop.f32.mrf.mxu0
        %v5907 = vadd.f32 0.0, %v5906
        %5908 = vdwg.mxu0
        %5909 = vmatpush.bf16.msra.mxu0 %v5826
        %5910 = vmatpush.bf16.msra.mxu0 %v5824
        %5911 = vmatpush.bf16.msra.mxu0 %v5822
        %5912 = vmatpush.bf16.msra.mxu0 %v5820
        %5913 = vmatpush.bf16.msra.mxu0 %v5818
        %5914 = vmatpush.bf16.msra.mxu0 %v5816
        %5915 = vmatpush.bf16.msra.mxu0 %v5814
        %5916 = vmatpush.bf16.msra.mxu0 %v5812
        %5917 = vmatmul.bf16.gmra.mxu0 %v5653
        %v5918 = vpop.f32.mrf.mxu0
        %v5919 = vadd.f32 %v5870, %v5918
        %v5920 = vpop.f32.mrf.mxu0
        %v5921 = vadd.f32 %v5872, %v5920
        %5922 = vmatmul.bf16.gmra.mxu0 %v5655
        %v5923 = vpop.f32.mrf.mxu0
        %v5924 = vadd.f32 %v5875, %v5923
        %v5925 = vpop.f32.mrf.mxu0
        %v5926 = vadd.f32 %v5877, %v5925
        %5927 = vmatmul.bf16.gmra.mxu0 %v5657
        %v5928 = vpop.f32.mrf.mxu0
        %v5929 = vadd.f32 %v5880, %v5928
        %v5930 = vpop.f32.mrf.mxu0
        %v5931 = vadd.f32 %v5882, %v5930
        %5932 = vmatmul.bf16.gmra.mxu0 %v5659
        %v5933 = vpop.f32.mrf.mxu0
        %v5934 = vadd.f32 %v5885, %v5933
        %v5935 = vpop.f32.mrf.mxu0
        %v5936 = vadd.f32 %v5887, %v5935
        %5937 = vmatmul.bf16.gmra.mxu0 %v5661
        %v5938 = vpop.f32.mrf.mxu0
        %v5939 = vadd.f32 %v5890, %v5938
        %v5940 = vpop.f32.mrf.mxu0
        %v5941 = vadd.f32 %v5892, %v5940
        %5942 = vmatmul.bf16.gmra.mxu0 %v5663
        %v5943 = vpop.f32.mrf.mxu0
        %v5944 = vadd.f32 %v5895, %v5943
        %v5945 = vpop.f32.mrf.mxu0
        %v5946 = vadd.f32 %v5897, %v5945
        %5947 = vmatmul.bf16.gmra.mxu0 %v5665
        %v5948 = vpop.f32.mrf.mxu0
        %v5949 = vadd.f32 %v5900, %v5948
        %v5950 = vpop.f32.mrf.mxu0
        %v5951 = vadd.f32 %v5902, %v5950
        %5952 = vmatmul.bf16.gmra.mxu0 %v5667
        %v5953 = vpop.f32.mrf.mxu0
        %v5954 = vadd.f32 %v5905, %v5953
        %v5955 = vpop.f32.mrf.mxu0
        %v5956 = vadd.f32 %v5907, %v5955
        %5957 = vdwg.mxu0
        %5958 = vmatpush.bf16.msra.mxu0 %v5811
        %5959 = vmatpush.bf16.msra.mxu0 %v5809
        %5960 = vmatpush.bf16.msra.mxu0 %v5807
        %5961 = vmatpush.bf16.msra.mxu0 %v5805
        %5962 = vmatpush.bf16.msra.mxu0 %v5803
        %5963 = vmatpush.bf16.msra.mxu0 %v5801
        %5964 = vmatpush.bf16.msra.mxu0 %v5799
        %5965 = vmatpush.bf16.msra.mxu0 %v5797
        %5966 = vmatmul.bf16.gmra.mxu0 %v5652
        %v5967 = vpop.f32.mrf.mxu0
        %v5968 = vadd.f32 0.0, %v5967
        %v5969 = vpop.f32.mrf.mxu0
        %v5970 = vadd.f32 0.0, %v5969
        %5971 = vmatmul.bf16.gmra.mxu0 %v5654
        %v5972 = vpop.f32.mrf.mxu0
        %v5973 = vadd.f32 0.0, %v5972
        %v5974 = vpop.f32.mrf.mxu0
        %v5975 = vadd.f32 0.0, %v5974
        %5976 = vmatmul.bf16.gmra.mxu0 %v5656
        %v5977 = vpop.f32.mrf.mxu0
        %v5978 = vadd.f32 0.0, %v5977
        %v5979 = vpop.f32.mrf.mxu0
        %v5980 = vadd.f32 0.0, %v5979
        %5981 = vmatmul.bf16.gmra.mxu0 %v5658
        %v5982 = vpop.f32.mrf.mxu0
        %v5983 = vadd.f32 0.0, %v5982
        %v5984 = vpop.f32.mrf.mxu0
        %v5985 = vadd.f32 0.0, %v5984
        %5986 = vmatmul.bf16.gmra.mxu0 %v5660
        %v5987 = vpop.f32.mrf.mxu0
        %v5988 = vadd.f32 0.0, %v5987
        %v5989 = vpop.f32.mrf.mxu0
        %v5990 = vadd.f32 0.0, %v5989
        %5991 = vmatmul.bf16.gmra.mxu0 %v5662
        %v5992 = vpop.f32.mrf.mxu0
        %v5993 = vadd.f32 0.0, %v5992
        %v5994 = vpop.f32.mrf.mxu0
        %v5995 = vadd.f32 0.0, %v5994
        %5996 = vmatmul.bf16.gmra.mxu0 %v5664
        %v5997 = vpop.f32.mrf.mxu0
        %v5998 = vadd.f32 0.0, %v5997
        %v5999 = vpop.f32.mrf.mxu0
        %v6000 = vadd.f32 0.0, %v5999
        %6001 = vmatmul.bf16.gmra.mxu0 %v5666
        %v6002 = vpop.f32.mrf.mxu0
        %v6003 = vadd.f32 0.0, %v6002
        %v6004 = vpop.f32.mrf.mxu0
        %v6005 = vadd.f32 0.0, %v6004
        %6006 = vdwg.mxu0
        %6007 = vmatpush.bf16.msra.mxu0 %v5827
        %6008 = vmatpush.bf16.msra.mxu0 %v5825
        %6009 = vmatpush.bf16.msra.mxu0 %v5823
        %6010 = vmatpush.bf16.msra.mxu0 %v5821
        %6011 = vmatpush.bf16.msra.mxu0 %v5819
        %6012 = vmatpush.bf16.msra.mxu0 %v5817
        %6013 = vmatpush.bf16.msra.mxu0 %v5815
        %6014 = vmatpush.bf16.msra.mxu0 %v5813
        %6015 = vmatmul.bf16.gmra.mxu0 %v5653
        %v6016 = vpop.f32.mrf.mxu0
        %v6017 = vadd.f32 %v5968, %v6016
        %v6018 = vpop.f32.mrf.mxu0
        %v6019 = vadd.f32 %v5970, %v6018
        %6020 = vmatmul.bf16.gmra.mxu0 %v5655
        %v6021 = vpop.f32.mrf.mxu0
        %v6022 = vadd.f32 %v5973, %v6021
        %v6023 = vpop.f32.mrf.mxu0
        %v6024 = vadd.f32 %v5975, %v6023
        %6025 = vmatmul.bf16.gmra.mxu0 %v5657
        %v6026 = vpop.f32.mrf.mxu0
        %v6027 = vadd.f32 %v5978, %v6026
        %v6028 = vpop.f32.mrf.mxu0
        %v6029 = vadd.f32 %v5980, %v6028
        %6030 = vmatmul.bf16.gmra.mxu0 %v5659
        %v6031 = vpop.f32.mrf.mxu0
        %v6032 = vadd.f32 %v5983, %v6031
        %v6033 = vpop.f32.mrf.mxu0
        %v6034 = vadd.f32 %v5985, %v6033
        %6035 = vmatmul.bf16.gmra.mxu0 %v5661
        %v6036 = vpop.f32.mrf.mxu0
        %v6037 = vadd.f32 %v5988, %v6036
        %v6038 = vpop.f32.mrf.mxu0
        %v6039 = vadd.f32 %v5990, %v6038
        %6040 = vmatmul.bf16.gmra.mxu0 %v5663
        %v6041 = vpop.f32.mrf.mxu0
        %v6042 = vadd.f32 %v5993, %v6041
        %v6043 = vpop.f32.mrf.mxu0
        %v6044 = vadd.f32 %v5995, %v6043
        %6045 = vmatmul.bf16.gmra.mxu0 %v5665
        %v6046 = vpop.f32.mrf.mxu0
        %v6047 = vadd.f32 %v5998, %v6046
        %v6048 = vpop.f32.mrf.mxu0
        %v6049 = vadd.f32 %v6000, %v6048
        %6050 = vmatmul.bf16.gmra.mxu0 %v5667
        %v6051 = vpop.f32.mrf.mxu0
        %v6052 = vadd.f32 %v6003, %v6051
        %v6053 = vpop.f32.mrf.mxu0
        %v6054 = vadd.f32 %v6005, %v6053
        %6055 = vdwg.mxu0
        %v6056 = vadd.f32 %v4168, %v5919
        %v6057 = vadd.f32 %v4217, %v6017
        %v6058 = vadd.f32 %v4170, %v5921
        %v6059 = vadd.f32 %v4219, %v6019
        %v6060 = vadd.f32 %v4173, %v5924
        %v6061 = vadd.f32 %v4222, %v6022
        %v6062 = vadd.f32 %v4175, %v5926
        %v6063 = vadd.f32 %v4224, %v6024
        %v6064 = vadd.f32 %v4178, %v5929
        %v6065 = vadd.f32 %v4227, %v6027
        %v6066 = vadd.f32 %v4180, %v5931
        %v6067 = vadd.f32 %v4229, %v6029
        %v6068 = vadd.f32 %v4183, %v5934
        %v6069 = vadd.f32 %v4232, %v6032
        %v6070 = vadd.f32 %v4185, %v5936
        %v6071 = vadd.f32 %v4234, %v6034
        %v6072 = vadd.f32 %v4188, %v5939
        %v6073 = vadd.f32 %v4237, %v6037
        %v6074 = vadd.f32 %v4190, %v5941
        %v6075 = vadd.f32 %v4239, %v6039
        %v6076 = vadd.f32 %v4193, %v5944
        %v6077 = vadd.f32 %v4242, %v6042
        %v6078 = vadd.f32 %v4195, %v5946
        %v6079 = vadd.f32 %v4244, %v6044
        %v6080 = vadd.f32 %v4198, %v5949
        %v6081 = vadd.f32 %v4247, %v6047
        %v6082 = vadd.f32 %v4200, %v5951
        %v6083 = vadd.f32 %v4249, %v6049
        %v6084 = vadd.f32 %v4203, %v5954
        %v6085 = vadd.f32 %v4252, %v6052
        %v6086 = vadd.f32 %v4205, %v5956
        %v6087 = vadd.f32 %v4254, %v6054
        %v6088 = vld [vmem:[%s16] sm:$0x3]
        %v6090 = vperm.slane %v6088, 0
        %v6091 = vperm.slane %v6088, 1
        %v6094 = vadd.f32 %v6056, %v6090
        %v6095 = vadd.f32 %v6057, %v6091
        %v6096 = vadd.f32 %v6058, %v6090
        %v6097 = vadd.f32 %v6059, %v6091
        %v6098 = vadd.f32 %v6060, %v6090
        %v6099 = vadd.f32 %v6061, %v6091
        %v6100 = vadd.f32 %v6062, %v6090
        %v6101 = vadd.f32 %v6063, %v6091
        %v6102 = vadd.f32 %v6064, %v6090
        %v6103 = vadd.f32 %v6065, %v6091
        %v6104 = vadd.f32 %v6066, %v6090
        %v6105 = vadd.f32 %v6067, %v6091
        %v6106 = vadd.f32 %v6068, %v6090
        %v6107 = vadd.f32 %v6069, %v6091
        %v6108 = vadd.f32 %v6070, %v6090
        %v6109 = vadd.f32 %v6071, %v6091
        %v6110 = vadd.f32 %v6072, %v6090
        %v6111 = vadd.f32 %v6073, %v6091
        %v6112 = vadd.f32 %v6074, %v6090
        %v6113 = vadd.f32 %v6075, %v6091
        %v6114 = vadd.f32 %v6076, %v6090
        %v6115 = vadd.f32 %v6077, %v6091
        %v6116 = vadd.f32 %v6078, %v6090
        %v6117 = vadd.f32 %v6079, %v6091
        %v6118 = vadd.f32 %v6080, %v6090
        %v6119 = vadd.f32 %v6081, %v6091
        %v6120 = vadd.f32 %v6082, %v6090
        %v6121 = vadd.f32 %v6083, %v6091
        %v6122 = vadd.f32 %v6084, %v6090
        %v6123 = vadd.f32 %v6085, %v6091
        %v6124 = vadd.f32 %v6086, %v6090
        %v6125 = vadd.f32 %v6087, %v6091
        %v6126 = vmax.f32 %v6094, 0.0
        %v6127 = vmax.f32 %v6095, 0.0
        %v6128 = vmax.f32 %v6096, 0.0
        %v6129 = vmax.f32 %v6097, 0.0
        %v6130 = vmax.f32 %v6098, 0.0
        %v6131 = vmax.f32 %v6099, 0.0
        %v6132 = vmax.f32 %v6100, 0.0
        %v6133 = vmax.f32 %v6101, 0.0
        %v6134 = vmax.f32 %v6102, 0.0
        %v6135 = vmax.f32 %v6103, 0.0
        %v6136 = vmax.f32 %v6104, 0.0
        %v6137 = vmax.f32 %v6105, 0.0
        %v6138 = vmax.f32 %v6106, 0.0
        %v6139 = vmax.f32 %v6107, 0.0
        %v6140 = vmax.f32 %v6108, 0.0
        %v6141 = vmax.f32 %v6109, 0.0
        %v6142 = vmax.f32 %v6110, 0.0
        %v6143 = vmax.f32 %v6111, 0.0
        %v6144 = vmax.f32 %v6112, 0.0
        %v6145 = vmax.f32 %v6113, 0.0
        %v6146 = vmax.f32 %v6114, 0.0
        %v6147 = vmax.f32 %v6115, 0.0
        %v6148 = vmax.f32 %v6116, 0.0
        %v6149 = vmax.f32 %v6117, 0.0
        %v6150 = vmax.f32 %v6118, 0.0
        %v6151 = vmax.f32 %v6119, 0.0
        %v6152 = vmax.f32 %v6120, 0.0
        %v6153 = vmax.f32 %v6121, 0.0
        %v6154 = vmax.f32 %v6122, 0.0
        %v6155 = vmax.f32 %v6123, 0.0
        %v6156 = vmax.f32 %v6124, 0.0
        %v6157 = vmax.f32 %v6125, 0.0
        %v6158 = vpack.c.bf16 %v6128, %v6126
        %v6159 = vpack.c.bf16 %v6129, %v6127
        %v6160 = vpack.c.bf16 %v6132, %v6130
        %v6161 = vpack.c.bf16 %v6133, %v6131
        %v6162 = vpack.c.bf16 %v6136, %v6134
        %v6163 = vpack.c.bf16 %v6137, %v6135
        %v6164 = vpack.c.bf16 %v6140, %v6138
        %v6165 = vpack.c.bf16 %v6141, %v6139
        %v6166 = vpack.c.bf16 %v6144, %v6142
        %v6167 = vpack.c.bf16 %v6145, %v6143
        %v6168 = vpack.c.bf16 %v6148, %v6146
        %v6169 = vpack.c.bf16 %v6149, %v6147
        %v6170 = vpack.c.bf16 %v6152, %v6150
        %v6171 = vpack.c.bf16 %v6153, %v6151
        %v6172 = vpack.c.bf16 %v6156, %v6154
        %v6173 = vpack.c.bf16 %v6157, %v6155
        %v6174 = vld [vmem:[#allocation18] sm:$0xff]
        %v6175 = vld [vmem:[#allocation18 + $0x8] sm:$0xff]
        %v6176 = vld [vmem:[#allocation18 + $0x10] sm:$0xff]
        %v6177 = vld [vmem:[#allocation18 + $0x18] sm:$0xff]
        %v6178 = vld [vmem:[#allocation18 + $0x20] sm:$0xff]
        %v6179 = vld [vmem:[#allocation18 + $0x28] sm:$0xff]
        %v6180 = vld [vmem:[#allocation18 + $0x30] sm:$0xff]
        %v6181 = vld [vmem:[#allocation18 + $0x38] sm:$0xff]
        %v6182 = vld [vmem:[#allocation18 + $0x40] sm:$0xff]
        %v6183 = vld [vmem:[#allocation18 + $0x48] sm:$0xff]
        %v6184 = vld [vmem:[#allocation18 + $0x50] sm:$0xff]
        %v6185 = vld [vmem:[#allocation18 + $0x58] sm:$0xff]
        %v6186 = vld [vmem:[#allocation18 + $0x60] sm:$0xff]
        %v6187 = vld [vmem:[#allocation18 + $0x68] sm:$0xff]
        %v6188 = vld [vmem:[#allocation18 + $0x70] sm:$0xff]
        %v6189 = vld [vmem:[#allocation18 + $0x78] sm:$0xff]
        %v6190 = vld [vmem:[#allocation18 + $0x80] sm:$0xff]
        %v6191 = vld [vmem:[#allocation18 + $0x88] sm:$0xff]
        %v6192 = vld [vmem:[#allocation18 + $0x90] sm:$0xff]
        %v6193 = vld [vmem:[#allocation18 + $0x98] sm:$0xff]
        %v6194 = vld [vmem:[#allocation18 + $0xa0] sm:$0xff]
        %v6195 = vld [vmem:[#allocation18 + $0xa8] sm:$0xff]
        %v6196 = vld [vmem:[#allocation18 + $0xb0] sm:$0xff]
        %v6197 = vld [vmem:[#allocation18 + $0xb8] sm:$0xff]
        %v6198 = vld [vmem:[#allocation18 + $0xc0] sm:$0xff]
        %v6199 = vld [vmem:[#allocation18 + $0xc8] sm:$0xff]
        %v6200 = vld [vmem:[#allocation18 + $0xd0] sm:$0xff]
        %v6201 = vld [vmem:[#allocation18 + $0xd8] sm:$0xff]
        %v6202 = vld [vmem:[#allocation18 + $0xe0] sm:$0xff]
        %v6203 = vld [vmem:[#allocation18 + $0xe8] sm:$0xff]
        %v6204 = vld [vmem:[#allocation18 + $0xf0] sm:$0xff]
        %v6205 = vld [vmem:[#allocation18 + $0xf8] sm:$0xff]
        %v6206 = vld [vmem:[%s18] sm:$0x3]
        %v6208 = vperm.slane %v6206, 0
        %v6209 = vperm.slane %v6206, 1
        %v6244 = vunpack.c.l.b16 %v6174
        %v6245 = vunpack.c.h.b16 %v6174
        %v6246 = vunpack.c.l.b16 %v6175
        %v6247 = vunpack.c.h.b16 %v6175
        %v6248 = vunpack.c.l.b16 %v6176
        %v6249 = vunpack.c.h.b16 %v6176
        %v6250 = vunpack.c.l.b16 %v6177
        %v6251 = vunpack.c.h.b16 %v6177
        %v6252 = vunpack.c.l.b16 %v6178
        %v6253 = vunpack.c.h.b16 %v6178
        %v6254 = vunpack.c.l.b16 %v6179
        %v6255 = vunpack.c.h.b16 %v6179
        %v6256 = vunpack.c.l.b16 %v6180
        %v6257 = vunpack.c.h.b16 %v6180
        %v6258 = vunpack.c.l.b16 %v6181
        %v6259 = vunpack.c.h.b16 %v6181
        %v6260 = vunpack.c.l.b16 %v6182
        %v6261 = vunpack.c.h.b16 %v6182
        %v6262 = vunpack.c.l.b16 %v6183
        %v6263 = vunpack.c.h.b16 %v6183
        %v6264 = vunpack.c.l.b16 %v6184
        %v6265 = vunpack.c.h.b16 %v6184
        %v6266 = vunpack.c.l.b16 %v6185
        %v6267 = vunpack.c.h.b16 %v6185
        %v6268 = vunpack.c.l.b16 %v6186
        %v6269 = vunpack.c.h.b16 %v6186
        %v6270 = vunpack.c.l.b16 %v6187
        %v6271 = vunpack.c.h.b16 %v6187
        %v6272 = vunpack.c.l.b16 %v6188
        %v6273 = vunpack.c.h.b16 %v6188
        %v6274 = vunpack.c.l.b16 %v6189
        %v6275 = vunpack.c.h.b16 %v6189
        %v6276 = vunpack.c.l.b16 %v6190
        %v6277 = vunpack.c.h.b16 %v6190
        %v6278 = vunpack.c.l.b16 %v6191
        %v6279 = vunpack.c.h.b16 %v6191
        %v6280 = vunpack.c.l.b16 %v6192
        %v6281 = vunpack.c.h.b16 %v6192
        %v6282 = vunpack.c.l.b16 %v6193
        %v6283 = vunpack.c.h.b16 %v6193
        %v6284 = vunpack.c.l.b16 %v6194
        %v6285 = vunpack.c.h.b16 %v6194
        %v6286 = vunpack.c.l.b16 %v6195
        %v6287 = vunpack.c.h.b16 %v6195
        %v6288 = vunpack.c.l.b16 %v6196
        %v6289 = vunpack.c.h.b16 %v6196
        %v6290 = vunpack.c.l.b16 %v6197
        %v6291 = vunpack.c.h.b16 %v6197
        %v6292 = vunpack.c.l.b16 %v6198
        %v6293 = vunpack.c.h.b16 %v6198
        %v6294 = vunpack.c.l.b16 %v6199
        %v6295 = vunpack.c.h.b16 %v6199
        %v6296 = vunpack.c.l.b16 %v6200
        %v6297 = vunpack.c.h.b16 %v6200
        %v6298 = vunpack.c.l.b16 %v6201
        %v6299 = vunpack.c.h.b16 %v6201
        %v6300 = vunpack.c.l.b16 %v6202
        %v6301 = vunpack.c.h.b16 %v6202
        %v6302 = vunpack.c.l.b16 %v6203
        %v6303 = vunpack.c.h.b16 %v6203
        %v6304 = vunpack.c.l.b16 %v6204
        %v6305 = vunpack.c.h.b16 %v6204
        %v6306 = vunpack.c.l.b16 %v6205
        %v6307 = vunpack.c.h.b16 %v6205
        %v6308 = vpack.c.b16 %v6246, %v6244
        %v6309 = vpack.c.b16 %v6247, %v6245
        %v6310 = vpack.c.b16 %v6250, %v6248
        %v6311 = vpack.c.b16 %v6251, %v6249
        %v6312 = vpack.c.b16 %v6254, %v6252
        %v6313 = vpack.c.b16 %v6255, %v6253
        %v6314 = vpack.c.b16 %v6258, %v6256
        %v6315 = vpack.c.b16 %v6259, %v6257
        %v6316 = vpack.c.b16 %v6262, %v6260
        %v6317 = vpack.c.b16 %v6263, %v6261
        %v6318 = vpack.c.b16 %v6266, %v6264
        %v6319 = vpack.c.b16 %v6267, %v6265
        %v6320 = vpack.c.b16 %v6270, %v6268
        %v6321 = vpack.c.b16 %v6271, %v6269
        %v6322 = vpack.c.b16 %v6274, %v6272
        %v6323 = vpack.c.b16 %v6275, %v6273
        %v6324 = vpack.c.b16 %v6278, %v6276
        %v6325 = vpack.c.b16 %v6279, %v6277
        %v6326 = vpack.c.b16 %v6282, %v6280
        %v6327 = vpack.c.b16 %v6283, %v6281
        %v6328 = vpack.c.b16 %v6286, %v6284
        %v6329 = vpack.c.b16 %v6287, %v6285
        %v6330 = vpack.c.b16 %v6290, %v6288
        %v6331 = vpack.c.b16 %v6291, %v6289
        %v6332 = vpack.c.b16 %v6294, %v6292
        %v6333 = vpack.c.b16 %v6295, %v6293
        %v6334 = vpack.c.b16 %v6298, %v6296
        %v6335 = vpack.c.b16 %v6299, %v6297
        %v6336 = vpack.c.b16 %v6302, %v6300
        %v6337 = vpack.c.b16 %v6303, %v6301
        %v6338 = vpack.c.b16 %v6306, %v6304
        %v6339 = vpack.c.b16 %v6307, %v6305
        %6372 = vmatpush.bf16.msra.mxu0 %v6322
        %6373 = vmatpush.bf16.msra.mxu0 %v6320
        %6374 = vmatpush.bf16.msra.mxu0 %v6318
        %6375 = vmatpush.bf16.msra.mxu0 %v6316
        %6376 = vmatpush.bf16.msra.mxu0 %v6314
        %6377 = vmatpush.bf16.msra.mxu0 %v6312
        %6378 = vmatpush.bf16.msra.mxu0 %v6310
        %6379 = vmatpush.bf16.msra.mxu0 %v6308
        %6380 = vmatmul.bf16.gmra.mxu0 %v6158
        %v6381 = vpop.f32.mrf.mxu0
        %v6382 = vadd.f32 %v6208, %v6381
        %v6383 = vpop.f32.mrf.mxu0
        %v6384 = vadd.f32 %v6208, %v6383
        %6385 = vmatmul.bf16.gmra.mxu0 %v6160
        %v6386 = vpop.f32.mrf.mxu0
        %v6387 = vadd.f32 %v6208, %v6386
        %v6388 = vpop.f32.mrf.mxu0
        %v6389 = vadd.f32 %v6208, %v6388
        %6390 = vmatmul.bf16.gmra.mxu0 %v6162
        %v6391 = vpop.f32.mrf.mxu0
        %v6392 = vadd.f32 %v6208, %v6391
        %v6393 = vpop.f32.mrf.mxu0
        %v6394 = vadd.f32 %v6208, %v6393
        %6395 = vmatmul.bf16.gmra.mxu0 %v6164
        %v6396 = vpop.f32.mrf.mxu0
        %v6397 = vadd.f32 %v6208, %v6396
        %v6398 = vpop.f32.mrf.mxu0
        %v6399 = vadd.f32 %v6208, %v6398
        %6400 = vmatmul.bf16.gmra.mxu0 %v6166
        %v6401 = vpop.f32.mrf.mxu0
        %v6402 = vadd.f32 %v6208, %v6401
        %v6403 = vpop.f32.mrf.mxu0
        %v6404 = vadd.f32 %v6208, %v6403
        %6405 = vmatmul.bf16.gmra.mxu0 %v6168
        %v6406 = vpop.f32.mrf.mxu0
        %v6407 = vadd.f32 %v6208, %v6406
        %v6408 = vpop.f32.mrf.mxu0
        %v6409 = vadd.f32 %v6208, %v6408
        %6410 = vmatmul.bf16.gmra.mxu0 %v6170
        %v6411 = vpop.f32.mrf.mxu0
        %v6412 = vadd.f32 %v6208, %v6411
        %v6413 = vpop.f32.mrf.mxu0
        %v6414 = vadd.f32 %v6208, %v6413
        %6415 = vmatmul.bf16.gmra.mxu0 %v6172
        %v6416 = vpop.f32.mrf.mxu0
        %v6417 = vadd.f32 %v6208, %v6416
        %v6418 = vpop.f32.mrf.mxu0
        %v6419 = vadd.f32 %v6208, %v6418
        %6420 = vdwg.mxu0
        %6421 = vmatpush.bf16.msra.mxu0 %v6338
        %6422 = vmatpush.bf16.msra.mxu0 %v6336
        %6423 = vmatpush.bf16.msra.mxu0 %v6334
        %6424 = vmatpush.bf16.msra.mxu0 %v6332
        %6425 = vmatpush.bf16.msra.mxu0 %v6330
        %6426 = vmatpush.bf16.msra.mxu0 %v6328
        %6427 = vmatpush.bf16.msra.mxu0 %v6326
        %6428 = vmatpush.bf16.msra.mxu0 %v6324
        %6429 = vmatmul.bf16.gmra.mxu0 %v6159
        %v6430 = vpop.f32.mrf.mxu0
        %v6431 = vadd.f32 %v6382, %v6430
        %v6432 = vpop.f32.mrf.mxu0
        %v6433 = vadd.f32 %v6384, %v6432
        %6434 = vmatmul.bf16.gmra.mxu0 %v6161
        %v6435 = vpop.f32.mrf.mxu0
        %v6436 = vadd.f32 %v6387, %v6435
        %v6437 = vpop.f32.mrf.mxu0
        %v6438 = vadd.f32 %v6389, %v6437
        %6439 = vmatmul.bf16.gmra.mxu0 %v6163
        %v6440 = vpop.f32.mrf.mxu0
        %v6441 = vadd.f32 %v6392, %v6440
        %v6442 = vpop.f32.mrf.mxu0
        %v6443 = vadd.f32 %v6394, %v6442
        %6444 = vmatmul.bf16.gmra.mxu0 %v6165
        %v6445 = vpop.f32.mrf.mxu0
        %v6446 = vadd.f32 %v6397, %v6445
        %v6447 = vpop.f32.mrf.mxu0
        %v6448 = vadd.f32 %v6399, %v6447
        %6449 = vmatmul.bf16.gmra.mxu0 %v6167
        %v6450 = vpop.f32.mrf.mxu0
        %v6451 = vadd.f32 %v6402, %v6450
        %v6452 = vpop.f32.mrf.mxu0
        %v6453 = vadd.f32 %v6404, %v6452
        %6454 = vmatmul.bf16.gmra.mxu0 %v6169
        %v6455 = vpop.f32.mrf.mxu0
        %v6456 = vadd.f32 %v6407, %v6455
        %v6457 = vpop.f32.mrf.mxu0
        %v6458 = vadd.f32 %v6409, %v6457
        %6459 = vmatmul.bf16.gmra.mxu0 %v6171
        %v6460 = vpop.f32.mrf.mxu0
        %v6461 = vadd.f32 %v6412, %v6460
        %v6462 = vpop.f32.mrf.mxu0
        %v6463 = vadd.f32 %v6414, %v6462
        %6464 = vmatmul.bf16.gmra.mxu0 %v6173
        %v6465 = vpop.f32.mrf.mxu0
        %v6466 = vadd.f32 %v6417, %v6465
        %v6467 = vpop.f32.mrf.mxu0
        %v6468 = vadd.f32 %v6419, %v6467
        %6469 = vdwg.mxu0
        %6470 = vmatpush.bf16.msra.mxu0 %v6323
        %6471 = vmatpush.bf16.msra.mxu0 %v6321
        %6472 = vmatpush.bf16.msra.mxu0 %v6319
        %6473 = vmatpush.bf16.msra.mxu0 %v6317
        %6474 = vmatpush.bf16.msra.mxu0 %v6315
        %6475 = vmatpush.bf16.msra.mxu0 %v6313
        %6476 = vmatpush.bf16.msra.mxu0 %v6311
        %6477 = vmatpush.bf16.msra.mxu0 %v6309
        %6478 = vmatmul.bf16.gmra.mxu0 %v6158
        %v6479 = vpop.f32.mrf.mxu0
        %v6480 = vadd.f32 %v6209, %v6479
        %v6481 = vpop.f32.mrf.mxu0
        %v6482 = vadd.f32 %v6209, %v6481
        %6483 = vmatmul.bf16.gmra.mxu0 %v6160
        %v6484 = vpop.f32.mrf.mxu0
        %v6485 = vadd.f32 %v6209, %v6484
        %v6486 = vpop.f32.mrf.mxu0
        %v6487 = vadd.f32 %v6209, %v6486
        %6488 = vmatmul.bf16.gmra.mxu0 %v6162
        %v6489 = vpop.f32.mrf.mxu0
        %v6490 = vadd.f32 %v6209, %v6489
        %v6491 = vpop.f32.mrf.mxu0
        %v6492 = vadd.f32 %v6209, %v6491
        %6493 = vmatmul.bf16.gmra.mxu0 %v6164
        %v6494 = vpop.f32.mrf.mxu0
        %v6495 = vadd.f32 %v6209, %v6494
        %v6496 = vpop.f32.mrf.mxu0
        %v6497 = vadd.f32 %v6209, %v6496
        %6498 = vmatmul.bf16.gmra.mxu0 %v6166
        %v6499 = vpop.f32.mrf.mxu0
        %v6500 = vadd.f32 %v6209, %v6499
        %v6501 = vpop.f32.mrf.mxu0
        %v6502 = vadd.f32 %v6209, %v6501
        %6503 = vmatmul.bf16.gmra.mxu0 %v6168
        %v6504 = vpop.f32.mrf.mxu0
        %v6505 = vadd.f32 %v6209, %v6504
        %v6506 = vpop.f32.mrf.mxu0
        %v6507 = vadd.f32 %v6209, %v6506
        %6508 = vmatmul.bf16.gmra.mxu0 %v6170
        %v6509 = vpop.f32.mrf.mxu0
        %v6510 = vadd.f32 %v6209, %v6509
        %v6511 = vpop.f32.mrf.mxu0
        %v6512 = vadd.f32 %v6209, %v6511
        %6513 = vmatmul.bf16.gmra.mxu0 %v6172
        %v6514 = vpop.f32.mrf.mxu0
        %v6515 = vadd.f32 %v6209, %v6514
        %v6516 = vpop.f32.mrf.mxu0
        %v6517 = vadd.f32 %v6209, %v6516
        %6518 = vdwg.mxu0
        %6519 = vmatpush.bf16.msra.mxu0 %v6339
        %6520 = vmatpush.bf16.msra.mxu0 %v6337
        %6521 = vmatpush.bf16.msra.mxu0 %v6335
        %6522 = vmatpush.bf16.msra.mxu0 %v6333
        %6523 = vmatpush.bf16.msra.mxu0 %v6331
        %6524 = vmatpush.bf16.msra.mxu0 %v6329
        %6525 = vmatpush.bf16.msra.mxu0 %v6327
        %6526 = vmatpush.bf16.msra.mxu0 %v6325
        %6527 = vmatmul.bf16.gmra.mxu0 %v6159
        %v6528 = vpop.f32.mrf.mxu0
        %v6529 = vadd.f32 %v6480, %v6528
        %v6530 = vpop.f32.mrf.mxu0
        %v6531 = vadd.f32 %v6482, %v6530
        %6532 = vmatmul.bf16.gmra.mxu0 %v6161
        %v6533 = vpop.f32.mrf.mxu0
        %v6534 = vadd.f32 %v6485, %v6533
        %v6535 = vpop.f32.mrf.mxu0
        %v6536 = vadd.f32 %v6487, %v6535
        %6537 = vmatmul.bf16.gmra.mxu0 %v6163
        %v6538 = vpop.f32.mrf.mxu0
        %v6539 = vadd.f32 %v6490, %v6538
        %v6540 = vpop.f32.mrf.mxu0
        %v6541 = vadd.f32 %v6492, %v6540
        %6542 = vmatmul.bf16.gmra.mxu0 %v6165
        %v6543 = vpop.f32.mrf.mxu0
        %v6544 = vadd.f32 %v6495, %v6543
        %v6545 = vpop.f32.mrf.mxu0
        %v6546 = vadd.f32 %v6497, %v6545
        %6547 = vmatmul.bf16.gmra.mxu0 %v6167
        %v6548 = vpop.f32.mrf.mxu0
        %v6549 = vadd.f32 %v6500, %v6548
        %v6550 = vpop.f32.mrf.mxu0
        %v6551 = vadd.f32 %v6502, %v6550
        %6552 = vmatmul.bf16.gmra.mxu0 %v6169
        %v6553 = vpop.f32.mrf.mxu0
        %v6554 = vadd.f32 %v6505, %v6553
        %v6555 = vpop.f32.mrf.mxu0
        %v6556 = vadd.f32 %v6507, %v6555
        %6557 = vmatmul.bf16.gmra.mxu0 %v6171
        %v6558 = vpop.f32.mrf.mxu0
        %v6559 = vadd.f32 %v6510, %v6558
        %v6560 = vpop.f32.mrf.mxu0
        %v6561 = vadd.f32 %v6512, %v6560
        %6562 = vmatmul.bf16.gmra.mxu0 %v6173
        %v6563 = vpop.f32.mrf.mxu0
        %v6564 = vadd.f32 %v6515, %v6563
        %v6565 = vpop.f32.mrf.mxu0
        %v6566 = vadd.f32 %v6517, %v6565
        %6567 = vdwg.mxu0
        %v6568 = vmax.f32 %v6431, 0.0
        %v6569 = vmax.f32 %v6529, 0.0
        %v6570 = vmax.f32 %v6433, 0.0
        %v6571 = vmax.f32 %v6531, 0.0
        %v6572 = vmax.f32 %v6436, 0.0
        %v6573 = vmax.f32 %v6534, 0.0
        %v6574 = vmax.f32 %v6438, 0.0
        %v6575 = vmax.f32 %v6536, 0.0
        %v6576 = vmax.f32 %v6441, 0.0
        %v6577 = vmax.f32 %v6539, 0.0
        %v6578 = vmax.f32 %v6443, 0.0
        %v6579 = vmax.f32 %v6541, 0.0
        %v6580 = vmax.f32 %v6446, 0.0
        %v6581 = vmax.f32 %v6544, 0.0
        %v6582 = vmax.f32 %v6448, 0.0
        %v6583 = vmax.f32 %v6546, 0.0
        %v6584 = vmax.f32 %v6451, 0.0
        %v6585 = vmax.f32 %v6549, 0.0
        %v6586 = vmax.f32 %v6453, 0.0
        %v6587 = vmax.f32 %v6551, 0.0
        %v6588 = vmax.f32 %v6456, 0.0
        %v6589 = vmax.f32 %v6554, 0.0
        %v6590 = vmax.f32 %v6458, 0.0
        %v6591 = vmax.f32 %v6556, 0.0
        %v6592 = vmax.f32 %v6461, 0.0
        %v6593 = vmax.f32 %v6559, 0.0
        %v6594 = vmax.f32 %v6463, 0.0
        %v6595 = vmax.f32 %v6561, 0.0
        %v6596 = vmax.f32 %v6466, 0.0
        %v6597 = vmax.f32 %v6564, 0.0
        %v6598 = vmax.f32 %v6468, 0.0
        %v6599 = vmax.f32 %v6566, 0.0
        %v6600 = vpack.c.bf16 %v6570, %v6568
        %v6601 = vpack.c.bf16 %v6571, %v6569
        %v6602 = vpack.c.bf16 %v6574, %v6572
        %v6603 = vpack.c.bf16 %v6575, %v6573
        %v6604 = vpack.c.bf16 %v6578, %v6576
        %v6605 = vpack.c.bf16 %v6579, %v6577
        %v6606 = vpack.c.bf16 %v6582, %v6580
        %v6607 = vpack.c.bf16 %v6583, %v6581
        %v6608 = vpack.c.bf16 %v6586, %v6584
        %v6609 = vpack.c.bf16 %v6587, %v6585
        %v6610 = vpack.c.bf16 %v6590, %v6588
        %v6611 = vpack.c.bf16 %v6591, %v6589
        %v6612 = vpack.c.bf16 %v6594, %v6592
        %v6613 = vpack.c.bf16 %v6595, %v6593
        %v6614 = vpack.c.bf16 %v6598, %v6596
        %v6615 = vpack.c.bf16 %v6599, %v6597
        %v6616 = vld [vmem:[#allocation19] sm:$0xff]
        %v6617 = vld [vmem:[#allocation19 + $0x8] sm:$0xff]
        %v6618 = vld [vmem:[#allocation19 + $0x10] sm:$0xff]
        %v6619 = vld [vmem:[#allocation19 + $0x18] sm:$0xff]
        %v6620 = vld [vmem:[#allocation19 + $0x20] sm:$0xff]
        %v6621 = vld [vmem:[#allocation19 + $0x28] sm:$0xff]
        %v6622 = vld [vmem:[#allocation19 + $0x30] sm:$0xff]
        %v6623 = vld [vmem:[#allocation19 + $0x38] sm:$0xff]
        %v6624 = vld [vmem:[#allocation19 + $0x40] sm:$0xff]
        %v6625 = vld [vmem:[#allocation19 + $0x48] sm:$0xff]
        %v6626 = vld [vmem:[#allocation19 + $0x50] sm:$0xff]
        %v6627 = vld [vmem:[#allocation19 + $0x58] sm:$0xff]
        %v6628 = vld [vmem:[#allocation19 + $0x60] sm:$0xff]
        %v6629 = vld [vmem:[#allocation19 + $0x68] sm:$0xff]
        %v6630 = vld [vmem:[#allocation19 + $0x70] sm:$0xff]
        %v6631 = vld [vmem:[#allocation19 + $0x78] sm:$0xff]
        %v6632 = vld [vmem:[#allocation19 + $0x80] sm:$0xff]
        %v6633 = vld [vmem:[#allocation19 + $0x88] sm:$0xff]
        %v6634 = vld [vmem:[#allocation19 + $0x90] sm:$0xff]
        %v6635 = vld [vmem:[#allocation19 + $0x98] sm:$0xff]
        %v6636 = vld [vmem:[#allocation19 + $0xa0] sm:$0xff]
        %v6637 = vld [vmem:[#allocation19 + $0xa8] sm:$0xff]
        %v6638 = vld [vmem:[#allocation19 + $0xb0] sm:$0xff]
        %v6639 = vld [vmem:[#allocation19 + $0xb8] sm:$0xff]
        %v6640 = vld [vmem:[#allocation19 + $0xc0] sm:$0xff]
        %v6641 = vld [vmem:[#allocation19 + $0xc8] sm:$0xff]
        %v6642 = vld [vmem:[#allocation19 + $0xd0] sm:$0xff]
        %v6643 = vld [vmem:[#allocation19 + $0xd8] sm:$0xff]
        %v6644 = vld [vmem:[#allocation19 + $0xe0] sm:$0xff]
        %v6645 = vld [vmem:[#allocation19 + $0xe8] sm:$0xff]
        %v6646 = vld [vmem:[#allocation19 + $0xf0] sm:$0xff]
        %v6647 = vld [vmem:[#allocation19 + $0xf8] sm:$0xff]
        %v6648 = vld [vmem:[%s20] sm:$0x3]
        %v6650 = vperm.slane %v6648, 0
        %v6651 = vperm.slane %v6648, 1
        %v6686 = vunpack.c.l.b16 %v6616
        %v6687 = vunpack.c.h.b16 %v6616
        %v6688 = vunpack.c.l.b16 %v6617
        %v6689 = vunpack.c.h.b16 %v6617
        %v6690 = vunpack.c.l.b16 %v6618
        %v6691 = vunpack.c.h.b16 %v6618
        %v6692 = vunpack.c.l.b16 %v6619
        %v6693 = vunpack.c.h.b16 %v6619
        %v6694 = vunpack.c.l.b16 %v6620
        %v6695 = vunpack.c.h.b16 %v6620
        %v6696 = vunpack.c.l.b16 %v6621
        %v6697 = vunpack.c.h.b16 %v6621
        %v6698 = vunpack.c.l.b16 %v6622
        %v6699 = vunpack.c.h.b16 %v6622
        %v6700 = vunpack.c.l.b16 %v6623
        %v6701 = vunpack.c.h.b16 %v6623
        %v6702 = vunpack.c.l.b16 %v6624
        %v6703 = vunpack.c.h.b16 %v6624
        %v6704 = vunpack.c.l.b16 %v6625
        %v6705 = vunpack.c.h.b16 %v6625
        %v6706 = vunpack.c.l.b16 %v6626
        %v6707 = vunpack.c.h.b16 %v6626
        %v6708 = vunpack.c.l.b16 %v6627
        %v6709 = vunpack.c.h.b16 %v6627
        %v6710 = vunpack.c.l.b16 %v6628
        %v6711 = vunpack.c.h.b16 %v6628
        %v6712 = vunpack.c.l.b16 %v6629
        %v6713 = vunpack.c.h.b16 %v6629
        %v6714 = vunpack.c.l.b16 %v6630
        %v6715 = vunpack.c.h.b16 %v6630
        %v6716 = vunpack.c.l.b16 %v6631
        %v6717 = vunpack.c.h.b16 %v6631
        %v6718 = vunpack.c.l.b16 %v6632
        %v6719 = vunpack.c.h.b16 %v6632
        %v6720 = vunpack.c.l.b16 %v6633
        %v6721 = vunpack.c.h.b16 %v6633
        %v6722 = vunpack.c.l.b16 %v6634
        %v6723 = vunpack.c.h.b16 %v6634
        %v6724 = vunpack.c.l.b16 %v6635
        %v6725 = vunpack.c.h.b16 %v6635
        %v6726 = vunpack.c.l.b16 %v6636
        %v6727 = vunpack.c.h.b16 %v6636
        %v6728 = vunpack.c.l.b16 %v6637
        %v6729 = vunpack.c.h.b16 %v6637
        %v6730 = vunpack.c.l.b16 %v6638
        %v6731 = vunpack.c.h.b16 %v6638
        %v6732 = vunpack.c.l.b16 %v6639
        %v6733 = vunpack.c.h.b16 %v6639
        %v6734 = vunpack.c.l.b16 %v6640
        %v6735 = vunpack.c.h.b16 %v6640
        %v6736 = vunpack.c.l.b16 %v6641
        %v6737 = vunpack.c.h.b16 %v6641
        %v6738 = vunpack.c.l.b16 %v6642
        %v6739 = vunpack.c.h.b16 %v6642
        %v6740 = vunpack.c.l.b16 %v6643
        %v6741 = vunpack.c.h.b16 %v6643
        %v6742 = vunpack.c.l.b16 %v6644
        %v6743 = vunpack.c.h.b16 %v6644
        %v6744 = vunpack.c.l.b16 %v6645
        %v6745 = vunpack.c.h.b16 %v6645
        %v6746 = vunpack.c.l.b16 %v6646
        %v6747 = vunpack.c.h.b16 %v6646
        %v6748 = vunpack.c.l.b16 %v6647
        %v6749 = vunpack.c.h.b16 %v6647
        %v6750 = vpack.c.b16 %v6688, %v6686
        %v6751 = vpack.c.b16 %v6689, %v6687
        %v6752 = vpack.c.b16 %v6692, %v6690
        %v6753 = vpack.c.b16 %v6693, %v6691
        %v6754 = vpack.c.b16 %v6696, %v6694
        %v6755 = vpack.c.b16 %v6697, %v6695
        %v6756 = vpack.c.b16 %v6700, %v6698
        %v6757 = vpack.c.b16 %v6701, %v6699
        %v6758 = vpack.c.b16 %v6704, %v6702
        %v6759 = vpack.c.b16 %v6705, %v6703
        %v6760 = vpack.c.b16 %v6708, %v6706
        %v6761 = vpack.c.b16 %v6709, %v6707
        %v6762 = vpack.c.b16 %v6712, %v6710
        %v6763 = vpack.c.b16 %v6713, %v6711
        %v6764 = vpack.c.b16 %v6716, %v6714
        %v6765 = vpack.c.b16 %v6717, %v6715
        %v6766 = vpack.c.b16 %v6720, %v6718
        %v6767 = vpack.c.b16 %v6721, %v6719
        %v6768 = vpack.c.b16 %v6724, %v6722
        %v6769 = vpack.c.b16 %v6725, %v6723
        %v6770 = vpack.c.b16 %v6728, %v6726
        %v6771 = vpack.c.b16 %v6729, %v6727
        %v6772 = vpack.c.b16 %v6732, %v6730
        %v6773 = vpack.c.b16 %v6733, %v6731
        %v6774 = vpack.c.b16 %v6736, %v6734
        %v6775 = vpack.c.b16 %v6737, %v6735
        %v6776 = vpack.c.b16 %v6740, %v6738
        %v6777 = vpack.c.b16 %v6741, %v6739
        %v6778 = vpack.c.b16 %v6744, %v6742
        %v6779 = vpack.c.b16 %v6745, %v6743
        %v6780 = vpack.c.b16 %v6748, %v6746
        %v6781 = vpack.c.b16 %v6749, %v6747
        %6814 = vmatpush.bf16.msra.mxu0 %v6764
        %6815 = vmatpush.bf16.msra.mxu0 %v6762
        %6816 = vmatpush.bf16.msra.mxu0 %v6760
        %6817 = vmatpush.bf16.msra.mxu0 %v6758
        %6818 = vmatpush.bf16.msra.mxu0 %v6756
        %6819 = vmatpush.bf16.msra.mxu0 %v6754
        %6820 = vmatpush.bf16.msra.mxu0 %v6752
        %6821 = vmatpush.bf16.msra.mxu0 %v6750
        %6822 = vmatmul.bf16.gmra.mxu0 %v6600
        %v6823 = vpop.f32.mrf.mxu0
        %v6824 = vadd.f32 %v6650, %v6823
        %v6825 = vpop.f32.mrf.mxu0
        %v6826 = vadd.f32 %v6650, %v6825
        %6827 = vmatmul.bf16.gmra.mxu0 %v6602
        %v6828 = vpop.f32.mrf.mxu0
        %v6829 = vadd.f32 %v6650, %v6828
        %v6830 = vpop.f32.mrf.mxu0
        %v6831 = vadd.f32 %v6650, %v6830
        %6832 = vmatmul.bf16.gmra.mxu0 %v6604
        %v6833 = vpop.f32.mrf.mxu0
        %v6834 = vadd.f32 %v6650, %v6833
        %v6835 = vpop.f32.mrf.mxu0
        %v6836 = vadd.f32 %v6650, %v6835
        %6837 = vmatmul.bf16.gmra.mxu0 %v6606
        %v6838 = vpop.f32.mrf.mxu0
        %v6839 = vadd.f32 %v6650, %v6838
        %v6840 = vpop.f32.mrf.mxu0
        %v6841 = vadd.f32 %v6650, %v6840
        %6842 = vmatmul.bf16.gmra.mxu0 %v6608
        %v6843 = vpop.f32.mrf.mxu0
        %v6844 = vadd.f32 %v6650, %v6843
        %v6845 = vpop.f32.mrf.mxu0
        %v6846 = vadd.f32 %v6650, %v6845
        %6847 = vmatmul.bf16.gmra.mxu0 %v6610
        %v6848 = vpop.f32.mrf.mxu0
        %v6849 = vadd.f32 %v6650, %v6848
        %v6850 = vpop.f32.mrf.mxu0
        %v6851 = vadd.f32 %v6650, %v6850
        %6852 = vmatmul.bf16.gmra.mxu0 %v6612
        %v6853 = vpop.f32.mrf.mxu0
        %v6854 = vadd.f32 %v6650, %v6853
        %v6855 = vpop.f32.mrf.mxu0
        %v6856 = vadd.f32 %v6650, %v6855
        %6857 = vmatmul.bf16.gmra.mxu0 %v6614
        %v6858 = vpop.f32.mrf.mxu0
        %v6859 = vadd.f32 %v6650, %v6858
        %v6860 = vpop.f32.mrf.mxu0
        %v6861 = vadd.f32 %v6650, %v6860
        %6862 = vdwg.mxu0
        %6863 = vmatpush.bf16.msra.mxu0 %v6780
        %6864 = vmatpush.bf16.msra.mxu0 %v6778
        %6865 = vmatpush.bf16.msra.mxu0 %v6776
        %6866 = vmatpush.bf16.msra.mxu0 %v6774
        %6867 = vmatpush.bf16.msra.mxu0 %v6772
        %6868 = vmatpush.bf16.msra.mxu0 %v6770
        %6869 = vmatpush.bf16.msra.mxu0 %v6768
        %6870 = vmatpush.bf16.msra.mxu0 %v6766
        %6871 = vmatmul.bf16.gmra.mxu0 %v6601
        %v6872 = vpop.f32.mrf.mxu0
        %v6873 = vadd.f32 %v6824, %v6872
        %v6874 = vpop.f32.mrf.mxu0
        %v6875 = vadd.f32 %v6826, %v6874
        %6876 = vmatmul.bf16.gmra.mxu0 %v6603
        %v6877 = vpop.f32.mrf.mxu0
        %v6878 = vadd.f32 %v6829, %v6877
        %v6879 = vpop.f32.mrf.mxu0
        %v6880 = vadd.f32 %v6831, %v6879
        %6881 = vmatmul.bf16.gmra.mxu0 %v6605
        %v6882 = vpop.f32.mrf.mxu0
        %v6883 = vadd.f32 %v6834, %v6882
        %v6884 = vpop.f32.mrf.mxu0
        %v6885 = vadd.f32 %v6836, %v6884
        %6886 = vmatmul.bf16.gmra.mxu0 %v6607
        %v6887 = vpop.f32.mrf.mxu0
        %v6888 = vadd.f32 %v6839, %v6887
        %v6889 = vpop.f32.mrf.mxu0
        %v6890 = vadd.f32 %v6841, %v6889
        %6891 = vmatmul.bf16.gmra.mxu0 %v6609
        %v6892 = vpop.f32.mrf.mxu0
        %v6893 = vadd.f32 %v6844, %v6892
        %v6894 = vpop.f32.mrf.mxu0
        %v6895 = vadd.f32 %v6846, %v6894
        %6896 = vmatmul.bf16.gmra.mxu0 %v6611
        %v6897 = vpop.f32.mrf.mxu0
        %v6898 = vadd.f32 %v6849, %v6897
        %v6899 = vpop.f32.mrf.mxu0
        %v6900 = vadd.f32 %v6851, %v6899
        %6901 = vmatmul.bf16.gmra.mxu0 %v6613
        %v6902 = vpop.f32.mrf.mxu0
        %v6903 = vadd.f32 %v6854, %v6902
        %v6904 = vpop.f32.mrf.mxu0
        %v6905 = vadd.f32 %v6856, %v6904
        %6906 = vmatmul.bf16.gmra.mxu0 %v6615
        %v6907 = vpop.f32.mrf.mxu0
        %v6908 = vadd.f32 %v6859, %v6907
        %v6909 = vpop.f32.mrf.mxu0
        %v6910 = vadd.f32 %v6861, %v6909
        %6911 = vdwg.mxu0
        %6912 = vmatpush.bf16.msra.mxu0 %v6765
        %6913 = vmatpush.bf16.msra.mxu0 %v6763
        %6914 = vmatpush.bf16.msra.mxu0 %v6761
        %6915 = vmatpush.bf16.msra.mxu0 %v6759
        %6916 = vmatpush.bf16.msra.mxu0 %v6757
        %6917 = vmatpush.bf16.msra.mxu0 %v6755
        %6918 = vmatpush.bf16.msra.mxu0 %v6753
        %6919 = vmatpush.bf16.msra.mxu0 %v6751
        %6920 = vmatmul.bf16.gmra.mxu0 %v6600
        %v6921 = vpop.f32.mrf.mxu0
        %v6922 = vadd.f32 %v6651, %v6921
        %v6923 = vpop.f32.mrf.mxu0
        %v6924 = vadd.f32 %v6651, %v6923
        %6925 = vmatmul.bf16.gmra.mxu0 %v6602
        %v6926 = vpop.f32.mrf.mxu0
        %v6927 = vadd.f32 %v6651, %v6926
        %v6928 = vpop.f32.mrf.mxu0
        %v6929 = vadd.f32 %v6651, %v6928
        %6930 = vmatmul.bf16.gmra.mxu0 %v6604
        %v6931 = vpop.f32.mrf.mxu0
        %v6932 = vadd.f32 %v6651, %v6931
        %v6933 = vpop.f32.mrf.mxu0
        %v6934 = vadd.f32 %v6651, %v6933
        %6935 = vmatmul.bf16.gmra.mxu0 %v6606
        %v6936 = vpop.f32.mrf.mxu0
        %v6937 = vadd.f32 %v6651, %v6936
        %v6938 = vpop.f32.mrf.mxu0
        %v6939 = vadd.f32 %v6651, %v6938
        %6940 = vmatmul.bf16.gmra.mxu0 %v6608
        %v6941 = vpop.f32.mrf.mxu0
        %v6942 = vadd.f32 %v6651, %v6941
        %v6943 = vpop.f32.mrf.mxu0
        %v6944 = vadd.f32 %v6651, %v6943
        %6945 = vmatmul.bf16.gmra.mxu0 %v6610
        %v6946 = vpop.f32.mrf.mxu0
        %v6947 = vadd.f32 %v6651, %v6946
        %v6948 = vpop.f32.mrf.mxu0
        %v6949 = vadd.f32 %v6651, %v6948
        %6950 = vmatmul.bf16.gmra.mxu0 %v6612
        %v6951 = vpop.f32.mrf.mxu0
        %v6952 = vadd.f32 %v6651, %v6951
        %v6953 = vpop.f32.mrf.mxu0
        %v6954 = vadd.f32 %v6651, %v6953
        %6955 = vmatmul.bf16.gmra.mxu0 %v6614
        %v6956 = vpop.f32.mrf.mxu0
        %v6957 = vadd.f32 %v6651, %v6956
        %v6958 = vpop.f32.mrf.mxu0
        %v6959 = vadd.f32 %v6651, %v6958
        %6960 = vdwg.mxu0
        %6961 = vmatpush.bf16.msra.mxu0 %v6781
        %6962 = vmatpush.bf16.msra.mxu0 %v6779
        %6963 = vmatpush.bf16.msra.mxu0 %v6777
        %6964 = vmatpush.bf16.msra.mxu0 %v6775
        %6965 = vmatpush.bf16.msra.mxu0 %v6773
        %6966 = vmatpush.bf16.msra.mxu0 %v6771
        %6967 = vmatpush.bf16.msra.mxu0 %v6769
        %6968 = vmatpush.bf16.msra.mxu0 %v6767
        %6969 = vmatmul.bf16.gmra.mxu0 %v6601
        %v6970 = vpop.f32.mrf.mxu0
        %v6971 = vadd.f32 %v6922, %v6970
        %v6972 = vpop.f32.mrf.mxu0
        %v6973 = vadd.f32 %v6924, %v6972
        %6974 = vmatmul.bf16.gmra.mxu0 %v6603
        %v6975 = vpop.f32.mrf.mxu0
        %v6976 = vadd.f32 %v6927, %v6975
        %v6977 = vpop.f32.mrf.mxu0
        %v6978 = vadd.f32 %v6929, %v6977
        %6979 = vmatmul.bf16.gmra.mxu0 %v6605
        %v6980 = vpop.f32.mrf.mxu0
        %v6981 = vadd.f32 %v6932, %v6980
        %v6982 = vpop.f32.mrf.mxu0
        %v6983 = vadd.f32 %v6934, %v6982
        %6984 = vmatmul.bf16.gmra.mxu0 %v6607
        %v6985 = vpop.f32.mrf.mxu0
        %v6986 = vadd.f32 %v6937, %v6985
        %v6987 = vpop.f32.mrf.mxu0
        %v6988 = vadd.f32 %v6939, %v6987
        %6989 = vmatmul.bf16.gmra.mxu0 %v6609
        %v6990 = vpop.f32.mrf.mxu0
        %v6991 = vadd.f32 %v6942, %v6990
        %v6992 = vpop.f32.mrf.mxu0
        %v6993 = vadd.f32 %v6944, %v6992
        %6994 = vmatmul.bf16.gmra.mxu0 %v6611
        %v6995 = vpop.f32.mrf.mxu0
        %v6996 = vadd.f32 %v6947, %v6995
        %v6997 = vpop.f32.mrf.mxu0
        %v6998 = vadd.f32 %v6949, %v6997
        %6999 = vmatmul.bf16.gmra.mxu0 %v6613
        %v7000 = vpop.f32.mrf.mxu0
        %v7001 = vadd.f32 %v6952, %v7000
        %v7002 = vpop.f32.mrf.mxu0
        %v7003 = vadd.f32 %v6954, %v7002
        %7004 = vmatmul.bf16.gmra.mxu0 %v6615
        %v7005 = vpop.f32.mrf.mxu0
        %v7006 = vadd.f32 %v6957, %v7005
        %v7007 = vpop.f32.mrf.mxu0
        %v7008 = vadd.f32 %v6959, %v7007
        %7009 = vdwg.mxu0
        %v7010 = vmax.f32 %v6873, 0.0
        %v7011 = vmax.f32 %v6971, 0.0
        %v7012 = vmax.f32 %v6875, 0.0
        %v7013 = vmax.f32 %v6973, 0.0
        %v7014 = vmax.f32 %v6878, 0.0
        %v7015 = vmax.f32 %v6976, 0.0
        %v7016 = vmax.f32 %v6880, 0.0
        %v7017 = vmax.f32 %v6978, 0.0
        %v7018 = vmax.f32 %v6883, 0.0
        %v7019 = vmax.f32 %v6981, 0.0
        %v7020 = vmax.f32 %v6885, 0.0
        %v7021 = vmax.f32 %v6983, 0.0
        %v7022 = vmax.f32 %v6888, 0.0
        %v7023 = vmax.f32 %v6986, 0.0
        %v7024 = vmax.f32 %v6890, 0.0
        %v7025 = vmax.f32 %v6988, 0.0
        %v7026 = vmax.f32 %v6893, 0.0
        %v7027 = vmax.f32 %v6991, 0.0
        %v7028 = vmax.f32 %v6895, 0.0
        %v7029 = vmax.f32 %v6993, 0.0
        %v7030 = vmax.f32 %v6898, 0.0
        %v7031 = vmax.f32 %v6996, 0.0
        %v7032 = vmax.f32 %v6900, 0.0
        %v7033 = vmax.f32 %v6998, 0.0
        %v7034 = vmax.f32 %v6903, 0.0
        %v7035 = vmax.f32 %v7001, 0.0
        %v7036 = vmax.f32 %v6905, 0.0
        %v7037 = vmax.f32 %v7003, 0.0
        %v7038 = vmax.f32 %v6908, 0.0
        %v7039 = vmax.f32 %v7006, 0.0
        %v7040 = vmax.f32 %v6910, 0.0
        %v7041 = vmax.f32 %v7008, 0.0
        %v7042 = vpack.c.bf16 %v7012, %v7010
        %v7043 = vpack.c.bf16 %v7013, %v7011
        %v7044 = vpack.c.bf16 %v7016, %v7014
        %v7045 = vpack.c.bf16 %v7017, %v7015
        %v7046 = vpack.c.bf16 %v7020, %v7018
        %v7047 = vpack.c.bf16 %v7021, %v7019
        %v7048 = vpack.c.bf16 %v7024, %v7022
        %v7049 = vpack.c.bf16 %v7025, %v7023
        %v7050 = vpack.c.bf16 %v7028, %v7026
        %v7051 = vpack.c.bf16 %v7029, %v7027
        %v7052 = vpack.c.bf16 %v7032, %v7030
        %v7053 = vpack.c.bf16 %v7033, %v7031
        %v7054 = vpack.c.bf16 %v7036, %v7034
        %v7055 = vpack.c.bf16 %v7037, %v7035
        %v7056 = vpack.c.bf16 %v7040, %v7038
        %v7057 = vpack.c.bf16 %v7041, %v7039
        %v7058 = vld [vmem:[#allocation21] sm:$0xff]
        %v7059 = vld [vmem:[#allocation21 + $0x8] sm:$0xff]
        %v7060 = vld [vmem:[#allocation21 + $0x10] sm:$0xff]
        %v7061 = vld [vmem:[#allocation21 + $0x18] sm:$0xff]
        %v7062 = vld [vmem:[#allocation21 + $0x20] sm:$0xff]
        %v7063 = vld [vmem:[#allocation21 + $0x28] sm:$0xff]
        %v7064 = vld [vmem:[#allocation21 + $0x30] sm:$0xff]
        %v7065 = vld [vmem:[#allocation21 + $0x38] sm:$0xff]
        %v7066 = vld [vmem:[#allocation21 + $0x40] sm:$0xff]
        %v7067 = vld [vmem:[#allocation21 + $0x48] sm:$0xff]
        %v7068 = vld [vmem:[#allocation21 + $0x50] sm:$0xff]
        %v7069 = vld [vmem:[#allocation21 + $0x58] sm:$0xff]
        %v7070 = vld [vmem:[#allocation21 + $0x60] sm:$0xff]
        %v7071 = vld [vmem:[#allocation21 + $0x68] sm:$0xff]
        %v7072 = vld [vmem:[#allocation21 + $0x70] sm:$0xff]
        %v7073 = vld [vmem:[#allocation21 + $0x78] sm:$0xff]
        %v7074 = vld [vmem:[#allocation21 + $0x80] sm:$0xff]
        %v7075 = vld [vmem:[#allocation21 + $0x88] sm:$0xff]
        %v7076 = vld [vmem:[#allocation21 + $0x90] sm:$0xff]
        %v7077 = vld [vmem:[#allocation21 + $0x98] sm:$0xff]
        %v7078 = vld [vmem:[#allocation21 + $0xa0] sm:$0xff]
        %v7079 = vld [vmem:[#allocation21 + $0xa8] sm:$0xff]
        %v7080 = vld [vmem:[#allocation21 + $0xb0] sm:$0xff]
        %v7081 = vld [vmem:[#allocation21 + $0xb8] sm:$0xff]
        %v7082 = vld [vmem:[#allocation21 + $0xc0] sm:$0xff]
        %v7083 = vld [vmem:[#allocation21 + $0xc8] sm:$0xff]
        %v7084 = vld [vmem:[#allocation21 + $0xd0] sm:$0xff]
        %v7085 = vld [vmem:[#allocation21 + $0xd8] sm:$0xff]
        %v7086 = vld [vmem:[#allocation21 + $0xe0] sm:$0xff]
        %v7087 = vld [vmem:[#allocation21 + $0xe8] sm:$0xff]
        %v7088 = vld [vmem:[#allocation21 + $0xf0] sm:$0xff]
        %v7089 = vld [vmem:[#allocation21 + $0xf8] sm:$0xff]
        %v7090 = vld [vmem:[%s22] sm:$0x3]
        %v7092 = vperm.slane %v7090, 0
        %v7093 = vperm.slane %v7090, 1
        %v7128 = vunpack.c.l.b16 %v7058
        %v7129 = vunpack.c.h.b16 %v7058
        %v7130 = vunpack.c.l.b16 %v7059
        %v7131 = vunpack.c.h.b16 %v7059
        %v7132 = vunpack.c.l.b16 %v7060
        %v7133 = vunpack.c.h.b16 %v7060
        %v7134 = vunpack.c.l.b16 %v7061
        %v7135 = vunpack.c.h.b16 %v7061
        %v7136 = vunpack.c.l.b16 %v7062
        %v7137 = vunpack.c.h.b16 %v7062
        %v7138 = vunpack.c.l.b16 %v7063
        %v7139 = vunpack.c.h.b16 %v7063
        %v7140 = vunpack.c.l.b16 %v7064
        %v7141 = vunpack.c.h.b16 %v7064
        %v7142 = vunpack.c.l.b16 %v7065
        %v7143 = vunpack.c.h.b16 %v7065
        %v7144 = vunpack.c.l.b16 %v7066
        %v7145 = vunpack.c.h.b16 %v7066
        %v7146 = vunpack.c.l.b16 %v7067
        %v7147 = vunpack.c.h.b16 %v7067
        %v7148 = vunpack.c.l.b16 %v7068
        %v7149 = vunpack.c.h.b16 %v7068
        %v7150 = vunpack.c.l.b16 %v7069
        %v7151 = vunpack.c.h.b16 %v7069
        %v7152 = vunpack.c.l.b16 %v7070
        %v7153 = vunpack.c.h.b16 %v7070
        %v7154 = vunpack.c.l.b16 %v7071
        %v7155 = vunpack.c.h.b16 %v7071
        %v7156 = vunpack.c.l.b16 %v7072
        %v7157 = vunpack.c.h.b16 %v7072
        %v7158 = vunpack.c.l.b16 %v7073
        %v7159 = vunpack.c.h.b16 %v7073
        %v7160 = vunpack.c.l.b16 %v7074
        %v7161 = vunpack.c.h.b16 %v7074
        %v7162 = vunpack.c.l.b16 %v7075
        %v7163 = vunpack.c.h.b16 %v7075
        %v7164 = vunpack.c.l.b16 %v7076
        %v7165 = vunpack.c.h.b16 %v7076
        %v7166 = vunpack.c.l.b16 %v7077
        %v7167 = vunpack.c.h.b16 %v7077
        %v7168 = vunpack.c.l.b16 %v7078
        %v7169 = vunpack.c.h.b16 %v7078
        %v7170 = vunpack.c.l.b16 %v7079
        %v7171 = vunpack.c.h.b16 %v7079
        %v7172 = vunpack.c.l.b16 %v7080
        %v7173 = vunpack.c.h.b16 %v7080
        %v7174 = vunpack.c.l.b16 %v7081
        %v7175 = vunpack.c.h.b16 %v7081
        %v7176 = vunpack.c.l.b16 %v7082
        %v7177 = vunpack.c.h.b16 %v7082
        %v7178 = vunpack.c.l.b16 %v7083
        %v7179 = vunpack.c.h.b16 %v7083
        %v7180 = vunpack.c.l.b16 %v7084
        %v7181 = vunpack.c.h.b16 %v7084
        %v7182 = vunpack.c.l.b16 %v7085
        %v7183 = vunpack.c.h.b16 %v7085
        %v7184 = vunpack.c.l.b16 %v7086
        %v7185 = vunpack.c.h.b16 %v7086
        %v7186 = vunpack.c.l.b16 %v7087
        %v7187 = vunpack.c.h.b16 %v7087
        %v7188 = vunpack.c.l.b16 %v7088
        %v7189 = vunpack.c.h.b16 %v7088
        %v7190 = vunpack.c.l.b16 %v7089
        %v7191 = vunpack.c.h.b16 %v7089
        %v7192 = vpack.c.b16 %v7130, %v7128
        %v7193 = vpack.c.b16 %v7131, %v7129
        %v7194 = vpack.c.b16 %v7134, %v7132
        %v7195 = vpack.c.b16 %v7135, %v7133
        %v7196 = vpack.c.b16 %v7138, %v7136
        %v7197 = vpack.c.b16 %v7139, %v7137
        %v7198 = vpack.c.b16 %v7142, %v7140
        %v7199 = vpack.c.b16 %v7143, %v7141
        %v7200 = vpack.c.b16 %v7146, %v7144
        %v7201 = vpack.c.b16 %v7147, %v7145
        %v7202 = vpack.c.b16 %v7150, %v7148
        %v7203 = vpack.c.b16 %v7151, %v7149
        %v7204 = vpack.c.b16 %v7154, %v7152
        %v7205 = vpack.c.b16 %v7155, %v7153
        %v7206 = vpack.c.b16 %v7158, %v7156
        %v7207 = vpack.c.b16 %v7159, %v7157
        %v7208 = vpack.c.b16 %v7162, %v7160
        %v7209 = vpack.c.b16 %v7163, %v7161
        %v7210 = vpack.c.b16 %v7166, %v7164
        %v7211 = vpack.c.b16 %v7167, %v7165
        %v7212 = vpack.c.b16 %v7170, %v7168
        %v7213 = vpack.c.b16 %v7171, %v7169
        %v7214 = vpack.c.b16 %v7174, %v7172
        %v7215 = vpack.c.b16 %v7175, %v7173
        %v7216 = vpack.c.b16 %v7178, %v7176
        %v7217 = vpack.c.b16 %v7179, %v7177
        %v7218 = vpack.c.b16 %v7182, %v7180
        %v7219 = vpack.c.b16 %v7183, %v7181
        %v7220 = vpack.c.b16 %v7186, %v7184
        %v7221 = vpack.c.b16 %v7187, %v7185
        %v7222 = vpack.c.b16 %v7190, %v7188
        %v7223 = vpack.c.b16 %v7191, %v7189
        %7256 = vmatpush.bf16.msra.mxu0 %v7206
        %7257 = vmatpush.bf16.msra.mxu0 %v7204
        %7258 = vmatpush.bf16.msra.mxu0 %v7202
        %7259 = vmatpush.bf16.msra.mxu0 %v7200
        %7260 = vmatpush.bf16.msra.mxu0 %v7198
        %7261 = vmatpush.bf16.msra.mxu0 %v7196
        %7262 = vmatpush.bf16.msra.mxu0 %v7194
        %7263 = vmatpush.bf16.msra.mxu0 %v7192
        %7264 = vmatmul.bf16.gmra.mxu0 %v7042
        %v7265 = vpop.f32.mrf.mxu0
        %v7266 = vadd.f32 %v7092, %v7265
        %v7267 = vpop.f32.mrf.mxu0
        %v7268 = vadd.f32 %v7092, %v7267
        %7269 = vmatmul.bf16.gmra.mxu0 %v7044
        %v7270 = vpop.f32.mrf.mxu0
        %v7271 = vadd.f32 %v7092, %v7270
        %v7272 = vpop.f32.mrf.mxu0
        %v7273 = vadd.f32 %v7092, %v7272
        %7274 = vmatmul.bf16.gmra.mxu0 %v7046
        %v7275 = vpop.f32.mrf.mxu0
        %v7276 = vadd.f32 %v7092, %v7275
        %v7277 = vpop.f32.mrf.mxu0
        %v7278 = vadd.f32 %v7092, %v7277
        %7279 = vmatmul.bf16.gmra.mxu0 %v7048
        %v7280 = vpop.f32.mrf.mxu0
        %v7281 = vadd.f32 %v7092, %v7280
        %v7282 = vpop.f32.mrf.mxu0
        %v7283 = vadd.f32 %v7092, %v7282
        %7284 = vmatmul.bf16.gmra.mxu0 %v7050
        %v7285 = vpop.f32.mrf.mxu0
        %v7286 = vadd.f32 %v7092, %v7285
        %v7287 = vpop.f32.mrf.mxu0
        %v7288 = vadd.f32 %v7092, %v7287
        %7289 = vmatmul.bf16.gmra.mxu0 %v7052
        %v7290 = vpop.f32.mrf.mxu0
        %v7291 = vadd.f32 %v7092, %v7290
        %v7292 = vpop.f32.mrf.mxu0
        %v7293 = vadd.f32 %v7092, %v7292
        %7294 = vmatmul.bf16.gmra.mxu0 %v7054
        %v7295 = vpop.f32.mrf.mxu0
        %v7296 = vadd.f32 %v7092, %v7295
        %v7297 = vpop.f32.mrf.mxu0
        %v7298 = vadd.f32 %v7092, %v7297
        %7299 = vmatmul.bf16.gmra.mxu0 %v7056
        %v7300 = vpop.f32.mrf.mxu0
        %v7301 = vadd.f32 %v7092, %v7300
        %v7302 = vpop.f32.mrf.mxu0
        %v7303 = vadd.f32 %v7092, %v7302
        %7304 = vdwg.mxu0
        %7305 = vmatpush.bf16.msra.mxu0 %v7222
        %7306 = vmatpush.bf16.msra.mxu0 %v7220
        %7307 = vmatpush.bf16.msra.mxu0 %v7218
        %7308 = vmatpush.bf16.msra.mxu0 %v7216
        %7309 = vmatpush.bf16.msra.mxu0 %v7214
        %7310 = vmatpush.bf16.msra.mxu0 %v7212
        %7311 = vmatpush.bf16.msra.mxu0 %v7210
        %7312 = vmatpush.bf16.msra.mxu0 %v7208
        %7313 = vmatmul.bf16.gmra.mxu0 %v7043
        %v7314 = vpop.f32.mrf.mxu0
        %v7315 = vadd.f32 %v7266, %v7314
        %v7316 = vpop.f32.mrf.mxu0
        %v7317 = vadd.f32 %v7268, %v7316
        %7318 = vmatmul.bf16.gmra.mxu0 %v7045
        %v7319 = vpop.f32.mrf.mxu0
        %v7320 = vadd.f32 %v7271, %v7319
        %v7321 = vpop.f32.mrf.mxu0
        %v7322 = vadd.f32 %v7273, %v7321
        %7323 = vmatmul.bf16.gmra.mxu0 %v7047
        %v7324 = vpop.f32.mrf.mxu0
        %v7325 = vadd.f32 %v7276, %v7324
        %v7326 = vpop.f32.mrf.mxu0
        %v7327 = vadd.f32 %v7278, %v7326
        %7328 = vmatmul.bf16.gmra.mxu0 %v7049
        %v7329 = vpop.f32.mrf.mxu0
        %v7330 = vadd.f32 %v7281, %v7329
        %v7331 = vpop.f32.mrf.mxu0
        %v7332 = vadd.f32 %v7283, %v7331
        %7333 = vmatmul.bf16.gmra.mxu0 %v7051
        %v7334 = vpop.f32.mrf.mxu0
        %v7335 = vadd.f32 %v7286, %v7334
        %v7336 = vpop.f32.mrf.mxu0
        %v7337 = vadd.f32 %v7288, %v7336
        %7338 = vmatmul.bf16.gmra.mxu0 %v7053
        %v7339 = vpop.f32.mrf.mxu0
        %v7340 = vadd.f32 %v7291, %v7339
        %v7341 = vpop.f32.mrf.mxu0
        %v7342 = vadd.f32 %v7293, %v7341
        %7343 = vmatmul.bf16.gmra.mxu0 %v7055
        %v7344 = vpop.f32.mrf.mxu0
        %v7345 = vadd.f32 %v7296, %v7344
        %v7346 = vpop.f32.mrf.mxu0
        %v7347 = vadd.f32 %v7298, %v7346
        %7348 = vmatmul.bf16.gmra.mxu0 %v7057
        %v7349 = vpop.f32.mrf.mxu0
        %v7350 = vadd.f32 %v7301, %v7349
        %v7351 = vpop.f32.mrf.mxu0
        %v7352 = vadd.f32 %v7303, %v7351
        %7353 = vdwg.mxu0
        %7354 = vmatpush.bf16.msra.mxu0 %v7207
        %7355 = vmatpush.bf16.msra.mxu0 %v7205
        %7356 = vmatpush.bf16.msra.mxu0 %v7203
        %7357 = vmatpush.bf16.msra.mxu0 %v7201
        %7358 = vmatpush.bf16.msra.mxu0 %v7199
        %7359 = vmatpush.bf16.msra.mxu0 %v7197
        %7360 = vmatpush.bf16.msra.mxu0 %v7195
        %7361 = vmatpush.bf16.msra.mxu0 %v7193
        %7362 = vmatmul.bf16.gmra.mxu0 %v7042
        %v7363 = vpop.f32.mrf.mxu0
        %v7364 = vadd.f32 %v7093, %v7363
        %v7365 = vpop.f32.mrf.mxu0
        %v7366 = vadd.f32 %v7093, %v7365
        %7367 = vmatmul.bf16.gmra.mxu0 %v7044
        %v7368 = vpop.f32.mrf.mxu0
        %v7369 = vadd.f32 %v7093, %v7368
        %v7370 = vpop.f32.mrf.mxu0
        %v7371 = vadd.f32 %v7093, %v7370
        %7372 = vmatmul.bf16.gmra.mxu0 %v7046
        %v7373 = vpop.f32.mrf.mxu0
        %v7374 = vadd.f32 %v7093, %v7373
        %v7375 = vpop.f32.mrf.mxu0
        %v7376 = vadd.f32 %v7093, %v7375
        %7377 = vmatmul.bf16.gmra.mxu0 %v7048
        %v7378 = vpop.f32.mrf.mxu0
        %v7379 = vadd.f32 %v7093, %v7378
        %v7380 = vpop.f32.mrf.mxu0
        %v7381 = vadd.f32 %v7093, %v7380
        %7382 = vmatmul.bf16.gmra.mxu0 %v7050
        %v7383 = vpop.f32.mrf.mxu0
        %v7384 = vadd.f32 %v7093, %v7383
        %v7385 = vpop.f32.mrf.mxu0
        %v7386 = vadd.f32 %v7093, %v7385
        %7387 = vmatmul.bf16.gmra.mxu0 %v7052
        %v7388 = vpop.f32.mrf.mxu0
        %v7389 = vadd.f32 %v7093, %v7388
        %v7390 = vpop.f32.mrf.mxu0
        %v7391 = vadd.f32 %v7093, %v7390
        %7392 = vmatmul.bf16.gmra.mxu0 %v7054
        %v7393 = vpop.f32.mrf.mxu0
        %v7394 = vadd.f32 %v7093, %v7393
        %v7395 = vpop.f32.mrf.mxu0
        %v7396 = vadd.f32 %v7093, %v7395
        %7397 = vmatmul.bf16.gmra.mxu0 %v7056
        %v7398 = vpop.f32.mrf.mxu0
        %v7399 = vadd.f32 %v7093, %v7398
        %v7400 = vpop.f32.mrf.mxu0
        %v7401 = vadd.f32 %v7093, %v7400
        %7402 = vdwg.mxu0
        %7403 = vmatpush.bf16.msra.mxu0 %v7223
        %7404 = vmatpush.bf16.msra.mxu0 %v7221
        %7405 = vmatpush.bf16.msra.mxu0 %v7219
        %7406 = vmatpush.bf16.msra.mxu0 %v7217
        %7407 = vmatpush.bf16.msra.mxu0 %v7215
        %7408 = vmatpush.bf16.msra.mxu0 %v7213
        %7409 = vmatpush.bf16.msra.mxu0 %v7211
        %7410 = vmatpush.bf16.msra.mxu0 %v7209
        %7411 = vmatmul.bf16.gmra.mxu0 %v7043
        %v7412 = vpop.f32.mrf.mxu0
        %v7413 = vadd.f32 %v7364, %v7412
        %v7414 = vpop.f32.mrf.mxu0
        %v7415 = vadd.f32 %v7366, %v7414
        %7416 = vmatmul.bf16.gmra.mxu0 %v7045
        %v7417 = vpop.f32.mrf.mxu0
        %v7418 = vadd.f32 %v7369, %v7417
        %v7419 = vpop.f32.mrf.mxu0
        %v7420 = vadd.f32 %v7371, %v7419
        %7421 = vmatmul.bf16.gmra.mxu0 %v7047
        %v7422 = vpop.f32.mrf.mxu0
        %v7423 = vadd.f32 %v7374, %v7422
        %v7424 = vpop.f32.mrf.mxu0
        %v7425 = vadd.f32 %v7376, %v7424
        %7426 = vmatmul.bf16.gmra.mxu0 %v7049
        %v7427 = vpop.f32.mrf.mxu0
        %v7428 = vadd.f32 %v7379, %v7427
        %v7429 = vpop.f32.mrf.mxu0
        %v7430 = vadd.f32 %v7381, %v7429
        %7431 = vmatmul.bf16.gmra.mxu0 %v7051
        %v7432 = vpop.f32.mrf.mxu0
        %v7433 = vadd.f32 %v7384, %v7432
        %v7434 = vpop.f32.mrf.mxu0
        %v7435 = vadd.f32 %v7386, %v7434
        %7436 = vmatmul.bf16.gmra.mxu0 %v7053
        %v7437 = vpop.f32.mrf.mxu0
        %v7438 = vadd.f32 %v7389, %v7437
        %v7439 = vpop.f32.mrf.mxu0
        %v7440 = vadd.f32 %v7391, %v7439
        %7441 = vmatmul.bf16.gmra.mxu0 %v7055
        %v7442 = vpop.f32.mrf.mxu0
        %v7443 = vadd.f32 %v7394, %v7442
        %v7444 = vpop.f32.mrf.mxu0
        %v7445 = vadd.f32 %v7396, %v7444
        %7446 = vmatmul.bf16.gmra.mxu0 %v7057
        %v7447 = vpop.f32.mrf.mxu0
        %v7448 = vadd.f32 %v7399, %v7447
        %v7449 = vpop.f32.mrf.mxu0
        %v7450 = vadd.f32 %v7401, %v7449
        %7451 = vdwg.mxu0
        %v7452 = vmax.f32 %v7315, 0.0
        %v7453 = vmax.f32 %v7413, 0.0
        %v7454 = vmax.f32 %v7317, 0.0
        %v7455 = vmax.f32 %v7415, 0.0
        %v7456 = vmax.f32 %v7320, 0.0
        %v7457 = vmax.f32 %v7418, 0.0
        %v7458 = vmax.f32 %v7322, 0.0
        %v7459 = vmax.f32 %v7420, 0.0
        %v7460 = vmax.f32 %v7325, 0.0
        %v7461 = vmax.f32 %v7423, 0.0
        %v7462 = vmax.f32 %v7327, 0.0
        %v7463 = vmax.f32 %v7425, 0.0
        %v7464 = vmax.f32 %v7330, 0.0
        %v7465 = vmax.f32 %v7428, 0.0
        %v7466 = vmax.f32 %v7332, 0.0
        %v7467 = vmax.f32 %v7430, 0.0
        %v7468 = vmax.f32 %v7335, 0.0
        %v7469 = vmax.f32 %v7433, 0.0
        %v7470 = vmax.f32 %v7337, 0.0
        %v7471 = vmax.f32 %v7435, 0.0
        %v7472 = vmax.f32 %v7340, 0.0
        %v7473 = vmax.f32 %v7438, 0.0
        %v7474 = vmax.f32 %v7342, 0.0
        %v7475 = vmax.f32 %v7440, 0.0
        %v7476 = vmax.f32 %v7345, 0.0
        %v7477 = vmax.f32 %v7443, 0.0
        %v7478 = vmax.f32 %v7347, 0.0
        %v7479 = vmax.f32 %v7445, 0.0
        %v7480 = vmax.f32 %v7350, 0.0
        %v7481 = vmax.f32 %v7448, 0.0
        %v7482 = vmax.f32 %v7352, 0.0
        %v7483 = vmax.f32 %v7450, 0.0
        %v7484 = vpack.c.bf16 %v7454, %v7452
        %v7485 = vpack.c.bf16 %v7455, %v7453
        %v7486 = vpack.c.bf16 %v7458, %v7456
        %v7487 = vpack.c.bf16 %v7459, %v7457
        %v7488 = vpack.c.bf16 %v7462, %v7460
        %v7489 = vpack.c.bf16 %v7463, %v7461
        %v7490 = vpack.c.bf16 %v7466, %v7464
        %v7491 = vpack.c.bf16 %v7467, %v7465
        %v7492 = vpack.c.bf16 %v7470, %v7468
        %v7493 = vpack.c.bf16 %v7471, %v7469
        %v7494 = vpack.c.bf16 %v7474, %v7472
        %v7495 = vpack.c.bf16 %v7475, %v7473
        %v7496 = vpack.c.bf16 %v7478, %v7476
        %v7497 = vpack.c.bf16 %v7479, %v7477
        %v7498 = vpack.c.bf16 %v7482, %v7480
        %v7499 = vpack.c.bf16 %v7483, %v7481
        %v7500 = vld [vmem:[#allocation22] sm:$0xf]
        %v7501 = vld [vmem:[#allocation22 + $0x4] sm:$0xf]
        %v7502 = vld [vmem:[#allocation22 + $0x8] sm:$0xf]
        %v7503 = vld [vmem:[#allocation22 + $0xc] sm:$0xf]
        %v7504 = vld [vmem:[#allocation22 + $0x10] sm:$0xf]
        %v7505 = vld [vmem:[#allocation22 + $0x14] sm:$0xf]
        %v7506 = vld [vmem:[#allocation22 + $0x18] sm:$0xf]
        %v7507 = vld [vmem:[#allocation22 + $0x1c] sm:$0xf]
        %v7508 = vld [vmem:[#allocation22 + $0x20] sm:$0xf]
        %v7509 = vld [vmem:[#allocation22 + $0x24] sm:$0xf]
        %v7510 = vld [vmem:[#allocation22 + $0x28] sm:$0xf]
        %v7511 = vld [vmem:[#allocation22 + $0x2c] sm:$0xf]
        %v7512 = vld [vmem:[#allocation22 + $0x30] sm:$0xf]
        %v7513 = vld [vmem:[#allocation22 + $0x34] sm:$0xf]
        %v7514 = vld [vmem:[#allocation22 + $0x38] sm:$0xf]
        %v7515 = vld [vmem:[#allocation22 + $0x3c] sm:$0xf]
        %v7516 = vld [vmem:[#allocation22 + $0x40] sm:$0xf]
        %v7517 = vld [vmem:[#allocation22 + $0x44] sm:$0xf]
        %v7518 = vld [vmem:[#allocation22 + $0x48] sm:$0xf]
        %v7519 = vld [vmem:[#allocation22 + $0x4c] sm:$0xf]
        %v7520 = vld [vmem:[#allocation22 + $0x50] sm:$0xf]
        %v7521 = vld [vmem:[#allocation22 + $0x54] sm:$0xf]
        %v7522 = vld [vmem:[#allocation22 + $0x58] sm:$0xf]
        %v7523 = vld [vmem:[#allocation22 + $0x5c] sm:$0xf]
        %v7524 = vld [vmem:[#allocation22 + $0x60] sm:$0xf]
        %v7525 = vld [vmem:[#allocation22 + $0x64] sm:$0xf]
        %v7526 = vld [vmem:[#allocation22 + $0x68] sm:$0xf]
        %v7527 = vld [vmem:[#allocation22 + $0x6c] sm:$0xf]
        %v7528 = vld [vmem:[#allocation22 + $0x70] sm:$0xf]
        %v7529 = vld [vmem:[#allocation22 + $0x74] sm:$0xf]
        %v7530 = vld [vmem:[#allocation22 + $0x78] sm:$0xf]
        %v7531 = vld [vmem:[#allocation22 + $0x7c] sm:$0xf]
        %v7532 = vld [vmem:[%s24] sm:$0x1]
        %v7534 = vperm.slane %v7532, 0
        %v7568 = vunpack.c.l.b16 %v7500
        %v7569 = vunpack.c.l.b16 %v7501
        %v7570 = vunpack.c.l.b16 %v7502
        %v7571 = vunpack.c.l.b16 %v7503
        %v7572 = vunpack.c.l.b16 %v7504
        %v7573 = vunpack.c.l.b16 %v7505
        %v7574 = vunpack.c.l.b16 %v7506
        %v7575 = vunpack.c.l.b16 %v7507
        %v7576 = vunpack.c.l.b16 %v7508
        %v7577 = vunpack.c.l.b16 %v7509
        %v7578 = vunpack.c.l.b16 %v7510
        %v7579 = vunpack.c.l.b16 %v7511
        %v7580 = vunpack.c.l.b16 %v7512
        %v7581 = vunpack.c.l.b16 %v7513
        %v7582 = vunpack.c.l.b16 %v7514
        %v7583 = vunpack.c.l.b16 %v7515
        %v7584 = vunpack.c.l.b16 %v7516
        %v7585 = vunpack.c.l.b16 %v7517
        %v7586 = vunpack.c.l.b16 %v7518
        %v7587 = vunpack.c.l.b16 %v7519
        %v7588 = vunpack.c.l.b16 %v7520
        %v7589 = vunpack.c.l.b16 %v7521
        %v7590 = vunpack.c.l.b16 %v7522
        %v7591 = vunpack.c.l.b16 %v7523
        %v7592 = vunpack.c.l.b16 %v7524
        %v7593 = vunpack.c.l.b16 %v7525
        %v7594 = vunpack.c.l.b16 %v7526
        %v7595 = vunpack.c.l.b16 %v7527
        %v7596 = vunpack.c.l.b16 %v7528
        %v7597 = vunpack.c.l.b16 %v7529
        %v7598 = vunpack.c.l.b16 %v7530
        %v7599 = vunpack.c.l.b16 %v7531
        %v7600 = vpack.c.b16 %v7569, %v7568
        %v7601 = vpack.c.b16 %v7571, %v7570
        %v7602 = vpack.c.b16 %v7573, %v7572
        %v7603 = vpack.c.b16 %v7575, %v7574
        %v7604 = vpack.c.b16 %v7577, %v7576
        %v7605 = vpack.c.b16 %v7579, %v7578
        %v7606 = vpack.c.b16 %v7581, %v7580
        %v7607 = vpack.c.b16 %v7583, %v7582
        %v7608 = vpack.c.b16 %v7585, %v7584
        %v7609 = vpack.c.b16 %v7587, %v7586
        %v7610 = vpack.c.b16 %v7589, %v7588
        %v7611 = vpack.c.b16 %v7591, %v7590
        %v7612 = vpack.c.b16 %v7593, %v7592
        %v7613 = vpack.c.b16 %v7595, %v7594
        %v7614 = vpack.c.b16 %v7597, %v7596
        %v7615 = vpack.c.b16 %v7599, %v7598
        %7632 = vmatpush.bf16.msra.mxu0 %v7607
        %7633 = vmatpush.bf16.msra.mxu0 %v7606
        %7634 = vmatpush.bf16.msra.mxu0 %v7605
        %7635 = vmatpush.bf16.msra.mxu0 %v7604
        %7636 = vmatpush.bf16.msra.mxu0 %v7603
        %7637 = vmatpush.bf16.msra.mxu0 %v7602
        %7638 = vmatpush.bf16.msra.mxu0 %v7601
        %7639 = vmatpush.bf16.msra.mxu0 %v7600
        %7640 = vmatmul.bf16.gmra.mxu0 %v7484
        %v7641 = vpop.f32.mrf.mxu0
        %v7642 = vadd.f32 %v7534, %v7641
        %v7643 = vpop.f32.mrf.mxu0
        %v7644 = vadd.f32 %v7534, %v7643
        %7645 = vmatmul.bf16.gmra.mxu0 %v7486
        %v7646 = vpop.f32.mrf.mxu0
        %v7647 = vadd.f32 %v7534, %v7646
        %v7648 = vpop.f32.mrf.mxu0
        %v7649 = vadd.f32 %v7534, %v7648
        %7650 = vmatmul.bf16.gmra.mxu0 %v7488
        %v7651 = vpop.f32.mrf.mxu0
        %v7652 = vadd.f32 %v7534, %v7651
        %v7653 = vpop.f32.mrf.mxu0
        %v7654 = vadd.f32 %v7534, %v7653
        %7655 = vmatmul.bf16.gmra.mxu0 %v7490
        %v7656 = vpop.f32.mrf.mxu0
        %v7657 = vadd.f32 %v7534, %v7656
        %v7658 = vpop.f32.mrf.mxu0
        %v7659 = vadd.f32 %v7534, %v7658
        %7660 = vmatmul.bf16.gmra.mxu0 %v7492
        %v7661 = vpop.f32.mrf.mxu0
        %v7662 = vadd.f32 %v7534, %v7661
        %v7663 = vpop.f32.mrf.mxu0
        %v7664 = vadd.f32 %v7534, %v7663
        %7665 = vmatmul.bf16.gmra.mxu0 %v7494
        %v7666 = vpop.f32.mrf.mxu0
        %v7667 = vadd.f32 %v7534, %v7666
        %v7668 = vpop.f32.mrf.mxu0
        %v7669 = vadd.f32 %v7534, %v7668
        %7670 = vmatmul.bf16.gmra.mxu0 %v7496
        %v7671 = vpop.f32.mrf.mxu0
        %v7672 = vadd.f32 %v7534, %v7671
        %v7673 = vpop.f32.mrf.mxu0
        %v7674 = vadd.f32 %v7534, %v7673
        %7675 = vmatmul.bf16.gmra.mxu0 %v7498
        %v7676 = vpop.f32.mrf.mxu0
        %v7677 = vadd.f32 %v7534, %v7676
        %v7678 = vpop.f32.mrf.mxu0
        %v7679 = vadd.f32 %v7534, %v7678
        %7680 = vdwg.mxu0
        %7681 = vmatpush.bf16.msra.mxu0 %v7615
        %7682 = vmatpush.bf16.msra.mxu0 %v7614
        %7683 = vmatpush.bf16.msra.mxu0 %v7613
        %7684 = vmatpush.bf16.msra.mxu0 %v7612
        %7685 = vmatpush.bf16.msra.mxu0 %v7611
        %7686 = vmatpush.bf16.msra.mxu0 %v7610
        %7687 = vmatpush.bf16.msra.mxu0 %v7609
        %7688 = vmatpush.bf16.msra.mxu0 %v7608
        %7689 = vmatmul.bf16.gmra.mxu0 %v7485
        %v7690 = vpop.f32.mrf.mxu0
        %v7691 = vadd.f32 %v7642, %v7690
        %v7692 = vpop.f32.mrf.mxu0
        %v7693 = vadd.f32 %v7644, %v7692
        %7694 = vmatmul.bf16.gmra.mxu0 %v7487
        %v7695 = vpop.f32.mrf.mxu0
        %v7696 = vadd.f32 %v7647, %v7695
        %v7697 = vpop.f32.mrf.mxu0
        %v7698 = vadd.f32 %v7649, %v7697
        %7699 = vmatmul.bf16.gmra.mxu0 %v7489
        %v7700 = vpop.f32.mrf.mxu0
        %v7701 = vadd.f32 %v7652, %v7700
        %v7702 = vpop.f32.mrf.mxu0
        %v7703 = vadd.f32 %v7654, %v7702
        %7704 = vmatmul.bf16.gmra.mxu0 %v7491
        %v7705 = vpop.f32.mrf.mxu0
        %v7706 = vadd.f32 %v7657, %v7705
        %v7707 = vpop.f32.mrf.mxu0
        %v7708 = vadd.f32 %v7659, %v7707
        %7709 = vmatmul.bf16.gmra.mxu0 %v7493
        %v7710 = vpop.f32.mrf.mxu0
        %v7711 = vadd.f32 %v7662, %v7710
        %v7712 = vpop.f32.mrf.mxu0
        %v7713 = vadd.f32 %v7664, %v7712
        %7714 = vmatmul.bf16.gmra.mxu0 %v7495
        %v7715 = vpop.f32.mrf.mxu0
        %v7716 = vadd.f32 %v7667, %v7715
        %v7717 = vpop.f32.mrf.mxu0
        %v7718 = vadd.f32 %v7669, %v7717
        %7719 = vmatmul.bf16.gmra.mxu0 %v7497
        %v7720 = vpop.f32.mrf.mxu0
        %v7721 = vadd.f32 %v7672, %v7720
        %v7722 = vpop.f32.mrf.mxu0
        %v7723 = vadd.f32 %v7674, %v7722
        %7724 = vmatmul.bf16.gmra.mxu0 %v7499
        %v7725 = vpop.f32.mrf.mxu0
        %v7726 = vadd.f32 %v7677, %v7725
        %v7727 = vpop.f32.mrf.mxu0
        %v7728 = vadd.f32 %v7679, %v7727
        %7729 = vdwg.mxu0
        %vm7730 = vcmask 31744
        %7731 = vst.msk [vmem:[%s986] sm:$0xff] %vm7730, %v7691
        %7732 = vst.msk [vmem:[%s986 + $0x8] sm:$0xff] %vm7730, %v7693
        %7733 = vst.msk [vmem:[%s986 + $0x10] sm:$0xff] %vm7730, %v7696
        %7734 = vst.msk [vmem:[%s986 + $0x18] sm:$0xff] %vm7730, %v7698
        %7735 = vst.msk [vmem:[%s986 + $0x20] sm:$0xff] %vm7730, %v7701
        %7736 = vst.msk [vmem:[%s986 + $0x28] sm:$0xff] %vm7730, %v7703
        %7737 = vst.msk [vmem:[%s986 + $0x30] sm:$0xff] %vm7730, %v7706
        %7738 = vst.msk [vmem:[%s986 + $0x38] sm:$0xff] %vm7730, %v7708
        %7739 = vst.msk [vmem:[%s986 + $0x40] sm:$0xff] %vm7730, %v7711
        %7740 = vst.msk [vmem:[%s986 + $0x48] sm:$0xff] %vm7730, %v7713
        %7741 = vst.msk [vmem:[%s986 + $0x50] sm:$0xff] %vm7730, %v7716
        %7742 = vst.msk [vmem:[%s986 + $0x58] sm:$0xff] %vm7730, %v7718
        %7743 = vst.msk [vmem:[%s986 + $0x60] sm:$0xff] %vm7730, %v7721
        %7744 = vst.msk [vmem:[%s986 + $0x68] sm:$0xff] %vm7730, %v7723
        %7745 = vst.msk [vmem:[%s986 + $0x70] sm:$0xff] %vm7730, %v7726
        %7746 = vst.msk [vmem:[%s986 + $0x78] sm:$0xff] %vm7730, %v7728
        %s7747 = smul.u32 16, %s44
        %p7748 = scmp.lt.s32.totalorder %s7747, 31
        %s7749 = scalar_select %p7748, %s7747, 31
        %s7750 = smul.addr %s7749, 8
        %s7751 = scalar_lea.vmem %s25, %s7750
        // Predicated region
        $region177: #{tpu_custom_call.1} parent=119 // pred_check
          %p7752 = pneg %p592
        $region178: #{tpu_custom_call.1} parent=119 // pred_check_branch
          %7754 = sbr.rel (%p7752) target = $region180
        $region179: #{tpu_custom_call.1} parent=119 // pred_region
          %s7755 = smul.u32 16, %s44
        $region180: #{tpu_custom_call.1} parent=119 // pred_fallthru
          _
      $region120: #{tpu_custom_call.1} parent=5 // pred_fallthru
        _
      %p7756 = scmp.le.s32.totalorder 2, %s39
      // Predicated region
      $region181: #{tpu_custom_call.1} parent=5 // pred_check
        %p7757 = pneg %p7756
      $region182: #{tpu_custom_call.1} parent=5 // pred_check_branch
        %7759 = sbr.rel (%p7757) target = $region184
      $region183: #{tpu_custom_call.1} parent=5 // pred_region
        %s7760 = ssub.s32 %s39, 2
        // Predicated region
        $region185: #{tpu_custom_call.1} parent=183 // pred_check
          %p7761 = pneg %p598
        $region186: #{tpu_custom_call.1} parent=183 // pred_check_branch
          %7763 = sbr.rel (%p7761) target = $region188
        $region187: #{tpu_custom_call.1} parent=183 // pred_region
          %s7764 = smul.u32 16, %s45
          %p7765 = scmp.lt.s32.totalorder %s7764, 31
          %s7766 = scalar_select %p7765, %s7764, 31
          %s7767 = smul.addr %s7766, 8
          %s7768 = scalar_lea.vmem %s25, %s7767
        $region188: #{tpu_custom_call.1} parent=183 // pred_fallthru
          _
      $region184: #{tpu_custom_call.1} parent=5 // pred_fallthru
        _
    $region6: #{tpu_custom_call.1} parent=1 // loop_footer
      %s43 = sadd.s32 1, %s39
    $region7: #{tpu_custom_call.1} parent=1 // loop_footer_branch
      %38 = sbr.rel target = $region3
    $region8: #{tpu_custom_call.1} parent=1 // loop_exit
      _
    %7769 = vsyncpa [#allocation3], 1
    %s7770 = scalar_lea.sflag [#allocation3], 1
    %7771 = vsyncpa %s7770, 1
    %7772 = vsyncpa [#allocation5], 1
    %7773 = vsyncpa [#allocation8], 1
    %7774 = vsyncpa [#allocation11], 1
    %7775 = vsyncpa [#allocation14], 1
    %7776 = vsyncpa [#allocation17], 1
    %7777 = vsyncpa [#allocation20], 1
    %7778 = vsyncpa [#allocation23], 1

</llo_original>
